<compile_context>
chip_gen: v7x
topology: tpu7x:2x2x1
jax: 0.10.0
libtpu: 0.0.40
codegen_flags: <defaults>
</compile_context>

<pallas_src>
import jax
import jax.numpy as jnp
from jax.experimental import pallas as pl
from jax.experimental.pallas import tpu as pltpu

LATENT_SIZE = 1024
NUM_OUTPUT = 2048
GRID_SIZE = 4
NUM_COARSE = NUM_OUTPUT // GRID_SIZE ** 2     # 128
MLP_HIDDEN = 1024
CONV_HIDDEN = 512
BN_EPS = 1e-5


# ----------------------------------------------------------------------------
# Kernel 1: coarse-point MLP (Linear -> ReLU -> Linear -> ReLU -> Linear),
# fused with the hoisted latent projection of the first final_conv layer.
# Small problem (bs rows) -> single VMEM-resident invocation.
# ----------------------------------------------------------------------------
def _mlp_kernel(x_ref, w1_ref, b1_ref, w2_ref, b2_ref, w3_ref, b3_ref, wl_ref,
                coarse_ref, latproj_ref):
    x = x_ref[...]
    h = jnp.dot(x, w1_ref[...], preferred_element_type=jnp.float32) + b1_ref[...]
    h = jnp.maximum(h, 0.0)
    h = jnp.dot(h, w2_ref[...], preferred_element_type=jnp.float32) + b2_ref[...]
    h = jnp.maximum(h, 0.0)
    coarse_ref[...] = jnp.dot(h, w3_ref[...], preferred_element_type=jnp.float32) + b3_ref[...]
    # Hoisted: conv1's latent-channel contribution, computed once per sample.
    latproj_ref[...] = jnp.dot(x, wl_ref[...], preferred_element_type=jnp.float32)


# ----------------------------------------------------------------------------
# Kernel 2: the folding head (three 1x1 convs + BN + ReLU + residual add).
# feat = concat([latent, seed, point_feat]) along channels is never built:
# the latent and seed contributions to conv1 arrive precomputed; only the tiny
# K=3 coarse-point contraction is done in-kernel on the VPU.
# Grid = (num_output // TILE_M, batch); each step processes TILE_M points.
# ----------------------------------------------------------------------------
def _final_conv_kernel(latproj_ref, seedproj_ref, pf_ref, wc_ref,
                       s1_ref, t1_ref, w2_ref, s2_ref, t2_ref, w3_ref, b3_ref,
                       out_ref):
    pf = pf_ref[...]                                   # (TM, 3)  point_feat rows

    # --- Conv1 (1029 -> 512): latent part (1, 512) + seed part (TM, 512)
    #     are precomputed; coarse part (K=3) via broadcast-mul-add on the VPU.
    h = latproj_ref[...] + seedproj_ref[...]
    h = h + (pf[:, 0:1] * wc_ref[0:1, :]
             + pf[:, 1:2] * wc_ref[1:2, :]
             + pf[:, 2:3] * wc_ref[2:3, :])
    # BN1 (inference mode, folded with conv bias) + ReLU
    # TODO(synk): PyTorch module defaults to training-mode BatchNorm (batch
    # statistics); here BN is applied with folded running stats (eval mode).
    h = jnp.maximum(h * s1_ref[...] + t1_ref[...], 0.0)

    # --- Conv2 (512 -> 512) + BN2 + ReLU --------------------------------------
    h = jnp.dot(h, w2_ref[...], preferred_element_type=jnp.float32)
    h = jnp.maximum(h * s2_ref[...] + t2_ref[...], 0.0)

    # --- Conv3 (512 -> 3) + residual point_feat --------------------------------
    y = jnp.dot(h, w3_ref[...], preferred_element_type=jnp.float32) + b3_ref[...]
    out_ref[...] = y + pf


def folding_decoder_forward(latent, params, *, tile_m=1024):
    bs = latent.shape[0]
    p = params

    # MLP -> coarse points (bs, NUM_COARSE, 3) and hoisted latent projection.
    coarse_flat, lat_proj = pl.pallas_call(
        _mlp_kernel,
        out_shape=(jax.ShapeDtypeStruct((bs, 3 * NUM_COARSE), jnp.float32),
                   jax.ShapeDtypeStruct((bs, CONV_HIDDEN), jnp.float32)),
        compiler_params=pltpu.CompilerParams(vmem_limit_bytes=32 * 1024 * 1024),
    )(latent, p["w1"], p["b1"], p["w2"], p["b2"], p["w3"], p["b3"], p["wc1_lat"])
    coarse = coarse_flat.reshape(bs, NUM_COARSE, 3)

    # Glue: replicate coarse points to per-output-point rows.
    pf = jnp.repeat(coarse, GRID_SIZE ** 2, axis=1)          # (bs, NUM_OUTPUT, 3)

    num_tiles = NUM_OUTPUT // tile_m
    const2 = lambda j, b: (0, 0)

    # Grid order (j outer, b inner): the 2 MB seed-projection tile stays
    # resident across the batch; weights stay resident across everything.
    fine = pl.pallas_call(
        _final_conv_kernel,
        out_shape=jax.ShapeDtypeStruct((bs, NUM_OUTPUT, 3), jnp.float32),
        grid=(num_tiles, bs),
        in_specs=[
            pl.BlockSpec((1, CONV_HIDDEN), lambda j, b: (b, 0)),         # latent @ W1[lat]
            pl.BlockSpec((tile_m, CONV_HIDDEN), lambda j, b: (j, 0)),    # seed @ W1[seed]
            pl.BlockSpec((None, tile_m, 3), lambda j, b: (b, j, 0)),     # point_feat rows
            pl.BlockSpec((3, CONV_HIDDEN), const2),                      # W1[coarse part]
            pl.BlockSpec((1, CONV_HIDDEN), const2),                      # BN1 scale
            pl.BlockSpec((1, CONV_HIDDEN), const2),                      # BN1 shift
            pl.BlockSpec((CONV_HIDDEN, CONV_HIDDEN), const2),            # W2
            pl.BlockSpec((1, CONV_HIDDEN), const2),                      # BN2 scale
            pl.BlockSpec((1, CONV_HIDDEN), const2),                      # BN2 shift
            pl.BlockSpec((CONV_HIDDEN, 3), const2),                      # W3
            pl.BlockSpec((1, 3), const2),                                # b3
        ],
        out_specs=pl.BlockSpec((None, tile_m, 3), lambda j, b: (b, j, 0)),
        compiler_params=pltpu.CompilerParams(
            dimension_semantics=("parallel", "parallel"),
            vmem_limit_bytes=24 * 1024 * 1024,
        ),
    )(lat_proj, p["seed_proj"], pf,
      p["wc1_coarse"], p["s1"], p["t1"],
      p["wc2"], p["s2"], p["t2"], p["wc3"], p["b3c"])
    return fine


# ----------------------------------------------------------------------------
# Deterministic parameter construction (PyTorch default Linear/Conv init style)
# ----------------------------------------------------------------------------
def init_params(key):
    ks = jax.random.split(key, 16)

    def linear(kw, kb, fan_in, fan_out):
        bound = 1.0 / jnp.sqrt(jnp.float32(fan_in))
        w = jax.random.uniform(kw, (fan_in, fan_out), jnp.float32, -bound, bound)
        b = jax.random.uniform(kb, (1, fan_out), jnp.float32, -bound, bound)
        return w, b

    w1, b1 = linear(ks[0], ks[1], LATENT_SIZE, MLP_HIDDEN)
    w2, b2 = linear(ks[2], ks[3], MLP_HIDDEN, MLP_HIDDEN)
    w3, b3 = linear(ks[4], ks[5], MLP_HIDDEN, 3 * NUM_COARSE)

    in1 = LATENT_SIZE + 3 + 2                      # 1029
    wc1, bc1 = linear(ks[6], ks[7], in1, CONV_HIDDEN)
    wc2, bc2 = linear(ks[8], ks[9], CONV_HIDDEN, CONV_HIDDEN)
    wc3, bc3 = linear(ks[10], ks[11], CONV_HIDDEN, 3)

    def bn(kg, kb_, n):
        gamma = 1.0 + 0.1 * jax.random.normal(kg, (1, n), jnp.float32)
        beta = 0.1 * jax.random.normal(kb_, (1, n), jnp.float32)
        mean = 0.05 * jax.random.normal(jax.random.fold_in(kg, 1), (1, n), jnp.float32)
        var = 1.0 + 0.1 * jnp.abs(jax.random.normal(jax.random.fold_in(kb_, 1), (1, n), jnp.float32))
        return gamma, beta, mean, var

    g1, be1, m1, v1 = bn(ks[12], ks[13], CONV_HIDDEN)
    g2, be2, m2, v2 = bn(ks[14], ks[15], CONV_HIDDEN)
    s1 = g1 / jnp.sqrt(v1 + BN_EPS)
    t1 = s1 * (bc1 - m1) + be1
    s2 = g2 / jnp.sqrt(v2 + BN_EPS)
    t2 = s2 * (bc2 - m2) + be2

    # folding seed: a = tiled linspace, b = repeat-interleaved linspace (matches torch)
    lin = jnp.linspace(-0.5, 0.5, GRID_SIZE, dtype=jnp.float32)
    a = jnp.tile(lin, GRID_SIZE)                      # (16,)
    bb = jnp.repeat(lin, GRID_SIZE)                   # (16,)
    seed = jnp.stack([a, bb], axis=1)                 # (16, 2) channels-last

    wc1_lat = wc1[:LATENT_SIZE]
    wc1_seed = wc1[LATENT_SIZE:LATENT_SIZE + 2]
    wc1_coarse = wc1[LATENT_SIZE + 2:]

    # Batch-independent precompute: seed contribution to conv1, (NUM_OUTPUT, 512)
    seed_full = jnp.tile(seed, (NUM_COARSE, 1))       # (NUM_OUTPUT, 2)
    seed_proj = seed_full @ wc1_seed                  # (NUM_OUTPUT, 512)

    return dict(
        w1=w1, b1=b1, w2=w2, b2=b2, w3=w3, b3=b3,
        wc1_lat=wc1_lat, wc1_seed=wc1_seed, wc1_coarse=wc1_coarse,
        s1=s1, t1=t1, wc2=wc2, s2=s2, t2=t2, wc3=wc3, b3c=bc3,
        seed=seed, seed_proj=seed_proj,
    )


# Pure-JAX reference of the same (inference-mode BN) forward, for verification.
# Uses the raw weight pieces (not the precomputed seed_proj) on purpose.
def reference_forward(latent, p):
    bs = latent.shape[0]
    h = jax.nn.relu(latent @ p["w1"] + p["b1"])
    h = jax.nn.relu(h @ p["w2"] + p["b2"])
    coarse = (h @ p["w3"] + p["b3"]).reshape(bs, NUM_COARSE, 3)
    pf = jnp.repeat(coarse, GRID_SIZE ** 2, axis=1)               # (bs, N, 3)
    seed_full = jnp.tile(p["seed"], (NUM_COARSE, 1))              # (N, 2)
    h1 = ((latent @ p["wc1_lat"])[:, None, :]
          + seed_full @ p["wc1_seed"]
          + pf @ p["wc1_coarse"])
    h1 = jax.nn.relu(h1 * p["s1"] + p["t1"])
    h2 = jax.nn.relu(h1 @ p["wc2"] * p["s2"] + p["t2"])
    y = h2 @ p["wc3"] + p["b3c"]
    return y + pf


if __name__ == "__main__":
    key = jax.random.PRNGKey(0)
    pkey, xkey = jax.random.split(key)
    params = init_params(pkey)

    bs = 2
    latent = jax.random.normal(xkey, (bs, LATENT_SIZE), jnp.float32)

    out = folding_decoder_forward(latent, params)
    out = jax.block_until_ready(out)
    assert out.shape == (bs, NUM_OUTPUT, 3), out.shape

    ref = reference_forward(latent, params)
    max_err = float(jnp.max(jnp.abs(out - ref)))
    assert jnp.allclose(out, ref, rtol=5e-2, atol=5e-2), max_err

    print("KERNEL_OK")
</pallas_src>

<mosaic_0001>
module attributes {stable_mosaic.version = 11 : i64} {
  func.func @_mlp_kernel(%arg0: memref<2x1024xf32, #tpu.memory_space<vmem>>, %arg1: memref<1024x1024xf32, #tpu.memory_space<vmem>>, %arg2: memref<1x1024xf32, #tpu.memory_space<vmem>>, %arg3: memref<1024x1024xf32, #tpu.memory_space<vmem>>, %arg4: memref<1x1024xf32, #tpu.memory_space<vmem>>, %arg5: memref<1024x384xf32, #tpu.memory_space<vmem>>, %arg6: memref<1x384xf32, #tpu.memory_space<vmem>>, %arg7: memref<1024x512xf32, #tpu.memory_space<vmem>>, %arg8: memref<2x384xf32, #tpu.memory_space<vmem>>, %arg9: memref<2x512xf32, #tpu.memory_space<vmem>>) attributes {dimension_semantics = [], scalar_prefetch = 0 : i64, scratch_operands = 0 : i64, tpu.core_type = #tpu.core_type<tc>} {
    %c0 = arith.constant 0 : index
    %c0_0 = arith.constant 0 : index
    %0 = vector.load %arg0[%c0, %c0_0] : memref<2x1024xf32, #tpu.memory_space<vmem>>, vector<2x1024xf32>
    %c0_1 = arith.constant 0 : index
    %c0_2 = arith.constant 0 : index
    %1 = vector.load %arg1[%c0_1, %c0_2] : memref<1024x1024xf32, #tpu.memory_space<vmem>>, vector<1024x1024xf32>
    %cst = arith.constant dense<0.000000e+00> : vector<2x1024xf32>
    %2 = tpu.matmul %0, %1, %cst {dimension_numbers = #tpu.dot_dimension_numbers<[1], [0], [0], [1], [0, 0, 1, 1], [], []>} : vector<2x1024xf32>, vector<1024x1024xf32>, vector<2x1024xf32> -> vector<2x1024xf32>
    %c0_3 = arith.constant 0 : index
    %c0_4 = arith.constant 0 : index
    %3 = vector.load %arg2[%c0_3, %c0_4] : memref<1x1024xf32, #tpu.memory_space<vmem>>, vector<1x1024xf32>
    %4 = vector.broadcast %3 : vector<1x1024xf32> to vector<2x1024xf32>
    %5 = arith.addf %2, %4 : vector<2x1024xf32>
    %cst_5 = arith.constant 0.000000e+00 : f32
    %6 = vector.broadcast %cst_5 : f32 to vector<2x1024xf32>
    %7 = arith.maximumf %5, %6 : vector<2x1024xf32>
    %c0_6 = arith.constant 0 : index
    %c0_7 = arith.constant 0 : index
    %8 = vector.load %arg3[%c0_6, %c0_7] : memref<1024x1024xf32, #tpu.memory_space<vmem>>, vector<1024x1024xf32>
    %cst_8 = arith.constant dense<0.000000e+00> : vector<2x1024xf32>
    %9 = tpu.matmul %7, %8, %cst_8 {dimension_numbers = #tpu.dot_dimension_numbers<[1], [0], [0], [1], [0, 0, 1, 1], [], []>} : vector<2x1024xf32>, vector<1024x1024xf32>, vector<2x1024xf32> -> vector<2x1024xf32>
    %c0_9 = arith.constant 0 : index
    %c0_10 = arith.constant 0 : index
    %10 = vector.load %arg4[%c0_9, %c0_10] : memref<1x1024xf32, #tpu.memory_space<vmem>>, vector<1x1024xf32>
    %11 = vector.broadcast %10 : vector<1x1024xf32> to vector<2x1024xf32>
    %12 = arith.addf %9, %11 : vector<2x1024xf32>
    %cst_11 = arith.constant 0.000000e+00 : f32
    %13 = vector.broadcast %cst_11 : f32 to vector<2x1024xf32>
    %14 = arith.maximumf %12, %13 : vector<2x1024xf32>
    %c0_12 = arith.constant 0 : index
    %c0_13 = arith.constant 0 : index
    %15 = vector.load %arg5[%c0_12, %c0_13] : memref<1024x384xf32, #tpu.memory_space<vmem>>, vector<1024x384xf32>
    %cst_14 = arith.constant dense<0.000000e+00> : vector<2x384xf32>
    %16 = tpu.matmul %14, %15, %cst_14 {dimension_numbers = #tpu.dot_dimension_numbers<[1], [0], [0], [1], [0, 0, 1, 1], [], []>} : vector<2x1024xf32>, vector<1024x384xf32>, vector<2x384xf32> -> vector<2x384xf32>
    %c0_15 = arith.constant 0 : index
    %c0_16 = arith.constant 0 : index
    %17 = vector.load %arg6[%c0_15, %c0_16] : memref<1x384xf32, #tpu.memory_space<vmem>>, vector<1x384xf32>
    %18 = vector.broadcast %17 : vector<1x384xf32> to vector<2x384xf32>
    %19 = arith.addf %16, %18 : vector<2x384xf32>
    %c0_17 = arith.constant 0 : index
    %c0_18 = arith.constant 0 : index
    %20 = vector.load %arg8[%c0_17, %c0_18] : memref<2x384xf32, #tpu.memory_space<vmem>>, vector<2x384xf32>
    tpu.vector_store %arg8[%c0_17, %c0_18], %19 {strides = array<i32>} : memref<2x384xf32, #tpu.memory_space<vmem>>, vector<2x384xf32>,
    %c0_19 = arith.constant 0 : index
    %c0_20 = arith.constant 0 : index
    %21 = vector.load %arg7[%c0_19, %c0_20] : memref<1024x512xf32, #tpu.memory_space<vmem>>, vector<1024x512xf32>
    %cst_21 = arith.constant dense<0.000000e+00> : vector<2x512xf32>
    %22 = tpu.matmul %0, %21, %cst_21 {dimension_numbers = #tpu.dot_dimension_numbers<[1], [0], [0], [1], [0, 0, 1, 1], [], []>} : vector<2x1024xf32>, vector<1024x512xf32>, vector<2x512xf32> -> vector<2x512xf32>
    %c0_22 = arith.constant 0 : index
    %c0_23 = arith.constant 0 : index
    %23 = vector.load %arg9[%c0_22, %c0_23] : memref<2x512xf32, #tpu.memory_space<vmem>>, vector<2x512xf32>
    tpu.vector_store %arg9[%c0_22, %c0_23], %22 {strides = array<i32>} : memref<2x512xf32, #tpu.memory_space<vmem>>, vector<2x512xf32>,
    return
  }
}

</mosaic_0001>

<llo_original>
// kernel: tpu_custom_call.1
$region0: #{tpu_custom_call.1}
  #allocation0 [shape = 'u32[]', space=smem, size = 0x4, offset = 0x4, fixed_abs, tag = 'smem constant byte address 0x4 - core index']
  #allocation1 [shape = 'u32[144,128]{1,0:T(1,128)}', space=vmem, size = 0x12000, scoped, tag = 'internal scratch']
  %s0 = inlined_call_operand.hbm [shape: f32[2,1024], index: 0, kind: input, shape index: {}]
  %s1 = inlined_call_operand.hbm [shape: f32[1024,1024], index: 1, kind: input, shape index: {}]
  %s2 = inlined_call_operand.hbm [shape: f32[1,1024], index: 2, kind: input, shape index: {}]
  %s3 = inlined_call_operand.hbm [shape: f32[1024,1024], index: 3, kind: input, shape index: {}]
  %s4 = inlined_call_operand.hbm [shape: f32[1,1024], index: 4, kind: input, shape index: {}]
  %s5 = inlined_call_operand.hbm [shape: f32[1024,384], index: 5, kind: input, shape index: {}]
  %s6 = inlined_call_operand.hbm [shape: f32[1,384], index: 6, kind: input, shape index: {}]
  %s7 = inlined_call_operand.hbm [shape: f32[1024,512], index: 7, kind: input, shape index: {}]
  %s8 = inlined_call_operand.hbm [shape: f32[2,384], index: 8, kind: output, shape index: {0}]
  %s9 = inlined_call_operand.hbm [shape: f32[2,512], index: 9, kind: output, shape index: {1}]
  %10 = xla_tuple %s8, %s9
  %s11 = sld [smem:[#allocation0]]
  $region82: #{tpu_custom_call.1} parent=0
    _
  %s13 = ssub.s32 1, %s11
  %s14 = scalar_select 0, %s13, %s11
  $region1: #{tpu_custom_call.1} parent=0
    #allocation2 [shape = 'u8[8192]{0}', space=vmem, size = 0x2000, scoped, tag = 'input window, operand 0, single buffered']
    #allocation3 [shape = 's32[1]{0}', space=sflag, size = 0x4, scoped, tag = 'scoped memory for tpu_custom_call.1']
    #allocation4 [shape = 's32[1]{0}', space=sflag, size = 0x4, scoped, tag = 'scoped memory for tpu_custom_call.1']
    #allocation5 [shape = 'u8[4194304]{0}', space=vmem, size = 0x400000, scoped, tag = 'input window, operand 1, single buffered']
    #allocation6 [shape = 's32[1]{0}', space=sflag, size = 0x4, scoped, tag = 'scoped memory for tpu_custom_call.1']
    #allocation7 [shape = 'u8[4096]{0}', space=vmem, size = 0x1000, scoped, tag = 'input window, operand 2, single buffered']
    #allocation8 [shape = 'u8[4194304]{0}', space=vmem, size = 0x400000, scoped, tag = 'input window, operand 3, single buffered']
    #allocation9 [shape = 's32[1]{0}', space=sflag, size = 0x4, scoped, tag = 'scoped memory for tpu_custom_call.1']
    #allocation10 [shape = 'u8[4096]{0}', space=vmem, size = 0x1000, scoped, tag = 'input window, operand 4, single buffered']
    #allocation11 [shape = 'u8[1572864]{0}', space=vmem, size = 0x180000, scoped, tag = 'input window, operand 5, single buffered']
    #allocation12 [shape = 's32[1]{0}', space=sflag, size = 0x4, scoped, tag = 'scoped memory for tpu_custom_call.1']
    #allocation13 [shape = 'u8[1536]{0}', space=vmem, size = 0x800, scoped, tag = 'input window, operand 6, single buffered']
    #allocation14 [shape = 'u8[2097152]{0}', space=vmem, size = 0x200000, scoped, tag = 'input window, operand 7, single buffered']
    #allocation15 [shape = 's32[1]{0}', space=sflag, size = 0x4, scoped, tag = 'scoped memory for tpu_custom_call.1']
    #allocation16 [shape = 'u8[3072]{0}', space=vmem, size = 0xc00, scoped, tag = 'output window, operand 0, single buffered']
    #allocation17 [shape = 'u8[4096]{0}', space=vmem, size = 0x1000, scoped, tag = 'output window, operand 1, single buffered']
    #allocation18 [shape = 's32[1]{0}', space=sflag, size = 0x4, scoped, tag = 'scoped memory for tpu_custom_call.1']
    %15 = vsyncpa [#allocation3], 0
    %16 = vsyncpa [#allocation6], 0
    %17 = vsyncpa [#allocation9], 0
    %18 = vsyncpa [#allocation12], 0
    %19 = vsyncpa [#allocation15], 0
    %20 = vsyncpa [#allocation4], 0
    %21 = vsyncpa [#allocation18], 0
    // Predicated region
    $region2: #{tpu_custom_call.1} parent=1 // pred_check
      _
    $region3: #{tpu_custom_call.1} parent=1 // pred_check_branch
      %23 = sbr.rel (0) target = $region5
    $region4: #{tpu_custom_call.1} parent=1 // pred_region
      %s25 = ssub.s32 256, 256
      %26 = vsyncadd [#allocation3], %s25
      %s28 = sshll.u32 [#allocation2], 4
      %s29 = int_to_ptr.vmem [resolvable:$true] %s28
      %31 = dma.hbm_to_vmem [thread:$0]  %s0, 256, %s29, [#allocation3]
    $region5: #{tpu_custom_call.1} parent=1 // pred_fallthru
      _
    // Predicated region
    $region6: #{tpu_custom_call.1} parent=1 // pred_check
      _
    $region7: #{tpu_custom_call.1} parent=1 // pred_check_branch
      %33 = sbr.rel (0) target = $region9
    $region8: #{tpu_custom_call.1} parent=1 // pred_region
      %s35 = ssub.s32 131072, 131072
      %36 = vsyncadd [#allocation6], %s35
      %s37 = sshll.u32 [#allocation5], 4
      %s38 = int_to_ptr.vmem [resolvable:$true] %s37
      %43 = dma.hbm_to_vmem [thread:$0]  %s1, 131072, %s38, [#allocation6], 1024, 1024, 64
    $region9: #{tpu_custom_call.1} parent=1 // pred_fallthru
      _
    // Predicated region
    $region10: #{tpu_custom_call.1} parent=1 // pred_check
      _
    $region11: #{tpu_custom_call.1} parent=1 // pred_check_branch
      %45 = sbr.rel (0) target = $region13
    $region12: #{tpu_custom_call.1} parent=1 // pred_region
      %s47 = ssub.s32 128, 128
      %48 = vsyncadd [#allocation6], %s47
      %s50 = sshll.u32 [#allocation7], 4
      %s51 = int_to_ptr.vmem [resolvable:$true] %s50
      %53 = dma.hbm_to_vmem [thread:$0]  %s2, 128, %s51, [#allocation6]
    $region13: #{tpu_custom_call.1} parent=1 // pred_fallthru
      _
    // Predicated region
    $region14: #{tpu_custom_call.1} parent=1 // pred_check
      _
    $region15: #{tpu_custom_call.1} parent=1 // pred_check_branch
      %55 = sbr.rel (0) target = $region17
    $region16: #{tpu_custom_call.1} parent=1 // pred_region
      %s57 = ssub.s32 131072, 131072
      %58 = vsyncadd [#allocation9], %s57
      %s59 = sshll.u32 [#allocation8], 4
      %s60 = int_to_ptr.vmem [resolvable:$true] %s59
      %65 = dma.hbm_to_vmem [thread:$0]  %s3, 131072, %s60, [#allocation9], 1024, 1024, 64
    $region17: #{tpu_custom_call.1} parent=1 // pred_fallthru
      _
    // Predicated region
    $region18: #{tpu_custom_call.1} parent=1 // pred_check
      _
    $region19: #{tpu_custom_call.1} parent=1 // pred_check_branch
      %67 = sbr.rel (0) target = $region21
    $region20: #{tpu_custom_call.1} parent=1 // pred_region
      %s69 = ssub.s32 128, 128
      %70 = vsyncadd [#allocation9], %s69
      %s72 = sshll.u32 [#allocation10], 4
      %s73 = int_to_ptr.vmem [resolvable:$true] %s72
      %75 = dma.hbm_to_vmem [thread:$0]  %s4, 128, %s73, [#allocation9]
    $region21: #{tpu_custom_call.1} parent=1 // pred_fallthru
      _
    // Predicated region
    $region22: #{tpu_custom_call.1} parent=1 // pred_check
      _
    $region23: #{tpu_custom_call.1} parent=1 // pred_check_branch
      %77 = sbr.rel (0) target = $region25
    $region24: #{tpu_custom_call.1} parent=1 // pred_region
      %s79 = ssub.s32 49152, 49152
      %80 = vsyncadd [#allocation12], %s79
      %s81 = sshll.u32 [#allocation11], 4
      %s82 = int_to_ptr.vmem [resolvable:$true] %s81
      %87 = dma.hbm_to_vmem [thread:$0]  %s5, 49152, %s82, [#allocation12], 384, 384, 24
    $region25: #{tpu_custom_call.1} parent=1 // pred_fallthru
      _
    // Predicated region
    $region26: #{tpu_custom_call.1} parent=1 // pred_check
      _
    $region27: #{tpu_custom_call.1} parent=1 // pred_check_branch
      %89 = sbr.rel (0) target = $region29
    $region28: #{tpu_custom_call.1} parent=1 // pred_region
      %s91 = ssub.s32 48, 48
      %92 = vsyncadd [#allocation12], %s91
      %s94 = sshll.u32 [#allocation13], 4
      %s95 = int_to_ptr.vmem [resolvable:$true] %s94
      %97 = dma.hbm_to_vmem [thread:$0]  %s6, 48, %s95, [#allocation12]
    $region29: #{tpu_custom_call.1} parent=1 // pred_fallthru
      _
    // Predicated region
    $region30: #{tpu_custom_call.1} parent=1 // pred_check
      _
    $region31: #{tpu_custom_call.1} parent=1 // pred_check_branch
      %99 = sbr.rel (0) target = $region33
    $region32: #{tpu_custom_call.1} parent=1 // pred_region
      %s101 = ssub.s32 65536, 65536
      %102 = vsyncadd [#allocation15], %s101
      %s103 = sshll.u32 [#allocation14], 4
      %s104 = int_to_ptr.vmem [resolvable:$true] %s103
      %109 = dma.hbm_to_vmem [thread:$0]  %s7, 65536, %s104, [#allocation15], 512, 512, 32
    $region33: #{tpu_custom_call.1} parent=1 // pred_fallthru
      _
    // Predicated region
    $region34: #{tpu_custom_call.1} parent=1 // pred_check
      _
    $region35: #{tpu_custom_call.1} parent=1 // pred_check_branch
      %111 = sbr.rel (0) target = $region37
    $region36: #{tpu_custom_call.1} parent=1 // pred_region
      %112 = dma.done [#allocation3], 256
    $region37: #{tpu_custom_call.1} parent=1 // pred_fallthru
      _
    // Predicated region
    $region38: #{tpu_custom_call.1} parent=1 // pred_check
      _
    $region39: #{tpu_custom_call.1} parent=1 // pred_check_branch
      %114 = sbr.rel (0) target = $region41
    $region40: #{tpu_custom_call.1} parent=1 // pred_region
      %115 = dma.done [#allocation6], 131072
    $region41: #{tpu_custom_call.1} parent=1 // pred_fallthru
      _
    // Predicated region
    $region42: #{tpu_custom_call.1} parent=1 // pred_check
      _
    $region43: #{tpu_custom_call.1} parent=1 // pred_check_branch
      %117 = sbr.rel (0) target = $region45
    $region44: #{tpu_custom_call.1} parent=1 // pred_region
      %118 = dma.done [#allocation6], 128
    $region45: #{tpu_custom_call.1} parent=1 // pred_fallthru
      _
    // Predicated region
    $region46: #{tpu_custom_call.1} parent=1 // pred_check
      _
    $region47: #{tpu_custom_call.1} parent=1 // pred_check_branch
      %120 = sbr.rel (0) target = $region49
    $region48: #{tpu_custom_call.1} parent=1 // pred_region
      %121 = dma.done [#allocation9], 131072
    $region49: #{tpu_custom_call.1} parent=1 // pred_fallthru
      _
    // Predicated region
    $region50: #{tpu_custom_call.1} parent=1 // pred_check
      _
    $region51: #{tpu_custom_call.1} parent=1 // pred_check_branch
      %123 = sbr.rel (0) target = $region53
    $region52: #{tpu_custom_call.1} parent=1 // pred_region
      %124 = dma.done [#allocation9], 128
    $region53: #{tpu_custom_call.1} parent=1 // pred_fallthru
      _
    // Predicated region
    $region54: #{tpu_custom_call.1} parent=1 // pred_check
      _
    $region55: #{tpu_custom_call.1} parent=1 // pred_check_branch
      %126 = sbr.rel (0) target = $region57
    $region56: #{tpu_custom_call.1} parent=1 // pred_region
      %127 = dma.done [#allocation12], 49152
    $region57: #{tpu_custom_call.1} parent=1 // pred_fallthru
      _
    // Predicated region
    $region58: #{tpu_custom_call.1} parent=1 // pred_check
      _
    $region59: #{tpu_custom_call.1} parent=1 // pred_check_branch
      %129 = sbr.rel (0) target = $region61
    $region60: #{tpu_custom_call.1} parent=1 // pred_region
      %130 = dma.done [#allocation12], 48
    $region61: #{tpu_custom_call.1} parent=1 // pred_fallthru
      _
    // Predicated region
    $region62: #{tpu_custom_call.1} parent=1 // pred_check
      _
    $region63: #{tpu_custom_call.1} parent=1 // pred_check_branch
      %132 = sbr.rel (0) target = $region65
    $region64: #{tpu_custom_call.1} parent=1 // pred_region
      %133 = dma.done [#allocation15], 65536
    $region65: #{tpu_custom_call.1} parent=1 // pred_fallthru
      _
    %v134 = vld [vmem:[#allocation2] sm:$0xff]
    %v135 = vld [vmem:[#allocation2 + $0x8] sm:$0xff]
    %v136 = vld [vmem:[#allocation5] sm:$0xff]
    %v137 = vld [vmem:[#allocation5 + $0x8] sm:$0xff]
    %v138 = vld [vmem:[#allocation5 + $0x10] sm:$0xff]
    %v139 = vld [vmem:[#allocation5 + $0x18] sm:$0xff]
    %v140 = vld [vmem:[#allocation5 + $0x20] sm:$0xff]
    %v141 = vld [vmem:[#allocation5 + $0x28] sm:$0xff]
    %v142 = vld [vmem:[#allocation5 + $0x30] sm:$0xff]
    %v143 = vld [vmem:[#allocation5 + $0x38] sm:$0xff]
    %v144 = vld [vmem:[#allocation5 + $0x40] sm:$0xff]
    %v145 = vld [vmem:[#allocation5 + $0x48] sm:$0xff]
    %v146 = vld [vmem:[#allocation5 + $0x50] sm:$0xff]
    %v147 = vld [vmem:[#allocation5 + $0x58] sm:$0xff]
    %v148 = vld [vmem:[#allocation5 + $0x60] sm:$0xff]
    %v149 = vld [vmem:[#allocation5 + $0x68] sm:$0xff]
    %v150 = vld [vmem:[#allocation5 + $0x70] sm:$0xff]
    %v151 = vld [vmem:[#allocation5 + $0x78] sm:$0xff]
    %v152 = vld [vmem:[#allocation5 + $0x80] sm:$0xff]
    %v153 = vld [vmem:[#allocation5 + $0x88] sm:$0xff]
    %v154 = vld [vmem:[#allocation5 + $0x90] sm:$0xff]
    %v155 = vld [vmem:[#allocation5 + $0x98] sm:$0xff]
    %v156 = vld [vmem:[#allocation5 + $0xa0] sm:$0xff]
    %v157 = vld [vmem:[#allocation5 + $0xa8] sm:$0xff]
    %v158 = vld [vmem:[#allocation5 + $0xb0] sm:$0xff]
    %v159 = vld [vmem:[#allocation5 + $0xb8] sm:$0xff]
    %v160 = vld [vmem:[#allocation5 + $0xc0] sm:$0xff]
    %v161 = vld [vmem:[#allocation5 + $0xc8] sm:$0xff]
    %v162 = vld [vmem:[#allocation5 + $0xd0] sm:$0xff]
    %v163 = vld [vmem:[#allocation5 + $0xd8] sm:$0xff]
    %v164 = vld [vmem:[#allocation5 + $0xe0] sm:$0xff]
    %v165 = vld [vmem:[#allocation5 + $0xe8] sm:$0xff]
    %v166 = vld [vmem:[#allocation5 + $0xf0] sm:$0xff]
    %v167 = vld [vmem:[#allocation5 + $0xf8] sm:$0xff]
    %v168 = vld [vmem:[#allocation5 + $0x100] sm:$0xff]
    %v169 = vld [vmem:[#allocation5 + $0x108] sm:$0xff]
    %v170 = vld [vmem:[#allocation5 + $0x110] sm:$0xff]
    %v171 = vld [vmem:[#allocation5 + $0x118] sm:$0xff]
    %v172 = vld [vmem:[#allocation5 + $0x120] sm:$0xff]
    %v173 = vld [vmem:[#allocation5 + $0x128] sm:$0xff]
    %v174 = vld [vmem:[#allocation5 + $0x130] sm:$0xff]
    %v175 = vld [vmem:[#allocation5 + $0x138] sm:$0xff]
    %v176 = vld [vmem:[#allocation5 + $0x140] sm:$0xff]
    %v177 = vld [vmem:[#allocation5 + $0x148] sm:$0xff]
    %v178 = vld [vmem:[#allocation5 + $0x150] sm:$0xff]
    %v179 = vld [vmem:[#allocation5 + $0x158] sm:$0xff]
    %v180 = vld [vmem:[#allocation5 + $0x160] sm:$0xff]
    %v181 = vld [vmem:[#allocation5 + $0x168] sm:$0xff]
    %v182 = vld [vmem:[#allocation5 + $0x170] sm:$0xff]
    %v183 = vld [vmem:[#allocation5 + $0x178] sm:$0xff]
    %v184 = vld [vmem:[#allocation5 + $0x180] sm:$0xff]
    %v185 = vld [vmem:[#allocation5 + $0x188] sm:$0xff]
    %v186 = vld [vmem:[#allocation5 + $0x190] sm:$0xff]
    %v187 = vld [vmem:[#allocation5 + $0x198] sm:$0xff]
    %v188 = vld [vmem:[#allocation5 + $0x1a0] sm:$0xff]
    %v189 = vld [vmem:[#allocation5 + $0x1a8] sm:$0xff]
    %v190 = vld [vmem:[#allocation5 + $0x1b0] sm:$0xff]
    %v191 = vld [vmem:[#allocation5 + $0x1b8] sm:$0xff]
    %v192 = vld [vmem:[#allocation5 + $0x1c0] sm:$0xff]
    %v193 = vld [vmem:[#allocation5 + $0x1c8] sm:$0xff]
    %v194 = vld [vmem:[#allocation5 + $0x1d0] sm:$0xff]
    %v195 = vld [vmem:[#allocation5 + $0x1d8] sm:$0xff]
    %v196 = vld [vmem:[#allocation5 + $0x1e0] sm:$0xff]
    %v197 = vld [vmem:[#allocation5 + $0x1e8] sm:$0xff]
    %v198 = vld [vmem:[#allocation5 + $0x1f0] sm:$0xff]
    %v199 = vld [vmem:[#allocation5 + $0x1f8] sm:$0xff]
    %v200 = vld [vmem:[#allocation5 + $0x200] sm:$0xff]
    %v201 = vld [vmem:[#allocation5 + $0x208] sm:$0xff]
    %v202 = vld [vmem:[#allocation5 + $0x210] sm:$0xff]
    %v203 = vld [vmem:[#allocation5 + $0x218] sm:$0xff]
    %v204 = vld [vmem:[#allocation5 + $0x220] sm:$0xff]
    %v205 = vld [vmem:[#allocation5 + $0x228] sm:$0xff]
    %v206 = vld [vmem:[#allocation5 + $0x230] sm:$0xff]
    %v207 = vld [vmem:[#allocation5 + $0x238] sm:$0xff]
    %v208 = vld [vmem:[#allocation5 + $0x240] sm:$0xff]
    %v209 = vld [vmem:[#allocation5 + $0x248] sm:$0xff]
    %v210 = vld [vmem:[#allocation5 + $0x250] sm:$0xff]
    %v211 = vld [vmem:[#allocation5 + $0x258] sm:$0xff]
    %v212 = vld [vmem:[#allocation5 + $0x260] sm:$0xff]
    %v213 = vld [vmem:[#allocation5 + $0x268] sm:$0xff]
    %v214 = vld [vmem:[#allocation5 + $0x270] sm:$0xff]
    %v215 = vld [vmem:[#allocation5 + $0x278] sm:$0xff]
    %v216 = vld [vmem:[#allocation5 + $0x280] sm:$0xff]
    %v217 = vld [vmem:[#allocation5 + $0x288] sm:$0xff]
    %v218 = vld [vmem:[#allocation5 + $0x290] sm:$0xff]
    %v219 = vld [vmem:[#allocation5 + $0x298] sm:$0xff]
    %v220 = vld [vmem:[#allocation5 + $0x2a0] sm:$0xff]
    %v221 = vld [vmem:[#allocation5 + $0x2a8] sm:$0xff]
    %v222 = vld [vmem:[#allocation5 + $0x2b0] sm:$0xff]
    %v223 = vld [vmem:[#allocation5 + $0x2b8] sm:$0xff]
    %v224 = vld [vmem:[#allocation5 + $0x2c0] sm:$0xff]
    %v225 = vld [vmem:[#allocation5 + $0x2c8] sm:$0xff]
    %v226 = vld [vmem:[#allocation5 + $0x2d0] sm:$0xff]
    %v227 = vld [vmem:[#allocation5 + $0x2d8] sm:$0xff]
    %v228 = vld [vmem:[#allocation5 + $0x2e0] sm:$0xff]
    %v229 = vld [vmem:[#allocation5 + $0x2e8] sm:$0xff]
    %v230 = vld [vmem:[#allocation5 + $0x2f0] sm:$0xff]
    %v231 = vld [vmem:[#allocation5 + $0x2f8] sm:$0xff]
    %v232 = vld [vmem:[#allocation5 + $0x300] sm:$0xff]
    %v233 = vld [vmem:[#allocation5 + $0x308] sm:$0xff]
    %v234 = vld [vmem:[#allocation5 + $0x310] sm:$0xff]
    %v235 = vld [vmem:[#allocation5 + $0x318] sm:$0xff]
    %v236 = vld [vmem:[#allocation5 + $0x320] sm:$0xff]
    %v237 = vld [vmem:[#allocation5 + $0x328] sm:$0xff]
    %v238 = vld [vmem:[#allocation5 + $0x330] sm:$0xff]
    %v239 = vld [vmem:[#allocation5 + $0x338] sm:$0xff]
    %v240 = vld [vmem:[#allocation5 + $0x340] sm:$0xff]
    %v241 = vld [vmem:[#allocation5 + $0x348] sm:$0xff]
    %v242 = vld [vmem:[#allocation5 + $0x350] sm:$0xff]
    %v243 = vld [vmem:[#allocation5 + $0x358] sm:$0xff]
    %v244 = vld [vmem:[#allocation5 + $0x360] sm:$0xff]
    %v245 = vld [vmem:[#allocation5 + $0x368] sm:$0xff]
    %v246 = vld [vmem:[#allocation5 + $0x370] sm:$0xff]
    %v247 = vld [vmem:[#allocation5 + $0x378] sm:$0xff]
    %v248 = vld [vmem:[#allocation5 + $0x380] sm:$0xff]
    %v249 = vld [vmem:[#allocation5 + $0x388] sm:$0xff]
    %v250 = vld [vmem:[#allocation5 + $0x390] sm:$0xff]
    %v251 = vld [vmem:[#allocation5 + $0x398] sm:$0xff]
    %v252 = vld [vmem:[#allocation5 + $0x3a0] sm:$0xff]
    %v253 = vld [vmem:[#allocation5 + $0x3a8] sm:$0xff]
    %v254 = vld [vmem:[#allocation5 + $0x3b0] sm:$0xff]
    %v255 = vld [vmem:[#allocation5 + $0x3b8] sm:$0xff]
    %v256 = vld [vmem:[#allocation5 + $0x3c0] sm:$0xff]
    %v257 = vld [vmem:[#allocation5 + $0x3c8] sm:$0xff]
    %v258 = vld [vmem:[#allocation5 + $0x3d0] sm:$0xff]
    %v259 = vld [vmem:[#allocation5 + $0x3d8] sm:$0xff]
    %v260 = vld [vmem:[#allocation5 + $0x3e0] sm:$0xff]
    %v261 = vld [vmem:[#allocation5 + $0x3e8] sm:$0xff]
    %v262 = vld [vmem:[#allocation5 + $0x3f0] sm:$0xff]
    %v263 = vld [vmem:[#allocation5 + $0x3f8] sm:$0xff]
    %v264 = vld [vmem:[#allocation5 + $0x400] sm:$0xff]
    %v265 = vld [vmem:[#allocation5 + $0x408] sm:$0xff]
    %v266 = vld [vmem:[#allocation5 + $0x410] sm:$0xff]
    %v267 = vld [vmem:[#allocation5 + $0x418] sm:$0xff]
    %v268 = vld [vmem:[#allocation5 + $0x420] sm:$0xff]
    %v269 = vld [vmem:[#allocation5 + $0x428] sm:$0xff]
    %v270 = vld [vmem:[#allocation5 + $0x430] sm:$0xff]
    %v271 = vld [vmem:[#allocation5 + $0x438] sm:$0xff]
    %v272 = vld [vmem:[#allocation5 + $0x440] sm:$0xff]
    %v273 = vld [vmem:[#allocation5 + $0x448] sm:$0xff]
    %v274 = vld [vmem:[#allocation5 + $0x450] sm:$0xff]
    %v275 = vld [vmem:[#allocation5 + $0x458] sm:$0xff]
    %v276 = vld [vmem:[#allocation5 + $0x460] sm:$0xff]
    %v277 = vld [vmem:[#allocation5 + $0x468] sm:$0xff]
    %v278 = vld [vmem:[#allocation5 + $0x470] sm:$0xff]
    %v279 = vld [vmem:[#allocation5 + $0x478] sm:$0xff]
    %v280 = vld [vmem:[#allocation5 + $0x480] sm:$0xff]
    %v281 = vld [vmem:[#allocation5 + $0x488] sm:$0xff]
    %v282 = vld [vmem:[#allocation5 + $0x490] sm:$0xff]
    %v283 = vld [vmem:[#allocation5 + $0x498] sm:$0xff]
    %v284 = vld [vmem:[#allocation5 + $0x4a0] sm:$0xff]
    %v285 = vld [vmem:[#allocation5 + $0x4a8] sm:$0xff]
    %v286 = vld [vmem:[#allocation5 + $0x4b0] sm:$0xff]
    %v287 = vld [vmem:[#allocation5 + $0x4b8] sm:$0xff]
    %v288 = vld [vmem:[#allocation5 + $0x4c0] sm:$0xff]
    %v289 = vld [vmem:[#allocation5 + $0x4c8] sm:$0xff]
    %v290 = vld [vmem:[#allocation5 + $0x4d0] sm:$0xff]
    %v291 = vld [vmem:[#allocation5 + $0x4d8] sm:$0xff]
    %v292 = vld [vmem:[#allocation5 + $0x4e0] sm:$0xff]
    %v293 = vld [vmem:[#allocation5 + $0x4e8] sm:$0xff]
    %v294 = vld [vmem:[#allocation5 + $0x4f0] sm:$0xff]
    %v295 = vld [vmem:[#allocation5 + $0x4f8] sm:$0xff]
    %v296 = vld [vmem:[#allocation5 + $0x500] sm:$0xff]
    %v297 = vld [vmem:[#allocation5 + $0x508] sm:$0xff]
    %v298 = vld [vmem:[#allocation5 + $0x510] sm:$0xff]
    %v299 = vld [vmem:[#allocation5 + $0x518] sm:$0xff]
    %v300 = vld [vmem:[#allocation5 + $0x520] sm:$0xff]
    %v301 = vld [vmem:[#allocation5 + $0x528] sm:$0xff]
    %v302 = vld [vmem:[#allocation5 + $0x530] sm:$0xff]
    %v303 = vld [vmem:[#allocation5 + $0x538] sm:$0xff]
    %v304 = vld [vmem:[#allocation5 + $0x540] sm:$0xff]
    %v305 = vld [vmem:[#allocation5 + $0x548] sm:$0xff]
    %v306 = vld [vmem:[#allocation5 + $0x550] sm:$0xff]
    %v307 = vld [vmem:[#allocation5 + $0x558] sm:$0xff]
    %v308 = vld [vmem:[#allocation5 + $0x560] sm:$0xff]
    %v309 = vld [vmem:[#allocation5 + $0x568] sm:$0xff]
    %v310 = vld [vmem:[#allocation5 + $0x570] sm:$0xff]
    %v311 = vld [vmem:[#allocation5 + $0x578] sm:$0xff]
    %v312 = vld [vmem:[#allocation5 + $0x580] sm:$0xff]
    %v313 = vld [vmem:[#allocation5 + $0x588] sm:$0xff]
    %v314 = vld [vmem:[#allocation5 + $0x590] sm:$0xff]
    %v315 = vld [vmem:[#allocation5 + $0x598] sm:$0xff]
    %v316 = vld [vmem:[#allocation5 + $0x5a0] sm:$0xff]
    %v317 = vld [vmem:[#allocation5 + $0x5a8] sm:$0xff]
    %v318 = vld [vmem:[#allocation5 + $0x5b0] sm:$0xff]
    %v319 = vld [vmem:[#allocation5 + $0x5b8] sm:$0xff]
    %v320 = vld [vmem:[#allocation5 + $0x5c0] sm:$0xff]
    %v321 = vld [vmem:[#allocation5 + $0x5c8] sm:$0xff]
    %v322 = vld [vmem:[#allocation5 + $0x5d0] sm:$0xff]
    %v323 = vld [vmem:[#allocation5 + $0x5d8] sm:$0xff]
    %v324 = vld [vmem:[#allocation5 + $0x5e0] sm:$0xff]
    %v325 = vld [vmem:[#allocation5 + $0x5e8] sm:$0xff]
    %v326 = vld [vmem:[#allocation5 + $0x5f0] sm:$0xff]
    %v327 = vld [vmem:[#allocation5 + $0x5f8] sm:$0xff]
    %v328 = vld [vmem:[#allocation5 + $0x600] sm:$0xff]
    %v329 = vld [vmem:[#allocation5 + $0x608] sm:$0xff]
    %v330 = vld [vmem:[#allocation5 + $0x610] sm:$0xff]
    %v331 = vld [vmem:[#allocation5 + $0x618] sm:$0xff]
    %v332 = vld [vmem:[#allocation5 + $0x620] sm:$0xff]
    %v333 = vld [vmem:[#allocation5 + $0x628] sm:$0xff]
    %v334 = vld [vmem:[#allocation5 + $0x630] sm:$0xff]
    %v335 = vld [vmem:[#allocation5 + $0x638] sm:$0xff]
    %v336 = vld [vmem:[#allocation5 + $0x640] sm:$0xff]
    %v337 = vld [vmem:[#allocation5 + $0x648] sm:$0xff]
    %v338 = vld [vmem:[#allocation5 + $0x650] sm:$0xff]
    %v339 = vld [vmem:[#allocation5 + $0x658] sm:$0xff]
    %v340 = vld [vmem:[#allocation5 + $0x660] sm:$0xff]
    %v341 = vld [vmem:[#allocation5 + $0x668] sm:$0xff]
    %v342 = vld [vmem:[#allocation5 + $0x670] sm:$0xff]
    %v343 = vld [vmem:[#allocation5 + $0x678] sm:$0xff]
    %v344 = vld [vmem:[#allocation5 + $0x680] sm:$0xff]
    %v345 = vld [vmem:[#allocation5 + $0x688] sm:$0xff]
    %v346 = vld [vmem:[#allocation5 + $0x690] sm:$0xff]
    %v347 = vld [vmem:[#allocation5 + $0x698] sm:$0xff]
    %v348 = vld [vmem:[#allocation5 + $0x6a0] sm:$0xff]
    %v349 = vld [vmem:[#allocation5 + $0x6a8] sm:$0xff]
    %v350 = vld [vmem:[#allocation5 + $0x6b0] sm:$0xff]
    %v351 = vld [vmem:[#allocation5 + $0x6b8] sm:$0xff]
    %v352 = vld [vmem:[#allocation5 + $0x6c0] sm:$0xff]
    %v353 = vld [vmem:[#allocation5 + $0x6c8] sm:$0xff]
    %v354 = vld [vmem:[#allocation5 + $0x6d0] sm:$0xff]
    %v355 = vld [vmem:[#allocation5 + $0x6d8] sm:$0xff]
    %v356 = vld [vmem:[#allocation5 + $0x6e0] sm:$0xff]
    %v357 = vld [vmem:[#allocation5 + $0x6e8] sm:$0xff]
    %v358 = vld [vmem:[#allocation5 + $0x6f0] sm:$0xff]
    %v359 = vld [vmem:[#allocation5 + $0x6f8] sm:$0xff]
    %v360 = vld [vmem:[#allocation5 + $0x700] sm:$0xff]
    %v361 = vld [vmem:[#allocation5 + $0x708] sm:$0xff]
    %v362 = vld [vmem:[#allocation5 + $0x710] sm:$0xff]
    %v363 = vld [vmem:[#allocation5 + $0x718] sm:$0xff]
    %v364 = vld [vmem:[#allocation5 + $0x720] sm:$0xff]
    %v365 = vld [vmem:[#allocation5 + $0x728] sm:$0xff]
    %v366 = vld [vmem:[#allocation5 + $0x730] sm:$0xff]
    %v367 = vld [vmem:[#allocation5 + $0x738] sm:$0xff]
    %v368 = vld [vmem:[#allocation5 + $0x740] sm:$0xff]
    %v369 = vld [vmem:[#allocation5 + $0x748] sm:$0xff]
    %v370 = vld [vmem:[#allocation5 + $0x750] sm:$0xff]
    %v371 = vld [vmem:[#allocation5 + $0x758] sm:$0xff]
    %v372 = vld [vmem:[#allocation5 + $0x760] sm:$0xff]
    %v373 = vld [vmem:[#allocation5 + $0x768] sm:$0xff]
    %v374 = vld [vmem:[#allocation5 + $0x770] sm:$0xff]
    %v375 = vld [vmem:[#allocation5 + $0x778] sm:$0xff]
    %v376 = vld [vmem:[#allocation5 + $0x780] sm:$0xff]
    %v377 = vld [vmem:[#allocation5 + $0x788] sm:$0xff]
    %v378 = vld [vmem:[#allocation5 + $0x790] sm:$0xff]
    %v379 = vld [vmem:[#allocation5 + $0x798] sm:$0xff]
    %v380 = vld [vmem:[#allocation5 + $0x7a0] sm:$0xff]
    %v381 = vld [vmem:[#allocation5 + $0x7a8] sm:$0xff]
    %v382 = vld [vmem:[#allocation5 + $0x7b0] sm:$0xff]
    %v383 = vld [vmem:[#allocation5 + $0x7b8] sm:$0xff]
    %v384 = vld [vmem:[#allocation5 + $0x7c0] sm:$0xff]
    %v385 = vld [vmem:[#allocation5 + $0x7c8] sm:$0xff]
    %v386 = vld [vmem:[#allocation5 + $0x7d0] sm:$0xff]
    %v387 = vld [vmem:[#allocation5 + $0x7d8] sm:$0xff]
    %v388 = vld [vmem:[#allocation5 + $0x7e0] sm:$0xff]
    %v389 = vld [vmem:[#allocation5 + $0x7e8] sm:$0xff]
    %v390 = vld [vmem:[#allocation5 + $0x7f0] sm:$0xff]
    %v391 = vld [vmem:[#allocation5 + $0x7f8] sm:$0xff]
    %v392 = vld [vmem:[#allocation5 + $0x800] sm:$0xff]
    %v393 = vld [vmem:[#allocation5 + $0x808] sm:$0xff]
    %v394 = vld [vmem:[#allocation5 + $0x810] sm:$0xff]
    %v395 = vld [vmem:[#allocation5 + $0x818] sm:$0xff]
    %v396 = vld [vmem:[#allocation5 + $0x820] sm:$0xff]
    %v397 = vld [vmem:[#allocation5 + $0x828] sm:$0xff]
    %v398 = vld [vmem:[#allocation5 + $0x830] sm:$0xff]
    %v399 = vld [vmem:[#allocation5 + $0x838] sm:$0xff]
    %v400 = vld [vmem:[#allocation5 + $0x840] sm:$0xff]
    %v401 = vld [vmem:[#allocation5 + $0x848] sm:$0xff]
    %v402 = vld [vmem:[#allocation5 + $0x850] sm:$0xff]
    %v403 = vld [vmem:[#allocation5 + $0x858] sm:$0xff]
    %v404 = vld [vmem:[#allocation5 + $0x860] sm:$0xff]
    %v405 = vld [vmem:[#allocation5 + $0x868] sm:$0xff]
    %v406 = vld [vmem:[#allocation5 + $0x870] sm:$0xff]
    %v407 = vld [vmem:[#allocation5 + $0x878] sm:$0xff]
    %v408 = vld [vmem:[#allocation5 + $0x880] sm:$0xff]
    %v409 = vld [vmem:[#allocation5 + $0x888] sm:$0xff]
    %v410 = vld [vmem:[#allocation5 + $0x890] sm:$0xff]
    %v411 = vld [vmem:[#allocation5 + $0x898] sm:$0xff]
    %v412 = vld [vmem:[#allocation5 + $0x8a0] sm:$0xff]
    %v413 = vld [vmem:[#allocation5 + $0x8a8] sm:$0xff]
    %v414 = vld [vmem:[#allocation5 + $0x8b0] sm:$0xff]
    %v415 = vld [vmem:[#allocation5 + $0x8b8] sm:$0xff]
    %v416 = vld [vmem:[#allocation5 + $0x8c0] sm:$0xff]
    %v417 = vld [vmem:[#allocation5 + $0x8c8] sm:$0xff]
    %v418 = vld [vmem:[#allocation5 + $0x8d0] sm:$0xff]
    %v419 = vld [vmem:[#allocation5 + $0x8d8] sm:$0xff]
    %v420 = vld [vmem:[#allocation5 + $0x8e0] sm:$0xff]
    %v421 = vld [vmem:[#allocation5 + $0x8e8] sm:$0xff]
    %v422 = vld [vmem:[#allocation5 + $0x8f0] sm:$0xff]
    %v423 = vld [vmem:[#allocation5 + $0x8f8] sm:$0xff]
    %v424 = vld [vmem:[#allocation5 + $0x900] sm:$0xff]
    %v425 = vld [vmem:[#allocation5 + $0x908] sm:$0xff]
    %v426 = vld [vmem:[#allocation5 + $0x910] sm:$0xff]
    %v427 = vld [vmem:[#allocation5 + $0x918] sm:$0xff]
    %v428 = vld [vmem:[#allocation5 + $0x920] sm:$0xff]
    %v429 = vld [vmem:[#allocation5 + $0x928] sm:$0xff]
    %v430 = vld [vmem:[#allocation5 + $0x930] sm:$0xff]
    %v431 = vld [vmem:[#allocation5 + $0x938] sm:$0xff]
    %v432 = vld [vmem:[#allocation5 + $0x940] sm:$0xff]
    %v433 = vld [vmem:[#allocation5 + $0x948] sm:$0xff]
    %v434 = vld [vmem:[#allocation5 + $0x950] sm:$0xff]
    %v435 = vld [vmem:[#allocation5 + $0x958] sm:$0xff]
    %v436 = vld [vmem:[#allocation5 + $0x960] sm:$0xff]
    %v437 = vld [vmem:[#allocation5 + $0x968] sm:$0xff]
    %v438 = vld [vmem:[#allocation5 + $0x970] sm:$0xff]
    %v439 = vld [vmem:[#allocation5 + $0x978] sm:$0xff]
    %v440 = vld [vmem:[#allocation5 + $0x980] sm:$0xff]
    %v441 = vld [vmem:[#allocation5 + $0x988] sm:$0xff]
    %v442 = vld [vmem:[#allocation5 + $0x990] sm:$0xff]
    %v443 = vld [vmem:[#allocation5 + $0x998] sm:$0xff]
    %v444 = vld [vmem:[#allocation5 + $0x9a0] sm:$0xff]
    %v445 = vld [vmem:[#allocation5 + $0x9a8] sm:$0xff]
    %v446 = vld [vmem:[#allocation5 + $0x9b0] sm:$0xff]
    %v447 = vld [vmem:[#allocation5 + $0x9b8] sm:$0xff]
    %v448 = vld [vmem:[#allocation5 + $0x9c0] sm:$0xff]
    %v449 = vld [vmem:[#allocation5 + $0x9c8] sm:$0xff]
    %v450 = vld [vmem:[#allocation5 + $0x9d0] sm:$0xff]
    %v451 = vld [vmem:[#allocation5 + $0x9d8] sm:$0xff]
    %v452 = vld [vmem:[#allocation5 + $0x9e0] sm:$0xff]
    %v453 = vld [vmem:[#allocation5 + $0x9e8] sm:$0xff]
    %v454 = vld [vmem:[#allocation5 + $0x9f0] sm:$0xff]
    %v455 = vld [vmem:[#allocation5 + $0x9f8] sm:$0xff]
    %v456 = vld [vmem:[#allocation5 + $0xa00] sm:$0xff]
    %v457 = vld [vmem:[#allocation5 + $0xa08] sm:$0xff]
    %v458 = vld [vmem:[#allocation5 + $0xa10] sm:$0xff]
    %v459 = vld [vmem:[#allocation5 + $0xa18] sm:$0xff]
    %v460 = vld [vmem:[#allocation5 + $0xa20] sm:$0xff]
    %v461 = vld [vmem:[#allocation5 + $0xa28] sm:$0xff]
    %v462 = vld [vmem:[#allocation5 + $0xa30] sm:$0xff]
    %v463 = vld [vmem:[#allocation5 + $0xa38] sm:$0xff]
    %v464 = vld [vmem:[#allocation5 + $0xa40] sm:$0xff]
    %v465 = vld [vmem:[#allocation5 + $0xa48] sm:$0xff]
    %v466 = vld [vmem:[#allocation5 + $0xa50] sm:$0xff]
    %v467 = vld [vmem:[#allocation5 + $0xa58] sm:$0xff]
    %v468 = vld [vmem:[#allocation5 + $0xa60] sm:$0xff]
    %v469 = vld [vmem:[#allocation5 + $0xa68] sm:$0xff]
    %v470 = vld [vmem:[#allocation5 + $0xa70] sm:$0xff]
    %v471 = vld [vmem:[#allocation5 + $0xa78] sm:$0xff]
    %v472 = vld [vmem:[#allocation5 + $0xa80] sm:$0xff]
    %v473 = vld [vmem:[#allocation5 + $0xa88] sm:$0xff]
    %v474 = vld [vmem:[#allocation5 + $0xa90] sm:$0xff]
    %v475 = vld [vmem:[#allocation5 + $0xa98] sm:$0xff]
    %v476 = vld [vmem:[#allocation5 + $0xaa0] sm:$0xff]
    %v477 = vld [vmem:[#allocation5 + $0xaa8] sm:$0xff]
    %v478 = vld [vmem:[#allocation5 + $0xab0] sm:$0xff]
    %v479 = vld [vmem:[#allocation5 + $0xab8] sm:$0xff]
    %v480 = vld [vmem:[#allocation5 + $0xac0] sm:$0xff]
    %v481 = vld [vmem:[#allocation5 + $0xac8] sm:$0xff]
    %v482 = vld [vmem:[#allocation5 + $0xad0] sm:$0xff]
    %v483 = vld [vmem:[#allocation5 + $0xad8] sm:$0xff]
    %v484 = vld [vmem:[#allocation5 + $0xae0] sm:$0xff]
    %v485 = vld [vmem:[#allocation5 + $0xae8] sm:$0xff]
    %v486 = vld [vmem:[#allocation5 + $0xaf0] sm:$0xff]
    %v487 = vld [vmem:[#allocation5 + $0xaf8] sm:$0xff]
    %v488 = vld [vmem:[#allocation5 + $0xb00] sm:$0xff]
    %v489 = vld [vmem:[#allocation5 + $0xb08] sm:$0xff]
    %v490 = vld [vmem:[#allocation5 + $0xb10] sm:$0xff]
    %v491 = vld [vmem:[#allocation5 + $0xb18] sm:$0xff]
    %v492 = vld [vmem:[#allocation5 + $0xb20] sm:$0xff]
    %v493 = vld [vmem:[#allocation5 + $0xb28] sm:$0xff]
    %v494 = vld [vmem:[#allocation5 + $0xb30] sm:$0xff]
    %v495 = vld [vmem:[#allocation5 + $0xb38] sm:$0xff]
    %v496 = vld [vmem:[#allocation5 + $0xb40] sm:$0xff]
    %v497 = vld [vmem:[#allocation5 + $0xb48] sm:$0xff]
    %v498 = vld [vmem:[#allocation5 + $0xb50] sm:$0xff]
    %v499 = vld [vmem:[#allocation5 + $0xb58] sm:$0xff]
    %v500 = vld [vmem:[#allocation5 + $0xb60] sm:$0xff]
    %v501 = vld [vmem:[#allocation5 + $0xb68] sm:$0xff]
    %v502 = vld [vmem:[#allocation5 + $0xb70] sm:$0xff]
    %v503 = vld [vmem:[#allocation5 + $0xb78] sm:$0xff]
    %v504 = vld [vmem:[#allocation5 + $0xb80] sm:$0xff]
    %v505 = vld [vmem:[#allocation5 + $0xb88] sm:$0xff]
    %v506 = vld [vmem:[#allocation5 + $0xb90] sm:$0xff]
    %v507 = vld [vmem:[#allocation5 + $0xb98] sm:$0xff]
    %v508 = vld [vmem:[#allocation5 + $0xba0] sm:$0xff]
    %v509 = vld [vmem:[#allocation5 + $0xba8] sm:$0xff]
    %v510 = vld [vmem:[#allocation5 + $0xbb0] sm:$0xff]
    %v511 = vld [vmem:[#allocation5 + $0xbb8] sm:$0xff]
    %v512 = vld [vmem:[#allocation5 + $0xbc0] sm:$0xff]
    %v513 = vld [vmem:[#allocation5 + $0xbc8] sm:$0xff]
    %v514 = vld [vmem:[#allocation5 + $0xbd0] sm:$0xff]
    %v515 = vld [vmem:[#allocation5 + $0xbd8] sm:$0xff]
    %v516 = vld [vmem:[#allocation5 + $0xbe0] sm:$0xff]
    %v517 = vld [vmem:[#allocation5 + $0xbe8] sm:$0xff]
    %v518 = vld [vmem:[#allocation5 + $0xbf0] sm:$0xff]
    %v519 = vld [vmem:[#allocation5 + $0xbf8] sm:$0xff]
    %v520 = vld [vmem:[#allocation5 + $0xc00] sm:$0xff]
    %v521 = vld [vmem:[#allocation5 + $0xc08] sm:$0xff]
    %v522 = vld [vmem:[#allocation5 + $0xc10] sm:$0xff]
    %v523 = vld [vmem:[#allocation5 + $0xc18] sm:$0xff]
    %v524 = vld [vmem:[#allocation5 + $0xc20] sm:$0xff]
    %v525 = vld [vmem:[#allocation5 + $0xc28] sm:$0xff]
    %v526 = vld [vmem:[#allocation5 + $0xc30] sm:$0xff]
    %v527 = vld [vmem:[#allocation5 + $0xc38] sm:$0xff]
    %v528 = vld [vmem:[#allocation5 + $0xc40] sm:$0xff]
    %v529 = vld [vmem:[#allocation5 + $0xc48] sm:$0xff]
    %v530 = vld [vmem:[#allocation5 + $0xc50] sm:$0xff]
    %v531 = vld [vmem:[#allocation5 + $0xc58] sm:$0xff]
    %v532 = vld [vmem:[#allocation5 + $0xc60] sm:$0xff]
    %v533 = vld [vmem:[#allocation5 + $0xc68] sm:$0xff]
    %v534 = vld [vmem:[#allocation5 + $0xc70] sm:$0xff]
    %v535 = vld [vmem:[#allocation5 + $0xc78] sm:$0xff]
    %v536 = vld [vmem:[#allocation5 + $0xc80] sm:$0xff]
    %v537 = vld [vmem:[#allocation5 + $0xc88] sm:$0xff]
    %v538 = vld [vmem:[#allocation5 + $0xc90] sm:$0xff]
    %v539 = vld [vmem:[#allocation5 + $0xc98] sm:$0xff]
    %v540 = vld [vmem:[#allocation5 + $0xca0] sm:$0xff]
    %v541 = vld [vmem:[#allocation5 + $0xca8] sm:$0xff]
    %v542 = vld [vmem:[#allocation5 + $0xcb0] sm:$0xff]
    %v543 = vld [vmem:[#allocation5 + $0xcb8] sm:$0xff]
    %v544 = vld [vmem:[#allocation5 + $0xcc0] sm:$0xff]
    %v545 = vld [vmem:[#allocation5 + $0xcc8] sm:$0xff]
    %v546 = vld [vmem:[#allocation5 + $0xcd0] sm:$0xff]
    %v547 = vld [vmem:[#allocation5 + $0xcd8] sm:$0xff]
    %v548 = vld [vmem:[#allocation5 + $0xce0] sm:$0xff]
    %v549 = vld [vmem:[#allocation5 + $0xce8] sm:$0xff]
    %v550 = vld [vmem:[#allocation5 + $0xcf0] sm:$0xff]
    %v551 = vld [vmem:[#allocation5 + $0xcf8] sm:$0xff]
    %v552 = vld [vmem:[#allocation5 + $0xd00] sm:$0xff]
    %v553 = vld [vmem:[#allocation5 + $0xd08] sm:$0xff]
    %v554 = vld [vmem:[#allocation5 + $0xd10] sm:$0xff]
    %v555 = vld [vmem:[#allocation5 + $0xd18] sm:$0xff]
    %v556 = vld [vmem:[#allocation5 + $0xd20] sm:$0xff]
    %v557 = vld [vmem:[#allocation5 + $0xd28] sm:$0xff]
    %v558 = vld [vmem:[#allocation5 + $0xd30] sm:$0xff]
    %v559 = vld [vmem:[#allocation5 + $0xd38] sm:$0xff]
    %v560 = vld [vmem:[#allocation5 + $0xd40] sm:$0xff]
    %v561 = vld [vmem:[#allocation5 + $0xd48] sm:$0xff]
    %v562 = vld [vmem:[#allocation5 + $0xd50] sm:$0xff]
    %v563 = vld [vmem:[#allocation5 + $0xd58] sm:$0xff]
    %v564 = vld [vmem:[#allocation5 + $0xd60] sm:$0xff]
    %v565 = vld [vmem:[#allocation5 + $0xd68] sm:$0xff]
    %v566 = vld [vmem:[#allocation5 + $0xd70] sm:$0xff]
    %v567 = vld [vmem:[#allocation5 + $0xd78] sm:$0xff]
    %v568 = vld [vmem:[#allocation5 + $0xd80] sm:$0xff]
    %v569 = vld [vmem:[#allocation5 + $0xd88] sm:$0xff]
    %v570 = vld [vmem:[#allocation5 + $0xd90] sm:$0xff]
    %v571 = vld [vmem:[#allocation5 + $0xd98] sm:$0xff]
    %v572 = vld [vmem:[#allocation5 + $0xda0] sm:$0xff]
    %v573 = vld [vmem:[#allocation5 + $0xda8] sm:$0xff]
    %v574 = vld [vmem:[#allocation5 + $0xdb0] sm:$0xff]
    %v575 = vld [vmem:[#allocation5 + $0xdb8] sm:$0xff]
    %v576 = vld [vmem:[#allocation5 + $0xdc0] sm:$0xff]
    %v577 = vld [vmem:[#allocation5 + $0xdc8] sm:$0xff]
    %v578 = vld [vmem:[#allocation5 + $0xdd0] sm:$0xff]
    %v579 = vld [vmem:[#allocation5 + $0xdd8] sm:$0xff]
    %v580 = vld [vmem:[#allocation5 + $0xde0] sm:$0xff]
    %v581 = vld [vmem:[#allocation5 + $0xde8] sm:$0xff]
    %v582 = vld [vmem:[#allocation5 + $0xdf0] sm:$0xff]
    %v583 = vld [vmem:[#allocation5 + $0xdf8] sm:$0xff]
    %v584 = vld [vmem:[#allocation5 + $0xe00] sm:$0xff]
    %v585 = vld [vmem:[#allocation5 + $0xe08] sm:$0xff]
    %v586 = vld [vmem:[#allocation5 + $0xe10] sm:$0xff]
    %v587 = vld [vmem:[#allocation5 + $0xe18] sm:$0xff]
    %v588 = vld [vmem:[#allocation5 + $0xe20] sm:$0xff]
    %v589 = vld [vmem:[#allocation5 + $0xe28] sm:$0xff]
    %v590 = vld [vmem:[#allocation5 + $0xe30] sm:$0xff]
    %v591 = vld [vmem:[#allocation5 + $0xe38] sm:$0xff]
    %v592 = vld [vmem:[#allocation5 + $0xe40] sm:$0xff]
    %v593 = vld [vmem:[#allocation5 + $0xe48] sm:$0xff]
    %v594 = vld [vmem:[#allocation5 + $0xe50] sm:$0xff]
    %v595 = vld [vmem:[#allocation5 + $0xe58] sm:$0xff]
    %v596 = vld [vmem:[#allocation5 + $0xe60] sm:$0xff]
    %v597 = vld [vmem:[#allocation5 + $0xe68] sm:$0xff]
    %v598 = vld [vmem:[#allocation5 + $0xe70] sm:$0xff]
    %v599 = vld [vmem:[#allocation5 + $0xe78] sm:$0xff]
    %v600 = vld [vmem:[#allocation5 + $0xe80] sm:$0xff]
    %v601 = vld [vmem:[#allocation5 + $0xe88] sm:$0xff]
    %v602 = vld [vmem:[#allocation5 + $0xe90] sm:$0xff]
    %v603 = vld [vmem:[#allocation5 + $0xe98] sm:$0xff]
    %v604 = vld [vmem:[#allocation5 + $0xea0] sm:$0xff]
    %v605 = vld [vmem:[#allocation5 + $0xea8] sm:$0xff]
    %v606 = vld [vmem:[#allocation5 + $0xeb0] sm:$0xff]
    %v607 = vld [vmem:[#allocation5 + $0xeb8] sm:$0xff]
    %v608 = vld [vmem:[#allocation5 + $0xec0] sm:$0xff]
    %v609 = vld [vmem:[#allocation5 + $0xec8] sm:$0xff]
    %v610 = vld [vmem:[#allocation5 + $0xed0] sm:$0xff]
    %v611 = vld [vmem:[#allocation5 + $0xed8] sm:$0xff]
    %v612 = vld [vmem:[#allocation5 + $0xee0] sm:$0xff]
    %v613 = vld [vmem:[#allocation5 + $0xee8] sm:$0xff]
    %v614 = vld [vmem:[#allocation5 + $0xef0] sm:$0xff]
    %v615 = vld [vmem:[#allocation5 + $0xef8] sm:$0xff]
    %v616 = vld [vmem:[#allocation5 + $0xf00] sm:$0xff]
    %v617 = vld [vmem:[#allocation5 + $0xf08] sm:$0xff]
    %v618 = vld [vmem:[#allocation5 + $0xf10] sm:$0xff]
    %v619 = vld [vmem:[#allocation5 + $0xf18] sm:$0xff]
    %v620 = vld [vmem:[#allocation5 + $0xf20] sm:$0xff]
    %v621 = vld [vmem:[#allocation5 + $0xf28] sm:$0xff]
    %v622 = vld [vmem:[#allocation5 + $0xf30] sm:$0xff]
    %v623 = vld [vmem:[#allocation5 + $0xf38] sm:$0xff]
    %v624 = vld [vmem:[#allocation5 + $0xf40] sm:$0xff]
    %v625 = vld [vmem:[#allocation5 + $0xf48] sm:$0xff]
    %v626 = vld [vmem:[#allocation5 + $0xf50] sm:$0xff]
    %v627 = vld [vmem:[#allocation5 + $0xf58] sm:$0xff]
    %v628 = vld [vmem:[#allocation5 + $0xf60] sm:$0xff]
    %v629 = vld [vmem:[#allocation5 + $0xf68] sm:$0xff]
    %v630 = vld [vmem:[#allocation5 + $0xf70] sm:$0xff]
    %v631 = vld [vmem:[#allocation5 + $0xf78] sm:$0xff]
    %v632 = vld [vmem:[#allocation5 + $0xf80] sm:$0xff]
    %v633 = vld [vmem:[#allocation5 + $0xf88] sm:$0xff]
    %v634 = vld [vmem:[#allocation5 + $0xf90] sm:$0xff]
    %v635 = vld [vmem:[#allocation5 + $0xf98] sm:$0xff]
    %v636 = vld [vmem:[#allocation5 + $0xfa0] sm:$0xff]
    %v637 = vld [vmem:[#allocation5 + $0xfa8] sm:$0xff]
    %v638 = vld [vmem:[#allocation5 + $0xfb0] sm:$0xff]
    %v639 = vld [vmem:[#allocation5 + $0xfb8] sm:$0xff]
    %v640 = vld [vmem:[#allocation5 + $0xfc0] sm:$0xff]
    %v641 = vld [vmem:[#allocation5 + $0xfc8] sm:$0xff]
    %v642 = vld [vmem:[#allocation5 + $0xfd0] sm:$0xff]
    %v643 = vld [vmem:[#allocation5 + $0xfd8] sm:$0xff]
    %v644 = vld [vmem:[#allocation5 + $0xfe0] sm:$0xff]
    %v645 = vld [vmem:[#allocation5 + $0xfe8] sm:$0xff]
    %v646 = vld [vmem:[#allocation5 + $0xff0] sm:$0xff]
    %v647 = vld [vmem:[#allocation5 + $0xff8] sm:$0xff]
    %v648 = vld [vmem:[#allocation5 + $0x1000] sm:$0xff]
    %v649 = vld [vmem:[#allocation5 + $0x1008] sm:$0xff]
    %v650 = vld [vmem:[#allocation5 + $0x1010] sm:$0xff]
    %v651 = vld [vmem:[#allocation5 + $0x1018] sm:$0xff]
    %v652 = vld [vmem:[#allocation5 + $0x1020] sm:$0xff]
    %v653 = vld [vmem:[#allocation5 + $0x1028] sm:$0xff]
    %v654 = vld [vmem:[#allocation5 + $0x1030] sm:$0xff]
    %v655 = vld [vmem:[#allocation5 + $0x1038] sm:$0xff]
    %v656 = vld [vmem:[#allocation5 + $0x1040] sm:$0xff]
    %v657 = vld [vmem:[#allocation5 + $0x1048] sm:$0xff]
    %v658 = vld [vmem:[#allocation5 + $0x1050] sm:$0xff]
    %v659 = vld [vmem:[#allocation5 + $0x1058] sm:$0xff]
    %v660 = vld [vmem:[#allocation5 + $0x1060] sm:$0xff]
    %v661 = vld [vmem:[#allocation5 + $0x1068] sm:$0xff]
    %v662 = vld [vmem:[#allocation5 + $0x1070] sm:$0xff]
    %v663 = vld [vmem:[#allocation5 + $0x1078] sm:$0xff]
    %v664 = vld [vmem:[#allocation5 + $0x1080] sm:$0xff]
    %v665 = vld [vmem:[#allocation5 + $0x1088] sm:$0xff]
    %v666 = vld [vmem:[#allocation5 + $0x1090] sm:$0xff]
    %v667 = vld [vmem:[#allocation5 + $0x1098] sm:$0xff]
    %v668 = vld [vmem:[#allocation5 + $0x10a0] sm:$0xff]
    %v669 = vld [vmem:[#allocation5 + $0x10a8] sm:$0xff]
    %v670 = vld [vmem:[#allocation5 + $0x10b0] sm:$0xff]
    %v671 = vld [vmem:[#allocation5 + $0x10b8] sm:$0xff]
    %v672 = vld [vmem:[#allocation5 + $0x10c0] sm:$0xff]
    %v673 = vld [vmem:[#allocation5 + $0x10c8] sm:$0xff]
    %v674 = vld [vmem:[#allocation5 + $0x10d0] sm:$0xff]
    %v675 = vld [vmem:[#allocation5 + $0x10d8] sm:$0xff]
    %v676 = vld [vmem:[#allocation5 + $0x10e0] sm:$0xff]
    %v677 = vld [vmem:[#allocation5 + $0x10e8] sm:$0xff]
    %v678 = vld [vmem:[#allocation5 + $0x10f0] sm:$0xff]
    %v679 = vld [vmem:[#allocation5 + $0x10f8] sm:$0xff]
    %v680 = vld [vmem:[#allocation5 + $0x1100] sm:$0xff]
    %v681 = vld [vmem:[#allocation5 + $0x1108] sm:$0xff]
    %v682 = vld [vmem:[#allocation5 + $0x1110] sm:$0xff]
    %v683 = vld [vmem:[#allocation5 + $0x1118] sm:$0xff]
    %v684 = vld [vmem:[#allocation5 + $0x1120] sm:$0xff]
    %v685 = vld [vmem:[#allocation5 + $0x1128] sm:$0xff]
    %v686 = vld [vmem:[#allocation5 + $0x1130] sm:$0xff]
    %v687 = vld [vmem:[#allocation5 + $0x1138] sm:$0xff]
    %v688 = vld [vmem:[#allocation5 + $0x1140] sm:$0xff]
    %v689 = vld [vmem:[#allocation5 + $0x1148] sm:$0xff]
    %v690 = vld [vmem:[#allocation5 + $0x1150] sm:$0xff]
    %v691 = vld [vmem:[#allocation5 + $0x1158] sm:$0xff]
    %v692 = vld [vmem:[#allocation5 + $0x1160] sm:$0xff]
    %v693 = vld [vmem:[#allocation5 + $0x1168] sm:$0xff]
    %v694 = vld [vmem:[#allocation5 + $0x1170] sm:$0xff]
    %v695 = vld [vmem:[#allocation5 + $0x1178] sm:$0xff]
    %v696 = vld [vmem:[#allocation5 + $0x1180] sm:$0xff]
    %v697 = vld [vmem:[#allocation5 + $0x1188] sm:$0xff]
    %v698 = vld [vmem:[#allocation5 + $0x1190] sm:$0xff]
    %v699 = vld [vmem:[#allocation5 + $0x1198] sm:$0xff]
    %v700 = vld [vmem:[#allocation5 + $0x11a0] sm:$0xff]
    %v701 = vld [vmem:[#allocation5 + $0x11a8] sm:$0xff]
    %v702 = vld [vmem:[#allocation5 + $0x11b0] sm:$0xff]
    %v703 = vld [vmem:[#allocation5 + $0x11b8] sm:$0xff]
    %v704 = vld [vmem:[#allocation5 + $0x11c0] sm:$0xff]
    %v705 = vld [vmem:[#allocation5 + $0x11c8] sm:$0xff]
    %v706 = vld [vmem:[#allocation5 + $0x11d0] sm:$0xff]
    %v707 = vld [vmem:[#allocation5 + $0x11d8] sm:$0xff]
    %v708 = vld [vmem:[#allocation5 + $0x11e0] sm:$0xff]
    %v709 = vld [vmem:[#allocation5 + $0x11e8] sm:$0xff]
    %v710 = vld [vmem:[#allocation5 + $0x11f0] sm:$0xff]
    %v711 = vld [vmem:[#allocation5 + $0x11f8] sm:$0xff]
    %v712 = vld [vmem:[#allocation5 + $0x1200] sm:$0xff]
    %v713 = vld [vmem:[#allocation5 + $0x1208] sm:$0xff]
    %v714 = vld [vmem:[#allocation5 + $0x1210] sm:$0xff]
    %v715 = vld [vmem:[#allocation5 + $0x1218] sm:$0xff]
    %v716 = vld [vmem:[#allocation5 + $0x1220] sm:$0xff]
    %v717 = vld [vmem:[#allocation5 + $0x1228] sm:$0xff]
    %v718 = vld [vmem:[#allocation5 + $0x1230] sm:$0xff]
    %v719 = vld [vmem:[#allocation5 + $0x1238] sm:$0xff]
    %v720 = vld [vmem:[#allocation5 + $0x1240] sm:$0xff]
    %v721 = vld [vmem:[#allocation5 + $0x1248] sm:$0xff]
    %v722 = vld [vmem:[#allocation5 + $0x1250] sm:$0xff]
    %v723 = vld [vmem:[#allocation5 + $0x1258] sm:$0xff]
    %v724 = vld [vmem:[#allocation5 + $0x1260] sm:$0xff]
    %v725 = vld [vmem:[#allocation5 + $0x1268] sm:$0xff]
    %v726 = vld [vmem:[#allocation5 + $0x1270] sm:$0xff]
    %v727 = vld [vmem:[#allocation5 + $0x1278] sm:$0xff]
    %v728 = vld [vmem:[#allocation5 + $0x1280] sm:$0xff]
    %v729 = vld [vmem:[#allocation5 + $0x1288] sm:$0xff]
    %v730 = vld [vmem:[#allocation5 + $0x1290] sm:$0xff]
    %v731 = vld [vmem:[#allocation5 + $0x1298] sm:$0xff]
    %v732 = vld [vmem:[#allocation5 + $0x12a0] sm:$0xff]
    %v733 = vld [vmem:[#allocation5 + $0x12a8] sm:$0xff]
    %v734 = vld [vmem:[#allocation5 + $0x12b0] sm:$0xff]
    %v735 = vld [vmem:[#allocation5 + $0x12b8] sm:$0xff]
    %v736 = vld [vmem:[#allocation5 + $0x12c0] sm:$0xff]
    %v737 = vld [vmem:[#allocation5 + $0x12c8] sm:$0xff]
    %v738 = vld [vmem:[#allocation5 + $0x12d0] sm:$0xff]
    %v739 = vld [vmem:[#allocation5 + $0x12d8] sm:$0xff]
    %v740 = vld [vmem:[#allocation5 + $0x12e0] sm:$0xff]
    %v741 = vld [vmem:[#allocation5 + $0x12e8] sm:$0xff]
    %v742 = vld [vmem:[#allocation5 + $0x12f0] sm:$0xff]
    %v743 = vld [vmem:[#allocation5 + $0x12f8] sm:$0xff]
    %v744 = vld [vmem:[#allocation5 + $0x1300] sm:$0xff]
    %v745 = vld [vmem:[#allocation5 + $0x1308] sm:$0xff]
    %v746 = vld [vmem:[#allocation5 + $0x1310] sm:$0xff]
    %v747 = vld [vmem:[#allocation5 + $0x1318] sm:$0xff]
    %v748 = vld [vmem:[#allocation5 + $0x1320] sm:$0xff]
    %v749 = vld [vmem:[#allocation5 + $0x1328] sm:$0xff]
    %v750 = vld [vmem:[#allocation5 + $0x1330] sm:$0xff]
    %v751 = vld [vmem:[#allocation5 + $0x1338] sm:$0xff]
    %v752 = vld [vmem:[#allocation5 + $0x1340] sm:$0xff]
    %v753 = vld [vmem:[#allocation5 + $0x1348] sm:$0xff]
    %v754 = vld [vmem:[#allocation5 + $0x1350] sm:$0xff]
    %v755 = vld [vmem:[#allocation5 + $0x1358] sm:$0xff]
    %v756 = vld [vmem:[#allocation5 + $0x1360] sm:$0xff]
    %v757 = vld [vmem:[#allocation5 + $0x1368] sm:$0xff]
    %v758 = vld [vmem:[#allocation5 + $0x1370] sm:$0xff]
    %v759 = vld [vmem:[#allocation5 + $0x1378] sm:$0xff]
    %v760 = vld [vmem:[#allocation5 + $0x1380] sm:$0xff]
    %v761 = vld [vmem:[#allocation5 + $0x1388] sm:$0xff]
    %v762 = vld [vmem:[#allocation5 + $0x1390] sm:$0xff]
    %v763 = vld [vmem:[#allocation5 + $0x1398] sm:$0xff]
    %v764 = vld [vmem:[#allocation5 + $0x13a0] sm:$0xff]
    %v765 = vld [vmem:[#allocation5 + $0x13a8] sm:$0xff]
    %v766 = vld [vmem:[#allocation5 + $0x13b0] sm:$0xff]
    %v767 = vld [vmem:[#allocation5 + $0x13b8] sm:$0xff]
    %v768 = vld [vmem:[#allocation5 + $0x13c0] sm:$0xff]
    %v769 = vld [vmem:[#allocation5 + $0x13c8] sm:$0xff]
    %v770 = vld [vmem:[#allocation5 + $0x13d0] sm:$0xff]
    %v771 = vld [vmem:[#allocation5 + $0x13d8] sm:$0xff]
    %v772 = vld [vmem:[#allocation5 + $0x13e0] sm:$0xff]
    %v773 = vld [vmem:[#allocation5 + $0x13e8] sm:$0xff]
    %v774 = vld [vmem:[#allocation5 + $0x13f0] sm:$0xff]
    %v775 = vld [vmem:[#allocation5 + $0x13f8] sm:$0xff]
    %v776 = vld [vmem:[#allocation5 + $0x1400] sm:$0xff]
    %v777 = vld [vmem:[#allocation5 + $0x1408] sm:$0xff]
    %v778 = vld [vmem:[#allocation5 + $0x1410] sm:$0xff]
    %v779 = vld [vmem:[#allocation5 + $0x1418] sm:$0xff]
    %v780 = vld [vmem:[#allocation5 + $0x1420] sm:$0xff]
    %v781 = vld [vmem:[#allocation5 + $0x1428] sm:$0xff]
    %v782 = vld [vmem:[#allocation5 + $0x1430] sm:$0xff]
    %v783 = vld [vmem:[#allocation5 + $0x1438] sm:$0xff]
    %v784 = vld [vmem:[#allocation5 + $0x1440] sm:$0xff]
    %v785 = vld [vmem:[#allocation5 + $0x1448] sm:$0xff]
    %v786 = vld [vmem:[#allocation5 + $0x1450] sm:$0xff]
    %v787 = vld [vmem:[#allocation5 + $0x1458] sm:$0xff]
    %v788 = vld [vmem:[#allocation5 + $0x1460] sm:$0xff]
    %v789 = vld [vmem:[#allocation5 + $0x1468] sm:$0xff]
    %v790 = vld [vmem:[#allocation5 + $0x1470] sm:$0xff]
    %v791 = vld [vmem:[#allocation5 + $0x1478] sm:$0xff]
    %v792 = vld [vmem:[#allocation5 + $0x1480] sm:$0xff]
    %v793 = vld [vmem:[#allocation5 + $0x1488] sm:$0xff]
    %v794 = vld [vmem:[#allocation5 + $0x1490] sm:$0xff]
    %v795 = vld [vmem:[#allocation5 + $0x1498] sm:$0xff]
    %v796 = vld [vmem:[#allocation5 + $0x14a0] sm:$0xff]
    %v797 = vld [vmem:[#allocation5 + $0x14a8] sm:$0xff]
    %v798 = vld [vmem:[#allocation5 + $0x14b0] sm:$0xff]
    %v799 = vld [vmem:[#allocation5 + $0x14b8] sm:$0xff]
    %v800 = vld [vmem:[#allocation5 + $0x14c0] sm:$0xff]
    %v801 = vld [vmem:[#allocation5 + $0x14c8] sm:$0xff]
    %v802 = vld [vmem:[#allocation5 + $0x14d0] sm:$0xff]
    %v803 = vld [vmem:[#allocation5 + $0x14d8] sm:$0xff]
    %v804 = vld [vmem:[#allocation5 + $0x14e0] sm:$0xff]
    %v805 = vld [vmem:[#allocation5 + $0x14e8] sm:$0xff]
    %v806 = vld [vmem:[#allocation5 + $0x14f0] sm:$0xff]
    %v807 = vld [vmem:[#allocation5 + $0x14f8] sm:$0xff]
    %v808 = vld [vmem:[#allocation5 + $0x1500] sm:$0xff]
    %v809 = vld [vmem:[#allocation5 + $0x1508] sm:$0xff]
    %v810 = vld [vmem:[#allocation5 + $0x1510] sm:$0xff]
    %v811 = vld [vmem:[#allocation5 + $0x1518] sm:$0xff]
    %v812 = vld [vmem:[#allocation5 + $0x1520] sm:$0xff]
    %v813 = vld [vmem:[#allocation5 + $0x1528] sm:$0xff]
    %v814 = vld [vmem:[#allocation5 + $0x1530] sm:$0xff]
    %v815 = vld [vmem:[#allocation5 + $0x1538] sm:$0xff]
    %v816 = vld [vmem:[#allocation5 + $0x1540] sm:$0xff]
    %v817 = vld [vmem:[#allocation5 + $0x1548] sm:$0xff]
    %v818 = vld [vmem:[#allocation5 + $0x1550] sm:$0xff]
    %v819 = vld [vmem:[#allocation5 + $0x1558] sm:$0xff]
    %v820 = vld [vmem:[#allocation5 + $0x1560] sm:$0xff]
    %v821 = vld [vmem:[#allocation5 + $0x1568] sm:$0xff]
    %v822 = vld [vmem:[#allocation5 + $0x1570] sm:$0xff]
    %v823 = vld [vmem:[#allocation5 + $0x1578] sm:$0xff]
    %v824 = vld [vmem:[#allocation5 + $0x1580] sm:$0xff]
    %v825 = vld [vmem:[#allocation5 + $0x1588] sm:$0xff]
    %v826 = vld [vmem:[#allocation5 + $0x1590] sm:$0xff]
    %v827 = vld [vmem:[#allocation5 + $0x1598] sm:$0xff]
    %v828 = vld [vmem:[#allocation5 + $0x15a0] sm:$0xff]
    %v829 = vld [vmem:[#allocation5 + $0x15a8] sm:$0xff]
    %v830 = vld [vmem:[#allocation5 + $0x15b0] sm:$0xff]
    %v831 = vld [vmem:[#allocation5 + $0x15b8] sm:$0xff]
    %v832 = vld [vmem:[#allocation5 + $0x15c0] sm:$0xff]
    %v833 = vld [vmem:[#allocation5 + $0x15c8] sm:$0xff]
    %v834 = vld [vmem:[#allocation5 + $0x15d0] sm:$0xff]
    %v835 = vld [vmem:[#allocation5 + $0x15d8] sm:$0xff]
    %v836 = vld [vmem:[#allocation5 + $0x15e0] sm:$0xff]
    %v837 = vld [vmem:[#allocation5 + $0x15e8] sm:$0xff]
    %v838 = vld [vmem:[#allocation5 + $0x15f0] sm:$0xff]
    %v839 = vld [vmem:[#allocation5 + $0x15f8] sm:$0xff]
    %v840 = vld [vmem:[#allocation5 + $0x1600] sm:$0xff]
    %v841 = vld [vmem:[#allocation5 + $0x1608] sm:$0xff]
    %v842 = vld [vmem:[#allocation5 + $0x1610] sm:$0xff]
    %v843 = vld [vmem:[#allocation5 + $0x1618] sm:$0xff]
    %v844 = vld [vmem:[#allocation5 + $0x1620] sm:$0xff]
    %v845 = vld [vmem:[#allocation5 + $0x1628] sm:$0xff]
    %v846 = vld [vmem:[#allocation5 + $0x1630] sm:$0xff]
    %v847 = vld [vmem:[#allocation5 + $0x1638] sm:$0xff]
    %v848 = vld [vmem:[#allocation5 + $0x1640] sm:$0xff]
    %v849 = vld [vmem:[#allocation5 + $0x1648] sm:$0xff]
    %v850 = vld [vmem:[#allocation5 + $0x1650] sm:$0xff]
    %v851 = vld [vmem:[#allocation5 + $0x1658] sm:$0xff]
    %v852 = vld [vmem:[#allocation5 + $0x1660] sm:$0xff]
    %v853 = vld [vmem:[#allocation5 + $0x1668] sm:$0xff]
    %v854 = vld [vmem:[#allocation5 + $0x1670] sm:$0xff]
    %v855 = vld [vmem:[#allocation5 + $0x1678] sm:$0xff]
    %v856 = vld [vmem:[#allocation5 + $0x1680] sm:$0xff]
    %v857 = vld [vmem:[#allocation5 + $0x1688] sm:$0xff]
    %v858 = vld [vmem:[#allocation5 + $0x1690] sm:$0xff]
    %v859 = vld [vmem:[#allocation5 + $0x1698] sm:$0xff]
    %v860 = vld [vmem:[#allocation5 + $0x16a0] sm:$0xff]
    %v861 = vld [vmem:[#allocation5 + $0x16a8] sm:$0xff]
    %v862 = vld [vmem:[#allocation5 + $0x16b0] sm:$0xff]
    %v863 = vld [vmem:[#allocation5 + $0x16b8] sm:$0xff]
    %v864 = vld [vmem:[#allocation5 + $0x16c0] sm:$0xff]
    %v865 = vld [vmem:[#allocation5 + $0x16c8] sm:$0xff]
    %v866 = vld [vmem:[#allocation5 + $0x16d0] sm:$0xff]
    %v867 = vld [vmem:[#allocation5 + $0x16d8] sm:$0xff]
    %v868 = vld [vmem:[#allocation5 + $0x16e0] sm:$0xff]
    %v869 = vld [vmem:[#allocation5 + $0x16e8] sm:$0xff]
    %v870 = vld [vmem:[#allocation5 + $0x16f0] sm:$0xff]
    %v871 = vld [vmem:[#allocation5 + $0x16f8] sm:$0xff]
    %v872 = vld [vmem:[#allocation5 + $0x1700] sm:$0xff]
    %v873 = vld [vmem:[#allocation5 + $0x1708] sm:$0xff]
    %v874 = vld [vmem:[#allocation5 + $0x1710] sm:$0xff]
    %v875 = vld [vmem:[#allocation5 + $0x1718] sm:$0xff]
    %v876 = vld [vmem:[#allocation5 + $0x1720] sm:$0xff]
    %v877 = vld [vmem:[#allocation5 + $0x1728] sm:$0xff]
    %v878 = vld [vmem:[#allocation5 + $0x1730] sm:$0xff]
    %v879 = vld [vmem:[#allocation5 + $0x1738] sm:$0xff]
    %v880 = vld [vmem:[#allocation5 + $0x1740] sm:$0xff]
    %v881 = vld [vmem:[#allocation5 + $0x1748] sm:$0xff]
    %v882 = vld [vmem:[#allocation5 + $0x1750] sm:$0xff]
    %v883 = vld [vmem:[#allocation5 + $0x1758] sm:$0xff]
    %v884 = vld [vmem:[#allocation5 + $0x1760] sm:$0xff]
    %v885 = vld [vmem:[#allocation5 + $0x1768] sm:$0xff]
    %v886 = vld [vmem:[#allocation5 + $0x1770] sm:$0xff]
    %v887 = vld [vmem:[#allocation5 + $0x1778] sm:$0xff]
    %v888 = vld [vmem:[#allocation5 + $0x1780] sm:$0xff]
    %v889 = vld [vmem:[#allocation5 + $0x1788] sm:$0xff]
    %v890 = vld [vmem:[#allocation5 + $0x1790] sm:$0xff]
    %v891 = vld [vmem:[#allocation5 + $0x1798] sm:$0xff]
    %v892 = vld [vmem:[#allocation5 + $0x17a0] sm:$0xff]
    %v893 = vld [vmem:[#allocation5 + $0x17a8] sm:$0xff]
    %v894 = vld [vmem:[#allocation5 + $0x17b0] sm:$0xff]
    %v895 = vld [vmem:[#allocation5 + $0x17b8] sm:$0xff]
    %v896 = vld [vmem:[#allocation5 + $0x17c0] sm:$0xff]
    %v897 = vld [vmem:[#allocation5 + $0x17c8] sm:$0xff]
    %v898 = vld [vmem:[#allocation5 + $0x17d0] sm:$0xff]
    %v899 = vld [vmem:[#allocation5 + $0x17d8] sm:$0xff]
    %v900 = vld [vmem:[#allocation5 + $0x17e0] sm:$0xff]
    %v901 = vld [vmem:[#allocation5 + $0x17e8] sm:$0xff]
    %v902 = vld [vmem:[#allocation5 + $0x17f0] sm:$0xff]
    %v903 = vld [vmem:[#allocation5 + $0x17f8] sm:$0xff]
    %v904 = vld [vmem:[#allocation5 + $0x1800] sm:$0xff]
    %v905 = vld [vmem:[#allocation5 + $0x1808] sm:$0xff]
    %v906 = vld [vmem:[#allocation5 + $0x1810] sm:$0xff]
    %v907 = vld [vmem:[#allocation5 + $0x1818] sm:$0xff]
    %v908 = vld [vmem:[#allocation5 + $0x1820] sm:$0xff]
    %v909 = vld [vmem:[#allocation5 + $0x1828] sm:$0xff]
    %v910 = vld [vmem:[#allocation5 + $0x1830] sm:$0xff]
    %v911 = vld [vmem:[#allocation5 + $0x1838] sm:$0xff]
    %v912 = vld [vmem:[#allocation5 + $0x1840] sm:$0xff]
    %v913 = vld [vmem:[#allocation5 + $0x1848] sm:$0xff]
    %v914 = vld [vmem:[#allocation5 + $0x1850] sm:$0xff]
    %v915 = vld [vmem:[#allocation5 + $0x1858] sm:$0xff]
    %v916 = vld [vmem:[#allocation5 + $0x1860] sm:$0xff]
    %v917 = vld [vmem:[#allocation5 + $0x1868] sm:$0xff]
    %v918 = vld [vmem:[#allocation5 + $0x1870] sm:$0xff]
    %v919 = vld [vmem:[#allocation5 + $0x1878] sm:$0xff]
    %v920 = vld [vmem:[#allocation5 + $0x1880] sm:$0xff]
    %v921 = vld [vmem:[#allocation5 + $0x1888] sm:$0xff]
    %v922 = vld [vmem:[#allocation5 + $0x1890] sm:$0xff]
    %v923 = vld [vmem:[#allocation5 + $0x1898] sm:$0xff]
    %v924 = vld [vmem:[#allocation5 + $0x18a0] sm:$0xff]
    %v925 = vld [vmem:[#allocation5 + $0x18a8] sm:$0xff]
    %v926 = vld [vmem:[#allocation5 + $0x18b0] sm:$0xff]
    %v927 = vld [vmem:[#allocation5 + $0x18b8] sm:$0xff]
    %v928 = vld [vmem:[#allocation5 + $0x18c0] sm:$0xff]
    %v929 = vld [vmem:[#allocation5 + $0x18c8] sm:$0xff]
    %v930 = vld [vmem:[#allocation5 + $0x18d0] sm:$0xff]
    %v931 = vld [vmem:[#allocation5 + $0x18d8] sm:$0xff]
    %v932 = vld [vmem:[#allocation5 + $0x18e0] sm:$0xff]
    %v933 = vld [vmem:[#allocation5 + $0x18e8] sm:$0xff]
    %v934 = vld [vmem:[#allocation5 + $0x18f0] sm:$0xff]
    %v935 = vld [vmem:[#allocation5 + $0x18f8] sm:$0xff]
    %v936 = vld [vmem:[#allocation5 + $0x1900] sm:$0xff]
    %v937 = vld [vmem:[#allocation5 + $0x1908] sm:$0xff]
    %v938 = vld [vmem:[#allocation5 + $0x1910] sm:$0xff]
    %v939 = vld [vmem:[#allocation5 + $0x1918] sm:$0xff]
    %v940 = vld [vmem:[#allocation5 + $0x1920] sm:$0xff]
    %v941 = vld [vmem:[#allocation5 + $0x1928] sm:$0xff]
    %v942 = vld [vmem:[#allocation5 + $0x1930] sm:$0xff]
    %v943 = vld [vmem:[#allocation5 + $0x1938] sm:$0xff]
    %v944 = vld [vmem:[#allocation5 + $0x1940] sm:$0xff]
    %v945 = vld [vmem:[#allocation5 + $0x1948] sm:$0xff]
    %v946 = vld [vmem:[#allocation5 + $0x1950] sm:$0xff]
    %v947 = vld [vmem:[#allocation5 + $0x1958] sm:$0xff]
    %v948 = vld [vmem:[#allocation5 + $0x1960] sm:$0xff]
    %v949 = vld [vmem:[#allocation5 + $0x1968] sm:$0xff]
    %v950 = vld [vmem:[#allocation5 + $0x1970] sm:$0xff]
    %v951 = vld [vmem:[#allocation5 + $0x1978] sm:$0xff]
    %v952 = vld [vmem:[#allocation5 + $0x1980] sm:$0xff]
    %v953 = vld [vmem:[#allocation5 + $0x1988] sm:$0xff]
    %v954 = vld [vmem:[#allocation5 + $0x1990] sm:$0xff]
    %v955 = vld [vmem:[#allocation5 + $0x1998] sm:$0xff]
    %v956 = vld [vmem:[#allocation5 + $0x19a0] sm:$0xff]
    %v957 = vld [vmem:[#allocation5 + $0x19a8] sm:$0xff]
    %v958 = vld [vmem:[#allocation5 + $0x19b0] sm:$0xff]
    %v959 = vld [vmem:[#allocation5 + $0x19b8] sm:$0xff]
    %v960 = vld [vmem:[#allocation5 + $0x19c0] sm:$0xff]
    %v961 = vld [vmem:[#allocation5 + $0x19c8] sm:$0xff]
    %v962 = vld [vmem:[#allocation5 + $0x19d0] sm:$0xff]
    %v963 = vld [vmem:[#allocation5 + $0x19d8] sm:$0xff]
    %v964 = vld [vmem:[#allocation5 + $0x19e0] sm:$0xff]
    %v965 = vld [vmem:[#allocation5 + $0x19e8] sm:$0xff]
    %v966 = vld [vmem:[#allocation5 + $0x19f0] sm:$0xff]
    %v967 = vld [vmem:[#allocation5 + $0x19f8] sm:$0xff]
    %v968 = vld [vmem:[#allocation5 + $0x1a00] sm:$0xff]
    %v969 = vld [vmem:[#allocation5 + $0x1a08] sm:$0xff]
    %v970 = vld [vmem:[#allocation5 + $0x1a10] sm:$0xff]
    %v971 = vld [vmem:[#allocation5 + $0x1a18] sm:$0xff]
    %v972 = vld [vmem:[#allocation5 + $0x1a20] sm:$0xff]
    %v973 = vld [vmem:[#allocation5 + $0x1a28] sm:$0xff]
    %v974 = vld [vmem:[#allocation5 + $0x1a30] sm:$0xff]
    %v975 = vld [vmem:[#allocation5 + $0x1a38] sm:$0xff]
    %v976 = vld [vmem:[#allocation5 + $0x1a40] sm:$0xff]
    %v977 = vld [vmem:[#allocation5 + $0x1a48] sm:$0xff]
    %v978 = vld [vmem:[#allocation5 + $0x1a50] sm:$0xff]
    %v979 = vld [vmem:[#allocation5 + $0x1a58] sm:$0xff]
    %v980 = vld [vmem:[#allocation5 + $0x1a60] sm:$0xff]
    %v981 = vld [vmem:[#allocation5 + $0x1a68] sm:$0xff]
    %v982 = vld [vmem:[#allocation5 + $0x1a70] sm:$0xff]
    %v983 = vld [vmem:[#allocation5 + $0x1a78] sm:$0xff]
    %v984 = vld [vmem:[#allocation5 + $0x1a80] sm:$0xff]
    %v985 = vld [vmem:[#allocation5 + $0x1a88] sm:$0xff]
    %v986 = vld [vmem:[#allocation5 + $0x1a90] sm:$0xff]
    %v987 = vld [vmem:[#allocation5 + $0x1a98] sm:$0xff]
    %v988 = vld [vmem:[#allocation5 + $0x1aa0] sm:$0xff]
    %v989 = vld [vmem:[#allocation5 + $0x1aa8] sm:$0xff]
    %v990 = vld [vmem:[#allocation5 + $0x1ab0] sm:$0xff]
    %v991 = vld [vmem:[#allocation5 + $0x1ab8] sm:$0xff]
    %v992 = vld [vmem:[#allocation5 + $0x1ac0] sm:$0xff]
    %v993 = vld [vmem:[#allocation5 + $0x1ac8] sm:$0xff]
    %v994 = vld [vmem:[#allocation5 + $0x1ad0] sm:$0xff]
    %v995 = vld [vmem:[#allocation5 + $0x1ad8] sm:$0xff]
    %v996 = vld [vmem:[#allocation5 + $0x1ae0] sm:$0xff]
    %v997 = vld [vmem:[#allocation5 + $0x1ae8] sm:$0xff]
    %v998 = vld [vmem:[#allocation5 + $0x1af0] sm:$0xff]
    %v999 = vld [vmem:[#allocation5 + $0x1af8] sm:$0xff]
    %v1000 = vld [vmem:[#allocation5 + $0x1b00] sm:$0xff]
    %v1001 = vld [vmem:[#allocation5 + $0x1b08] sm:$0xff]
    %v1002 = vld [vmem:[#allocation5 + $0x1b10] sm:$0xff]
    %v1003 = vld [vmem:[#allocation5 + $0x1b18] sm:$0xff]
    %v1004 = vld [vmem:[#allocation5 + $0x1b20] sm:$0xff]
    %v1005 = vld [vmem:[#allocation5 + $0x1b28] sm:$0xff]
    %v1006 = vld [vmem:[#allocation5 + $0x1b30] sm:$0xff]
    %v1007 = vld [vmem:[#allocation5 + $0x1b38] sm:$0xff]
    %v1008 = vld [vmem:[#allocation5 + $0x1b40] sm:$0xff]
    %v1009 = vld [vmem:[#allocation5 + $0x1b48] sm:$0xff]
    %v1010 = vld [vmem:[#allocation5 + $0x1b50] sm:$0xff]
    %v1011 = vld [vmem:[#allocation5 + $0x1b58] sm:$0xff]
    %v1012 = vld [vmem:[#allocation5 + $0x1b60] sm:$0xff]
    %v1013 = vld [vmem:[#allocation5 + $0x1b68] sm:$0xff]
    %v1014 = vld [vmem:[#allocation5 + $0x1b70] sm:$0xff]
    %v1015 = vld [vmem:[#allocation5 + $0x1b78] sm:$0xff]
    %v1016 = vld [vmem:[#allocation5 + $0x1b80] sm:$0xff]
    %v1017 = vld [vmem:[#allocation5 + $0x1b88] sm:$0xff]
    %v1018 = vld [vmem:[#allocation5 + $0x1b90] sm:$0xff]
    %v1019 = vld [vmem:[#allocation5 + $0x1b98] sm:$0xff]
    %v1020 = vld [vmem:[#allocation5 + $0x1ba0] sm:$0xff]
    %v1021 = vld [vmem:[#allocation5 + $0x1ba8] sm:$0xff]
    %v1022 = vld [vmem:[#allocation5 + $0x1bb0] sm:$0xff]
    %v1023 = vld [vmem:[#allocation5 + $0x1bb8] sm:$0xff]
    %v1024 = vld [vmem:[#allocation5 + $0x1bc0] sm:$0xff]
    %v1025 = vld [vmem:[#allocation5 + $0x1bc8] sm:$0xff]
    %v1026 = vld [vmem:[#allocation5 + $0x1bd0] sm:$0xff]
    %v1027 = vld [vmem:[#allocation5 + $0x1bd8] sm:$0xff]
    %v1028 = vld [vmem:[#allocation5 + $0x1be0] sm:$0xff]
    %v1029 = vld [vmem:[#allocation5 + $0x1be8] sm:$0xff]
    %v1030 = vld [vmem:[#allocation5 + $0x1bf0] sm:$0xff]
    %v1031 = vld [vmem:[#allocation5 + $0x1bf8] sm:$0xff]
    %v1032 = vld [vmem:[#allocation5 + $0x1c00] sm:$0xff]
    %v1033 = vld [vmem:[#allocation5 + $0x1c08] sm:$0xff]
    %v1034 = vld [vmem:[#allocation5 + $0x1c10] sm:$0xff]
    %v1035 = vld [vmem:[#allocation5 + $0x1c18] sm:$0xff]
    %v1036 = vld [vmem:[#allocation5 + $0x1c20] sm:$0xff]
    %v1037 = vld [vmem:[#allocation5 + $0x1c28] sm:$0xff]
    %v1038 = vld [vmem:[#allocation5 + $0x1c30] sm:$0xff]
    %v1039 = vld [vmem:[#allocation5 + $0x1c38] sm:$0xff]
    %v1040 = vld [vmem:[#allocation5 + $0x1c40] sm:$0xff]
    %v1041 = vld [vmem:[#allocation5 + $0x1c48] sm:$0xff]
    %v1042 = vld [vmem:[#allocation5 + $0x1c50] sm:$0xff]
    %v1043 = vld [vmem:[#allocation5 + $0x1c58] sm:$0xff]
    %v1044 = vld [vmem:[#allocation5 + $0x1c60] sm:$0xff]
    %v1045 = vld [vmem:[#allocation5 + $0x1c68] sm:$0xff]
    %v1046 = vld [vmem:[#allocation5 + $0x1c70] sm:$0xff]
    %v1047 = vld [vmem:[#allocation5 + $0x1c78] sm:$0xff]
    %v1048 = vld [vmem:[#allocation5 + $0x1c80] sm:$0xff]
    %v1049 = vld [vmem:[#allocation5 + $0x1c88] sm:$0xff]
    %v1050 = vld [vmem:[#allocation5 + $0x1c90] sm:$0xff]
    %v1051 = vld [vmem:[#allocation5 + $0x1c98] sm:$0xff]
    %v1052 = vld [vmem:[#allocation5 + $0x1ca0] sm:$0xff]
    %v1053 = vld [vmem:[#allocation5 + $0x1ca8] sm:$0xff]
    %v1054 = vld [vmem:[#allocation5 + $0x1cb0] sm:$0xff]
    %v1055 = vld [vmem:[#allocation5 + $0x1cb8] sm:$0xff]
    %v1056 = vld [vmem:[#allocation5 + $0x1cc0] sm:$0xff]
    %v1057 = vld [vmem:[#allocation5 + $0x1cc8] sm:$0xff]
    %v1058 = vld [vmem:[#allocation5 + $0x1cd0] sm:$0xff]
    %v1059 = vld [vmem:[#allocation5 + $0x1cd8] sm:$0xff]
    %v1060 = vld [vmem:[#allocation5 + $0x1ce0] sm:$0xff]
    %v1061 = vld [vmem:[#allocation5 + $0x1ce8] sm:$0xff]
    %v1062 = vld [vmem:[#allocation5 + $0x1cf0] sm:$0xff]
    %v1063 = vld [vmem:[#allocation5 + $0x1cf8] sm:$0xff]
    %v1064 = vld [vmem:[#allocation5 + $0x1d00] sm:$0xff]
    %v1065 = vld [vmem:[#allocation5 + $0x1d08] sm:$0xff]
    %v1066 = vld [vmem:[#allocation5 + $0x1d10] sm:$0xff]
    %v1067 = vld [vmem:[#allocation5 + $0x1d18] sm:$0xff]
    %v1068 = vld [vmem:[#allocation5 + $0x1d20] sm:$0xff]
    %v1069 = vld [vmem:[#allocation5 + $0x1d28] sm:$0xff]
    %v1070 = vld [vmem:[#allocation5 + $0x1d30] sm:$0xff]
    %v1071 = vld [vmem:[#allocation5 + $0x1d38] sm:$0xff]
    %v1072 = vld [vmem:[#allocation5 + $0x1d40] sm:$0xff]
    %v1073 = vld [vmem:[#allocation5 + $0x1d48] sm:$0xff]
    %v1074 = vld [vmem:[#allocation5 + $0x1d50] sm:$0xff]
    %v1075 = vld [vmem:[#allocation5 + $0x1d58] sm:$0xff]
    %v1076 = vld [vmem:[#allocation5 + $0x1d60] sm:$0xff]
    %v1077 = vld [vmem:[#allocation5 + $0x1d68] sm:$0xff]
    %v1078 = vld [vmem:[#allocation5 + $0x1d70] sm:$0xff]
    %v1079 = vld [vmem:[#allocation5 + $0x1d78] sm:$0xff]
    %v1080 = vld [vmem:[#allocation5 + $0x1d80] sm:$0xff]
    %v1081 = vld [vmem:[#allocation5 + $0x1d88] sm:$0xff]
    %v1082 = vld [vmem:[#allocation5 + $0x1d90] sm:$0xff]
    %v1083 = vld [vmem:[#allocation5 + $0x1d98] sm:$0xff]
    %v1084 = vld [vmem:[#allocation5 + $0x1da0] sm:$0xff]
    %v1085 = vld [vmem:[#allocation5 + $0x1da8] sm:$0xff]
    %v1086 = vld [vmem:[#allocation5 + $0x1db0] sm:$0xff]
    %v1087 = vld [vmem:[#allocation5 + $0x1db8] sm:$0xff]
    %v1088 = vld [vmem:[#allocation5 + $0x1dc0] sm:$0xff]
    %v1089 = vld [vmem:[#allocation5 + $0x1dc8] sm:$0xff]
    %v1090 = vld [vmem:[#allocation5 + $0x1dd0] sm:$0xff]
    %v1091 = vld [vmem:[#allocation5 + $0x1dd8] sm:$0xff]
    %v1092 = vld [vmem:[#allocation5 + $0x1de0] sm:$0xff]
    %v1093 = vld [vmem:[#allocation5 + $0x1de8] sm:$0xff]
    %v1094 = vld [vmem:[#allocation5 + $0x1df0] sm:$0xff]
    %v1095 = vld [vmem:[#allocation5 + $0x1df8] sm:$0xff]
    %v1096 = vld [vmem:[#allocation5 + $0x1e00] sm:$0xff]
    %v1097 = vld [vmem:[#allocation5 + $0x1e08] sm:$0xff]
    %v1098 = vld [vmem:[#allocation5 + $0x1e10] sm:$0xff]
    %v1099 = vld [vmem:[#allocation5 + $0x1e18] sm:$0xff]
    %v1100 = vld [vmem:[#allocation5 + $0x1e20] sm:$0xff]
    %v1101 = vld [vmem:[#allocation5 + $0x1e28] sm:$0xff]
    %v1102 = vld [vmem:[#allocation5 + $0x1e30] sm:$0xff]
    %v1103 = vld [vmem:[#allocation5 + $0x1e38] sm:$0xff]
    %v1104 = vld [vmem:[#allocation5 + $0x1e40] sm:$0xff]
    %v1105 = vld [vmem:[#allocation5 + $0x1e48] sm:$0xff]
    %v1106 = vld [vmem:[#allocation5 + $0x1e50] sm:$0xff]
    %v1107 = vld [vmem:[#allocation5 + $0x1e58] sm:$0xff]
    %v1108 = vld [vmem:[#allocation5 + $0x1e60] sm:$0xff]
    %v1109 = vld [vmem:[#allocation5 + $0x1e68] sm:$0xff]
    %v1110 = vld [vmem:[#allocation5 + $0x1e70] sm:$0xff]
    %v1111 = vld [vmem:[#allocation5 + $0x1e78] sm:$0xff]
    %v1112 = vld [vmem:[#allocation5 + $0x1e80] sm:$0xff]
    %v1113 = vld [vmem:[#allocation5 + $0x1e88] sm:$0xff]
    %v1114 = vld [vmem:[#allocation5 + $0x1e90] sm:$0xff]
    %v1115 = vld [vmem:[#allocation5 + $0x1e98] sm:$0xff]
    %v1116 = vld [vmem:[#allocation5 + $0x1ea0] sm:$0xff]
    %v1117 = vld [vmem:[#allocation5 + $0x1ea8] sm:$0xff]
    %v1118 = vld [vmem:[#allocation5 + $0x1eb0] sm:$0xff]
    %v1119 = vld [vmem:[#allocation5 + $0x1eb8] sm:$0xff]
    %v1120 = vld [vmem:[#allocation5 + $0x1ec0] sm:$0xff]
    %v1121 = vld [vmem:[#allocation5 + $0x1ec8] sm:$0xff]
    %v1122 = vld [vmem:[#allocation5 + $0x1ed0] sm:$0xff]
    %v1123 = vld [vmem:[#allocation5 + $0x1ed8] sm:$0xff]
    %v1124 = vld [vmem:[#allocation5 + $0x1ee0] sm:$0xff]
    %v1125 = vld [vmem:[#allocation5 + $0x1ee8] sm:$0xff]
    %v1126 = vld [vmem:[#allocation5 + $0x1ef0] sm:$0xff]
    %v1127 = vld [vmem:[#allocation5 + $0x1ef8] sm:$0xff]
    %v1128 = vld [vmem:[#allocation5 + $0x1f00] sm:$0xff]
    %v1129 = vld [vmem:[#allocation5 + $0x1f08] sm:$0xff]
    %v1130 = vld [vmem:[#allocation5 + $0x1f10] sm:$0xff]
    %v1131 = vld [vmem:[#allocation5 + $0x1f18] sm:$0xff]
    %v1132 = vld [vmem:[#allocation5 + $0x1f20] sm:$0xff]
    %v1133 = vld [vmem:[#allocation5 + $0x1f28] sm:$0xff]
    %v1134 = vld [vmem:[#allocation5 + $0x1f30] sm:$0xff]
    %v1135 = vld [vmem:[#allocation5 + $0x1f38] sm:$0xff]
    %v1136 = vld [vmem:[#allocation5 + $0x1f40] sm:$0xff]
    %v1137 = vld [vmem:[#allocation5 + $0x1f48] sm:$0xff]
    %v1138 = vld [vmem:[#allocation5 + $0x1f50] sm:$0xff]
    %v1139 = vld [vmem:[#allocation5 + $0x1f58] sm:$0xff]
    %v1140 = vld [vmem:[#allocation5 + $0x1f60] sm:$0xff]
    %v1141 = vld [vmem:[#allocation5 + $0x1f68] sm:$0xff]
    %v1142 = vld [vmem:[#allocation5 + $0x1f70] sm:$0xff]
    %v1143 = vld [vmem:[#allocation5 + $0x1f78] sm:$0xff]
    %v1144 = vld [vmem:[#allocation5 + $0x1f80] sm:$0xff]
    %v1145 = vld [vmem:[#allocation5 + $0x1f88] sm:$0xff]
    %v1146 = vld [vmem:[#allocation5 + $0x1f90] sm:$0xff]
    %v1147 = vld [vmem:[#allocation5 + $0x1f98] sm:$0xff]
    %v1148 = vld [vmem:[#allocation5 + $0x1fa0] sm:$0xff]
    %v1149 = vld [vmem:[#allocation5 + $0x1fa8] sm:$0xff]
    %v1150 = vld [vmem:[#allocation5 + $0x1fb0] sm:$0xff]
    %v1151 = vld [vmem:[#allocation5 + $0x1fb8] sm:$0xff]
    %v1152 = vld [vmem:[#allocation5 + $0x1fc0] sm:$0xff]
    %v1153 = vld [vmem:[#allocation5 + $0x1fc8] sm:$0xff]
    %v1154 = vld [vmem:[#allocation5 + $0x1fd0] sm:$0xff]
    %v1155 = vld [vmem:[#allocation5 + $0x1fd8] sm:$0xff]
    %v1156 = vld [vmem:[#allocation5 + $0x1fe0] sm:$0xff]
    %v1157 = vld [vmem:[#allocation5 + $0x1fe8] sm:$0xff]
    %v1158 = vld [vmem:[#allocation5 + $0x1ff0] sm:$0xff]
    %v1159 = vld [vmem:[#allocation5 + $0x1ff8] sm:$0xff]
    %v1160 = vld [vmem:[#allocation7] sm:$0xff]
    %v1162 = vlaneseq
    %v1163 = vshrl.u32 %v1162, 7
    %v1164 = vsub.s32 0, %v1163
    %v1165 = vrot.slane %v1160, %v1164
    %v1166 = vlaneseq
    %v1167 = vshrl.u32 %v1166, 7
    %v1168 = vsub.s32 1, %v1167
    %v1169 = vrot.slane %v1160, %v1168
    %v1170 = vlaneseq
    %v1171 = vshrl.u32 %v1170, 7
    %v1172 = vsub.s32 2, %v1171
    %v1173 = vrot.slane %v1160, %v1172
    %v1174 = vlaneseq
    %v1175 = vshrl.u32 %v1174, 7
    %v1176 = vsub.s32 3, %v1175
    %v1177 = vrot.slane %v1160, %v1176
    %v1178 = vlaneseq
    %v1179 = vshrl.u32 %v1178, 7
    %v1180 = vsub.s32 4, %v1179
    %v1181 = vrot.slane %v1160, %v1180
    %v1182 = vlaneseq
    %v1183 = vshrl.u32 %v1182, 7
    %v1184 = vsub.s32 5, %v1183
    %v1185 = vrot.slane %v1160, %v1184
    %v1186 = vlaneseq
    %v1187 = vshrl.u32 %v1186, 7
    %v1188 = vsub.s32 6, %v1187
    %v1189 = vrot.slane %v1160, %v1188
    %v1190 = vlaneseq
    %v1191 = vshrl.u32 %v1190, 7
    %v1192 = vsub.s32 7, %v1191
    %v1193 = vrot.slane %v1160, %v1192
    %v1204 = vcombine.high %v134, %v134
    %v1206 = vunpack.c.l.s4 1983009808
    %v1207 = vunpack.c.0.s8 %v1206
    %v1208 = vlaneseq
    %v1209 = vshrl.u32 %v1208, 7
    %v1210 = vsub.s32 %v1207, %v1209
    %v1211 = vrot.slane %v134, %v1210
    %v1213 = vunpack.c.l.s4 1983009808
    %v1214 = vunpack.c.0.s8 %v1213
    %v1215 = vlaneseq
    %v1216 = vshrl.u32 %v1215, 7
    %v1217 = vsub.s32 %v1214, %v1216
    %v1218 = vrot.slane %v1204, %v1217
    %v1219 = vcombine.high %v1211, %v1211
    %v1220 = vcombine.high %v1218, %v1218
    %v1221 = vcombine.high %v135, %v135
    %v1223 = vunpack.c.l.s4 1983009808
    %v1224 = vunpack.c.0.s8 %v1223
    %v1225 = vlaneseq
    %v1226 = vshrl.u32 %v1225, 7
    %v1227 = vsub.s32 %v1224, %v1226
    %v1228 = vrot.slane %v135, %v1227
    %v1230 = vunpack.c.l.s4 1983009808
    %v1231 = vunpack.c.0.s8 %v1230
    %v1232 = vlaneseq
    %v1233 = vshrl.u32 %v1232, 7
    %v1234 = vsub.s32 %v1231, %v1233
    %v1235 = vrot.slane %v1221, %v1234
    %v1236 = vcombine.high %v1228, %v1228
    %v1237 = vcombine.high %v1235, %v1235
    %1246 = vmatprep.subr.mxu0 %v137
    %1247 = vmatpush1.msra.mxu0 %v136
    %1248 = vmatprep.subr.mxu0 %v145
    %1249 = vmatpush1.msra.mxu0 %v144
    %1250 = vmatprep.subr.mxu0 %v153
    %1251 = vmatpush1.msra.mxu0 %v152
    %1252 = vmatprep.subr.mxu0 %v161
    %1253 = vmatpush1.msra.mxu0 %v160
    %1254 = vmatprep.subr.mxu0 %v169
    %1255 = vmatpush1.msra.mxu0 %v168
    %1256 = vmatprep.subr.mxu0 %v177
    %1257 = vmatpush1.msra.mxu0 %v176
    %1258 = vmatprep.subr.mxu0 %v185
    %1259 = vmatpush1.msra.mxu0 %v184
    %1260 = vmatprep.subr.mxu0 %v193
    %1261 = vmatpush1.msra.mxu0 %v192
    %1262 = vmatprep.subr.mxu0 %v201
    %1263 = vmatpush1.msra.mxu0 %v200
    %1264 = vmatprep.subr.mxu0 %v209
    %1265 = vmatpush1.msra.mxu0 %v208
    %1266 = vmatprep.subr.mxu0 %v217
    %1267 = vmatpush1.msra.mxu0 %v216
    %1268 = vmatprep.subr.mxu0 %v225
    %1269 = vmatpush1.msra.mxu0 %v224
    %1270 = vmatprep.subr.mxu0 %v233
    %1271 = vmatpush1.msra.mxu0 %v232
    %1272 = vmatprep.subr.mxu0 %v241
    %1273 = vmatpush1.msra.mxu0 %v240
    %1274 = vmatprep.subr.mxu0 %v249
    %1275 = vmatpush1.msra.mxu0 %v248
    %1276 = vmatprep.subr.mxu0 %v257
    %1277 = vmatpush1.msra.mxu0 %v256
    %1278 = vmatprep.subr.mxu0 %v265
    %1279 = vmatpush1.msra.mxu0 %v264
    %1280 = vmatprep.subr.mxu0 %v273
    %1281 = vmatpush1.msra.mxu0 %v272
    %1282 = vmatprep.subr.mxu0 %v281
    %1283 = vmatpush1.msra.mxu0 %v280
    %1284 = vmatprep.subr.mxu0 %v289
    %1285 = vmatpush1.msra.mxu0 %v288
    %1286 = vmatprep.subr.mxu0 %v297
    %1287 = vmatpush1.msra.mxu0 %v296
    %1288 = vmatprep.subr.mxu0 %v305
    %1289 = vmatpush1.msra.mxu0 %v304
    %1290 = vmatprep.subr.mxu0 %v313
    %1291 = vmatpush1.msra.mxu0 %v312
    %1292 = vmatprep.subr.mxu0 %v321
    %1293 = vmatpush1.msra.mxu0 %v320
    %1294 = vmatprep.subr.mxu0 %v329
    %1295 = vmatpush1.msra.mxu0 %v328
    %1296 = vmatprep.subr.mxu0 %v337
    %1297 = vmatpush1.msra.mxu0 %v336
    %1298 = vmatprep.subr.mxu0 %v345
    %1299 = vmatpush1.msra.mxu0 %v344
    %1300 = vmatprep.subr.mxu0 %v353
    %1301 = vmatpush1.msra.mxu0 %v352
    %1302 = vmatprep.subr.mxu0 %v361
    %1303 = vmatpush1.msra.mxu0 %v360
    %1304 = vmatprep.subr.mxu0 %v369
    %1305 = vmatpush1.msra.mxu0 %v368
    %1306 = vmatprep.subr.mxu0 %v377
    %1307 = vmatpush1.msra.mxu0 %v376
    %1308 = vmatprep.subr.mxu0 %v385
    %1309 = vmatpush1.msra.mxu0 %v384
    %1310 = vmatprep.mubr.f32.mxu0 %v1219
    %1311 = vmatmul.mubr.f32.gmra.mrb[0].mxu0 %v1211
    %v1312 = vpop.f32.mrb[0].mxu0
    %v1313 = vadd.f32 %v1165, %v1312
    %v1314 = vpop.f32.mrb[0].mxu0
    %v1315 = vadd.f32 %v1169, %v1314
    %1316 = vdwg.mxu0
    %1317 = vmatprep.subr.mxu0 %v393
    %1318 = vmatpush1.msra.mxu0 %v392
    %1319 = vmatprep.subr.mxu0 %v401
    %1320 = vmatpush1.msra.mxu0 %v400
    %1321 = vmatprep.subr.mxu0 %v409
    %1322 = vmatpush1.msra.mxu0 %v408
    %1323 = vmatprep.subr.mxu0 %v417
    %1324 = vmatpush1.msra.mxu0 %v416
    %1325 = vmatprep.subr.mxu0 %v425
    %1326 = vmatpush1.msra.mxu0 %v424
    %1327 = vmatprep.subr.mxu0 %v433
    %1328 = vmatpush1.msra.mxu0 %v432
    %1329 = vmatprep.subr.mxu0 %v441
    %1330 = vmatpush1.msra.mxu0 %v440
    %1331 = vmatprep.subr.mxu0 %v449
    %1332 = vmatpush1.msra.mxu0 %v448
    %1333 = vmatprep.subr.mxu0 %v457
    %1334 = vmatpush1.msra.mxu0 %v456
    %1335 = vmatprep.subr.mxu0 %v465
    %1336 = vmatpush1.msra.mxu0 %v464
    %1337 = vmatprep.subr.mxu0 %v473
    %1338 = vmatpush1.msra.mxu0 %v472
    %1339 = vmatprep.subr.mxu0 %v481
    %1340 = vmatpush1.msra.mxu0 %v480
    %1341 = vmatprep.subr.mxu0 %v489
    %1342 = vmatpush1.msra.mxu0 %v488
    %1343 = vmatprep.subr.mxu0 %v497
    %1344 = vmatpush1.msra.mxu0 %v496
    %1345 = vmatprep.subr.mxu0 %v505
    %1346 = vmatpush1.msra.mxu0 %v504
    %1347 = vmatprep.subr.mxu0 %v513
    %1348 = vmatpush1.msra.mxu0 %v512
    %1349 = vmatprep.subr.mxu0 %v521
    %1350 = vmatpush1.msra.mxu0 %v520
    %1351 = vmatprep.subr.mxu0 %v529
    %1352 = vmatpush1.msra.mxu0 %v528
    %1353 = vmatprep.subr.mxu0 %v537
    %1354 = vmatpush1.msra.mxu0 %v536
    %1355 = vmatprep.subr.mxu0 %v545
    %1356 = vmatpush1.msra.mxu0 %v544
    %1357 = vmatprep.subr.mxu0 %v553
    %1358 = vmatpush1.msra.mxu0 %v552
    %1359 = vmatprep.subr.mxu0 %v561
    %1360 = vmatpush1.msra.mxu0 %v560
    %1361 = vmatprep.subr.mxu0 %v569
    %1362 = vmatpush1.msra.mxu0 %v568
    %1363 = vmatprep.subr.mxu0 %v577
    %1364 = vmatpush1.msra.mxu0 %v576
    %1365 = vmatprep.subr.mxu0 %v585
    %1366 = vmatpush1.msra.mxu0 %v584
    %1367 = vmatprep.subr.mxu0 %v593
    %1368 = vmatpush1.msra.mxu0 %v592
    %1369 = vmatprep.subr.mxu0 %v601
    %1370 = vmatpush1.msra.mxu0 %v600
    %1371 = vmatprep.subr.mxu0 %v609
    %1372 = vmatpush1.msra.mxu0 %v608
    %1373 = vmatprep.subr.mxu0 %v617
    %1374 = vmatpush1.msra.mxu0 %v616
    %1375 = vmatprep.subr.mxu0 %v625
    %1376 = vmatpush1.msra.mxu0 %v624
    %1377 = vmatprep.subr.mxu0 %v633
    %1378 = vmatpush1.msra.mxu0 %v632
    %1379 = vmatprep.subr.mxu0 %v641
    %1380 = vmatpush1.msra.mxu0 %v640
    %1381 = vmatprep.mubr.f32.mxu0 %v1220
    %1382 = vmatmul.mubr.f32.gmra.mrb[0].mxu0 %v1218
    %v1383 = vpop.f32.mrb[0].mxu0
    %v1384 = vadd.f32 %v1313, %v1383
    %v1385 = vpop.f32.mrb[0].mxu0
    %v1386 = vadd.f32 %v1315, %v1385
    %1387 = vdwg.mxu0
    %1388 = vmatprep.subr.mxu0 %v649
    %1389 = vmatpush1.msra.mxu0 %v648
    %1390 = vmatprep.subr.mxu0 %v657
    %1391 = vmatpush1.msra.mxu0 %v656
    %1392 = vmatprep.subr.mxu0 %v665
    %1393 = vmatpush1.msra.mxu0 %v664
    %1394 = vmatprep.subr.mxu0 %v673
    %1395 = vmatpush1.msra.mxu0 %v672
    %1396 = vmatprep.subr.mxu0 %v681
    %1397 = vmatpush1.msra.mxu0 %v680
    %1398 = vmatprep.subr.mxu0 %v689
    %1399 = vmatpush1.msra.mxu0 %v688
    %1400 = vmatprep.subr.mxu0 %v697
    %1401 = vmatpush1.msra.mxu0 %v696
    %1402 = vmatprep.subr.mxu0 %v705
    %1403 = vmatpush1.msra.mxu0 %v704
    %1404 = vmatprep.subr.mxu0 %v713
    %1405 = vmatpush1.msra.mxu0 %v712
    %1406 = vmatprep.subr.mxu0 %v721
    %1407 = vmatpush1.msra.mxu0 %v720
    %1408 = vmatprep.subr.mxu0 %v729
    %1409 = vmatpush1.msra.mxu0 %v728
    %1410 = vmatprep.subr.mxu0 %v737
    %1411 = vmatpush1.msra.mxu0 %v736
    %1412 = vmatprep.subr.mxu0 %v745
    %1413 = vmatpush1.msra.mxu0 %v744
    %1414 = vmatprep.subr.mxu0 %v753
    %1415 = vmatpush1.msra.mxu0 %v752
    %1416 = vmatprep.subr.mxu0 %v761
    %1417 = vmatpush1.msra.mxu0 %v760
    %1418 = vmatprep.subr.mxu0 %v769
    %1419 = vmatpush1.msra.mxu0 %v768
    %1420 = vmatprep.subr.mxu0 %v777
    %1421 = vmatpush1.msra.mxu0 %v776
    %1422 = vmatprep.subr.mxu0 %v785
    %1423 = vmatpush1.msra.mxu0 %v784
    %1424 = vmatprep.subr.mxu0 %v793
    %1425 = vmatpush1.msra.mxu0 %v792
    %1426 = vmatprep.subr.mxu0 %v801
    %1427 = vmatpush1.msra.mxu0 %v800
    %1428 = vmatprep.subr.mxu0 %v809
    %1429 = vmatpush1.msra.mxu0 %v808
    %1430 = vmatprep.subr.mxu0 %v817
    %1431 = vmatpush1.msra.mxu0 %v816
    %1432 = vmatprep.subr.mxu0 %v825
    %1433 = vmatpush1.msra.mxu0 %v824
    %1434 = vmatprep.subr.mxu0 %v833
    %1435 = vmatpush1.msra.mxu0 %v832
    %1436 = vmatprep.subr.mxu0 %v841
    %1437 = vmatpush1.msra.mxu0 %v840
    %1438 = vmatprep.subr.mxu0 %v849
    %1439 = vmatpush1.msra.mxu0 %v848
    %1440 = vmatprep.subr.mxu0 %v857
    %1441 = vmatpush1.msra.mxu0 %v856
    %1442 = vmatprep.subr.mxu0 %v865
    %1443 = vmatpush1.msra.mxu0 %v864
    %1444 = vmatprep.subr.mxu0 %v873
    %1445 = vmatpush1.msra.mxu0 %v872
    %1446 = vmatprep.subr.mxu0 %v881
    %1447 = vmatpush1.msra.mxu0 %v880
    %1448 = vmatprep.subr.mxu0 %v889
    %1449 = vmatpush1.msra.mxu0 %v888
    %1450 = vmatprep.subr.mxu0 %v897
    %1451 = vmatpush1.msra.mxu0 %v896
    %1452 = vmatprep.mubr.f32.mxu0 %v1236
    %1453 = vmatmul.mubr.f32.gmra.mrb[0].mxu0 %v1228
    %v1454 = vpop.f32.mrb[0].mxu0
    %v1455 = vadd.f32 %v1384, %v1454
    %v1456 = vpop.f32.mrb[0].mxu0
    %v1457 = vadd.f32 %v1386, %v1456
    %1458 = vdwg.mxu0
    %1459 = vmatprep.subr.mxu0 %v905
    %1460 = vmatpush1.msra.mxu0 %v904
    %1461 = vmatprep.subr.mxu0 %v913
    %1462 = vmatpush1.msra.mxu0 %v912
    %1463 = vmatprep.subr.mxu0 %v921
    %1464 = vmatpush1.msra.mxu0 %v920
    %1465 = vmatprep.subr.mxu0 %v929
    %1466 = vmatpush1.msra.mxu0 %v928
    %1467 = vmatprep.subr.mxu0 %v937
    %1468 = vmatpush1.msra.mxu0 %v936
    %1469 = vmatprep.subr.mxu0 %v945
    %1470 = vmatpush1.msra.mxu0 %v944
    %1471 = vmatprep.subr.mxu0 %v953
    %1472 = vmatpush1.msra.mxu0 %v952
    %1473 = vmatprep.subr.mxu0 %v961
    %1474 = vmatpush1.msra.mxu0 %v960
    %1475 = vmatprep.subr.mxu0 %v969
    %1476 = vmatpush1.msra.mxu0 %v968
    %1477 = vmatprep.subr.mxu0 %v977
    %1478 = vmatpush1.msra.mxu0 %v976
    %1479 = vmatprep.subr.mxu0 %v985
    %1480 = vmatpush1.msra.mxu0 %v984
    %1481 = vmatprep.subr.mxu0 %v993
    %1482 = vmatpush1.msra.mxu0 %v992
    %1483 = vmatprep.subr.mxu0 %v1001
    %1484 = vmatpush1.msra.mxu0 %v1000
    %1485 = vmatprep.subr.mxu0 %v1009
    %1486 = vmatpush1.msra.mxu0 %v1008
    %1487 = vmatprep.subr.mxu0 %v1017
    %1488 = vmatpush1.msra.mxu0 %v1016
    %1489 = vmatprep.subr.mxu0 %v1025
    %1490 = vmatpush1.msra.mxu0 %v1024
    %1491 = vmatprep.subr.mxu0 %v1033
    %1492 = vmatpush1.msra.mxu0 %v1032
    %1493 = vmatprep.subr.mxu0 %v1041
    %1494 = vmatpush1.msra.mxu0 %v1040
    %1495 = vmatprep.subr.mxu0 %v1049
    %1496 = vmatpush1.msra.mxu0 %v1048
    %1497 = vmatprep.subr.mxu0 %v1057
    %1498 = vmatpush1.msra.mxu0 %v1056
    %1499 = vmatprep.subr.mxu0 %v1065
    %1500 = vmatpush1.msra.mxu0 %v1064
    %1501 = vmatprep.subr.mxu0 %v1073
    %1502 = vmatpush1.msra.mxu0 %v1072
    %1503 = vmatprep.subr.mxu0 %v1081
    %1504 = vmatpush1.msra.mxu0 %v1080
    %1505 = vmatprep.subr.mxu0 %v1089
    %1506 = vmatpush1.msra.mxu0 %v1088
    %1507 = vmatprep.subr.mxu0 %v1097
    %1508 = vmatpush1.msra.mxu0 %v1096
    %1509 = vmatprep.subr.mxu0 %v1105
    %1510 = vmatpush1.msra.mxu0 %v1104
    %1511 = vmatprep.subr.mxu0 %v1113
    %1512 = vmatpush1.msra.mxu0 %v1112
    %1513 = vmatprep.subr.mxu0 %v1121
    %1514 = vmatpush1.msra.mxu0 %v1120
    %1515 = vmatprep.subr.mxu0 %v1129
    %1516 = vmatpush1.msra.mxu0 %v1128
    %1517 = vmatprep.subr.mxu0 %v1137
    %1518 = vmatpush1.msra.mxu0 %v1136
    %1519 = vmatprep.subr.mxu0 %v1145
    %1520 = vmatpush1.msra.mxu0 %v1144
    %1521 = vmatprep.subr.mxu0 %v1153
    %1522 = vmatpush1.msra.mxu0 %v1152
    %1523 = vmatprep.mubr.f32.mxu0 %v1237
    %1524 = vmatmul.mubr.f32.gmra.mrb[0].mxu0 %v1235
    %v1525 = vpop.f32.mrb[0].mxu0
    %v1526 = vadd.f32 %v1455, %v1525
    %v1527 = vpop.f32.mrb[0].mxu0
    %v1528 = vadd.f32 %v1457, %v1527
    %1529 = vdwg.mxu0
    %1530 = vmatprep.subr.mxu0 %v139
    %1531 = vmatpush1.msra.mxu0 %v138
    %1532 = vmatprep.subr.mxu0 %v147
    %1533 = vmatpush1.msra.mxu0 %v146
    %1534 = vmatprep.subr.mxu0 %v155
    %1535 = vmatpush1.msra.mxu0 %v154
    %1536 = vmatprep.subr.mxu0 %v163
    %1537 = vmatpush1.msra.mxu0 %v162
    %1538 = vmatprep.subr.mxu0 %v171
    %1539 = vmatpush1.msra.mxu0 %v170
    %1540 = vmatprep.subr.mxu0 %v179
    %1541 = vmatpush1.msra.mxu0 %v178
    %1542 = vmatprep.subr.mxu0 %v187
    %1543 = vmatpush1.msra.mxu0 %v186
    %1544 = vmatprep.subr.mxu0 %v195
    %1545 = vmatpush1.msra.mxu0 %v194
    %1546 = vmatprep.subr.mxu0 %v203
    %1547 = vmatpush1.msra.mxu0 %v202
    %1548 = vmatprep.subr.mxu0 %v211
    %1549 = vmatpush1.msra.mxu0 %v210
    %1550 = vmatprep.subr.mxu0 %v219
    %1551 = vmatpush1.msra.mxu0 %v218
    %1552 = vmatprep.subr.mxu0 %v227
    %1553 = vmatpush1.msra.mxu0 %v226
    %1554 = vmatprep.subr.mxu0 %v235
    %1555 = vmatpush1.msra.mxu0 %v234
    %1556 = vmatprep.subr.mxu0 %v243
    %1557 = vmatpush1.msra.mxu0 %v242
    %1558 = vmatprep.subr.mxu0 %v251
    %1559 = vmatpush1.msra.mxu0 %v250
    %1560 = vmatprep.subr.mxu0 %v259
    %1561 = vmatpush1.msra.mxu0 %v258
    %1562 = vmatprep.subr.mxu0 %v267
    %1563 = vmatpush1.msra.mxu0 %v266
    %1564 = vmatprep.subr.mxu0 %v275
    %1565 = vmatpush1.msra.mxu0 %v274
    %1566 = vmatprep.subr.mxu0 %v283
    %1567 = vmatpush1.msra.mxu0 %v282
    %1568 = vmatprep.subr.mxu0 %v291
    %1569 = vmatpush1.msra.mxu0 %v290
    %1570 = vmatprep.subr.mxu0 %v299
    %1571 = vmatpush1.msra.mxu0 %v298
    %1572 = vmatprep.subr.mxu0 %v307
    %1573 = vmatpush1.msra.mxu0 %v306
    %1574 = vmatprep.subr.mxu0 %v315
    %1575 = vmatpush1.msra.mxu0 %v314
    %1576 = vmatprep.subr.mxu0 %v323
    %1577 = vmatpush1.msra.mxu0 %v322
    %1578 = vmatprep.subr.mxu0 %v331
    %1579 = vmatpush1.msra.mxu0 %v330
    %1580 = vmatprep.subr.mxu0 %v339
    %1581 = vmatpush1.msra.mxu0 %v338
    %1582 = vmatprep.subr.mxu0 %v347
    %1583 = vmatpush1.msra.mxu0 %v346
    %1584 = vmatprep.subr.mxu0 %v355
    %1585 = vmatpush1.msra.mxu0 %v354
    %1586 = vmatprep.subr.mxu0 %v363
    %1587 = vmatpush1.msra.mxu0 %v362
    %1588 = vmatprep.subr.mxu0 %v371
    %1589 = vmatpush1.msra.mxu0 %v370
    %1590 = vmatprep.subr.mxu0 %v379
    %1591 = vmatpush1.msra.mxu0 %v378
    %1592 = vmatprep.subr.mxu0 %v387
    %1593 = vmatpush1.msra.mxu0 %v386
    %1594 = vmatprep.mubr.f32.mxu0 %v1219
    %1595 = vmatmul.mubr.f32.gmra.mrb[0].mxu0 %v1211
    %v1596 = vpop.f32.mrb[0].mxu0
    %v1597 = vadd.f32 %v1173, %v1596
    %v1598 = vpop.f32.mrb[0].mxu0
    %v1599 = vadd.f32 %v1177, %v1598
    %1600 = vdwg.mxu0
    %1601 = vmatprep.subr.mxu0 %v395
    %1602 = vmatpush1.msra.mxu0 %v394
    %1603 = vmatprep.subr.mxu0 %v403
    %1604 = vmatpush1.msra.mxu0 %v402
    %1605 = vmatprep.subr.mxu0 %v411
    %1606 = vmatpush1.msra.mxu0 %v410
    %1607 = vmatprep.subr.mxu0 %v419
    %1608 = vmatpush1.msra.mxu0 %v418
    %1609 = vmatprep.subr.mxu0 %v427
    %1610 = vmatpush1.msra.mxu0 %v426
    %1611 = vmatprep.subr.mxu0 %v435
    %1612 = vmatpush1.msra.mxu0 %v434
    %1613 = vmatprep.subr.mxu0 %v443
    %1614 = vmatpush1.msra.mxu0 %v442
    %1615 = vmatprep.subr.mxu0 %v451
    %1616 = vmatpush1.msra.mxu0 %v450
    %1617 = vmatprep.subr.mxu0 %v459
    %1618 = vmatpush1.msra.mxu0 %v458
    %1619 = vmatprep.subr.mxu0 %v467
    %1620 = vmatpush1.msra.mxu0 %v466
    %1621 = vmatprep.subr.mxu0 %v475
    %1622 = vmatpush1.msra.mxu0 %v474
    %1623 = vmatprep.subr.mxu0 %v483
    %1624 = vmatpush1.msra.mxu0 %v482
    %1625 = vmatprep.subr.mxu0 %v491
    %1626 = vmatpush1.msra.mxu0 %v490
    %1627 = vmatprep.subr.mxu0 %v499
    %1628 = vmatpush1.msra.mxu0 %v498
    %1629 = vmatprep.subr.mxu0 %v507
    %1630 = vmatpush1.msra.mxu0 %v506
    %1631 = vmatprep.subr.mxu0 %v515
    %1632 = vmatpush1.msra.mxu0 %v514
    %1633 = vmatprep.subr.mxu0 %v523
    %1634 = vmatpush1.msra.mxu0 %v522
    %1635 = vmatprep.subr.mxu0 %v531
    %1636 = vmatpush1.msra.mxu0 %v530
    %1637 = vmatprep.subr.mxu0 %v539
    %1638 = vmatpush1.msra.mxu0 %v538
    %1639 = vmatprep.subr.mxu0 %v547
    %1640 = vmatpush1.msra.mxu0 %v546
    %1641 = vmatprep.subr.mxu0 %v555
    %1642 = vmatpush1.msra.mxu0 %v554
    %1643 = vmatprep.subr.mxu0 %v563
    %1644 = vmatpush1.msra.mxu0 %v562
    %1645 = vmatprep.subr.mxu0 %v571
    %1646 = vmatpush1.msra.mxu0 %v570
    %1647 = vmatprep.subr.mxu0 %v579
    %1648 = vmatpush1.msra.mxu0 %v578
    %1649 = vmatprep.subr.mxu0 %v587
    %1650 = vmatpush1.msra.mxu0 %v586
    %1651 = vmatprep.subr.mxu0 %v595
    %1652 = vmatpush1.msra.mxu0 %v594
    %1653 = vmatprep.subr.mxu0 %v603
    %1654 = vmatpush1.msra.mxu0 %v602
    %1655 = vmatprep.subr.mxu0 %v611
    %1656 = vmatpush1.msra.mxu0 %v610
    %1657 = vmatprep.subr.mxu0 %v619
    %1658 = vmatpush1.msra.mxu0 %v618
    %1659 = vmatprep.subr.mxu0 %v627
    %1660 = vmatpush1.msra.mxu0 %v626
    %1661 = vmatprep.subr.mxu0 %v635
    %1662 = vmatpush1.msra.mxu0 %v634
    %1663 = vmatprep.subr.mxu0 %v643
    %1664 = vmatpush1.msra.mxu0 %v642
    %1665 = vmatprep.mubr.f32.mxu0 %v1220
    %1666 = vmatmul.mubr.f32.gmra.mrb[0].mxu0 %v1218
    %v1667 = vpop.f32.mrb[0].mxu0
    %v1668 = vadd.f32 %v1597, %v1667
    %v1669 = vpop.f32.mrb[0].mxu0
    %v1670 = vadd.f32 %v1599, %v1669
    %1671 = vdwg.mxu0
    %1672 = vmatprep.subr.mxu0 %v651
    %1673 = vmatpush1.msra.mxu0 %v650
    %1674 = vmatprep.subr.mxu0 %v659
    %1675 = vmatpush1.msra.mxu0 %v658
    %1676 = vmatprep.subr.mxu0 %v667
    %1677 = vmatpush1.msra.mxu0 %v666
    %1678 = vmatprep.subr.mxu0 %v675
    %1679 = vmatpush1.msra.mxu0 %v674
    %1680 = vmatprep.subr.mxu0 %v683
    %1681 = vmatpush1.msra.mxu0 %v682
    %1682 = vmatprep.subr.mxu0 %v691
    %1683 = vmatpush1.msra.mxu0 %v690
    %1684 = vmatprep.subr.mxu0 %v699
    %1685 = vmatpush1.msra.mxu0 %v698
    %1686 = vmatprep.subr.mxu0 %v707
    %1687 = vmatpush1.msra.mxu0 %v706
    %1688 = vmatprep.subr.mxu0 %v715
    %1689 = vmatpush1.msra.mxu0 %v714
    %1690 = vmatprep.subr.mxu0 %v723
    %1691 = vmatpush1.msra.mxu0 %v722
    %1692 = vmatprep.subr.mxu0 %v731
    %1693 = vmatpush1.msra.mxu0 %v730
    %1694 = vmatprep.subr.mxu0 %v739
    %1695 = vmatpush1.msra.mxu0 %v738
    %1696 = vmatprep.subr.mxu0 %v747
    %1697 = vmatpush1.msra.mxu0 %v746
    %1698 = vmatprep.subr.mxu0 %v755
    %1699 = vmatpush1.msra.mxu0 %v754
    %1700 = vmatprep.subr.mxu0 %v763
    %1701 = vmatpush1.msra.mxu0 %v762
    %1702 = vmatprep.subr.mxu0 %v771
    %1703 = vmatpush1.msra.mxu0 %v770
    %1704 = vmatprep.subr.mxu0 %v779
    %1705 = vmatpush1.msra.mxu0 %v778
    %1706 = vmatprep.subr.mxu0 %v787
    %1707 = vmatpush1.msra.mxu0 %v786
    %1708 = vmatprep.subr.mxu0 %v795
    %1709 = vmatpush1.msra.mxu0 %v794
    %1710 = vmatprep.subr.mxu0 %v803
    %1711 = vmatpush1.msra.mxu0 %v802
    %1712 = vmatprep.subr.mxu0 %v811
    %1713 = vmatpush1.msra.mxu0 %v810
    %1714 = vmatprep.subr.mxu0 %v819
    %1715 = vmatpush1.msra.mxu0 %v818
    %1716 = vmatprep.subr.mxu0 %v827
    %1717 = vmatpush1.msra.mxu0 %v826
    %1718 = vmatprep.subr.mxu0 %v835
    %1719 = vmatpush1.msra.mxu0 %v834
    %1720 = vmatprep.subr.mxu0 %v843
    %1721 = vmatpush1.msra.mxu0 %v842
    %1722 = vmatprep.subr.mxu0 %v851
    %1723 = vmatpush1.msra.mxu0 %v850
    %1724 = vmatprep.subr.mxu0 %v859
    %1725 = vmatpush1.msra.mxu0 %v858
    %1726 = vmatprep.subr.mxu0 %v867
    %1727 = vmatpush1.msra.mxu0 %v866
    %1728 = vmatprep.subr.mxu0 %v875
    %1729 = vmatpush1.msra.mxu0 %v874
    %1730 = vmatprep.subr.mxu0 %v883
    %1731 = vmatpush1.msra.mxu0 %v882
    %1732 = vmatprep.subr.mxu0 %v891
    %1733 = vmatpush1.msra.mxu0 %v890
    %1734 = vmatprep.subr.mxu0 %v899
    %1735 = vmatpush1.msra.mxu0 %v898
    %1736 = vmatprep.mubr.f32.mxu0 %v1236
    %1737 = vmatmul.mubr.f32.gmra.mrb[0].mxu0 %v1228
    %v1738 = vpop.f32.mrb[0].mxu0
    %v1739 = vadd.f32 %v1668, %v1738
    %v1740 = vpop.f32.mrb[0].mxu0
    %v1741 = vadd.f32 %v1670, %v1740
    %1742 = vdwg.mxu0
    %1743 = vmatprep.subr.mxu0 %v907
    %1744 = vmatpush1.msra.mxu0 %v906
    %1745 = vmatprep.subr.mxu0 %v915
    %1746 = vmatpush1.msra.mxu0 %v914
    %1747 = vmatprep.subr.mxu0 %v923
    %1748 = vmatpush1.msra.mxu0 %v922
    %1749 = vmatprep.subr.mxu0 %v931
    %1750 = vmatpush1.msra.mxu0 %v930
    %1751 = vmatprep.subr.mxu0 %v939
    %1752 = vmatpush1.msra.mxu0 %v938
    %1753 = vmatprep.subr.mxu0 %v947
    %1754 = vmatpush1.msra.mxu0 %v946
    %1755 = vmatprep.subr.mxu0 %v955
    %1756 = vmatpush1.msra.mxu0 %v954
    %1757 = vmatprep.subr.mxu0 %v963
    %1758 = vmatpush1.msra.mxu0 %v962
    %1759 = vmatprep.subr.mxu0 %v971
    %1760 = vmatpush1.msra.mxu0 %v970
    %1761 = vmatprep.subr.mxu0 %v979
    %1762 = vmatpush1.msra.mxu0 %v978
    %1763 = vmatprep.subr.mxu0 %v987
    %1764 = vmatpush1.msra.mxu0 %v986
    %1765 = vmatprep.subr.mxu0 %v995
    %1766 = vmatpush1.msra.mxu0 %v994
    %1767 = vmatprep.subr.mxu0 %v1003
    %1768 = vmatpush1.msra.mxu0 %v1002
    %1769 = vmatprep.subr.mxu0 %v1011
    %1770 = vmatpush1.msra.mxu0 %v1010
    %1771 = vmatprep.subr.mxu0 %v1019
    %1772 = vmatpush1.msra.mxu0 %v1018
    %1773 = vmatprep.subr.mxu0 %v1027
    %1774 = vmatpush1.msra.mxu0 %v1026
    %1775 = vmatprep.subr.mxu0 %v1035
    %1776 = vmatpush1.msra.mxu0 %v1034
    %1777 = vmatprep.subr.mxu0 %v1043
    %1778 = vmatpush1.msra.mxu0 %v1042
    %1779 = vmatprep.subr.mxu0 %v1051
    %1780 = vmatpush1.msra.mxu0 %v1050
    %1781 = vmatprep.subr.mxu0 %v1059
    %1782 = vmatpush1.msra.mxu0 %v1058
    %1783 = vmatprep.subr.mxu0 %v1067
    %1784 = vmatpush1.msra.mxu0 %v1066
    %1785 = vmatprep.subr.mxu0 %v1075
    %1786 = vmatpush1.msra.mxu0 %v1074
    %1787 = vmatprep.subr.mxu0 %v1083
    %1788 = vmatpush1.msra.mxu0 %v1082
    %1789 = vmatprep.subr.mxu0 %v1091
    %1790 = vmatpush1.msra.mxu0 %v1090
    %1791 = vmatprep.subr.mxu0 %v1099
    %1792 = vmatpush1.msra.mxu0 %v1098
    %1793 = vmatprep.subr.mxu0 %v1107
    %1794 = vmatpush1.msra.mxu0 %v1106
    %1795 = vmatprep.subr.mxu0 %v1115
    %1796 = vmatpush1.msra.mxu0 %v1114
    %1797 = vmatprep.subr.mxu0 %v1123
    %1798 = vmatpush1.msra.mxu0 %v1122
    %1799 = vmatprep.subr.mxu0 %v1131
    %1800 = vmatpush1.msra.mxu0 %v1130
    %1801 = vmatprep.subr.mxu0 %v1139
    %1802 = vmatpush1.msra.mxu0 %v1138
    %1803 = vmatprep.subr.mxu0 %v1147
    %1804 = vmatpush1.msra.mxu0 %v1146
    %1805 = vmatprep.subr.mxu0 %v1155
    %1806 = vmatpush1.msra.mxu0 %v1154
    %1807 = vmatprep.mubr.f32.mxu0 %v1237
    %1808 = vmatmul.mubr.f32.gmra.mrb[0].mxu0 %v1235
    %v1809 = vpop.f32.mrb[0].mxu0
    %v1810 = vadd.f32 %v1739, %v1809
    %v1811 = vpop.f32.mrb[0].mxu0
    %v1812 = vadd.f32 %v1741, %v1811
    %1813 = vdwg.mxu0
    %1814 = vmatprep.subr.mxu0 %v141
    %1815 = vmatpush1.msra.mxu0 %v140
    %1816 = vmatprep.subr.mxu0 %v149
    %1817 = vmatpush1.msra.mxu0 %v148
    %1818 = vmatprep.subr.mxu0 %v157
    %1819 = vmatpush1.msra.mxu0 %v156
    %1820 = vmatprep.subr.mxu0 %v165
    %1821 = vmatpush1.msra.mxu0 %v164
    %1822 = vmatprep.subr.mxu0 %v173
    %1823 = vmatpush1.msra.mxu0 %v172
    %1824 = vmatprep.subr.mxu0 %v181
    %1825 = vmatpush1.msra.mxu0 %v180
    %1826 = vmatprep.subr.mxu0 %v189
    %1827 = vmatpush1.msra.mxu0 %v188
    %1828 = vmatprep.subr.mxu0 %v197
    %1829 = vmatpush1.msra.mxu0 %v196
    %1830 = vmatprep.subr.mxu0 %v205
    %1831 = vmatpush1.msra.mxu0 %v204
    %1832 = vmatprep.subr.mxu0 %v213
    %1833 = vmatpush1.msra.mxu0 %v212
    %1834 = vmatprep.subr.mxu0 %v221
    %1835 = vmatpush1.msra.mxu0 %v220
    %1836 = vmatprep.subr.mxu0 %v229
    %1837 = vmatpush1.msra.mxu0 %v228
    %1838 = vmatprep.subr.mxu0 %v237
    %1839 = vmatpush1.msra.mxu0 %v236
    %1840 = vmatprep.subr.mxu0 %v245
    %1841 = vmatpush1.msra.mxu0 %v244
    %1842 = vmatprep.subr.mxu0 %v253
    %1843 = vmatpush1.msra.mxu0 %v252
    %1844 = vmatprep.subr.mxu0 %v261
    %1845 = vmatpush1.msra.mxu0 %v260
    %1846 = vmatprep.subr.mxu0 %v269
    %1847 = vmatpush1.msra.mxu0 %v268
    %1848 = vmatprep.subr.mxu0 %v277
    %1849 = vmatpush1.msra.mxu0 %v276
    %1850 = vmatprep.subr.mxu0 %v285
    %1851 = vmatpush1.msra.mxu0 %v284
    %1852 = vmatprep.subr.mxu0 %v293
    %1853 = vmatpush1.msra.mxu0 %v292
    %1854 = vmatprep.subr.mxu0 %v301
    %1855 = vmatpush1.msra.mxu0 %v300
    %1856 = vmatprep.subr.mxu0 %v309
    %1857 = vmatpush1.msra.mxu0 %v308
    %1858 = vmatprep.subr.mxu0 %v317
    %1859 = vmatpush1.msra.mxu0 %v316
    %1860 = vmatprep.subr.mxu0 %v325
    %1861 = vmatpush1.msra.mxu0 %v324
    %1862 = vmatprep.subr.mxu0 %v333
    %1863 = vmatpush1.msra.mxu0 %v332
    %1864 = vmatprep.subr.mxu0 %v341
    %1865 = vmatpush1.msra.mxu0 %v340
    %1866 = vmatprep.subr.mxu0 %v349
    %1867 = vmatpush1.msra.mxu0 %v348
    %1868 = vmatprep.subr.mxu0 %v357
    %1869 = vmatpush1.msra.mxu0 %v356
    %1870 = vmatprep.subr.mxu0 %v365
    %1871 = vmatpush1.msra.mxu0 %v364
    %1872 = vmatprep.subr.mxu0 %v373
    %1873 = vmatpush1.msra.mxu0 %v372
    %1874 = vmatprep.subr.mxu0 %v381
    %1875 = vmatpush1.msra.mxu0 %v380
    %1876 = vmatprep.subr.mxu0 %v389
    %1877 = vmatpush1.msra.mxu0 %v388
    %1878 = vmatprep.mubr.f32.mxu0 %v1219
    %1879 = vmatmul.mubr.f32.gmra.mrb[0].mxu0 %v1211
    %v1880 = vpop.f32.mrb[0].mxu0
    %v1881 = vadd.f32 %v1181, %v1880
    %v1882 = vpop.f32.mrb[0].mxu0
    %v1883 = vadd.f32 %v1185, %v1882
    %1884 = vdwg.mxu0
    %1885 = vmatprep.subr.mxu0 %v397
    %1886 = vmatpush1.msra.mxu0 %v396
    %1887 = vmatprep.subr.mxu0 %v405
    %1888 = vmatpush1.msra.mxu0 %v404
    %1889 = vmatprep.subr.mxu0 %v413
    %1890 = vmatpush1.msra.mxu0 %v412
    %1891 = vmatprep.subr.mxu0 %v421
    %1892 = vmatpush1.msra.mxu0 %v420
    %1893 = vmatprep.subr.mxu0 %v429
    %1894 = vmatpush1.msra.mxu0 %v428
    %1895 = vmatprep.subr.mxu0 %v437
    %1896 = vmatpush1.msra.mxu0 %v436
    %1897 = vmatprep.subr.mxu0 %v445
    %1898 = vmatpush1.msra.mxu0 %v444
    %1899 = vmatprep.subr.mxu0 %v453
    %1900 = vmatpush1.msra.mxu0 %v452
    %1901 = vmatprep.subr.mxu0 %v461
    %1902 = vmatpush1.msra.mxu0 %v460
    %1903 = vmatprep.subr.mxu0 %v469
    %1904 = vmatpush1.msra.mxu0 %v468
    %1905 = vmatprep.subr.mxu0 %v477
    %1906 = vmatpush1.msra.mxu0 %v476
    %1907 = vmatprep.subr.mxu0 %v485
    %1908 = vmatpush1.msra.mxu0 %v484
    %1909 = vmatprep.subr.mxu0 %v493
    %1910 = vmatpush1.msra.mxu0 %v492
    %1911 = vmatprep.subr.mxu0 %v501
    %1912 = vmatpush1.msra.mxu0 %v500
    %1913 = vmatprep.subr.mxu0 %v509
    %1914 = vmatpush1.msra.mxu0 %v508
    %1915 = vmatprep.subr.mxu0 %v517
    %1916 = vmatpush1.msra.mxu0 %v516
    %1917 = vmatprep.subr.mxu0 %v525
    %1918 = vmatpush1.msra.mxu0 %v524
    %1919 = vmatprep.subr.mxu0 %v533
    %1920 = vmatpush1.msra.mxu0 %v532
    %1921 = vmatprep.subr.mxu0 %v541
    %1922 = vmatpush1.msra.mxu0 %v540
    %1923 = vmatprep.subr.mxu0 %v549
    %1924 = vmatpush1.msra.mxu0 %v548
    %1925 = vmatprep.subr.mxu0 %v557
    %1926 = vmatpush1.msra.mxu0 %v556
    %1927 = vmatprep.subr.mxu0 %v565
    %1928 = vmatpush1.msra.mxu0 %v564
    %1929 = vmatprep.subr.mxu0 %v573
    %1930 = vmatpush1.msra.mxu0 %v572
    %1931 = vmatprep.subr.mxu0 %v581
    %1932 = vmatpush1.msra.mxu0 %v580
    %1933 = vmatprep.subr.mxu0 %v589
    %1934 = vmatpush1.msra.mxu0 %v588
    %1935 = vmatprep.subr.mxu0 %v597
    %1936 = vmatpush1.msra.mxu0 %v596
    %1937 = vmatprep.subr.mxu0 %v605
    %1938 = vmatpush1.msra.mxu0 %v604
    %1939 = vmatprep.subr.mxu0 %v613
    %1940 = vmatpush1.msra.mxu0 %v612
    %1941 = vmatprep.subr.mxu0 %v621
    %1942 = vmatpush1.msra.mxu0 %v620
    %1943 = vmatprep.subr.mxu0 %v629
    %1944 = vmatpush1.msra.mxu0 %v628
    %1945 = vmatprep.subr.mxu0 %v637
    %1946 = vmatpush1.msra.mxu0 %v636
    %1947 = vmatprep.subr.mxu0 %v645
    %1948 = vmatpush1.msra.mxu0 %v644
    %1949 = vmatprep.mubr.f32.mxu0 %v1220
    %1950 = vmatmul.mubr.f32.gmra.mrb[0].mxu0 %v1218
    %v1951 = vpop.f32.mrb[0].mxu0
    %v1952 = vadd.f32 %v1881, %v1951
    %v1953 = vpop.f32.mrb[0].mxu0
    %v1954 = vadd.f32 %v1883, %v1953
    %1955 = vdwg.mxu0
    %1956 = vmatprep.subr.mxu0 %v653
    %1957 = vmatpush1.msra.mxu0 %v652
    %1958 = vmatprep.subr.mxu0 %v661
    %1959 = vmatpush1.msra.mxu0 %v660
    %1960 = vmatprep.subr.mxu0 %v669
    %1961 = vmatpush1.msra.mxu0 %v668
    %1962 = vmatprep.subr.mxu0 %v677
    %1963 = vmatpush1.msra.mxu0 %v676
    %1964 = vmatprep.subr.mxu0 %v685
    %1965 = vmatpush1.msra.mxu0 %v684
    %1966 = vmatprep.subr.mxu0 %v693
    %1967 = vmatpush1.msra.mxu0 %v692
    %1968 = vmatprep.subr.mxu0 %v701
    %1969 = vmatpush1.msra.mxu0 %v700
    %1970 = vmatprep.subr.mxu0 %v709
    %1971 = vmatpush1.msra.mxu0 %v708
    %1972 = vmatprep.subr.mxu0 %v717
    %1973 = vmatpush1.msra.mxu0 %v716
    %1974 = vmatprep.subr.mxu0 %v725
    %1975 = vmatpush1.msra.mxu0 %v724
    %1976 = vmatprep.subr.mxu0 %v733
    %1977 = vmatpush1.msra.mxu0 %v732
    %1978 = vmatprep.subr.mxu0 %v741
    %1979 = vmatpush1.msra.mxu0 %v740
    %1980 = vmatprep.subr.mxu0 %v749
    %1981 = vmatpush1.msra.mxu0 %v748
    %1982 = vmatprep.subr.mxu0 %v757
    %1983 = vmatpush1.msra.mxu0 %v756
    %1984 = vmatprep.subr.mxu0 %v765
    %1985 = vmatpush1.msra.mxu0 %v764
    %1986 = vmatprep.subr.mxu0 %v773
    %1987 = vmatpush1.msra.mxu0 %v772
    %1988 = vmatprep.subr.mxu0 %v781
    %1989 = vmatpush1.msra.mxu0 %v780
    %1990 = vmatprep.subr.mxu0 %v789
    %1991 = vmatpush1.msra.mxu0 %v788
    %1992 = vmatprep.subr.mxu0 %v797
    %1993 = vmatpush1.msra.mxu0 %v796
    %1994 = vmatprep.subr.mxu0 %v805
    %1995 = vmatpush1.msra.mxu0 %v804
    %1996 = vmatprep.subr.mxu0 %v813
    %1997 = vmatpush1.msra.mxu0 %v812
    %1998 = vmatprep.subr.mxu0 %v821
    %1999 = vmatpush1.msra.mxu0 %v820
    %2000 = vmatprep.subr.mxu0 %v829
    %2001 = vmatpush1.msra.mxu0 %v828
    %2002 = vmatprep.subr.mxu0 %v837
    %2003 = vmatpush1.msra.mxu0 %v836
    %2004 = vmatprep.subr.mxu0 %v845
    %2005 = vmatpush1.msra.mxu0 %v844
    %2006 = vmatprep.subr.mxu0 %v853
    %2007 = vmatpush1.msra.mxu0 %v852
    %2008 = vmatprep.subr.mxu0 %v861
    %2009 = vmatpush1.msra.mxu0 %v860
    %2010 = vmatprep.subr.mxu0 %v869
    %2011 = vmatpush1.msra.mxu0 %v868
    %2012 = vmatprep.subr.mxu0 %v877
    %2013 = vmatpush1.msra.mxu0 %v876
    %2014 = vmatprep.subr.mxu0 %v885
    %2015 = vmatpush1.msra.mxu0 %v884
    %2016 = vmatprep.subr.mxu0 %v893
    %2017 = vmatpush1.msra.mxu0 %v892
    %2018 = vmatprep.subr.mxu0 %v901
    %2019 = vmatpush1.msra.mxu0 %v900
    %2020 = vmatprep.mubr.f32.mxu0 %v1236
    %2021 = vmatmul.mubr.f32.gmra.mrb[0].mxu0 %v1228
    %v2022 = vpop.f32.mrb[0].mxu0
    %v2023 = vadd.f32 %v1952, %v2022
    %v2024 = vpop.f32.mrb[0].mxu0
    %v2025 = vadd.f32 %v1954, %v2024
    %2026 = vdwg.mxu0
    %2027 = vmatprep.subr.mxu0 %v909
    %2028 = vmatpush1.msra.mxu0 %v908
    %2029 = vmatprep.subr.mxu0 %v917
    %2030 = vmatpush1.msra.mxu0 %v916
    %2031 = vmatprep.subr.mxu0 %v925
    %2032 = vmatpush1.msra.mxu0 %v924
    %2033 = vmatprep.subr.mxu0 %v933
    %2034 = vmatpush1.msra.mxu0 %v932
    %2035 = vmatprep.subr.mxu0 %v941
    %2036 = vmatpush1.msra.mxu0 %v940
    %2037 = vmatprep.subr.mxu0 %v949
    %2038 = vmatpush1.msra.mxu0 %v948
    %2039 = vmatprep.subr.mxu0 %v957
    %2040 = vmatpush1.msra.mxu0 %v956
    %2041 = vmatprep.subr.mxu0 %v965
    %2042 = vmatpush1.msra.mxu0 %v964
    %2043 = vmatprep.subr.mxu0 %v973
    %2044 = vmatpush1.msra.mxu0 %v972
    %2045 = vmatprep.subr.mxu0 %v981
    %2046 = vmatpush1.msra.mxu0 %v980
    %2047 = vmatprep.subr.mxu0 %v989
    %2048 = vmatpush1.msra.mxu0 %v988
    %2049 = vmatprep.subr.mxu0 %v997
    %2050 = vmatpush1.msra.mxu0 %v996
    %2051 = vmatprep.subr.mxu0 %v1005
    %2052 = vmatpush1.msra.mxu0 %v1004
    %2053 = vmatprep.subr.mxu0 %v1013
    %2054 = vmatpush1.msra.mxu0 %v1012
    %2055 = vmatprep.subr.mxu0 %v1021
    %2056 = vmatpush1.msra.mxu0 %v1020
    %2057 = vmatprep.subr.mxu0 %v1029
    %2058 = vmatpush1.msra.mxu0 %v1028
    %2059 = vmatprep.subr.mxu0 %v1037
    %2060 = vmatpush1.msra.mxu0 %v1036
    %2061 = vmatprep.subr.mxu0 %v1045
    %2062 = vmatpush1.msra.mxu0 %v1044
    %2063 = vmatprep.subr.mxu0 %v1053
    %2064 = vmatpush1.msra.mxu0 %v1052
    %2065 = vmatprep.subr.mxu0 %v1061
    %2066 = vmatpush1.msra.mxu0 %v1060
    %2067 = vmatprep.subr.mxu0 %v1069
    %2068 = vmatpush1.msra.mxu0 %v1068
    %2069 = vmatprep.subr.mxu0 %v1077
    %2070 = vmatpush1.msra.mxu0 %v1076
    %2071 = vmatprep.subr.mxu0 %v1085
    %2072 = vmatpush1.msra.mxu0 %v1084
    %2073 = vmatprep.subr.mxu0 %v1093
    %2074 = vmatpush1.msra.mxu0 %v1092
    %2075 = vmatprep.subr.mxu0 %v1101
    %2076 = vmatpush1.msra.mxu0 %v1100
    %2077 = vmatprep.subr.mxu0 %v1109
    %2078 = vmatpush1.msra.mxu0 %v1108
    %2079 = vmatprep.subr.mxu0 %v1117
    %2080 = vmatpush1.msra.mxu0 %v1116
    %2081 = vmatprep.subr.mxu0 %v1125
    %2082 = vmatpush1.msra.mxu0 %v1124
    %2083 = vmatprep.subr.mxu0 %v1133
    %2084 = vmatpush1.msra.mxu0 %v1132
    %2085 = vmatprep.subr.mxu0 %v1141
    %2086 = vmatpush1.msra.mxu0 %v1140
    %2087 = vmatprep.subr.mxu0 %v1149
    %2088 = vmatpush1.msra.mxu0 %v1148
    %2089 = vmatprep.subr.mxu0 %v1157
    %2090 = vmatpush1.msra.mxu0 %v1156
    %2091 = vmatprep.mubr.f32.mxu0 %v1237
    %2092 = vmatmul.mubr.f32.gmra.mrb[0].mxu0 %v1235
    %v2093 = vpop.f32.mrb[0].mxu0
    %v2094 = vadd.f32 %v2023, %v2093
    %v2095 = vpop.f32.mrb[0].mxu0
    %v2096 = vadd.f32 %v2025, %v2095
    %2097 = vdwg.mxu0
    %2098 = vmatprep.subr.mxu0 %v143
    %2099 = vmatpush1.msra.mxu0 %v142
    %2100 = vmatprep.subr.mxu0 %v151
    %2101 = vmatpush1.msra.mxu0 %v150
    %2102 = vmatprep.subr.mxu0 %v159
    %2103 = vmatpush1.msra.mxu0 %v158
    %2104 = vmatprep.subr.mxu0 %v167
    %2105 = vmatpush1.msra.mxu0 %v166
    %2106 = vmatprep.subr.mxu0 %v175
    %2107 = vmatpush1.msra.mxu0 %v174
    %2108 = vmatprep.subr.mxu0 %v183
    %2109 = vmatpush1.msra.mxu0 %v182
    %2110 = vmatprep.subr.mxu0 %v191
    %2111 = vmatpush1.msra.mxu0 %v190
    %2112 = vmatprep.subr.mxu0 %v199
    %2113 = vmatpush1.msra.mxu0 %v198
    %2114 = vmatprep.subr.mxu0 %v207
    %2115 = vmatpush1.msra.mxu0 %v206
    %2116 = vmatprep.subr.mxu0 %v215
    %2117 = vmatpush1.msra.mxu0 %v214
    %2118 = vmatprep.subr.mxu0 %v223
    %2119 = vmatpush1.msra.mxu0 %v222
    %2120 = vmatprep.subr.mxu0 %v231
    %2121 = vmatpush1.msra.mxu0 %v230
    %2122 = vmatprep.subr.mxu0 %v239
    %2123 = vmatpush1.msra.mxu0 %v238
    %2124 = vmatprep.subr.mxu0 %v247
    %2125 = vmatpush1.msra.mxu0 %v246
    %2126 = vmatprep.subr.mxu0 %v255
    %2127 = vmatpush1.msra.mxu0 %v254
    %2128 = vmatprep.subr.mxu0 %v263
    %2129 = vmatpush1.msra.mxu0 %v262
    %2130 = vmatprep.subr.mxu0 %v271
    %2131 = vmatpush1.msra.mxu0 %v270
    %2132 = vmatprep.subr.mxu0 %v279
    %2133 = vmatpush1.msra.mxu0 %v278
    %2134 = vmatprep.subr.mxu0 %v287
    %2135 = vmatpush1.msra.mxu0 %v286
    %2136 = vmatprep.subr.mxu0 %v295
    %2137 = vmatpush1.msra.mxu0 %v294
    %2138 = vmatprep.subr.mxu0 %v303
    %2139 = vmatpush1.msra.mxu0 %v302
    %2140 = vmatprep.subr.mxu0 %v311
    %2141 = vmatpush1.msra.mxu0 %v310
    %2142 = vmatprep.subr.mxu0 %v319
    %2143 = vmatpush1.msra.mxu0 %v318
    %2144 = vmatprep.subr.mxu0 %v327
    %2145 = vmatpush1.msra.mxu0 %v326
    %2146 = vmatprep.subr.mxu0 %v335
    %2147 = vmatpush1.msra.mxu0 %v334
    %2148 = vmatprep.subr.mxu0 %v343
    %2149 = vmatpush1.msra.mxu0 %v342
    %2150 = vmatprep.subr.mxu0 %v351
    %2151 = vmatpush1.msra.mxu0 %v350
    %2152 = vmatprep.subr.mxu0 %v359
    %2153 = vmatpush1.msra.mxu0 %v358
    %2154 = vmatprep.subr.mxu0 %v367
    %2155 = vmatpush1.msra.mxu0 %v366
    %2156 = vmatprep.subr.mxu0 %v375
    %2157 = vmatpush1.msra.mxu0 %v374
    %2158 = vmatprep.subr.mxu0 %v383
    %2159 = vmatpush1.msra.mxu0 %v382
    %2160 = vmatprep.subr.mxu0 %v391
    %2161 = vmatpush1.msra.mxu0 %v390
    %2162 = vmatprep.mubr.f32.mxu0 %v1219
    %2163 = vmatmul.mubr.f32.gmra.mrb[0].mxu0 %v1211
    %v2164 = vpop.f32.mrb[0].mxu0
    %v2165 = vadd.f32 %v1189, %v2164
    %v2166 = vpop.f32.mrb[0].mxu0
    %v2167 = vadd.f32 %v1193, %v2166
    %2168 = vdwg.mxu0
    %2169 = vmatprep.subr.mxu0 %v399
    %2170 = vmatpush1.msra.mxu0 %v398
    %2171 = vmatprep.subr.mxu0 %v407
    %2172 = vmatpush1.msra.mxu0 %v406
    %2173 = vmatprep.subr.mxu0 %v415
    %2174 = vmatpush1.msra.mxu0 %v414
    %2175 = vmatprep.subr.mxu0 %v423
    %2176 = vmatpush1.msra.mxu0 %v422
    %2177 = vmatprep.subr.mxu0 %v431
    %2178 = vmatpush1.msra.mxu0 %v430
    %2179 = vmatprep.subr.mxu0 %v439
    %2180 = vmatpush1.msra.mxu0 %v438
    %2181 = vmatprep.subr.mxu0 %v447
    %2182 = vmatpush1.msra.mxu0 %v446
    %2183 = vmatprep.subr.mxu0 %v455
    %2184 = vmatpush1.msra.mxu0 %v454
    %2185 = vmatprep.subr.mxu0 %v463
    %2186 = vmatpush1.msra.mxu0 %v462
    %2187 = vmatprep.subr.mxu0 %v471
    %2188 = vmatpush1.msra.mxu0 %v470
    %2189 = vmatprep.subr.mxu0 %v479
    %2190 = vmatpush1.msra.mxu0 %v478
    %2191 = vmatprep.subr.mxu0 %v487
    %2192 = vmatpush1.msra.mxu0 %v486
    %2193 = vmatprep.subr.mxu0 %v495
    %2194 = vmatpush1.msra.mxu0 %v494
    %2195 = vmatprep.subr.mxu0 %v503
    %2196 = vmatpush1.msra.mxu0 %v502
    %2197 = vmatprep.subr.mxu0 %v511
    %2198 = vmatpush1.msra.mxu0 %v510
    %2199 = vmatprep.subr.mxu0 %v519
    %2200 = vmatpush1.msra.mxu0 %v518
    %2201 = vmatprep.subr.mxu0 %v527
    %2202 = vmatpush1.msra.mxu0 %v526
    %2203 = vmatprep.subr.mxu0 %v535
    %2204 = vmatpush1.msra.mxu0 %v534
    %2205 = vmatprep.subr.mxu0 %v543
    %2206 = vmatpush1.msra.mxu0 %v542
    %2207 = vmatprep.subr.mxu0 %v551
    %2208 = vmatpush1.msra.mxu0 %v550
    %2209 = vmatprep.subr.mxu0 %v559
    %2210 = vmatpush1.msra.mxu0 %v558
    %2211 = vmatprep.subr.mxu0 %v567
    %2212 = vmatpush1.msra.mxu0 %v566
    %2213 = vmatprep.subr.mxu0 %v575
    %2214 = vmatpush1.msra.mxu0 %v574
    %2215 = vmatprep.subr.mxu0 %v583
    %2216 = vmatpush1.msra.mxu0 %v582
    %2217 = vmatprep.subr.mxu0 %v591
    %2218 = vmatpush1.msra.mxu0 %v590
    %2219 = vmatprep.subr.mxu0 %v599
    %2220 = vmatpush1.msra.mxu0 %v598
    %2221 = vmatprep.subr.mxu0 %v607
    %2222 = vmatpush1.msra.mxu0 %v606
    %2223 = vmatprep.subr.mxu0 %v615
    %2224 = vmatpush1.msra.mxu0 %v614
    %2225 = vmatprep.subr.mxu0 %v623
    %2226 = vmatpush1.msra.mxu0 %v622
    %2227 = vmatprep.subr.mxu0 %v631
    %2228 = vmatpush1.msra.mxu0 %v630
    %2229 = vmatprep.subr.mxu0 %v639
    %2230 = vmatpush1.msra.mxu0 %v638
    %2231 = vmatprep.subr.mxu0 %v647
    %2232 = vmatpush1.msra.mxu0 %v646
    %2233 = vmatprep.mubr.f32.mxu0 %v1220
    %2234 = vmatmul.mubr.f32.gmra.mrb[0].mxu0 %v1218
    %v2235 = vpop.f32.mrb[0].mxu0
    %v2236 = vadd.f32 %v2165, %v2235
    %v2237 = vpop.f32.mrb[0].mxu0
    %v2238 = vadd.f32 %v2167, %v2237
    %2239 = vdwg.mxu0
    %2240 = vmatprep.subr.mxu0 %v655
    %2241 = vmatpush1.msra.mxu0 %v654
    %2242 = vmatprep.subr.mxu0 %v663
    %2243 = vmatpush1.msra.mxu0 %v662
    %2244 = vmatprep.subr.mxu0 %v671
    %2245 = vmatpush1.msra.mxu0 %v670
    %2246 = vmatprep.subr.mxu0 %v679
    %2247 = vmatpush1.msra.mxu0 %v678
    %2248 = vmatprep.subr.mxu0 %v687
    %2249 = vmatpush1.msra.mxu0 %v686
    %2250 = vmatprep.subr.mxu0 %v695
    %2251 = vmatpush1.msra.mxu0 %v694
    %2252 = vmatprep.subr.mxu0 %v703
    %2253 = vmatpush1.msra.mxu0 %v702
    %2254 = vmatprep.subr.mxu0 %v711
    %2255 = vmatpush1.msra.mxu0 %v710
    %2256 = vmatprep.subr.mxu0 %v719
    %2257 = vmatpush1.msra.mxu0 %v718
    %2258 = vmatprep.subr.mxu0 %v727
    %2259 = vmatpush1.msra.mxu0 %v726
    %2260 = vmatprep.subr.mxu0 %v735
    %2261 = vmatpush1.msra.mxu0 %v734
    %2262 = vmatprep.subr.mxu0 %v743
    %2263 = vmatpush1.msra.mxu0 %v742
    %2264 = vmatprep.subr.mxu0 %v751
    %2265 = vmatpush1.msra.mxu0 %v750
    %2266 = vmatprep.subr.mxu0 %v759
    %2267 = vmatpush1.msra.mxu0 %v758
    %2268 = vmatprep.subr.mxu0 %v767
    %2269 = vmatpush1.msra.mxu0 %v766
    %2270 = vmatprep.subr.mxu0 %v775
    %2271 = vmatpush1.msra.mxu0 %v774
    %2272 = vmatprep.subr.mxu0 %v783
    %2273 = vmatpush1.msra.mxu0 %v782
    %2274 = vmatprep.subr.mxu0 %v791
    %2275 = vmatpush1.msra.mxu0 %v790
    %2276 = vmatprep.subr.mxu0 %v799
    %2277 = vmatpush1.msra.mxu0 %v798
    %2278 = vmatprep.subr.mxu0 %v807
    %2279 = vmatpush1.msra.mxu0 %v806
    %2280 = vmatprep.subr.mxu0 %v815
    %2281 = vmatpush1.msra.mxu0 %v814
    %2282 = vmatprep.subr.mxu0 %v823
    %2283 = vmatpush1.msra.mxu0 %v822
    %2284 = vmatprep.subr.mxu0 %v831
    %2285 = vmatpush1.msra.mxu0 %v830
    %2286 = vmatprep.subr.mxu0 %v839
    %2287 = vmatpush1.msra.mxu0 %v838
    %2288 = vmatprep.subr.mxu0 %v847
    %2289 = vmatpush1.msra.mxu0 %v846
    %2290 = vmatprep.subr.mxu0 %v855
    %2291 = vmatpush1.msra.mxu0 %v854
    %2292 = vmatprep.subr.mxu0 %v863
    %2293 = vmatpush1.msra.mxu0 %v862
    %2294 = vmatprep.subr.mxu0 %v871
    %2295 = vmatpush1.msra.mxu0 %v870
    %2296 = vmatprep.subr.mxu0 %v879
    %2297 = vmatpush1.msra.mxu0 %v878
    %2298 = vmatprep.subr.mxu0 %v887
    %2299 = vmatpush1.msra.mxu0 %v886
    %2300 = vmatprep.subr.mxu0 %v895
    %2301 = vmatpush1.msra.mxu0 %v894
    %2302 = vmatprep.subr.mxu0 %v903
    %2303 = vmatpush1.msra.mxu0 %v902
    %2304 = vmatprep.mubr.f32.mxu0 %v1236
    %2305 = vmatmul.mubr.f32.gmra.mrb[0].mxu0 %v1228
    %v2306 = vpop.f32.mrb[0].mxu0
    %v2307 = vadd.f32 %v2236, %v2306
    %v2308 = vpop.f32.mrb[0].mxu0
    %v2309 = vadd.f32 %v2238, %v2308
    %2310 = vdwg.mxu0
    %2311 = vmatprep.subr.mxu0 %v911
    %2312 = vmatpush1.msra.mxu0 %v910
    %2313 = vmatprep.subr.mxu0 %v919
    %2314 = vmatpush1.msra.mxu0 %v918
    %2315 = vmatprep.subr.mxu0 %v927
    %2316 = vmatpush1.msra.mxu0 %v926
    %2317 = vmatprep.subr.mxu0 %v935
    %2318 = vmatpush1.msra.mxu0 %v934
    %2319 = vmatprep.subr.mxu0 %v943
    %2320 = vmatpush1.msra.mxu0 %v942
    %2321 = vmatprep.subr.mxu0 %v951
    %2322 = vmatpush1.msra.mxu0 %v950
    %2323 = vmatprep.subr.mxu0 %v959
    %2324 = vmatpush1.msra.mxu0 %v958
    %2325 = vmatprep.subr.mxu0 %v967
    %2326 = vmatpush1.msra.mxu0 %v966
    %2327 = vmatprep.subr.mxu0 %v975
    %2328 = vmatpush1.msra.mxu0 %v974
    %2329 = vmatprep.subr.mxu0 %v983
    %2330 = vmatpush1.msra.mxu0 %v982
    %2331 = vmatprep.subr.mxu0 %v991
    %2332 = vmatpush1.msra.mxu0 %v990
    %2333 = vmatprep.subr.mxu0 %v999
    %2334 = vmatpush1.msra.mxu0 %v998
    %2335 = vmatprep.subr.mxu0 %v1007
    %2336 = vmatpush1.msra.mxu0 %v1006
    %2337 = vmatprep.subr.mxu0 %v1015
    %2338 = vmatpush1.msra.mxu0 %v1014
    %2339 = vmatprep.subr.mxu0 %v1023
    %2340 = vmatpush1.msra.mxu0 %v1022
    %2341 = vmatprep.subr.mxu0 %v1031
    %2342 = vmatpush1.msra.mxu0 %v1030
    %2343 = vmatprep.subr.mxu0 %v1039
    %2344 = vmatpush1.msra.mxu0 %v1038
    %2345 = vmatprep.subr.mxu0 %v1047
    %2346 = vmatpush1.msra.mxu0 %v1046
    %2347 = vmatprep.subr.mxu0 %v1055
    %2348 = vmatpush1.msra.mxu0 %v1054
    %2349 = vmatprep.subr.mxu0 %v1063
    %2350 = vmatpush1.msra.mxu0 %v1062
    %2351 = vmatprep.subr.mxu0 %v1071
    %2352 = vmatpush1.msra.mxu0 %v1070
    %2353 = vmatprep.subr.mxu0 %v1079
    %2354 = vmatpush1.msra.mxu0 %v1078
    %2355 = vmatprep.subr.mxu0 %v1087
    %2356 = vmatpush1.msra.mxu0 %v1086
    %2357 = vmatprep.subr.mxu0 %v1095
    %2358 = vmatpush1.msra.mxu0 %v1094
    %2359 = vmatprep.subr.mxu0 %v1103
    %2360 = vmatpush1.msra.mxu0 %v1102
    %2361 = vmatprep.subr.mxu0 %v1111
    %2362 = vmatpush1.msra.mxu0 %v1110
    %2363 = vmatprep.subr.mxu0 %v1119
    %2364 = vmatpush1.msra.mxu0 %v1118
    %2365 = vmatprep.subr.mxu0 %v1127
    %2366 = vmatpush1.msra.mxu0 %v1126
    %2367 = vmatprep.subr.mxu0 %v1135
    %2368 = vmatpush1.msra.mxu0 %v1134
    %2369 = vmatprep.subr.mxu0 %v1143
    %2370 = vmatpush1.msra.mxu0 %v1142
    %2371 = vmatprep.subr.mxu0 %v1151
    %2372 = vmatpush1.msra.mxu0 %v1150
    %2373 = vmatprep.subr.mxu0 %v1159
    %2374 = vmatpush1.msra.mxu0 %v1158
    %2375 = vmatprep.mubr.f32.mxu0 %v1237
    %2376 = vmatmul.mubr.f32.gmra.mrb[0].mxu0 %v1235
    %v2377 = vpop.f32.mrb[0].mxu0
    %v2378 = vadd.f32 %v2307, %v2377
    %v2379 = vpop.f32.mrb[0].mxu0
    %v2380 = vadd.f32 %v2309, %v2379
    %2381 = vdwg.mxu0
    %v2382 = vmax.f32 %v1526, 0.0
    %v2383 = vmax.f32 %v1528, 0.0
    %v2384 = vmax.f32 %v1810, 0.0
    %v2385 = vmax.f32 %v1812, 0.0
    %v2386 = vmax.f32 %v2094, 0.0
    %v2387 = vmax.f32 %v2096, 0.0
    %v2388 = vmax.f32 %v2378, 0.0
    %v2389 = vmax.f32 %v2380, 0.0
    %v2390 = vld [vmem:[#allocation8] sm:$0xff]
    %v2391 = vld [vmem:[#allocation8 + $0x8] sm:$0xff]
    %v2392 = vld [vmem:[#allocation8 + $0x10] sm:$0xff]
    %v2393 = vld [vmem:[#allocation8 + $0x18] sm:$0xff]
    %v2394 = vld [vmem:[#allocation8 + $0x20] sm:$0xff]
    %v2395 = vld [vmem:[#allocation8 + $0x28] sm:$0xff]
    %v2396 = vld [vmem:[#allocation8 + $0x30] sm:$0xff]
    %v2397 = vld [vmem:[#allocation8 + $0x38] sm:$0xff]
    %v2398 = vld [vmem:[#allocation8 + $0x40] sm:$0xff]
    %v2399 = vld [vmem:[#allocation8 + $0x48] sm:$0xff]
    %v2400 = vld [vmem:[#allocation8 + $0x50] sm:$0xff]
    %v2401 = vld [vmem:[#allocation8 + $0x58] sm:$0xff]
    %v2402 = vld [vmem:[#allocation8 + $0x60] sm:$0xff]
    %v2403 = vld [vmem:[#allocation8 + $0x68] sm:$0xff]
    %v2404 = vld [vmem:[#allocation8 + $0x70] sm:$0xff]
    %v2405 = vld [vmem:[#allocation8 + $0x78] sm:$0xff]
    %v2406 = vld [vmem:[#allocation8 + $0x80] sm:$0xff]
    %v2407 = vld [vmem:[#allocation8 + $0x88] sm:$0xff]
    %v2408 = vld [vmem:[#allocation8 + $0x90] sm:$0xff]
    %v2409 = vld [vmem:[#allocation8 + $0x98] sm:$0xff]
    %v2410 = vld [vmem:[#allocation8 + $0xa0] sm:$0xff]
    %v2411 = vld [vmem:[#allocation8 + $0xa8] sm:$0xff]
    %v2412 = vld [vmem:[#allocation8 + $0xb0] sm:$0xff]
    %v2413 = vld [vmem:[#allocation8 + $0xb8] sm:$0xff]
    %v2414 = vld [vmem:[#allocation8 + $0xc0] sm:$0xff]
    %v2415 = vld [vmem:[#allocation8 + $0xc8] sm:$0xff]
    %v2416 = vld [vmem:[#allocation8 + $0xd0] sm:$0xff]
    %v2417 = vld [vmem:[#allocation8 + $0xd8] sm:$0xff]
    %v2418 = vld [vmem:[#allocation8 + $0xe0] sm:$0xff]
    %v2419 = vld [vmem:[#allocation8 + $0xe8] sm:$0xff]
    %v2420 = vld [vmem:[#allocation8 + $0xf0] sm:$0xff]
    %v2421 = vld [vmem:[#allocation8 + $0xf8] sm:$0xff]
    %v2422 = vld [vmem:[#allocation8 + $0x100] sm:$0xff]
    %v2423 = vld [vmem:[#allocation8 + $0x108] sm:$0xff]
    %v2424 = vld [vmem:[#allocation8 + $0x110] sm:$0xff]
    %v2425 = vld [vmem:[#allocation8 + $0x118] sm:$0xff]
    %v2426 = vld [vmem:[#allocation8 + $0x120] sm:$0xff]
    %v2427 = vld [vmem:[#allocation8 + $0x128] sm:$0xff]
    %v2428 = vld [vmem:[#allocation8 + $0x130] sm:$0xff]
    %v2429 = vld [vmem:[#allocation8 + $0x138] sm:$0xff]
    %v2430 = vld [vmem:[#allocation8 + $0x140] sm:$0xff]
    %v2431 = vld [vmem:[#allocation8 + $0x148] sm:$0xff]
    %v2432 = vld [vmem:[#allocation8 + $0x150] sm:$0xff]
    %v2433 = vld [vmem:[#allocation8 + $0x158] sm:$0xff]
    %v2434 = vld [vmem:[#allocation8 + $0x160] sm:$0xff]
    %v2435 = vld [vmem:[#allocation8 + $0x168] sm:$0xff]
    %v2436 = vld [vmem:[#allocation8 + $0x170] sm:$0xff]
    %v2437 = vld [vmem:[#allocation8 + $0x178] sm:$0xff]
    %v2438 = vld [vmem:[#allocation8 + $0x180] sm:$0xff]
    %v2439 = vld [vmem:[#allocation8 + $0x188] sm:$0xff]
    %v2440 = vld [vmem:[#allocation8 + $0x190] sm:$0xff]
    %v2441 = vld [vmem:[#allocation8 + $0x198] sm:$0xff]
    %v2442 = vld [vmem:[#allocation8 + $0x1a0] sm:$0xff]
    %v2443 = vld [vmem:[#allocation8 + $0x1a8] sm:$0xff]
    %v2444 = vld [vmem:[#allocation8 + $0x1b0] sm:$0xff]
    %v2445 = vld [vmem:[#allocation8 + $0x1b8] sm:$0xff]
    %v2446 = vld [vmem:[#allocation8 + $0x1c0] sm:$0xff]
    %v2447 = vld [vmem:[#allocation8 + $0x1c8] sm:$0xff]
    %v2448 = vld [vmem:[#allocation8 + $0x1d0] sm:$0xff]
    %v2449 = vld [vmem:[#allocation8 + $0x1d8] sm:$0xff]
    %v2450 = vld [vmem:[#allocation8 + $0x1e0] sm:$0xff]
    %v2451 = vld [vmem:[#allocation8 + $0x1e8] sm:$0xff]
    %v2452 = vld [vmem:[#allocation8 + $0x1f0] sm:$0xff]
    %v2453 = vld [vmem:[#allocation8 + $0x1f8] sm:$0xff]
    %v2454 = vld [vmem:[#allocation8 + $0x200] sm:$0xff]
    %v2455 = vld [vmem:[#allocation8 + $0x208] sm:$0xff]
    %v2456 = vld [vmem:[#allocation8 + $0x210] sm:$0xff]
    %v2457 = vld [vmem:[#allocation8 + $0x218] sm:$0xff]
    %v2458 = vld [vmem:[#allocation8 + $0x220] sm:$0xff]
    %v2459 = vld [vmem:[#allocation8 + $0x228] sm:$0xff]
    %v2460 = vld [vmem:[#allocation8 + $0x230] sm:$0xff]
    %v2461 = vld [vmem:[#allocation8 + $0x238] sm:$0xff]
    %v2462 = vld [vmem:[#allocation8 + $0x240] sm:$0xff]
    %v2463 = vld [vmem:[#allocation8 + $0x248] sm:$0xff]
    %v2464 = vld [vmem:[#allocation8 + $0x250] sm:$0xff]
    %v2465 = vld [vmem:[#allocation8 + $0x258] sm:$0xff]
    %v2466 = vld [vmem:[#allocation8 + $0x260] sm:$0xff]
    %v2467 = vld [vmem:[#allocation8 + $0x268] sm:$0xff]
    %v2468 = vld [vmem:[#allocation8 + $0x270] sm:$0xff]
    %v2469 = vld [vmem:[#allocation8 + $0x278] sm:$0xff]
    %v2470 = vld [vmem:[#allocation8 + $0x280] sm:$0xff]
    %v2471 = vld [vmem:[#allocation8 + $0x288] sm:$0xff]
    %v2472 = vld [vmem:[#allocation8 + $0x290] sm:$0xff]
    %v2473 = vld [vmem:[#allocation8 + $0x298] sm:$0xff]
    %v2474 = vld [vmem:[#allocation8 + $0x2a0] sm:$0xff]
    %v2475 = vld [vmem:[#allocation8 + $0x2a8] sm:$0xff]
    %v2476 = vld [vmem:[#allocation8 + $0x2b0] sm:$0xff]
    %v2477 = vld [vmem:[#allocation8 + $0x2b8] sm:$0xff]
    %v2478 = vld [vmem:[#allocation8 + $0x2c0] sm:$0xff]
    %v2479 = vld [vmem:[#allocation8 + $0x2c8] sm:$0xff]
    %v2480 = vld [vmem:[#allocation8 + $0x2d0] sm:$0xff]
    %v2481 = vld [vmem:[#allocation8 + $0x2d8] sm:$0xff]
    %v2482 = vld [vmem:[#allocation8 + $0x2e0] sm:$0xff]
    %v2483 = vld [vmem:[#allocation8 + $0x2e8] sm:$0xff]
    %v2484 = vld [vmem:[#allocation8 + $0x2f0] sm:$0xff]
    %v2485 = vld [vmem:[#allocation8 + $0x2f8] sm:$0xff]
    %v2486 = vld [vmem:[#allocation8 + $0x300] sm:$0xff]
    %v2487 = vld [vmem:[#allocation8 + $0x308] sm:$0xff]
    %v2488 = vld [vmem:[#allocation8 + $0x310] sm:$0xff]
    %v2489 = vld [vmem:[#allocation8 + $0x318] sm:$0xff]
    %v2490 = vld [vmem:[#allocation8 + $0x320] sm:$0xff]
    %v2491 = vld [vmem:[#allocation8 + $0x328] sm:$0xff]
    %v2492 = vld [vmem:[#allocation8 + $0x330] sm:$0xff]
    %v2493 = vld [vmem:[#allocation8 + $0x338] sm:$0xff]
    %v2494 = vld [vmem:[#allocation8 + $0x340] sm:$0xff]
    %v2495 = vld [vmem:[#allocation8 + $0x348] sm:$0xff]
    %v2496 = vld [vmem:[#allocation8 + $0x350] sm:$0xff]
    %v2497 = vld [vmem:[#allocation8 + $0x358] sm:$0xff]
    %v2498 = vld [vmem:[#allocation8 + $0x360] sm:$0xff]
    %v2499 = vld [vmem:[#allocation8 + $0x368] sm:$0xff]
    %v2500 = vld [vmem:[#allocation8 + $0x370] sm:$0xff]
    %v2501 = vld [vmem:[#allocation8 + $0x378] sm:$0xff]
    %v2502 = vld [vmem:[#allocation8 + $0x380] sm:$0xff]
    %v2503 = vld [vmem:[#allocation8 + $0x388] sm:$0xff]
    %v2504 = vld [vmem:[#allocation8 + $0x390] sm:$0xff]
    %v2505 = vld [vmem:[#allocation8 + $0x398] sm:$0xff]
    %v2506 = vld [vmem:[#allocation8 + $0x3a0] sm:$0xff]
    %v2507 = vld [vmem:[#allocation8 + $0x3a8] sm:$0xff]
    %v2508 = vld [vmem:[#allocation8 + $0x3b0] sm:$0xff]
    %v2509 = vld [vmem:[#allocation8 + $0x3b8] sm:$0xff]
    %v2510 = vld [vmem:[#allocation8 + $0x3c0] sm:$0xff]
    %v2511 = vld [vmem:[#allocation8 + $0x3c8] sm:$0xff]
    %v2512 = vld [vmem:[#allocation8 + $0x3d0] sm:$0xff]
    %v2513 = vld [vmem:[#allocation8 + $0x3d8] sm:$0xff]
    %v2514 = vld [vmem:[#allocation8 + $0x3e0] sm:$0xff]
    %v2515 = vld [vmem:[#allocation8 + $0x3e8] sm:$0xff]
    %v2516 = vld [vmem:[#allocation8 + $0x3f0] sm:$0xff]
    %v2517 = vld [vmem:[#allocation8 + $0x3f8] sm:$0xff]
    %v2518 = vld [vmem:[#allocation8 + $0x400] sm:$0xff]
    %v2519 = vld [vmem:[#allocation8 + $0x408] sm:$0xff]
    %v2520 = vld [vmem:[#allocation8 + $0x410] sm:$0xff]
    %v2521 = vld [vmem:[#allocation8 + $0x418] sm:$0xff]
    %v2522 = vld [vmem:[#allocation8 + $0x420] sm:$0xff]
    %v2523 = vld [vmem:[#allocation8 + $0x428] sm:$0xff]
    %v2524 = vld [vmem:[#allocation8 + $0x430] sm:$0xff]
    %v2525 = vld [vmem:[#allocation8 + $0x438] sm:$0xff]
    %v2526 = vld [vmem:[#allocation8 + $0x440] sm:$0xff]
    %v2527 = vld [vmem:[#allocation8 + $0x448] sm:$0xff]
    %v2528 = vld [vmem:[#allocation8 + $0x450] sm:$0xff]
    %v2529 = vld [vmem:[#allocation8 + $0x458] sm:$0xff]
    %v2530 = vld [vmem:[#allocation8 + $0x460] sm:$0xff]
    %v2531 = vld [vmem:[#allocation8 + $0x468] sm:$0xff]
    %v2532 = vld [vmem:[#allocation8 + $0x470] sm:$0xff]
    %v2533 = vld [vmem:[#allocation8 + $0x478] sm:$0xff]
    %v2534 = vld [vmem:[#allocation8 + $0x480] sm:$0xff]
    %v2535 = vld [vmem:[#allocation8 + $0x488] sm:$0xff]
    %v2536 = vld [vmem:[#allocation8 + $0x490] sm:$0xff]
    %v2537 = vld [vmem:[#allocation8 + $0x498] sm:$0xff]
    %v2538 = vld [vmem:[#allocation8 + $0x4a0] sm:$0xff]
    %v2539 = vld [vmem:[#allocation8 + $0x4a8] sm:$0xff]
    %v2540 = vld [vmem:[#allocation8 + $0x4b0] sm:$0xff]
    %v2541 = vld [vmem:[#allocation8 + $0x4b8] sm:$0xff]
    %v2542 = vld [vmem:[#allocation8 + $0x4c0] sm:$0xff]
    %v2543 = vld [vmem:[#allocation8 + $0x4c8] sm:$0xff]
    %v2544 = vld [vmem:[#allocation8 + $0x4d0] sm:$0xff]
    %v2545 = vld [vmem:[#allocation8 + $0x4d8] sm:$0xff]
    %v2546 = vld [vmem:[#allocation8 + $0x4e0] sm:$0xff]
    %v2547 = vld [vmem:[#allocation8 + $0x4e8] sm:$0xff]
    %v2548 = vld [vmem:[#allocation8 + $0x4f0] sm:$0xff]
    %v2549 = vld [vmem:[#allocation8 + $0x4f8] sm:$0xff]
    %v2550 = vld [vmem:[#allocation8 + $0x500] sm:$0xff]
    %v2551 = vld [vmem:[#allocation8 + $0x508] sm:$0xff]
    %v2552 = vld [vmem:[#allocation8 + $0x510] sm:$0xff]
    %v2553 = vld [vmem:[#allocation8 + $0x518] sm:$0xff]
    %v2554 = vld [vmem:[#allocation8 + $0x520] sm:$0xff]
    %v2555 = vld [vmem:[#allocation8 + $0x528] sm:$0xff]
    %v2556 = vld [vmem:[#allocation8 + $0x530] sm:$0xff]
    %v2557 = vld [vmem:[#allocation8 + $0x538] sm:$0xff]
    %v2558 = vld [vmem:[#allocation8 + $0x540] sm:$0xff]
    %v2559 = vld [vmem:[#allocation8 + $0x548] sm:$0xff]
    %v2560 = vld [vmem:[#allocation8 + $0x550] sm:$0xff]
    %v2561 = vld [vmem:[#allocation8 + $0x558] sm:$0xff]
    %v2562 = vld [vmem:[#allocation8 + $0x560] sm:$0xff]
    %v2563 = vld [vmem:[#allocation8 + $0x568] sm:$0xff]
    %v2564 = vld [vmem:[#allocation8 + $0x570] sm:$0xff]
    %v2565 = vld [vmem:[#allocation8 + $0x578] sm:$0xff]
    %v2566 = vld [vmem:[#allocation8 + $0x580] sm:$0xff]
    %v2567 = vld [vmem:[#allocation8 + $0x588] sm:$0xff]
    %v2568 = vld [vmem:[#allocation8 + $0x590] sm:$0xff]
    %v2569 = vld [vmem:[#allocation8 + $0x598] sm:$0xff]
    %v2570 = vld [vmem:[#allocation8 + $0x5a0] sm:$0xff]
    %v2571 = vld [vmem:[#allocation8 + $0x5a8] sm:$0xff]
    %v2572 = vld [vmem:[#allocation8 + $0x5b0] sm:$0xff]
    %v2573 = vld [vmem:[#allocation8 + $0x5b8] sm:$0xff]
    %v2574 = vld [vmem:[#allocation8 + $0x5c0] sm:$0xff]
    %v2575 = vld [vmem:[#allocation8 + $0x5c8] sm:$0xff]
    %v2576 = vld [vmem:[#allocation8 + $0x5d0] sm:$0xff]
    %v2577 = vld [vmem:[#allocation8 + $0x5d8] sm:$0xff]
    %v2578 = vld [vmem:[#allocation8 + $0x5e0] sm:$0xff]
    %v2579 = vld [vmem:[#allocation8 + $0x5e8] sm:$0xff]
    %v2580 = vld [vmem:[#allocation8 + $0x5f0] sm:$0xff]
    %v2581 = vld [vmem:[#allocation8 + $0x5f8] sm:$0xff]
    %v2582 = vld [vmem:[#allocation8 + $0x600] sm:$0xff]
    %v2583 = vld [vmem:[#allocation8 + $0x608] sm:$0xff]
    %v2584 = vld [vmem:[#allocation8 + $0x610] sm:$0xff]
    %v2585 = vld [vmem:[#allocation8 + $0x618] sm:$0xff]
    %v2586 = vld [vmem:[#allocation8 + $0x620] sm:$0xff]
    %v2587 = vld [vmem:[#allocation8 + $0x628] sm:$0xff]
    %v2588 = vld [vmem:[#allocation8 + $0x630] sm:$0xff]
    %v2589 = vld [vmem:[#allocation8 + $0x638] sm:$0xff]
    %v2590 = vld [vmem:[#allocation8 + $0x640] sm:$0xff]
    %v2591 = vld [vmem:[#allocation8 + $0x648] sm:$0xff]
    %v2592 = vld [vmem:[#allocation8 + $0x650] sm:$0xff]
    %v2593 = vld [vmem:[#allocation8 + $0x658] sm:$0xff]
    %v2594 = vld [vmem:[#allocation8 + $0x660] sm:$0xff]
    %v2595 = vld [vmem:[#allocation8 + $0x668] sm:$0xff]
    %v2596 = vld [vmem:[#allocation8 + $0x670] sm:$0xff]
    %v2597 = vld [vmem:[#allocation8 + $0x678] sm:$0xff]
    %v2598 = vld [vmem:[#allocation8 + $0x680] sm:$0xff]
    %v2599 = vld [vmem:[#allocation8 + $0x688] sm:$0xff]
    %v2600 = vld [vmem:[#allocation8 + $0x690] sm:$0xff]
    %v2601 = vld [vmem:[#allocation8 + $0x698] sm:$0xff]
    %v2602 = vld [vmem:[#allocation8 + $0x6a0] sm:$0xff]
    %v2603 = vld [vmem:[#allocation8 + $0x6a8] sm:$0xff]
    %v2604 = vld [vmem:[#allocation8 + $0x6b0] sm:$0xff]
    %v2605 = vld [vmem:[#allocation8 + $0x6b8] sm:$0xff]
    %v2606 = vld [vmem:[#allocation8 + $0x6c0] sm:$0xff]
    %v2607 = vld [vmem:[#allocation8 + $0x6c8] sm:$0xff]
    %v2608 = vld [vmem:[#allocation8 + $0x6d0] sm:$0xff]
    %v2609 = vld [vmem:[#allocation8 + $0x6d8] sm:$0xff]
    %v2610 = vld [vmem:[#allocation8 + $0x6e0] sm:$0xff]
    %v2611 = vld [vmem:[#allocation8 + $0x6e8] sm:$0xff]
    %v2612 = vld [vmem:[#allocation8 + $0x6f0] sm:$0xff]
    %v2613 = vld [vmem:[#allocation8 + $0x6f8] sm:$0xff]
    %v2614 = vld [vmem:[#allocation8 + $0x700] sm:$0xff]
    %v2615 = vld [vmem:[#allocation8 + $0x708] sm:$0xff]
    %v2616 = vld [vmem:[#allocation8 + $0x710] sm:$0xff]
    %v2617 = vld [vmem:[#allocation8 + $0x718] sm:$0xff]
    %v2618 = vld [vmem:[#allocation8 + $0x720] sm:$0xff]
    %v2619 = vld [vmem:[#allocation8 + $0x728] sm:$0xff]
    %v2620 = vld [vmem:[#allocation8 + $0x730] sm:$0xff]
    %v2621 = vld [vmem:[#allocation8 + $0x738] sm:$0xff]
    %v2622 = vld [vmem:[#allocation8 + $0x740] sm:$0xff]
    %v2623 = vld [vmem:[#allocation8 + $0x748] sm:$0xff]
    %v2624 = vld [vmem:[#allocation8 + $0x750] sm:$0xff]
    %v2625 = vld [vmem:[#allocation8 + $0x758] sm:$0xff]
    %v2626 = vld [vmem:[#allocation8 + $0x760] sm:$0xff]
    %v2627 = vld [vmem:[#allocation8 + $0x768] sm:$0xff]
    %v2628 = vld [vmem:[#allocation8 + $0x770] sm:$0xff]
    %v2629 = vld [vmem:[#allocation8 + $0x778] sm:$0xff]
    %v2630 = vld [vmem:[#allocation8 + $0x780] sm:$0xff]
    %v2631 = vld [vmem:[#allocation8 + $0x788] sm:$0xff]
    %v2632 = vld [vmem:[#allocation8 + $0x790] sm:$0xff]
    %v2633 = vld [vmem:[#allocation8 + $0x798] sm:$0xff]
    %v2634 = vld [vmem:[#allocation8 + $0x7a0] sm:$0xff]
    %v2635 = vld [vmem:[#allocation8 + $0x7a8] sm:$0xff]
    %v2636 = vld [vmem:[#allocation8 + $0x7b0] sm:$0xff]
    %v2637 = vld [vmem:[#allocation8 + $0x7b8] sm:$0xff]
    %v2638 = vld [vmem:[#allocation8 + $0x7c0] sm:$0xff]
    %v2639 = vld [vmem:[#allocation8 + $0x7c8] sm:$0xff]
    %v2640 = vld [vmem:[#allocation8 + $0x7d0] sm:$0xff]
    %v2641 = vld [vmem:[#allocation8 + $0x7d8] sm:$0xff]
    %v2642 = vld [vmem:[#allocation8 + $0x7e0] sm:$0xff]
    %v2643 = vld [vmem:[#allocation8 + $0x7e8] sm:$0xff]
    %v2644 = vld [vmem:[#allocation8 + $0x7f0] sm:$0xff]
    %v2645 = vld [vmem:[#allocation8 + $0x7f8] sm:$0xff]
    %v2646 = vld [vmem:[#allocation8 + $0x800] sm:$0xff]
    %v2647 = vld [vmem:[#allocation8 + $0x808] sm:$0xff]
    %v2648 = vld [vmem:[#allocation8 + $0x810] sm:$0xff]
    %v2649 = vld [vmem:[#allocation8 + $0x818] sm:$0xff]
    %v2650 = vld [vmem:[#allocation8 + $0x820] sm:$0xff]
    %v2651 = vld [vmem:[#allocation8 + $0x828] sm:$0xff]
    %v2652 = vld [vmem:[#allocation8 + $0x830] sm:$0xff]
    %v2653 = vld [vmem:[#allocation8 + $0x838] sm:$0xff]
    %v2654 = vld [vmem:[#allocation8 + $0x840] sm:$0xff]
    %v2655 = vld [vmem:[#allocation8 + $0x848] sm:$0xff]
    %v2656 = vld [vmem:[#allocation8 + $0x850] sm:$0xff]
    %v2657 = vld [vmem:[#allocation8 + $0x858] sm:$0xff]
    %v2658 = vld [vmem:[#allocation8 + $0x860] sm:$0xff]
    %v2659 = vld [vmem:[#allocation8 + $0x868] sm:$0xff]
    %v2660 = vld [vmem:[#allocation8 + $0x870] sm:$0xff]
    %v2661 = vld [vmem:[#allocation8 + $0x878] sm:$0xff]
    %v2662 = vld [vmem:[#allocation8 + $0x880] sm:$0xff]
    %v2663 = vld [vmem:[#allocation8 + $0x888] sm:$0xff]
    %v2664 = vld [vmem:[#allocation8 + $0x890] sm:$0xff]
    %v2665 = vld [vmem:[#allocation8 + $0x898] sm:$0xff]
    %v2666 = vld [vmem:[#allocation8 + $0x8a0] sm:$0xff]
    %v2667 = vld [vmem:[#allocation8 + $0x8a8] sm:$0xff]
    %v2668 = vld [vmem:[#allocation8 + $0x8b0] sm:$0xff]
    %v2669 = vld [vmem:[#allocation8 + $0x8b8] sm:$0xff]
    %v2670 = vld [vmem:[#allocation8 + $0x8c0] sm:$0xff]
    %v2671 = vld [vmem:[#allocation8 + $0x8c8] sm:$0xff]
    %v2672 = vld [vmem:[#allocation8 + $0x8d0] sm:$0xff]
    %v2673 = vld [vmem:[#allocation8 + $0x8d8] sm:$0xff]
    %v2674 = vld [vmem:[#allocation8 + $0x8e0] sm:$0xff]
    %v2675 = vld [vmem:[#allocation8 + $0x8e8] sm:$0xff]
    %v2676 = vld [vmem:[#allocation8 + $0x8f0] sm:$0xff]
    %v2677 = vld [vmem:[#allocation8 + $0x8f8] sm:$0xff]
    %v2678 = vld [vmem:[#allocation8 + $0x900] sm:$0xff]
    %v2679 = vld [vmem:[#allocation8 + $0x908] sm:$0xff]
    %v2680 = vld [vmem:[#allocation8 + $0x910] sm:$0xff]
    %v2681 = vld [vmem:[#allocation8 + $0x918] sm:$0xff]
    %v2682 = vld [vmem:[#allocation8 + $0x920] sm:$0xff]
    %v2683 = vld [vmem:[#allocation8 + $0x928] sm:$0xff]
    %v2684 = vld [vmem:[#allocation8 + $0x930] sm:$0xff]
    %v2685 = vld [vmem:[#allocation8 + $0x938] sm:$0xff]
    %v2686 = vld [vmem:[#allocation8 + $0x940] sm:$0xff]
    %v2687 = vld [vmem:[#allocation8 + $0x948] sm:$0xff]
    %v2688 = vld [vmem:[#allocation8 + $0x950] sm:$0xff]
    %v2689 = vld [vmem:[#allocation8 + $0x958] sm:$0xff]
    %v2690 = vld [vmem:[#allocation8 + $0x960] sm:$0xff]
    %v2691 = vld [vmem:[#allocation8 + $0x968] sm:$0xff]
    %v2692 = vld [vmem:[#allocation8 + $0x970] sm:$0xff]
    %v2693 = vld [vmem:[#allocation8 + $0x978] sm:$0xff]
    %v2694 = vld [vmem:[#allocation8 + $0x980] sm:$0xff]
    %v2695 = vld [vmem:[#allocation8 + $0x988] sm:$0xff]
    %v2696 = vld [vmem:[#allocation8 + $0x990] sm:$0xff]
    %v2697 = vld [vmem:[#allocation8 + $0x998] sm:$0xff]
    %v2698 = vld [vmem:[#allocation8 + $0x9a0] sm:$0xff]
    %v2699 = vld [vmem:[#allocation8 + $0x9a8] sm:$0xff]
    %v2700 = vld [vmem:[#allocation8 + $0x9b0] sm:$0xff]
    %v2701 = vld [vmem:[#allocation8 + $0x9b8] sm:$0xff]
    %v2702 = vld [vmem:[#allocation8 + $0x9c0] sm:$0xff]
    %v2703 = vld [vmem:[#allocation8 + $0x9c8] sm:$0xff]
    %v2704 = vld [vmem:[#allocation8 + $0x9d0] sm:$0xff]
    %v2705 = vld [vmem:[#allocation8 + $0x9d8] sm:$0xff]
    %v2706 = vld [vmem:[#allocation8 + $0x9e0] sm:$0xff]
    %v2707 = vld [vmem:[#allocation8 + $0x9e8] sm:$0xff]
    %v2708 = vld [vmem:[#allocation8 + $0x9f0] sm:$0xff]
    %v2709 = vld [vmem:[#allocation8 + $0x9f8] sm:$0xff]
    %v2710 = vld [vmem:[#allocation8 + $0xa00] sm:$0xff]
    %v2711 = vld [vmem:[#allocation8 + $0xa08] sm:$0xff]
    %v2712 = vld [vmem:[#allocation8 + $0xa10] sm:$0xff]
    %v2713 = vld [vmem:[#allocation8 + $0xa18] sm:$0xff]
    %v2714 = vld [vmem:[#allocation8 + $0xa20] sm:$0xff]
    %v2715 = vld [vmem:[#allocation8 + $0xa28] sm:$0xff]
    %v2716 = vld [vmem:[#allocation8 + $0xa30] sm:$0xff]
    %v2717 = vld [vmem:[#allocation8 + $0xa38] sm:$0xff]
    %v2718 = vld [vmem:[#allocation8 + $0xa40] sm:$0xff]
    %v2719 = vld [vmem:[#allocation8 + $0xa48] sm:$0xff]
    %v2720 = vld [vmem:[#allocation8 + $0xa50] sm:$0xff]
    %v2721 = vld [vmem:[#allocation8 + $0xa58] sm:$0xff]
    %v2722 = vld [vmem:[#allocation8 + $0xa60] sm:$0xff]
    %v2723 = vld [vmem:[#allocation8 + $0xa68] sm:$0xff]
    %v2724 = vld [vmem:[#allocation8 + $0xa70] sm:$0xff]
    %v2725 = vld [vmem:[#allocation8 + $0xa78] sm:$0xff]
    %v2726 = vld [vmem:[#allocation8 + $0xa80] sm:$0xff]
    %v2727 = vld [vmem:[#allocation8 + $0xa88] sm:$0xff]
    %v2728 = vld [vmem:[#allocation8 + $0xa90] sm:$0xff]
    %v2729 = vld [vmem:[#allocation8 + $0xa98] sm:$0xff]
    %v2730 = vld [vmem:[#allocation8 + $0xaa0] sm:$0xff]
    %v2731 = vld [vmem:[#allocation8 + $0xaa8] sm:$0xff]
    %v2732 = vld [vmem:[#allocation8 + $0xab0] sm:$0xff]
    %v2733 = vld [vmem:[#allocation8 + $0xab8] sm:$0xff]
    %v2734 = vld [vmem:[#allocation8 + $0xac0] sm:$0xff]
    %v2735 = vld [vmem:[#allocation8 + $0xac8] sm:$0xff]
    %v2736 = vld [vmem:[#allocation8 + $0xad0] sm:$0xff]
    %v2737 = vld [vmem:[#allocation8 + $0xad8] sm:$0xff]
    %v2738 = vld [vmem:[#allocation8 + $0xae0] sm:$0xff]
    %v2739 = vld [vmem:[#allocation8 + $0xae8] sm:$0xff]
    %v2740 = vld [vmem:[#allocation8 + $0xaf0] sm:$0xff]
    %v2741 = vld [vmem:[#allocation8 + $0xaf8] sm:$0xff]
    %v2742 = vld [vmem:[#allocation8 + $0xb00] sm:$0xff]
    %v2743 = vld [vmem:[#allocation8 + $0xb08] sm:$0xff]
    %v2744 = vld [vmem:[#allocation8 + $0xb10] sm:$0xff]
    %v2745 = vld [vmem:[#allocation8 + $0xb18] sm:$0xff]
    %v2746 = vld [vmem:[#allocation8 + $0xb20] sm:$0xff]
    %v2747 = vld [vmem:[#allocation8 + $0xb28] sm:$0xff]
    %v2748 = vld [vmem:[#allocation8 + $0xb30] sm:$0xff]
    %v2749 = vld [vmem:[#allocation8 + $0xb38] sm:$0xff]
    %v2750 = vld [vmem:[#allocation8 + $0xb40] sm:$0xff]
    %v2751 = vld [vmem:[#allocation8 + $0xb48] sm:$0xff]
    %v2752 = vld [vmem:[#allocation8 + $0xb50] sm:$0xff]
    %v2753 = vld [vmem:[#allocation8 + $0xb58] sm:$0xff]
    %v2754 = vld [vmem:[#allocation8 + $0xb60] sm:$0xff]
    %v2755 = vld [vmem:[#allocation8 + $0xb68] sm:$0xff]
    %v2756 = vld [vmem:[#allocation8 + $0xb70] sm:$0xff]
    %v2757 = vld [vmem:[#allocation8 + $0xb78] sm:$0xff]
    %v2758 = vld [vmem:[#allocation8 + $0xb80] sm:$0xff]
    %v2759 = vld [vmem:[#allocation8 + $0xb88] sm:$0xff]
    %v2760 = vld [vmem:[#allocation8 + $0xb90] sm:$0xff]
    %v2761 = vld [vmem:[#allocation8 + $0xb98] sm:$0xff]
    %v2762 = vld [vmem:[#allocation8 + $0xba0] sm:$0xff]
    %v2763 = vld [vmem:[#allocation8 + $0xba8] sm:$0xff]
    %v2764 = vld [vmem:[#allocation8 + $0xbb0] sm:$0xff]
    %v2765 = vld [vmem:[#allocation8 + $0xbb8] sm:$0xff]
    %v2766 = vld [vmem:[#allocation8 + $0xbc0] sm:$0xff]
    %v2767 = vld [vmem:[#allocation8 + $0xbc8] sm:$0xff]
    %v2768 = vld [vmem:[#allocation8 + $0xbd0] sm:$0xff]
    %v2769 = vld [vmem:[#allocation8 + $0xbd8] sm:$0xff]
    %v2770 = vld [vmem:[#allocation8 + $0xbe0] sm:$0xff]
    %v2771 = vld [vmem:[#allocation8 + $0xbe8] sm:$0xff]
    %v2772 = vld [vmem:[#allocation8 + $0xbf0] sm:$0xff]
    %v2773 = vld [vmem:[#allocation8 + $0xbf8] sm:$0xff]
    %v2774 = vld [vmem:[#allocation8 + $0xc00] sm:$0xff]
    %v2775 = vld [vmem:[#allocation8 + $0xc08] sm:$0xff]
    %v2776 = vld [vmem:[#allocation8 + $0xc10] sm:$0xff]
    %v2777 = vld [vmem:[#allocation8 + $0xc18] sm:$0xff]
    %v2778 = vld [vmem:[#allocation8 + $0xc20] sm:$0xff]
    %v2779 = vld [vmem:[#allocation8 + $0xc28] sm:$0xff]
    %v2780 = vld [vmem:[#allocation8 + $0xc30] sm:$0xff]
    %v2781 = vld [vmem:[#allocation8 + $0xc38] sm:$0xff]
    %v2782 = vld [vmem:[#allocation8 + $0xc40] sm:$0xff]
    %v2783 = vld [vmem:[#allocation8 + $0xc48] sm:$0xff]
    %v2784 = vld [vmem:[#allocation8 + $0xc50] sm:$0xff]
    %v2785 = vld [vmem:[#allocation8 + $0xc58] sm:$0xff]
    %v2786 = vld [vmem:[#allocation8 + $0xc60] sm:$0xff]
    %v2787 = vld [vmem:[#allocation8 + $0xc68] sm:$0xff]
    %v2788 = vld [vmem:[#allocation8 + $0xc70] sm:$0xff]
    %v2789 = vld [vmem:[#allocation8 + $0xc78] sm:$0xff]
    %v2790 = vld [vmem:[#allocation8 + $0xc80] sm:$0xff]
    %v2791 = vld [vmem:[#allocation8 + $0xc88] sm:$0xff]
    %v2792 = vld [vmem:[#allocation8 + $0xc90] sm:$0xff]
    %v2793 = vld [vmem:[#allocation8 + $0xc98] sm:$0xff]
    %v2794 = vld [vmem:[#allocation8 + $0xca0] sm:$0xff]
    %v2795 = vld [vmem:[#allocation8 + $0xca8] sm:$0xff]
    %v2796 = vld [vmem:[#allocation8 + $0xcb0] sm:$0xff]
    %v2797 = vld [vmem:[#allocation8 + $0xcb8] sm:$0xff]
    %v2798 = vld [vmem:[#allocation8 + $0xcc0] sm:$0xff]
    %v2799 = vld [vmem:[#allocation8 + $0xcc8] sm:$0xff]
    %v2800 = vld [vmem:[#allocation8 + $0xcd0] sm:$0xff]
    %v2801 = vld [vmem:[#allocation8 + $0xcd8] sm:$0xff]
    %v2802 = vld [vmem:[#allocation8 + $0xce0] sm:$0xff]
    %v2803 = vld [vmem:[#allocation8 + $0xce8] sm:$0xff]
    %v2804 = vld [vmem:[#allocation8 + $0xcf0] sm:$0xff]
    %v2805 = vld [vmem:[#allocation8 + $0xcf8] sm:$0xff]
    %v2806 = vld [vmem:[#allocation8 + $0xd00] sm:$0xff]
    %v2807 = vld [vmem:[#allocation8 + $0xd08] sm:$0xff]
    %v2808 = vld [vmem:[#allocation8 + $0xd10] sm:$0xff]
    %v2809 = vld [vmem:[#allocation8 + $0xd18] sm:$0xff]
    %v2810 = vld [vmem:[#allocation8 + $0xd20] sm:$0xff]
    %v2811 = vld [vmem:[#allocation8 + $0xd28] sm:$0xff]
    %v2812 = vld [vmem:[#allocation8 + $0xd30] sm:$0xff]
    %v2813 = vld [vmem:[#allocation8 + $0xd38] sm:$0xff]
    %v2814 = vld [vmem:[#allocation8 + $0xd40] sm:$0xff]
    %v2815 = vld [vmem:[#allocation8 + $0xd48] sm:$0xff]
    %v2816 = vld [vmem:[#allocation8 + $0xd50] sm:$0xff]
    %v2817 = vld [vmem:[#allocation8 + $0xd58] sm:$0xff]
    %v2818 = vld [vmem:[#allocation8 + $0xd60] sm:$0xff]
    %v2819 = vld [vmem:[#allocation8 + $0xd68] sm:$0xff]
    %v2820 = vld [vmem:[#allocation8 + $0xd70] sm:$0xff]
    %v2821 = vld [vmem:[#allocation8 + $0xd78] sm:$0xff]
    %v2822 = vld [vmem:[#allocation8 + $0xd80] sm:$0xff]
    %v2823 = vld [vmem:[#allocation8 + $0xd88] sm:$0xff]
    %v2824 = vld [vmem:[#allocation8 + $0xd90] sm:$0xff]
    %v2825 = vld [vmem:[#allocation8 + $0xd98] sm:$0xff]
    %v2826 = vld [vmem:[#allocation8 + $0xda0] sm:$0xff]
    %v2827 = vld [vmem:[#allocation8 + $0xda8] sm:$0xff]
    %v2828 = vld [vmem:[#allocation8 + $0xdb0] sm:$0xff]
    %v2829 = vld [vmem:[#allocation8 + $0xdb8] sm:$0xff]
    %v2830 = vld [vmem:[#allocation8 + $0xdc0] sm:$0xff]
    %v2831 = vld [vmem:[#allocation8 + $0xdc8] sm:$0xff]
    %v2832 = vld [vmem:[#allocation8 + $0xdd0] sm:$0xff]
    %v2833 = vld [vmem:[#allocation8 + $0xdd8] sm:$0xff]
    %v2834 = vld [vmem:[#allocation8 + $0xde0] sm:$0xff]
    %v2835 = vld [vmem:[#allocation8 + $0xde8] sm:$0xff]
    %v2836 = vld [vmem:[#allocation8 + $0xdf0] sm:$0xff]
    %v2837 = vld [vmem:[#allocation8 + $0xdf8] sm:$0xff]
    %v2838 = vld [vmem:[#allocation8 + $0xe00] sm:$0xff]
    %v2839 = vld [vmem:[#allocation8 + $0xe08] sm:$0xff]
    %v2840 = vld [vmem:[#allocation8 + $0xe10] sm:$0xff]
    %v2841 = vld [vmem:[#allocation8 + $0xe18] sm:$0xff]
    %v2842 = vld [vmem:[#allocation8 + $0xe20] sm:$0xff]
    %v2843 = vld [vmem:[#allocation8 + $0xe28] sm:$0xff]
    %v2844 = vld [vmem:[#allocation8 + $0xe30] sm:$0xff]
    %v2845 = vld [vmem:[#allocation8 + $0xe38] sm:$0xff]
    %v2846 = vld [vmem:[#allocation8 + $0xe40] sm:$0xff]
    %v2847 = vld [vmem:[#allocation8 + $0xe48] sm:$0xff]
    %v2848 = vld [vmem:[#allocation8 + $0xe50] sm:$0xff]
    %v2849 = vld [vmem:[#allocation8 + $0xe58] sm:$0xff]
    %v2850 = vld [vmem:[#allocation8 + $0xe60] sm:$0xff]
    %v2851 = vld [vmem:[#allocation8 + $0xe68] sm:$0xff]
    %v2852 = vld [vmem:[#allocation8 + $0xe70] sm:$0xff]
    %v2853 = vld [vmem:[#allocation8 + $0xe78] sm:$0xff]
    %v2854 = vld [vmem:[#allocation8 + $0xe80] sm:$0xff]
    %v2855 = vld [vmem:[#allocation8 + $0xe88] sm:$0xff]
    %v2856 = vld [vmem:[#allocation8 + $0xe90] sm:$0xff]
    %v2857 = vld [vmem:[#allocation8 + $0xe98] sm:$0xff]
    %v2858 = vld [vmem:[#allocation8 + $0xea0] sm:$0xff]
    %v2859 = vld [vmem:[#allocation8 + $0xea8] sm:$0xff]
    %v2860 = vld [vmem:[#allocation8 + $0xeb0] sm:$0xff]
    %v2861 = vld [vmem:[#allocation8 + $0xeb8] sm:$0xff]
    %v2862 = vld [vmem:[#allocation8 + $0xec0] sm:$0xff]
    %v2863 = vld [vmem:[#allocation8 + $0xec8] sm:$0xff]
    %v2864 = vld [vmem:[#allocation8 + $0xed0] sm:$0xff]
    %v2865 = vld [vmem:[#allocation8 + $0xed8] sm:$0xff]
    %v2866 = vld [vmem:[#allocation8 + $0xee0] sm:$0xff]
    %v2867 = vld [vmem:[#allocation8 + $0xee8] sm:$0xff]
    %v2868 = vld [vmem:[#allocation8 + $0xef0] sm:$0xff]
    %v2869 = vld [vmem:[#allocation8 + $0xef8] sm:$0xff]
    %v2870 = vld [vmem:[#allocation8 + $0xf00] sm:$0xff]
    %v2871 = vld [vmem:[#allocation8 + $0xf08] sm:$0xff]
    %v2872 = vld [vmem:[#allocation8 + $0xf10] sm:$0xff]
    %v2873 = vld [vmem:[#allocation8 + $0xf18] sm:$0xff]
    %v2874 = vld [vmem:[#allocation8 + $0xf20] sm:$0xff]
    %v2875 = vld [vmem:[#allocation8 + $0xf28] sm:$0xff]
    %v2876 = vld [vmem:[#allocation8 + $0xf30] sm:$0xff]
    %v2877 = vld [vmem:[#allocation8 + $0xf38] sm:$0xff]
    %v2878 = vld [vmem:[#allocation8 + $0xf40] sm:$0xff]
    %v2879 = vld [vmem:[#allocation8 + $0xf48] sm:$0xff]
    %v2880 = vld [vmem:[#allocation8 + $0xf50] sm:$0xff]
    %v2881 = vld [vmem:[#allocation8 + $0xf58] sm:$0xff]
    %v2882 = vld [vmem:[#allocation8 + $0xf60] sm:$0xff]
    %v2883 = vld [vmem:[#allocation8 + $0xf68] sm:$0xff]
    %v2884 = vld [vmem:[#allocation8 + $0xf70] sm:$0xff]
    %v2885 = vld [vmem:[#allocation8 + $0xf78] sm:$0xff]
    %v2886 = vld [vmem:[#allocation8 + $0xf80] sm:$0xff]
    %v2887 = vld [vmem:[#allocation8 + $0xf88] sm:$0xff]
    %v2888 = vld [vmem:[#allocation8 + $0xf90] sm:$0xff]
    %v2889 = vld [vmem:[#allocation8 + $0xf98] sm:$0xff]
    %v2890 = vld [vmem:[#allocation8 + $0xfa0] sm:$0xff]
    %v2891 = vld [vmem:[#allocation8 + $0xfa8] sm:$0xff]
    %v2892 = vld [vmem:[#allocation8 + $0xfb0] sm:$0xff]
    %v2893 = vld [vmem:[#allocation8 + $0xfb8] sm:$0xff]
    %v2894 = vld [vmem:[#allocation8 + $0xfc0] sm:$0xff]
    %v2895 = vld [vmem:[#allocation8 + $0xfc8] sm:$0xff]
    %v2896 = vld [vmem:[#allocation8 + $0xfd0] sm:$0xff]
    %v2897 = vld [vmem:[#allocation8 + $0xfd8] sm:$0xff]
    %v2898 = vld [vmem:[#allocation8 + $0xfe0] sm:$0xff]
    %v2899 = vld [vmem:[#allocation8 + $0xfe8] sm:$0xff]
    %v2900 = vld [vmem:[#allocation8 + $0xff0] sm:$0xff]
    %v2901 = vld [vmem:[#allocation8 + $0xff8] sm:$0xff]
    %v2902 = vld [vmem:[#allocation8 + $0x1000] sm:$0xff]
    %v2903 = vld [vmem:[#allocation8 + $0x1008] sm:$0xff]
    %v2904 = vld [vmem:[#allocation8 + $0x1010] sm:$0xff]
    %v2905 = vld [vmem:[#allocation8 + $0x1018] sm:$0xff]
    %v2906 = vld [vmem:[#allocation8 + $0x1020] sm:$0xff]
    %v2907 = vld [vmem:[#allocation8 + $0x1028] sm:$0xff]
    %v2908 = vld [vmem:[#allocation8 + $0x1030] sm:$0xff]
    %v2909 = vld [vmem:[#allocation8 + $0x1038] sm:$0xff]
    %v2910 = vld [vmem:[#allocation8 + $0x1040] sm:$0xff]
    %v2911 = vld [vmem:[#allocation8 + $0x1048] sm:$0xff]
    %v2912 = vld [vmem:[#allocation8 + $0x1050] sm:$0xff]
    %v2913 = vld [vmem:[#allocation8 + $0x1058] sm:$0xff]
    %v2914 = vld [vmem:[#allocation8 + $0x1060] sm:$0xff]
    %v2915 = vld [vmem:[#allocation8 + $0x1068] sm:$0xff]
    %v2916 = vld [vmem:[#allocation8 + $0x1070] sm:$0xff]
    %v2917 = vld [vmem:[#allocation8 + $0x1078] sm:$0xff]
    %v2918 = vld [vmem:[#allocation8 + $0x1080] sm:$0xff]
    %v2919 = vld [vmem:[#allocation8 + $0x1088] sm:$0xff]
    %v2920 = vld [vmem:[#allocation8 + $0x1090] sm:$0xff]
    %v2921 = vld [vmem:[#allocation8 + $0x1098] sm:$0xff]
    %v2922 = vld [vmem:[#allocation8 + $0x10a0] sm:$0xff]
    %v2923 = vld [vmem:[#allocation8 + $0x10a8] sm:$0xff]
    %v2924 = vld [vmem:[#allocation8 + $0x10b0] sm:$0xff]
    %v2925 = vld [vmem:[#allocation8 + $0x10b8] sm:$0xff]
    %v2926 = vld [vmem:[#allocation8 + $0x10c0] sm:$0xff]
    %v2927 = vld [vmem:[#allocation8 + $0x10c8] sm:$0xff]
    %v2928 = vld [vmem:[#allocation8 + $0x10d0] sm:$0xff]
    %v2929 = vld [vmem:[#allocation8 + $0x10d8] sm:$0xff]
    %v2930 = vld [vmem:[#allocation8 + $0x10e0] sm:$0xff]
    %v2931 = vld [vmem:[#allocation8 + $0x10e8] sm:$0xff]
    %v2932 = vld [vmem:[#allocation8 + $0x10f0] sm:$0xff]
    %v2933 = vld [vmem:[#allocation8 + $0x10f8] sm:$0xff]
    %v2934 = vld [vmem:[#allocation8 + $0x1100] sm:$0xff]
    %v2935 = vld [vmem:[#allocation8 + $0x1108] sm:$0xff]
    %v2936 = vld [vmem:[#allocation8 + $0x1110] sm:$0xff]
    %v2937 = vld [vmem:[#allocation8 + $0x1118] sm:$0xff]
    %v2938 = vld [vmem:[#allocation8 + $0x1120] sm:$0xff]
    %v2939 = vld [vmem:[#allocation8 + $0x1128] sm:$0xff]
    %v2940 = vld [vmem:[#allocation8 + $0x1130] sm:$0xff]
    %v2941 = vld [vmem:[#allocation8 + $0x1138] sm:$0xff]
    %v2942 = vld [vmem:[#allocation8 + $0x1140] sm:$0xff]
    %v2943 = vld [vmem:[#allocation8 + $0x1148] sm:$0xff]
    %v2944 = vld [vmem:[#allocation8 + $0x1150] sm:$0xff]
    %v2945 = vld [vmem:[#allocation8 + $0x1158] sm:$0xff]
    %v2946 = vld [vmem:[#allocation8 + $0x1160] sm:$0xff]
    %v2947 = vld [vmem:[#allocation8 + $0x1168] sm:$0xff]
    %v2948 = vld [vmem:[#allocation8 + $0x1170] sm:$0xff]
    %v2949 = vld [vmem:[#allocation8 + $0x1178] sm:$0xff]
    %v2950 = vld [vmem:[#allocation8 + $0x1180] sm:$0xff]
    %v2951 = vld [vmem:[#allocation8 + $0x1188] sm:$0xff]
    %v2952 = vld [vmem:[#allocation8 + $0x1190] sm:$0xff]
    %v2953 = vld [vmem:[#allocation8 + $0x1198] sm:$0xff]
    %v2954 = vld [vmem:[#allocation8 + $0x11a0] sm:$0xff]
    %v2955 = vld [vmem:[#allocation8 + $0x11a8] sm:$0xff]
    %v2956 = vld [vmem:[#allocation8 + $0x11b0] sm:$0xff]
    %v2957 = vld [vmem:[#allocation8 + $0x11b8] sm:$0xff]
    %v2958 = vld [vmem:[#allocation8 + $0x11c0] sm:$0xff]
    %v2959 = vld [vmem:[#allocation8 + $0x11c8] sm:$0xff]
    %v2960 = vld [vmem:[#allocation8 + $0x11d0] sm:$0xff]
    %v2961 = vld [vmem:[#allocation8 + $0x11d8] sm:$0xff]
    %v2962 = vld [vmem:[#allocation8 + $0x11e0] sm:$0xff]
    %v2963 = vld [vmem:[#allocation8 + $0x11e8] sm:$0xff]
    %v2964 = vld [vmem:[#allocation8 + $0x11f0] sm:$0xff]
    %v2965 = vld [vmem:[#allocation8 + $0x11f8] sm:$0xff]
    %v2966 = vld [vmem:[#allocation8 + $0x1200] sm:$0xff]
    %v2967 = vld [vmem:[#allocation8 + $0x1208] sm:$0xff]
    %v2968 = vld [vmem:[#allocation8 + $0x1210] sm:$0xff]
    %v2969 = vld [vmem:[#allocation8 + $0x1218] sm:$0xff]
    %v2970 = vld [vmem:[#allocation8 + $0x1220] sm:$0xff]
    %v2971 = vld [vmem:[#allocation8 + $0x1228] sm:$0xff]
    %v2972 = vld [vmem:[#allocation8 + $0x1230] sm:$0xff]
    %v2973 = vld [vmem:[#allocation8 + $0x1238] sm:$0xff]
    %v2974 = vld [vmem:[#allocation8 + $0x1240] sm:$0xff]
    %v2975 = vld [vmem:[#allocation8 + $0x1248] sm:$0xff]
    %v2976 = vld [vmem:[#allocation8 + $0x1250] sm:$0xff]
    %v2977 = vld [vmem:[#allocation8 + $0x1258] sm:$0xff]
    %v2978 = vld [vmem:[#allocation8 + $0x1260] sm:$0xff]
    %v2979 = vld [vmem:[#allocation8 + $0x1268] sm:$0xff]
    %v2980 = vld [vmem:[#allocation8 + $0x1270] sm:$0xff]
    %v2981 = vld [vmem:[#allocation8 + $0x1278] sm:$0xff]
    %v2982 = vld [vmem:[#allocation8 + $0x1280] sm:$0xff]
    %v2983 = vld [vmem:[#allocation8 + $0x1288] sm:$0xff]
    %v2984 = vld [vmem:[#allocation8 + $0x1290] sm:$0xff]
    %v2985 = vld [vmem:[#allocation8 + $0x1298] sm:$0xff]
    %v2986 = vld [vmem:[#allocation8 + $0x12a0] sm:$0xff]
    %v2987 = vld [vmem:[#allocation8 + $0x12a8] sm:$0xff]
    %v2988 = vld [vmem:[#allocation8 + $0x12b0] sm:$0xff]
    %v2989 = vld [vmem:[#allocation8 + $0x12b8] sm:$0xff]
    %v2990 = vld [vmem:[#allocation8 + $0x12c0] sm:$0xff]
    %v2991 = vld [vmem:[#allocation8 + $0x12c8] sm:$0xff]
    %v2992 = vld [vmem:[#allocation8 + $0x12d0] sm:$0xff]
    %v2993 = vld [vmem:[#allocation8 + $0x12d8] sm:$0xff]
    %v2994 = vld [vmem:[#allocation8 + $0x12e0] sm:$0xff]
    %v2995 = vld [vmem:[#allocation8 + $0x12e8] sm:$0xff]
    %v2996 = vld [vmem:[#allocation8 + $0x12f0] sm:$0xff]
    %v2997 = vld [vmem:[#allocation8 + $0x12f8] sm:$0xff]
    %v2998 = vld [vmem:[#allocation8 + $0x1300] sm:$0xff]
    %v2999 = vld [vmem:[#allocation8 + $0x1308] sm:$0xff]
    %v3000 = vld [vmem:[#allocation8 + $0x1310] sm:$0xff]
    %v3001 = vld [vmem:[#allocation8 + $0x1318] sm:$0xff]
    %v3002 = vld [vmem:[#allocation8 + $0x1320] sm:$0xff]
    %v3003 = vld [vmem:[#allocation8 + $0x1328] sm:$0xff]
    %v3004 = vld [vmem:[#allocation8 + $0x1330] sm:$0xff]
    %v3005 = vld [vmem:[#allocation8 + $0x1338] sm:$0xff]
    %v3006 = vld [vmem:[#allocation8 + $0x1340] sm:$0xff]
    %v3007 = vld [vmem:[#allocation8 + $0x1348] sm:$0xff]
    %v3008 = vld [vmem:[#allocation8 + $0x1350] sm:$0xff]
    %v3009 = vld [vmem:[#allocation8 + $0x1358] sm:$0xff]
    %v3010 = vld [vmem:[#allocation8 + $0x1360] sm:$0xff]
    %v3011 = vld [vmem:[#allocation8 + $0x1368] sm:$0xff]
    %v3012 = vld [vmem:[#allocation8 + $0x1370] sm:$0xff]
    %v3013 = vld [vmem:[#allocation8 + $0x1378] sm:$0xff]
    %v3014 = vld [vmem:[#allocation8 + $0x1380] sm:$0xff]
    %v3015 = vld [vmem:[#allocation8 + $0x1388] sm:$0xff]
    %v3016 = vld [vmem:[#allocation8 + $0x1390] sm:$0xff]
    %v3017 = vld [vmem:[#allocation8 + $0x1398] sm:$0xff]
    %v3018 = vld [vmem:[#allocation8 + $0x13a0] sm:$0xff]
    %v3019 = vld [vmem:[#allocation8 + $0x13a8] sm:$0xff]
    %v3020 = vld [vmem:[#allocation8 + $0x13b0] sm:$0xff]
    %v3021 = vld [vmem:[#allocation8 + $0x13b8] sm:$0xff]
    %v3022 = vld [vmem:[#allocation8 + $0x13c0] sm:$0xff]
    %v3023 = vld [vmem:[#allocation8 + $0x13c8] sm:$0xff]
    %v3024 = vld [vmem:[#allocation8 + $0x13d0] sm:$0xff]
    %v3025 = vld [vmem:[#allocation8 + $0x13d8] sm:$0xff]
    %v3026 = vld [vmem:[#allocation8 + $0x13e0] sm:$0xff]
    %v3027 = vld [vmem:[#allocation8 + $0x13e8] sm:$0xff]
    %v3028 = vld [vmem:[#allocation8 + $0x13f0] sm:$0xff]
    %v3029 = vld [vmem:[#allocation8 + $0x13f8] sm:$0xff]
    %v3030 = vld [vmem:[#allocation8 + $0x1400] sm:$0xff]
    %v3031 = vld [vmem:[#allocation8 + $0x1408] sm:$0xff]
    %v3032 = vld [vmem:[#allocation8 + $0x1410] sm:$0xff]
    %v3033 = vld [vmem:[#allocation8 + $0x1418] sm:$0xff]
    %v3034 = vld [vmem:[#allocation8 + $0x1420] sm:$0xff]
    %v3035 = vld [vmem:[#allocation8 + $0x1428] sm:$0xff]
    %v3036 = vld [vmem:[#allocation8 + $0x1430] sm:$0xff]
    %v3037 = vld [vmem:[#allocation8 + $0x1438] sm:$0xff]
    %v3038 = vld [vmem:[#allocation8 + $0x1440] sm:$0xff]
    %v3039 = vld [vmem:[#allocation8 + $0x1448] sm:$0xff]
    %v3040 = vld [vmem:[#allocation8 + $0x1450] sm:$0xff]
    %v3041 = vld [vmem:[#allocation8 + $0x1458] sm:$0xff]
    %v3042 = vld [vmem:[#allocation8 + $0x1460] sm:$0xff]
    %v3043 = vld [vmem:[#allocation8 + $0x1468] sm:$0xff]
    %v3044 = vld [vmem:[#allocation8 + $0x1470] sm:$0xff]
    %v3045 = vld [vmem:[#allocation8 + $0x1478] sm:$0xff]
    %v3046 = vld [vmem:[#allocation8 + $0x1480] sm:$0xff]
    %v3047 = vld [vmem:[#allocation8 + $0x1488] sm:$0xff]
    %v3048 = vld [vmem:[#allocation8 + $0x1490] sm:$0xff]
    %v3049 = vld [vmem:[#allocation8 + $0x1498] sm:$0xff]
    %v3050 = vld [vmem:[#allocation8 + $0x14a0] sm:$0xff]
    %v3051 = vld [vmem:[#allocation8 + $0x14a8] sm:$0xff]
    %v3052 = vld [vmem:[#allocation8 + $0x14b0] sm:$0xff]
    %v3053 = vld [vmem:[#allocation8 + $0x14b8] sm:$0xff]
    %v3054 = vld [vmem:[#allocation8 + $0x14c0] sm:$0xff]
    %v3055 = vld [vmem:[#allocation8 + $0x14c8] sm:$0xff]
    %v3056 = vld [vmem:[#allocation8 + $0x14d0] sm:$0xff]
    %v3057 = vld [vmem:[#allocation8 + $0x14d8] sm:$0xff]
    %v3058 = vld [vmem:[#allocation8 + $0x14e0] sm:$0xff]
    %v3059 = vld [vmem:[#allocation8 + $0x14e8] sm:$0xff]
    %v3060 = vld [vmem:[#allocation8 + $0x14f0] sm:$0xff]
    %v3061 = vld [vmem:[#allocation8 + $0x14f8] sm:$0xff]
    %v3062 = vld [vmem:[#allocation8 + $0x1500] sm:$0xff]
    %v3063 = vld [vmem:[#allocation8 + $0x1508] sm:$0xff]
    %v3064 = vld [vmem:[#allocation8 + $0x1510] sm:$0xff]
    %v3065 = vld [vmem:[#allocation8 + $0x1518] sm:$0xff]
    %v3066 = vld [vmem:[#allocation8 + $0x1520] sm:$0xff]
    %v3067 = vld [vmem:[#allocation8 + $0x1528] sm:$0xff]
    %v3068 = vld [vmem:[#allocation8 + $0x1530] sm:$0xff]
    %v3069 = vld [vmem:[#allocation8 + $0x1538] sm:$0xff]
    %v3070 = vld [vmem:[#allocation8 + $0x1540] sm:$0xff]
    %v3071 = vld [vmem:[#allocation8 + $0x1548] sm:$0xff]
    %v3072 = vld [vmem:[#allocation8 + $0x1550] sm:$0xff]
    %v3073 = vld [vmem:[#allocation8 + $0x1558] sm:$0xff]
    %v3074 = vld [vmem:[#allocation8 + $0x1560] sm:$0xff]
    %v3075 = vld [vmem:[#allocation8 + $0x1568] sm:$0xff]
    %v3076 = vld [vmem:[#allocation8 + $0x1570] sm:$0xff]
    %v3077 = vld [vmem:[#allocation8 + $0x1578] sm:$0xff]
    %v3078 = vld [vmem:[#allocation8 + $0x1580] sm:$0xff]
    %v3079 = vld [vmem:[#allocation8 + $0x1588] sm:$0xff]
    %v3080 = vld [vmem:[#allocation8 + $0x1590] sm:$0xff]
    %v3081 = vld [vmem:[#allocation8 + $0x1598] sm:$0xff]
    %v3082 = vld [vmem:[#allocation8 + $0x15a0] sm:$0xff]
    %v3083 = vld [vmem:[#allocation8 + $0x15a8] sm:$0xff]
    %v3084 = vld [vmem:[#allocation8 + $0x15b0] sm:$0xff]
    %v3085 = vld [vmem:[#allocation8 + $0x15b8] sm:$0xff]
    %v3086 = vld [vmem:[#allocation8 + $0x15c0] sm:$0xff]
    %v3087 = vld [vmem:[#allocation8 + $0x15c8] sm:$0xff]
    %v3088 = vld [vmem:[#allocation8 + $0x15d0] sm:$0xff]
    %v3089 = vld [vmem:[#allocation8 + $0x15d8] sm:$0xff]
    %v3090 = vld [vmem:[#allocation8 + $0x15e0] sm:$0xff]
    %v3091 = vld [vmem:[#allocation8 + $0x15e8] sm:$0xff]
    %v3092 = vld [vmem:[#allocation8 + $0x15f0] sm:$0xff]
    %v3093 = vld [vmem:[#allocation8 + $0x15f8] sm:$0xff]
    %v3094 = vld [vmem:[#allocation8 + $0x1600] sm:$0xff]
    %v3095 = vld [vmem:[#allocation8 + $0x1608] sm:$0xff]
    %v3096 = vld [vmem:[#allocation8 + $0x1610] sm:$0xff]
    %v3097 = vld [vmem:[#allocation8 + $0x1618] sm:$0xff]
    %v3098 = vld [vmem:[#allocation8 + $0x1620] sm:$0xff]
    %v3099 = vld [vmem:[#allocation8 + $0x1628] sm:$0xff]
    %v3100 = vld [vmem:[#allocation8 + $0x1630] sm:$0xff]
    %v3101 = vld [vmem:[#allocation8 + $0x1638] sm:$0xff]
    %v3102 = vld [vmem:[#allocation8 + $0x1640] sm:$0xff]
    %v3103 = vld [vmem:[#allocation8 + $0x1648] sm:$0xff]
    %v3104 = vld [vmem:[#allocation8 + $0x1650] sm:$0xff]
    %v3105 = vld [vmem:[#allocation8 + $0x1658] sm:$0xff]
    %v3106 = vld [vmem:[#allocation8 + $0x1660] sm:$0xff]
    %v3107 = vld [vmem:[#allocation8 + $0x1668] sm:$0xff]
    %v3108 = vld [vmem:[#allocation8 + $0x1670] sm:$0xff]
    %v3109 = vld [vmem:[#allocation8 + $0x1678] sm:$0xff]
    %v3110 = vld [vmem:[#allocation8 + $0x1680] sm:$0xff]
    %v3111 = vld [vmem:[#allocation8 + $0x1688] sm:$0xff]
    %v3112 = vld [vmem:[#allocation8 + $0x1690] sm:$0xff]
    %v3113 = vld [vmem:[#allocation8 + $0x1698] sm:$0xff]
    %v3114 = vld [vmem:[#allocation8 + $0x16a0] sm:$0xff]
    %v3115 = vld [vmem:[#allocation8 + $0x16a8] sm:$0xff]
    %v3116 = vld [vmem:[#allocation8 + $0x16b0] sm:$0xff]
    %v3117 = vld [vmem:[#allocation8 + $0x16b8] sm:$0xff]
    %v3118 = vld [vmem:[#allocation8 + $0x16c0] sm:$0xff]
    %v3119 = vld [vmem:[#allocation8 + $0x16c8] sm:$0xff]
    %v3120 = vld [vmem:[#allocation8 + $0x16d0] sm:$0xff]
    %v3121 = vld [vmem:[#allocation8 + $0x16d8] sm:$0xff]
    %v3122 = vld [vmem:[#allocation8 + $0x16e0] sm:$0xff]
    %v3123 = vld [vmem:[#allocation8 + $0x16e8] sm:$0xff]
    %v3124 = vld [vmem:[#allocation8 + $0x16f0] sm:$0xff]
    %v3125 = vld [vmem:[#allocation8 + $0x16f8] sm:$0xff]
    %v3126 = vld [vmem:[#allocation8 + $0x1700] sm:$0xff]
    %v3127 = vld [vmem:[#allocation8 + $0x1708] sm:$0xff]
    %v3128 = vld [vmem:[#allocation8 + $0x1710] sm:$0xff]
    %v3129 = vld [vmem:[#allocation8 + $0x1718] sm:$0xff]
    %v3130 = vld [vmem:[#allocation8 + $0x1720] sm:$0xff]
    %v3131 = vld [vmem:[#allocation8 + $0x1728] sm:$0xff]
    %v3132 = vld [vmem:[#allocation8 + $0x1730] sm:$0xff]
    %v3133 = vld [vmem:[#allocation8 + $0x1738] sm:$0xff]
    %v3134 = vld [vmem:[#allocation8 + $0x1740] sm:$0xff]
    %v3135 = vld [vmem:[#allocation8 + $0x1748] sm:$0xff]
    %v3136 = vld [vmem:[#allocation8 + $0x1750] sm:$0xff]
    %v3137 = vld [vmem:[#allocation8 + $0x1758] sm:$0xff]
    %v3138 = vld [vmem:[#allocation8 + $0x1760] sm:$0xff]
    %v3139 = vld [vmem:[#allocation8 + $0x1768] sm:$0xff]
    %v3140 = vld [vmem:[#allocation8 + $0x1770] sm:$0xff]
    %v3141 = vld [vmem:[#allocation8 + $0x1778] sm:$0xff]
    %v3142 = vld [vmem:[#allocation8 + $0x1780] sm:$0xff]
    %v3143 = vld [vmem:[#allocation8 + $0x1788] sm:$0xff]
    %v3144 = vld [vmem:[#allocation8 + $0x1790] sm:$0xff]
    %v3145 = vld [vmem:[#allocation8 + $0x1798] sm:$0xff]
    %v3146 = vld [vmem:[#allocation8 + $0x17a0] sm:$0xff]
    %v3147 = vld [vmem:[#allocation8 + $0x17a8] sm:$0xff]
    %v3148 = vld [vmem:[#allocation8 + $0x17b0] sm:$0xff]
    %v3149 = vld [vmem:[#allocation8 + $0x17b8] sm:$0xff]
    %v3150 = vld [vmem:[#allocation8 + $0x17c0] sm:$0xff]
    %v3151 = vld [vmem:[#allocation8 + $0x17c8] sm:$0xff]
    %v3152 = vld [vmem:[#allocation8 + $0x17d0] sm:$0xff]
    %v3153 = vld [vmem:[#allocation8 + $0x17d8] sm:$0xff]
    %v3154 = vld [vmem:[#allocation8 + $0x17e0] sm:$0xff]
    %v3155 = vld [vmem:[#allocation8 + $0x17e8] sm:$0xff]
    %v3156 = vld [vmem:[#allocation8 + $0x17f0] sm:$0xff]
    %v3157 = vld [vmem:[#allocation8 + $0x17f8] sm:$0xff]
    %v3158 = vld [vmem:[#allocation8 + $0x1800] sm:$0xff]
    %v3159 = vld [vmem:[#allocation8 + $0x1808] sm:$0xff]
    %v3160 = vld [vmem:[#allocation8 + $0x1810] sm:$0xff]
    %v3161 = vld [vmem:[#allocation8 + $0x1818] sm:$0xff]
    %v3162 = vld [vmem:[#allocation8 + $0x1820] sm:$0xff]
    %v3163 = vld [vmem:[#allocation8 + $0x1828] sm:$0xff]
    %v3164 = vld [vmem:[#allocation8 + $0x1830] sm:$0xff]
    %v3165 = vld [vmem:[#allocation8 + $0x1838] sm:$0xff]
    %v3166 = vld [vmem:[#allocation8 + $0x1840] sm:$0xff]
    %v3167 = vld [vmem:[#allocation8 + $0x1848] sm:$0xff]
    %v3168 = vld [vmem:[#allocation8 + $0x1850] sm:$0xff]
    %v3169 = vld [vmem:[#allocation8 + $0x1858] sm:$0xff]
    %v3170 = vld [vmem:[#allocation8 + $0x1860] sm:$0xff]
    %v3171 = vld [vmem:[#allocation8 + $0x1868] sm:$0xff]
    %v3172 = vld [vmem:[#allocation8 + $0x1870] sm:$0xff]
    %v3173 = vld [vmem:[#allocation8 + $0x1878] sm:$0xff]
    %v3174 = vld [vmem:[#allocation8 + $0x1880] sm:$0xff]
    %v3175 = vld [vmem:[#allocation8 + $0x1888] sm:$0xff]
    %v3176 = vld [vmem:[#allocation8 + $0x1890] sm:$0xff]
    %v3177 = vld [vmem:[#allocation8 + $0x1898] sm:$0xff]
    %v3178 = vld [vmem:[#allocation8 + $0x18a0] sm:$0xff]
    %v3179 = vld [vmem:[#allocation8 + $0x18a8] sm:$0xff]
    %v3180 = vld [vmem:[#allocation8 + $0x18b0] sm:$0xff]
    %v3181 = vld [vmem:[#allocation8 + $0x18b8] sm:$0xff]
    %v3182 = vld [vmem:[#allocation8 + $0x18c0] sm:$0xff]
    %v3183 = vld [vmem:[#allocation8 + $0x18c8] sm:$0xff]
    %v3184 = vld [vmem:[#allocation8 + $0x18d0] sm:$0xff]
    %v3185 = vld [vmem:[#allocation8 + $0x18d8] sm:$0xff]
    %v3186 = vld [vmem:[#allocation8 + $0x18e0] sm:$0xff]
    %v3187 = vld [vmem:[#allocation8 + $0x18e8] sm:$0xff]
    %v3188 = vld [vmem:[#allocation8 + $0x18f0] sm:$0xff]
    %v3189 = vld [vmem:[#allocation8 + $0x18f8] sm:$0xff]
    %v3190 = vld [vmem:[#allocation8 + $0x1900] sm:$0xff]
    %v3191 = vld [vmem:[#allocation8 + $0x1908] sm:$0xff]
    %v3192 = vld [vmem:[#allocation8 + $0x1910] sm:$0xff]
    %v3193 = vld [vmem:[#allocation8 + $0x1918] sm:$0xff]
    %v3194 = vld [vmem:[#allocation8 + $0x1920] sm:$0xff]
    %v3195 = vld [vmem:[#allocation8 + $0x1928] sm:$0xff]
    %v3196 = vld [vmem:[#allocation8 + $0x1930] sm:$0xff]
    %v3197 = vld [vmem:[#allocation8 + $0x1938] sm:$0xff]
    %v3198 = vld [vmem:[#allocation8 + $0x1940] sm:$0xff]
    %v3199 = vld [vmem:[#allocation8 + $0x1948] sm:$0xff]
    %v3200 = vld [vmem:[#allocation8 + $0x1950] sm:$0xff]
    %v3201 = vld [vmem:[#allocation8 + $0x1958] sm:$0xff]
    %v3202 = vld [vmem:[#allocation8 + $0x1960] sm:$0xff]
    %v3203 = vld [vmem:[#allocation8 + $0x1968] sm:$0xff]
    %v3204 = vld [vmem:[#allocation8 + $0x1970] sm:$0xff]
    %v3205 = vld [vmem:[#allocation8 + $0x1978] sm:$0xff]
    %v3206 = vld [vmem:[#allocation8 + $0x1980] sm:$0xff]
    %v3207 = vld [vmem:[#allocation8 + $0x1988] sm:$0xff]
    %v3208 = vld [vmem:[#allocation8 + $0x1990] sm:$0xff]
    %v3209 = vld [vmem:[#allocation8 + $0x1998] sm:$0xff]
    %v3210 = vld [vmem:[#allocation8 + $0x19a0] sm:$0xff]
    %v3211 = vld [vmem:[#allocation8 + $0x19a8] sm:$0xff]
    %v3212 = vld [vmem:[#allocation8 + $0x19b0] sm:$0xff]
    %v3213 = vld [vmem:[#allocation8 + $0x19b8] sm:$0xff]
    %v3214 = vld [vmem:[#allocation8 + $0x19c0] sm:$0xff]
    %v3215 = vld [vmem:[#allocation8 + $0x19c8] sm:$0xff]
    %v3216 = vld [vmem:[#allocation8 + $0x19d0] sm:$0xff]
    %v3217 = vld [vmem:[#allocation8 + $0x19d8] sm:$0xff]
    %v3218 = vld [vmem:[#allocation8 + $0x19e0] sm:$0xff]
    %v3219 = vld [vmem:[#allocation8 + $0x19e8] sm:$0xff]
    %v3220 = vld [vmem:[#allocation8 + $0x19f0] sm:$0xff]
    %v3221 = vld [vmem:[#allocation8 + $0x19f8] sm:$0xff]
    %v3222 = vld [vmem:[#allocation8 + $0x1a00] sm:$0xff]
    %v3223 = vld [vmem:[#allocation8 + $0x1a08] sm:$0xff]
    %v3224 = vld [vmem:[#allocation8 + $0x1a10] sm:$0xff]
    %v3225 = vld [vmem:[#allocation8 + $0x1a18] sm:$0xff]
    %v3226 = vld [vmem:[#allocation8 + $0x1a20] sm:$0xff]
    %v3227 = vld [vmem:[#allocation8 + $0x1a28] sm:$0xff]
    %v3228 = vld [vmem:[#allocation8 + $0x1a30] sm:$0xff]
    %v3229 = vld [vmem:[#allocation8 + $0x1a38] sm:$0xff]
    %v3230 = vld [vmem:[#allocation8 + $0x1a40] sm:$0xff]
    %v3231 = vld [vmem:[#allocation8 + $0x1a48] sm:$0xff]
    %v3232 = vld [vmem:[#allocation8 + $0x1a50] sm:$0xff]
    %v3233 = vld [vmem:[#allocation8 + $0x1a58] sm:$0xff]
    %v3234 = vld [vmem:[#allocation8 + $0x1a60] sm:$0xff]
    %v3235 = vld [vmem:[#allocation8 + $0x1a68] sm:$0xff]
    %v3236 = vld [vmem:[#allocation8 + $0x1a70] sm:$0xff]
    %v3237 = vld [vmem:[#allocation8 + $0x1a78] sm:$0xff]
    %v3238 = vld [vmem:[#allocation8 + $0x1a80] sm:$0xff]
    %v3239 = vld [vmem:[#allocation8 + $0x1a88] sm:$0xff]
    %v3240 = vld [vmem:[#allocation8 + $0x1a90] sm:$0xff]
    %v3241 = vld [vmem:[#allocation8 + $0x1a98] sm:$0xff]
    %v3242 = vld [vmem:[#allocation8 + $0x1aa0] sm:$0xff]
    %v3243 = vld [vmem:[#allocation8 + $0x1aa8] sm:$0xff]
    %v3244 = vld [vmem:[#allocation8 + $0x1ab0] sm:$0xff]
    %v3245 = vld [vmem:[#allocation8 + $0x1ab8] sm:$0xff]
    %v3246 = vld [vmem:[#allocation8 + $0x1ac0] sm:$0xff]
    %v3247 = vld [vmem:[#allocation8 + $0x1ac8] sm:$0xff]
    %v3248 = vld [vmem:[#allocation8 + $0x1ad0] sm:$0xff]
    %v3249 = vld [vmem:[#allocation8 + $0x1ad8] sm:$0xff]
    %v3250 = vld [vmem:[#allocation8 + $0x1ae0] sm:$0xff]
    %v3251 = vld [vmem:[#allocation8 + $0x1ae8] sm:$0xff]
    %v3252 = vld [vmem:[#allocation8 + $0x1af0] sm:$0xff]
    %v3253 = vld [vmem:[#allocation8 + $0x1af8] sm:$0xff]
    %v3254 = vld [vmem:[#allocation8 + $0x1b00] sm:$0xff]
    %v3255 = vld [vmem:[#allocation8 + $0x1b08] sm:$0xff]
    %v3256 = vld [vmem:[#allocation8 + $0x1b10] sm:$0xff]
    %v3257 = vld [vmem:[#allocation8 + $0x1b18] sm:$0xff]
    %v3258 = vld [vmem:[#allocation8 + $0x1b20] sm:$0xff]
    %v3259 = vld [vmem:[#allocation8 + $0x1b28] sm:$0xff]
    %v3260 = vld [vmem:[#allocation8 + $0x1b30] sm:$0xff]
    %v3261 = vld [vmem:[#allocation8 + $0x1b38] sm:$0xff]
    %v3262 = vld [vmem:[#allocation8 + $0x1b40] sm:$0xff]
    %v3263 = vld [vmem:[#allocation8 + $0x1b48] sm:$0xff]
    %v3264 = vld [vmem:[#allocation8 + $0x1b50] sm:$0xff]
    %v3265 = vld [vmem:[#allocation8 + $0x1b58] sm:$0xff]
    %v3266 = vld [vmem:[#allocation8 + $0x1b60] sm:$0xff]
    %v3267 = vld [vmem:[#allocation8 + $0x1b68] sm:$0xff]
    %v3268 = vld [vmem:[#allocation8 + $0x1b70] sm:$0xff]
    %v3269 = vld [vmem:[#allocation8 + $0x1b78] sm:$0xff]
    %v3270 = vld [vmem:[#allocation8 + $0x1b80] sm:$0xff]
    %v3271 = vld [vmem:[#allocation8 + $0x1b88] sm:$0xff]
    %v3272 = vld [vmem:[#allocation8 + $0x1b90] sm:$0xff]
    %v3273 = vld [vmem:[#allocation8 + $0x1b98] sm:$0xff]
    %v3274 = vld [vmem:[#allocation8 + $0x1ba0] sm:$0xff]
    %v3275 = vld [vmem:[#allocation8 + $0x1ba8] sm:$0xff]
    %v3276 = vld [vmem:[#allocation8 + $0x1bb0] sm:$0xff]
    %v3277 = vld [vmem:[#allocation8 + $0x1bb8] sm:$0xff]
    %v3278 = vld [vmem:[#allocation8 + $0x1bc0] sm:$0xff]
    %v3279 = vld [vmem:[#allocation8 + $0x1bc8] sm:$0xff]
    %v3280 = vld [vmem:[#allocation8 + $0x1bd0] sm:$0xff]
    %v3281 = vld [vmem:[#allocation8 + $0x1bd8] sm:$0xff]
    %v3282 = vld [vmem:[#allocation8 + $0x1be0] sm:$0xff]
    %v3283 = vld [vmem:[#allocation8 + $0x1be8] sm:$0xff]
    %v3284 = vld [vmem:[#allocation8 + $0x1bf0] sm:$0xff]
    %v3285 = vld [vmem:[#allocation8 + $0x1bf8] sm:$0xff]
    %v3286 = vld [vmem:[#allocation8 + $0x1c00] sm:$0xff]
    %v3287 = vld [vmem:[#allocation8 + $0x1c08] sm:$0xff]
    %v3288 = vld [vmem:[#allocation8 + $0x1c10] sm:$0xff]
    %v3289 = vld [vmem:[#allocation8 + $0x1c18] sm:$0xff]
    %v3290 = vld [vmem:[#allocation8 + $0x1c20] sm:$0xff]
    %v3291 = vld [vmem:[#allocation8 + $0x1c28] sm:$0xff]
    %v3292 = vld [vmem:[#allocation8 + $0x1c30] sm:$0xff]
    %v3293 = vld [vmem:[#allocation8 + $0x1c38] sm:$0xff]
    %v3294 = vld [vmem:[#allocation8 + $0x1c40] sm:$0xff]
    %v3295 = vld [vmem:[#allocation8 + $0x1c48] sm:$0xff]
    %v3296 = vld [vmem:[#allocation8 + $0x1c50] sm:$0xff]
    %v3297 = vld [vmem:[#allocation8 + $0x1c58] sm:$0xff]
    %v3298 = vld [vmem:[#allocation8 + $0x1c60] sm:$0xff]
    %v3299 = vld [vmem:[#allocation8 + $0x1c68] sm:$0xff]
    %v3300 = vld [vmem:[#allocation8 + $0x1c70] sm:$0xff]
    %v3301 = vld [vmem:[#allocation8 + $0x1c78] sm:$0xff]
    %v3302 = vld [vmem:[#allocation8 + $0x1c80] sm:$0xff]
    %v3303 = vld [vmem:[#allocation8 + $0x1c88] sm:$0xff]
    %v3304 = vld [vmem:[#allocation8 + $0x1c90] sm:$0xff]
    %v3305 = vld [vmem:[#allocation8 + $0x1c98] sm:$0xff]
    %v3306 = vld [vmem:[#allocation8 + $0x1ca0] sm:$0xff]
    %v3307 = vld [vmem:[#allocation8 + $0x1ca8] sm:$0xff]
    %v3308 = vld [vmem:[#allocation8 + $0x1cb0] sm:$0xff]
    %v3309 = vld [vmem:[#allocation8 + $0x1cb8] sm:$0xff]
    %v3310 = vld [vmem:[#allocation8 + $0x1cc0] sm:$0xff]
    %v3311 = vld [vmem:[#allocation8 + $0x1cc8] sm:$0xff]
    %v3312 = vld [vmem:[#allocation8 + $0x1cd0] sm:$0xff]
    %v3313 = vld [vmem:[#allocation8 + $0x1cd8] sm:$0xff]
    %v3314 = vld [vmem:[#allocation8 + $0x1ce0] sm:$0xff]
    %v3315 = vld [vmem:[#allocation8 + $0x1ce8] sm:$0xff]
    %v3316 = vld [vmem:[#allocation8 + $0x1cf0] sm:$0xff]
    %v3317 = vld [vmem:[#allocation8 + $0x1cf8] sm:$0xff]
    %v3318 = vld [vmem:[#allocation8 + $0x1d00] sm:$0xff]
    %v3319 = vld [vmem:[#allocation8 + $0x1d08] sm:$0xff]
    %v3320 = vld [vmem:[#allocation8 + $0x1d10] sm:$0xff]
    %v3321 = vld [vmem:[#allocation8 + $0x1d18] sm:$0xff]
    %v3322 = vld [vmem:[#allocation8 + $0x1d20] sm:$0xff]
    %v3323 = vld [vmem:[#allocation8 + $0x1d28] sm:$0xff]
    %v3324 = vld [vmem:[#allocation8 + $0x1d30] sm:$0xff]
    %v3325 = vld [vmem:[#allocation8 + $0x1d38] sm:$0xff]
    %v3326 = vld [vmem:[#allocation8 + $0x1d40] sm:$0xff]
    %v3327 = vld [vmem:[#allocation8 + $0x1d48] sm:$0xff]
    %v3328 = vld [vmem:[#allocation8 + $0x1d50] sm:$0xff]
    %v3329 = vld [vmem:[#allocation8 + $0x1d58] sm:$0xff]
    %v3330 = vld [vmem:[#allocation8 + $0x1d60] sm:$0xff]
    %v3331 = vld [vmem:[#allocation8 + $0x1d68] sm:$0xff]
    %v3332 = vld [vmem:[#allocation8 + $0x1d70] sm:$0xff]
    %v3333 = vld [vmem:[#allocation8 + $0x1d78] sm:$0xff]
    %v3334 = vld [vmem:[#allocation8 + $0x1d80] sm:$0xff]
    %v3335 = vld [vmem:[#allocation8 + $0x1d88] sm:$0xff]
    %v3336 = vld [vmem:[#allocation8 + $0x1d90] sm:$0xff]
    %v3337 = vld [vmem:[#allocation8 + $0x1d98] sm:$0xff]
    %v3338 = vld [vmem:[#allocation8 + $0x1da0] sm:$0xff]
    %v3339 = vld [vmem:[#allocation8 + $0x1da8] sm:$0xff]
    %v3340 = vld [vmem:[#allocation8 + $0x1db0] sm:$0xff]
    %v3341 = vld [vmem:[#allocation8 + $0x1db8] sm:$0xff]
    %v3342 = vld [vmem:[#allocation8 + $0x1dc0] sm:$0xff]
    %v3343 = vld [vmem:[#allocation8 + $0x1dc8] sm:$0xff]
    %v3344 = vld [vmem:[#allocation8 + $0x1dd0] sm:$0xff]
    %v3345 = vld [vmem:[#allocation8 + $0x1dd8] sm:$0xff]
    %v3346 = vld [vmem:[#allocation8 + $0x1de0] sm:$0xff]
    %v3347 = vld [vmem:[#allocation8 + $0x1de8] sm:$0xff]
    %v3348 = vld [vmem:[#allocation8 + $0x1df0] sm:$0xff]
    %v3349 = vld [vmem:[#allocation8 + $0x1df8] sm:$0xff]
    %v3350 = vld [vmem:[#allocation8 + $0x1e00] sm:$0xff]
    %v3351 = vld [vmem:[#allocation8 + $0x1e08] sm:$0xff]
    %v3352 = vld [vmem:[#allocation8 + $0x1e10] sm:$0xff]
    %v3353 = vld [vmem:[#allocation8 + $0x1e18] sm:$0xff]
    %v3354 = vld [vmem:[#allocation8 + $0x1e20] sm:$0xff]
    %v3355 = vld [vmem:[#allocation8 + $0x1e28] sm:$0xff]
    %v3356 = vld [vmem:[#allocation8 + $0x1e30] sm:$0xff]
    %v3357 = vld [vmem:[#allocation8 + $0x1e38] sm:$0xff]
    %v3358 = vld [vmem:[#allocation8 + $0x1e40] sm:$0xff]
    %v3359 = vld [vmem:[#allocation8 + $0x1e48] sm:$0xff]
    %v3360 = vld [vmem:[#allocation8 + $0x1e50] sm:$0xff]
    %v3361 = vld [vmem:[#allocation8 + $0x1e58] sm:$0xff]
    %v3362 = vld [vmem:[#allocation8 + $0x1e60] sm:$0xff]
    %v3363 = vld [vmem:[#allocation8 + $0x1e68] sm:$0xff]
    %v3364 = vld [vmem:[#allocation8 + $0x1e70] sm:$0xff]
    %v3365 = vld [vmem:[#allocation8 + $0x1e78] sm:$0xff]
    %v3366 = vld [vmem:[#allocation8 + $0x1e80] sm:$0xff]
    %v3367 = vld [vmem:[#allocation8 + $0x1e88] sm:$0xff]
    %v3368 = vld [vmem:[#allocation8 + $0x1e90] sm:$0xff]
    %v3369 = vld [vmem:[#allocation8 + $0x1e98] sm:$0xff]
    %v3370 = vld [vmem:[#allocation8 + $0x1ea0] sm:$0xff]
    %v3371 = vld [vmem:[#allocation8 + $0x1ea8] sm:$0xff]
    %v3372 = vld [vmem:[#allocation8 + $0x1eb0] sm:$0xff]
    %v3373 = vld [vmem:[#allocation8 + $0x1eb8] sm:$0xff]
    %v3374 = vld [vmem:[#allocation8 + $0x1ec0] sm:$0xff]
    %v3375 = vld [vmem:[#allocation8 + $0x1ec8] sm:$0xff]
    %v3376 = vld [vmem:[#allocation8 + $0x1ed0] sm:$0xff]
    %v3377 = vld [vmem:[#allocation8 + $0x1ed8] sm:$0xff]
    %v3378 = vld [vmem:[#allocation8 + $0x1ee0] sm:$0xff]
    %v3379 = vld [vmem:[#allocation8 + $0x1ee8] sm:$0xff]
    %v3380 = vld [vmem:[#allocation8 + $0x1ef0] sm:$0xff]
    %v3381 = vld [vmem:[#allocation8 + $0x1ef8] sm:$0xff]
    %v3382 = vld [vmem:[#allocation8 + $0x1f00] sm:$0xff]
    %v3383 = vld [vmem:[#allocation8 + $0x1f08] sm:$0xff]
    %v3384 = vld [vmem:[#allocation8 + $0x1f10] sm:$0xff]
    %v3385 = vld [vmem:[#allocation8 + $0x1f18] sm:$0xff]
    %v3386 = vld [vmem:[#allocation8 + $0x1f20] sm:$0xff]
    %v3387 = vld [vmem:[#allocation8 + $0x1f28] sm:$0xff]
    %v3388 = vld [vmem:[#allocation8 + $0x1f30] sm:$0xff]
    %v3389 = vld [vmem:[#allocation8 + $0x1f38] sm:$0xff]
    %v3390 = vld [vmem:[#allocation8 + $0x1f40] sm:$0xff]
    %v3391 = vld [vmem:[#allocation8 + $0x1f48] sm:$0xff]
    %v3392 = vld [vmem:[#allocation8 + $0x1f50] sm:$0xff]
    %v3393 = vld [vmem:[#allocation8 + $0x1f58] sm:$0xff]
    %v3394 = vld [vmem:[#allocation8 + $0x1f60] sm:$0xff]
    %v3395 = vld [vmem:[#allocation8 + $0x1f68] sm:$0xff]
    %v3396 = vld [vmem:[#allocation8 + $0x1f70] sm:$0xff]
    %v3397 = vld [vmem:[#allocation8 + $0x1f78] sm:$0xff]
    %v3398 = vld [vmem:[#allocation8 + $0x1f80] sm:$0xff]
    %v3399 = vld [vmem:[#allocation8 + $0x1f88] sm:$0xff]
    %v3400 = vld [vmem:[#allocation8 + $0x1f90] sm:$0xff]
    %v3401 = vld [vmem:[#allocation8 + $0x1f98] sm:$0xff]
    %v3402 = vld [vmem:[#allocation8 + $0x1fa0] sm:$0xff]
    %v3403 = vld [vmem:[#allocation8 + $0x1fa8] sm:$0xff]
    %v3404 = vld [vmem:[#allocation8 + $0x1fb0] sm:$0xff]
    %v3405 = vld [vmem:[#allocation8 + $0x1fb8] sm:$0xff]
    %v3406 = vld [vmem:[#allocation8 + $0x1fc0] sm:$0xff]
    %v3407 = vld [vmem:[#allocation8 + $0x1fc8] sm:$0xff]
    %v3408 = vld [vmem:[#allocation8 + $0x1fd0] sm:$0xff]
    %v3409 = vld [vmem:[#allocation8 + $0x1fd8] sm:$0xff]
    %v3410 = vld [vmem:[#allocation8 + $0x1fe0] sm:$0xff]
    %v3411 = vld [vmem:[#allocation8 + $0x1fe8] sm:$0xff]
    %v3412 = vld [vmem:[#allocation8 + $0x1ff0] sm:$0xff]
    %v3413 = vld [vmem:[#allocation8 + $0x1ff8] sm:$0xff]
    %v3414 = vld [vmem:[#allocation10] sm:$0xff]
    %v3416 = vlaneseq
    %v3417 = vshrl.u32 %v3416, 7
    %v3418 = vsub.s32 0, %v3417
    %v3419 = vrot.slane %v3414, %v3418
    %v3420 = vlaneseq
    %v3421 = vshrl.u32 %v3420, 7
    %v3422 = vsub.s32 1, %v3421
    %v3423 = vrot.slane %v3414, %v3422
    %v3424 = vlaneseq
    %v3425 = vshrl.u32 %v3424, 7
    %v3426 = vsub.s32 2, %v3425
    %v3427 = vrot.slane %v3414, %v3426
    %v3428 = vlaneseq
    %v3429 = vshrl.u32 %v3428, 7
    %v3430 = vsub.s32 3, %v3429
    %v3431 = vrot.slane %v3414, %v3430
    %v3432 = vlaneseq
    %v3433 = vshrl.u32 %v3432, 7
    %v3434 = vsub.s32 4, %v3433
    %v3435 = vrot.slane %v3414, %v3434
    %v3436 = vlaneseq
    %v3437 = vshrl.u32 %v3436, 7
    %v3438 = vsub.s32 5, %v3437
    %v3439 = vrot.slane %v3414, %v3438
    %v3440 = vlaneseq
    %v3441 = vshrl.u32 %v3440, 7
    %v3442 = vsub.s32 6, %v3441
    %v3443 = vrot.slane %v3414, %v3442
    %v3444 = vlaneseq
    %v3445 = vshrl.u32 %v3444, 7
    %v3446 = vsub.s32 7, %v3445
    %v3447 = vrot.slane %v3414, %v3446
    %3456 = vmatprep.subr.mxu0 %v2391
    %3457 = vmatpush1.msra.mxu0 %v2390
    %3458 = vmatprep.subr.mxu0 %v2399
    %3459 = vmatpush1.msra.mxu0 %v2398
    %3460 = vmatprep.subr.mxu0 %v2407
    %3461 = vmatpush1.msra.mxu0 %v2406
    %3462 = vmatprep.subr.mxu0 %v2415
    %3463 = vmatpush1.msra.mxu0 %v2414
    %3464 = vmatprep.subr.mxu0 %v2423
    %3465 = vmatpush1.msra.mxu0 %v2422
    %3466 = vmatprep.subr.mxu0 %v2431
    %3467 = vmatpush1.msra.mxu0 %v2430
    %3468 = vmatprep.subr.mxu0 %v2439
    %3469 = vmatpush1.msra.mxu0 %v2438
    %3470 = vmatprep.subr.mxu0 %v2447
    %3471 = vmatpush1.msra.mxu0 %v2446
    %3472 = vmatprep.subr.mxu0 %v2455
    %3473 = vmatpush1.msra.mxu0 %v2454
    %3474 = vmatprep.subr.mxu0 %v2463
    %3475 = vmatpush1.msra.mxu0 %v2462
    %3476 = vmatprep.subr.mxu0 %v2471
    %3477 = vmatpush1.msra.mxu0 %v2470
    %3478 = vmatprep.subr.mxu0 %v2479
    %3479 = vmatpush1.msra.mxu0 %v2478
    %3480 = vmatprep.subr.mxu0 %v2487
    %3481 = vmatpush1.msra.mxu0 %v2486
    %3482 = vmatprep.subr.mxu0 %v2495
    %3483 = vmatpush1.msra.mxu0 %v2494
    %3484 = vmatprep.subr.mxu0 %v2503
    %3485 = vmatpush1.msra.mxu0 %v2502
    %3486 = vmatprep.subr.mxu0 %v2511
    %3487 = vmatpush1.msra.mxu0 %v2510
    %3488 = vmatprep.subr.mxu0 %v2519
    %3489 = vmatpush1.msra.mxu0 %v2518
    %3490 = vmatprep.subr.mxu0 %v2527
    %3491 = vmatpush1.msra.mxu0 %v2526
    %3492 = vmatprep.subr.mxu0 %v2535
    %3493 = vmatpush1.msra.mxu0 %v2534
    %3494 = vmatprep.subr.mxu0 %v2543
    %3495 = vmatpush1.msra.mxu0 %v2542
    %3496 = vmatprep.subr.mxu0 %v2551
    %3497 = vmatpush1.msra.mxu0 %v2550
    %3498 = vmatprep.subr.mxu0 %v2559
    %3499 = vmatpush1.msra.mxu0 %v2558
    %3500 = vmatprep.subr.mxu0 %v2567
    %3501 = vmatpush1.msra.mxu0 %v2566
    %3502 = vmatprep.subr.mxu0 %v2575
    %3503 = vmatpush1.msra.mxu0 %v2574
    %3504 = vmatprep.subr.mxu0 %v2583
    %3505 = vmatpush1.msra.mxu0 %v2582
    %3506 = vmatprep.subr.mxu0 %v2591
    %3507 = vmatpush1.msra.mxu0 %v2590
    %3508 = vmatprep.subr.mxu0 %v2599
    %3509 = vmatpush1.msra.mxu0 %v2598
    %3510 = vmatprep.subr.mxu0 %v2607
    %3511 = vmatpush1.msra.mxu0 %v2606
    %3512 = vmatprep.subr.mxu0 %v2615
    %3513 = vmatpush1.msra.mxu0 %v2614
    %3514 = vmatprep.subr.mxu0 %v2623
    %3515 = vmatpush1.msra.mxu0 %v2622
    %3516 = vmatprep.subr.mxu0 %v2631
    %3517 = vmatpush1.msra.mxu0 %v2630
    %3518 = vmatprep.subr.mxu0 %v2639
    %3519 = vmatpush1.msra.mxu0 %v2638
    %3520 = vmatprep.mubr.f32.mxu0 %v2383
    %3521 = vmatmul.mubr.f32.gmra.mrb[0].mxu0 %v2382
    %v3522 = vpop.f32.mrb[0].mxu0
    %v3523 = vadd.f32 %v3419, %v3522
    %v3524 = vpop.f32.mrb[0].mxu0
    %v3525 = vadd.f32 %v3423, %v3524
    %3526 = vdwg.mxu0
    %3527 = vmatprep.subr.mxu0 %v2647
    %3528 = vmatpush1.msra.mxu0 %v2646
    %3529 = vmatprep.subr.mxu0 %v2655
    %3530 = vmatpush1.msra.mxu0 %v2654
    %3531 = vmatprep.subr.mxu0 %v2663
    %3532 = vmatpush1.msra.mxu0 %v2662
    %3533 = vmatprep.subr.mxu0 %v2671
    %3534 = vmatpush1.msra.mxu0 %v2670
    %3535 = vmatprep.subr.mxu0 %v2679
    %3536 = vmatpush1.msra.mxu0 %v2678
    %3537 = vmatprep.subr.mxu0 %v2687
    %3538 = vmatpush1.msra.mxu0 %v2686
    %3539 = vmatprep.subr.mxu0 %v2695
    %3540 = vmatpush1.msra.mxu0 %v2694
    %3541 = vmatprep.subr.mxu0 %v2703
    %3542 = vmatpush1.msra.mxu0 %v2702
    %3543 = vmatprep.subr.mxu0 %v2711
    %3544 = vmatpush1.msra.mxu0 %v2710
    %3545 = vmatprep.subr.mxu0 %v2719
    %3546 = vmatpush1.msra.mxu0 %v2718
    %3547 = vmatprep.subr.mxu0 %v2727
    %3548 = vmatpush1.msra.mxu0 %v2726
    %3549 = vmatprep.subr.mxu0 %v2735
    %3550 = vmatpush1.msra.mxu0 %v2734
    %3551 = vmatprep.subr.mxu0 %v2743
    %3552 = vmatpush1.msra.mxu0 %v2742
    %3553 = vmatprep.subr.mxu0 %v2751
    %3554 = vmatpush1.msra.mxu0 %v2750
    %3555 = vmatprep.subr.mxu0 %v2759
    %3556 = vmatpush1.msra.mxu0 %v2758
    %3557 = vmatprep.subr.mxu0 %v2767
    %3558 = vmatpush1.msra.mxu0 %v2766
    %3559 = vmatprep.subr.mxu0 %v2775
    %3560 = vmatpush1.msra.mxu0 %v2774
    %3561 = vmatprep.subr.mxu0 %v2783
    %3562 = vmatpush1.msra.mxu0 %v2782
    %3563 = vmatprep.subr.mxu0 %v2791
    %3564 = vmatpush1.msra.mxu0 %v2790
    %3565 = vmatprep.subr.mxu0 %v2799
    %3566 = vmatpush1.msra.mxu0 %v2798
    %3567 = vmatprep.subr.mxu0 %v2807
    %3568 = vmatpush1.msra.mxu0 %v2806
    %3569 = vmatprep.subr.mxu0 %v2815
    %3570 = vmatpush1.msra.mxu0 %v2814
    %3571 = vmatprep.subr.mxu0 %v2823
    %3572 = vmatpush1.msra.mxu0 %v2822
    %3573 = vmatprep.subr.mxu0 %v2831
    %3574 = vmatpush1.msra.mxu0 %v2830
    %3575 = vmatprep.subr.mxu0 %v2839
    %3576 = vmatpush1.msra.mxu0 %v2838
    %3577 = vmatprep.subr.mxu0 %v2847
    %3578 = vmatpush1.msra.mxu0 %v2846
    %3579 = vmatprep.subr.mxu0 %v2855
    %3580 = vmatpush1.msra.mxu0 %v2854
    %3581 = vmatprep.subr.mxu0 %v2863
    %3582 = vmatpush1.msra.mxu0 %v2862
    %3583 = vmatprep.subr.mxu0 %v2871
    %3584 = vmatpush1.msra.mxu0 %v2870
    %3585 = vmatprep.subr.mxu0 %v2879
    %3586 = vmatpush1.msra.mxu0 %v2878
    %3587 = vmatprep.subr.mxu0 %v2887
    %3588 = vmatpush1.msra.mxu0 %v2886
    %3589 = vmatprep.subr.mxu0 %v2895
    %3590 = vmatpush1.msra.mxu0 %v2894
    %3591 = vmatprep.mubr.f32.mxu0 %v2385
    %3592 = vmatmul.mubr.f32.gmra.mrb[0].mxu0 %v2384
    %v3593 = vpop.f32.mrb[0].mxu0
    %v3594 = vadd.f32 %v3523, %v3593
    %v3595 = vpop.f32.mrb[0].mxu0
    %v3596 = vadd.f32 %v3525, %v3595
    %3597 = vdwg.mxu0
    %3598 = vmatprep.subr.mxu0 %v2903
    %3599 = vmatpush1.msra.mxu0 %v2902
    %3600 = vmatprep.subr.mxu0 %v2911
    %3601 = vmatpush1.msra.mxu0 %v2910
    %3602 = vmatprep.subr.mxu0 %v2919
    %3603 = vmatpush1.msra.mxu0 %v2918
    %3604 = vmatprep.subr.mxu0 %v2927
    %3605 = vmatpush1.msra.mxu0 %v2926
    %3606 = vmatprep.subr.mxu0 %v2935
    %3607 = vmatpush1.msra.mxu0 %v2934
    %3608 = vmatprep.subr.mxu0 %v2943
    %3609 = vmatpush1.msra.mxu0 %v2942
    %3610 = vmatprep.subr.mxu0 %v2951
    %3611 = vmatpush1.msra.mxu0 %v2950
    %3612 = vmatprep.subr.mxu0 %v2959
    %3613 = vmatpush1.msra.mxu0 %v2958
    %3614 = vmatprep.subr.mxu0 %v2967
    %3615 = vmatpush1.msra.mxu0 %v2966
    %3616 = vmatprep.subr.mxu0 %v2975
    %3617 = vmatpush1.msra.mxu0 %v2974
    %3618 = vmatprep.subr.mxu0 %v2983
    %3619 = vmatpush1.msra.mxu0 %v2982
    %3620 = vmatprep.subr.mxu0 %v2991
    %3621 = vmatpush1.msra.mxu0 %v2990
    %3622 = vmatprep.subr.mxu0 %v2999
    %3623 = vmatpush1.msra.mxu0 %v2998
    %3624 = vmatprep.subr.mxu0 %v3007
    %3625 = vmatpush1.msra.mxu0 %v3006
    %3626 = vmatprep.subr.mxu0 %v3015
    %3627 = vmatpush1.msra.mxu0 %v3014
    %3628 = vmatprep.subr.mxu0 %v3023
    %3629 = vmatpush1.msra.mxu0 %v3022
    %3630 = vmatprep.subr.mxu0 %v3031
    %3631 = vmatpush1.msra.mxu0 %v3030
    %3632 = vmatprep.subr.mxu0 %v3039
    %3633 = vmatpush1.msra.mxu0 %v3038
    %3634 = vmatprep.subr.mxu0 %v3047
    %3635 = vmatpush1.msra.mxu0 %v3046
    %3636 = vmatprep.subr.mxu0 %v3055
    %3637 = vmatpush1.msra.mxu0 %v3054
    %3638 = vmatprep.subr.mxu0 %v3063
    %3639 = vmatpush1.msra.mxu0 %v3062
    %3640 = vmatprep.subr.mxu0 %v3071
    %3641 = vmatpush1.msra.mxu0 %v3070
    %3642 = vmatprep.subr.mxu0 %v3079
    %3643 = vmatpush1.msra.mxu0 %v3078
    %3644 = vmatprep.subr.mxu0 %v3087
    %3645 = vmatpush1.msra.mxu0 %v3086
    %3646 = vmatprep.subr.mxu0 %v3095
    %3647 = vmatpush1.msra.mxu0 %v3094
    %3648 = vmatprep.subr.mxu0 %v3103
    %3649 = vmatpush1.msra.mxu0 %v3102
    %3650 = vmatprep.subr.mxu0 %v3111
    %3651 = vmatpush1.msra.mxu0 %v3110
    %3652 = vmatprep.subr.mxu0 %v3119
    %3653 = vmatpush1.msra.mxu0 %v3118
    %3654 = vmatprep.subr.mxu0 %v3127
    %3655 = vmatpush1.msra.mxu0 %v3126
    %3656 = vmatprep.subr.mxu0 %v3135
    %3657 = vmatpush1.msra.mxu0 %v3134
    %3658 = vmatprep.subr.mxu0 %v3143
    %3659 = vmatpush1.msra.mxu0 %v3142
    %3660 = vmatprep.subr.mxu0 %v3151
    %3661 = vmatpush1.msra.mxu0 %v3150
    %3662 = vmatprep.mubr.f32.mxu0 %v2387
    %3663 = vmatmul.mubr.f32.gmra.mrb[0].mxu0 %v2386
    %v3664 = vpop.f32.mrb[0].mxu0
    %v3665 = vadd.f32 %v3594, %v3664
    %v3666 = vpop.f32.mrb[0].mxu0
    %v3667 = vadd.f32 %v3596, %v3666
    %3668 = vdwg.mxu0
    %3669 = vmatprep.subr.mxu0 %v3159
    %3670 = vmatpush1.msra.mxu0 %v3158
    %3671 = vmatprep.subr.mxu0 %v3167
    %3672 = vmatpush1.msra.mxu0 %v3166
    %3673 = vmatprep.subr.mxu0 %v3175
    %3674 = vmatpush1.msra.mxu0 %v3174
    %3675 = vmatprep.subr.mxu0 %v3183
    %3676 = vmatpush1.msra.mxu0 %v3182
    %3677 = vmatprep.subr.mxu0 %v3191
    %3678 = vmatpush1.msra.mxu0 %v3190
    %3679 = vmatprep.subr.mxu0 %v3199
    %3680 = vmatpush1.msra.mxu0 %v3198
    %3681 = vmatprep.subr.mxu0 %v3207
    %3682 = vmatpush1.msra.mxu0 %v3206
    %3683 = vmatprep.subr.mxu0 %v3215
    %3684 = vmatpush1.msra.mxu0 %v3214
    %3685 = vmatprep.subr.mxu0 %v3223
    %3686 = vmatpush1.msra.mxu0 %v3222
    %3687 = vmatprep.subr.mxu0 %v3231
    %3688 = vmatpush1.msra.mxu0 %v3230
    %3689 = vmatprep.subr.mxu0 %v3239
    %3690 = vmatpush1.msra.mxu0 %v3238
    %3691 = vmatprep.subr.mxu0 %v3247
    %3692 = vmatpush1.msra.mxu0 %v3246
    %3693 = vmatprep.subr.mxu0 %v3255
    %3694 = vmatpush1.msra.mxu0 %v3254
    %3695 = vmatprep.subr.mxu0 %v3263
    %3696 = vmatpush1.msra.mxu0 %v3262
    %3697 = vmatprep.subr.mxu0 %v3271
    %3698 = vmatpush1.msra.mxu0 %v3270
    %3699 = vmatprep.subr.mxu0 %v3279
    %3700 = vmatpush1.msra.mxu0 %v3278
    %3701 = vmatprep.subr.mxu0 %v3287
    %3702 = vmatpush1.msra.mxu0 %v3286
    %3703 = vmatprep.subr.mxu0 %v3295
    %3704 = vmatpush1.msra.mxu0 %v3294
    %3705 = vmatprep.subr.mxu0 %v3303
    %3706 = vmatpush1.msra.mxu0 %v3302
    %3707 = vmatprep.subr.mxu0 %v3311
    %3708 = vmatpush1.msra.mxu0 %v3310
    %3709 = vmatprep.subr.mxu0 %v3319
    %3710 = vmatpush1.msra.mxu0 %v3318
    %3711 = vmatprep.subr.mxu0 %v3327
    %3712 = vmatpush1.msra.mxu0 %v3326
    %3713 = vmatprep.subr.mxu0 %v3335
    %3714 = vmatpush1.msra.mxu0 %v3334
    %3715 = vmatprep.subr.mxu0 %v3343
    %3716 = vmatpush1.msra.mxu0 %v3342
    %3717 = vmatprep.subr.mxu0 %v3351
    %3718 = vmatpush1.msra.mxu0 %v3350
    %3719 = vmatprep.subr.mxu0 %v3359
    %3720 = vmatpush1.msra.mxu0 %v3358
    %3721 = vmatprep.subr.mxu0 %v3367
    %3722 = vmatpush1.msra.mxu0 %v3366
    %3723 = vmatprep.subr.mxu0 %v3375
    %3724 = vmatpush1.msra.mxu0 %v3374
    %3725 = vmatprep.subr.mxu0 %v3383
    %3726 = vmatpush1.msra.mxu0 %v3382
    %3727 = vmatprep.subr.mxu0 %v3391
    %3728 = vmatpush1.msra.mxu0 %v3390
    %3729 = vmatprep.subr.mxu0 %v3399
    %3730 = vmatpush1.msra.mxu0 %v3398
    %3731 = vmatprep.subr.mxu0 %v3407
    %3732 = vmatpush1.msra.mxu0 %v3406
    %3733 = vmatprep.mubr.f32.mxu0 %v2389
    %3734 = vmatmul.mubr.f32.gmra.mrb[0].mxu0 %v2388
    %v3735 = vpop.f32.mrb[0].mxu0
    %v3736 = vadd.f32 %v3665, %v3735
    %v3737 = vpop.f32.mrb[0].mxu0
    %v3738 = vadd.f32 %v3667, %v3737
    %3739 = vdwg.mxu0
    %3740 = vmatprep.subr.mxu0 %v2393
    %3741 = vmatpush1.msra.mxu0 %v2392
    %3742 = vmatprep.subr.mxu0 %v2401
    %3743 = vmatpush1.msra.mxu0 %v2400
    %3744 = vmatprep.subr.mxu0 %v2409
    %3745 = vmatpush1.msra.mxu0 %v2408
    %3746 = vmatprep.subr.mxu0 %v2417
    %3747 = vmatpush1.msra.mxu0 %v2416
    %3748 = vmatprep.subr.mxu0 %v2425
    %3749 = vmatpush1.msra.mxu0 %v2424
    %3750 = vmatprep.subr.mxu0 %v2433
    %3751 = vmatpush1.msra.mxu0 %v2432
    %3752 = vmatprep.subr.mxu0 %v2441
    %3753 = vmatpush1.msra.mxu0 %v2440
    %3754 = vmatprep.subr.mxu0 %v2449
    %3755 = vmatpush1.msra.mxu0 %v2448
    %3756 = vmatprep.subr.mxu0 %v2457
    %3757 = vmatpush1.msra.mxu0 %v2456
    %3758 = vmatprep.subr.mxu0 %v2465
    %3759 = vmatpush1.msra.mxu0 %v2464
    %3760 = vmatprep.subr.mxu0 %v2473
    %3761 = vmatpush1.msra.mxu0 %v2472
    %3762 = vmatprep.subr.mxu0 %v2481
    %3763 = vmatpush1.msra.mxu0 %v2480
    %3764 = vmatprep.subr.mxu0 %v2489
    %3765 = vmatpush1.msra.mxu0 %v2488
    %3766 = vmatprep.subr.mxu0 %v2497
    %3767 = vmatpush1.msra.mxu0 %v2496
    %3768 = vmatprep.subr.mxu0 %v2505
    %3769 = vmatpush1.msra.mxu0 %v2504
    %3770 = vmatprep.subr.mxu0 %v2513
    %3771 = vmatpush1.msra.mxu0 %v2512
    %3772 = vmatprep.subr.mxu0 %v2521
    %3773 = vmatpush1.msra.mxu0 %v2520
    %3774 = vmatprep.subr.mxu0 %v2529
    %3775 = vmatpush1.msra.mxu0 %v2528
    %3776 = vmatprep.subr.mxu0 %v2537
    %3777 = vmatpush1.msra.mxu0 %v2536
    %3778 = vmatprep.subr.mxu0 %v2545
    %3779 = vmatpush1.msra.mxu0 %v2544
    %3780 = vmatprep.subr.mxu0 %v2553
    %3781 = vmatpush1.msra.mxu0 %v2552
    %3782 = vmatprep.subr.mxu0 %v2561
    %3783 = vmatpush1.msra.mxu0 %v2560
    %3784 = vmatprep.subr.mxu0 %v2569
    %3785 = vmatpush1.msra.mxu0 %v2568
    %3786 = vmatprep.subr.mxu0 %v2577
    %3787 = vmatpush1.msra.mxu0 %v2576
    %3788 = vmatprep.subr.mxu0 %v2585
    %3789 = vmatpush1.msra.mxu0 %v2584
    %3790 = vmatprep.subr.mxu0 %v2593
    %3791 = vmatpush1.msra.mxu0 %v2592
    %3792 = vmatprep.subr.mxu0 %v2601
    %3793 = vmatpush1.msra.mxu0 %v2600
    %3794 = vmatprep.subr.mxu0 %v2609
    %3795 = vmatpush1.msra.mxu0 %v2608
    %3796 = vmatprep.subr.mxu0 %v2617
    %3797 = vmatpush1.msra.mxu0 %v2616
    %3798 = vmatprep.subr.mxu0 %v2625
    %3799 = vmatpush1.msra.mxu0 %v2624
    %3800 = vmatprep.subr.mxu0 %v2633
    %3801 = vmatpush1.msra.mxu0 %v2632
    %3802 = vmatprep.subr.mxu0 %v2641
    %3803 = vmatpush1.msra.mxu0 %v2640
    %3804 = vmatprep.mubr.f32.mxu0 %v2383
    %3805 = vmatmul.mubr.f32.gmra.mrb[0].mxu0 %v2382
    %v3806 = vpop.f32.mrb[0].mxu0
    %v3807 = vadd.f32 %v3427, %v3806
    %v3808 = vpop.f32.mrb[0].mxu0
    %v3809 = vadd.f32 %v3431, %v3808
    %3810 = vdwg.mxu0
    %3811 = vmatprep.subr.mxu0 %v2649
    %3812 = vmatpush1.msra.mxu0 %v2648
    %3813 = vmatprep.subr.mxu0 %v2657
    %3814 = vmatpush1.msra.mxu0 %v2656
    %3815 = vmatprep.subr.mxu0 %v2665
    %3816 = vmatpush1.msra.mxu0 %v2664
    %3817 = vmatprep.subr.mxu0 %v2673
    %3818 = vmatpush1.msra.mxu0 %v2672
    %3819 = vmatprep.subr.mxu0 %v2681
    %3820 = vmatpush1.msra.mxu0 %v2680
    %3821 = vmatprep.subr.mxu0 %v2689
    %3822 = vmatpush1.msra.mxu0 %v2688
    %3823 = vmatprep.subr.mxu0 %v2697
    %3824 = vmatpush1.msra.mxu0 %v2696
    %3825 = vmatprep.subr.mxu0 %v2705
    %3826 = vmatpush1.msra.mxu0 %v2704
    %3827 = vmatprep.subr.mxu0 %v2713
    %3828 = vmatpush1.msra.mxu0 %v2712
    %3829 = vmatprep.subr.mxu0 %v2721
    %3830 = vmatpush1.msra.mxu0 %v2720
    %3831 = vmatprep.subr.mxu0 %v2729
    %3832 = vmatpush1.msra.mxu0 %v2728
    %3833 = vmatprep.subr.mxu0 %v2737
    %3834 = vmatpush1.msra.mxu0 %v2736
    %3835 = vmatprep.subr.mxu0 %v2745
    %3836 = vmatpush1.msra.mxu0 %v2744
    %3837 = vmatprep.subr.mxu0 %v2753
    %3838 = vmatpush1.msra.mxu0 %v2752
    %3839 = vmatprep.subr.mxu0 %v2761
    %3840 = vmatpush1.msra.mxu0 %v2760
    %3841 = vmatprep.subr.mxu0 %v2769
    %3842 = vmatpush1.msra.mxu0 %v2768
    %3843 = vmatprep.subr.mxu0 %v2777
    %3844 = vmatpush1.msra.mxu0 %v2776
    %3845 = vmatprep.subr.mxu0 %v2785
    %3846 = vmatpush1.msra.mxu0 %v2784
    %3847 = vmatprep.subr.mxu0 %v2793
    %3848 = vmatpush1.msra.mxu0 %v2792
    %3849 = vmatprep.subr.mxu0 %v2801
    %3850 = vmatpush1.msra.mxu0 %v2800
    %3851 = vmatprep.subr.mxu0 %v2809
    %3852 = vmatpush1.msra.mxu0 %v2808
    %3853 = vmatprep.subr.mxu0 %v2817
    %3854 = vmatpush1.msra.mxu0 %v2816
    %3855 = vmatprep.subr.mxu0 %v2825
    %3856 = vmatpush1.msra.mxu0 %v2824
    %3857 = vmatprep.subr.mxu0 %v2833
    %3858 = vmatpush1.msra.mxu0 %v2832
    %3859 = vmatprep.subr.mxu0 %v2841
    %3860 = vmatpush1.msra.mxu0 %v2840
    %3861 = vmatprep.subr.mxu0 %v2849
    %3862 = vmatpush1.msra.mxu0 %v2848
    %3863 = vmatprep.subr.mxu0 %v2857
    %3864 = vmatpush1.msra.mxu0 %v2856
    %3865 = vmatprep.subr.mxu0 %v2865
    %3866 = vmatpush1.msra.mxu0 %v2864
    %3867 = vmatprep.subr.mxu0 %v2873
    %3868 = vmatpush1.msra.mxu0 %v2872
    %3869 = vmatprep.subr.mxu0 %v2881
    %3870 = vmatpush1.msra.mxu0 %v2880
    %3871 = vmatprep.subr.mxu0 %v2889
    %3872 = vmatpush1.msra.mxu0 %v2888
    %3873 = vmatprep.subr.mxu0 %v2897
    %3874 = vmatpush1.msra.mxu0 %v2896
    %3875 = vmatprep.mubr.f32.mxu0 %v2385
    %3876 = vmatmul.mubr.f32.gmra.mrb[0].mxu0 %v2384
    %v3877 = vpop.f32.mrb[0].mxu0
    %v3878 = vadd.f32 %v3807, %v3877
    %v3879 = vpop.f32.mrb[0].mxu0
    %v3880 = vadd.f32 %v3809, %v3879
    %3881 = vdwg.mxu0
    %3882 = vmatprep.subr.mxu0 %v2905
    %3883 = vmatpush1.msra.mxu0 %v2904
    %3884 = vmatprep.subr.mxu0 %v2913
    %3885 = vmatpush1.msra.mxu0 %v2912
    %3886 = vmatprep.subr.mxu0 %v2921
    %3887 = vmatpush1.msra.mxu0 %v2920
    %3888 = vmatprep.subr.mxu0 %v2929
    %3889 = vmatpush1.msra.mxu0 %v2928
    %3890 = vmatprep.subr.mxu0 %v2937
    %3891 = vmatpush1.msra.mxu0 %v2936
    %3892 = vmatprep.subr.mxu0 %v2945
    %3893 = vmatpush1.msra.mxu0 %v2944
    %3894 = vmatprep.subr.mxu0 %v2953
    %3895 = vmatpush1.msra.mxu0 %v2952
    %3896 = vmatprep.subr.mxu0 %v2961
    %3897 = vmatpush1.msra.mxu0 %v2960
    %3898 = vmatprep.subr.mxu0 %v2969
    %3899 = vmatpush1.msra.mxu0 %v2968
    %3900 = vmatprep.subr.mxu0 %v2977
    %3901 = vmatpush1.msra.mxu0 %v2976
    %3902 = vmatprep.subr.mxu0 %v2985
    %3903 = vmatpush1.msra.mxu0 %v2984
    %3904 = vmatprep.subr.mxu0 %v2993
    %3905 = vmatpush1.msra.mxu0 %v2992
    %3906 = vmatprep.subr.mxu0 %v3001
    %3907 = vmatpush1.msra.mxu0 %v3000
    %3908 = vmatprep.subr.mxu0 %v3009
    %3909 = vmatpush1.msra.mxu0 %v3008
    %3910 = vmatprep.subr.mxu0 %v3017
    %3911 = vmatpush1.msra.mxu0 %v3016
    %3912 = vmatprep.subr.mxu0 %v3025
    %3913 = vmatpush1.msra.mxu0 %v3024
    %3914 = vmatprep.subr.mxu0 %v3033
    %3915 = vmatpush1.msra.mxu0 %v3032
    %3916 = vmatprep.subr.mxu0 %v3041
    %3917 = vmatpush1.msra.mxu0 %v3040
    %3918 = vmatprep.subr.mxu0 %v3049
    %3919 = vmatpush1.msra.mxu0 %v3048
    %3920 = vmatprep.subr.mxu0 %v3057
    %3921 = vmatpush1.msra.mxu0 %v3056
    %3922 = vmatprep.subr.mxu0 %v3065
    %3923 = vmatpush1.msra.mxu0 %v3064
    %3924 = vmatprep.subr.mxu0 %v3073
    %3925 = vmatpush1.msra.mxu0 %v3072
    %3926 = vmatprep.subr.mxu0 %v3081
    %3927 = vmatpush1.msra.mxu0 %v3080
    %3928 = vmatprep.subr.mxu0 %v3089
    %3929 = vmatpush1.msra.mxu0 %v3088
    %3930 = vmatprep.subr.mxu0 %v3097
    %3931 = vmatpush1.msra.mxu0 %v3096
    %3932 = vmatprep.subr.mxu0 %v3105
    %3933 = vmatpush1.msra.mxu0 %v3104
    %3934 = vmatprep.subr.mxu0 %v3113
    %3935 = vmatpush1.msra.mxu0 %v3112
    %3936 = vmatprep.subr.mxu0 %v3121
    %3937 = vmatpush1.msra.mxu0 %v3120
    %3938 = vmatprep.subr.mxu0 %v3129
    %3939 = vmatpush1.msra.mxu0 %v3128
    %3940 = vmatprep.subr.mxu0 %v3137
    %3941 = vmatpush1.msra.mxu0 %v3136
    %3942 = vmatprep.subr.mxu0 %v3145
    %3943 = vmatpush1.msra.mxu0 %v3144
    %3944 = vmatprep.subr.mxu0 %v3153
    %3945 = vmatpush1.msra.mxu0 %v3152
    %3946 = vmatprep.mubr.f32.mxu0 %v2387
    %3947 = vmatmul.mubr.f32.gmra.mrb[0].mxu0 %v2386
    %v3948 = vpop.f32.mrb[0].mxu0
    %v3949 = vadd.f32 %v3878, %v3948
    %v3950 = vpop.f32.mrb[0].mxu0
    %v3951 = vadd.f32 %v3880, %v3950
    %3952 = vdwg.mxu0
    %3953 = vmatprep.subr.mxu0 %v3161
    %3954 = vmatpush1.msra.mxu0 %v3160
    %3955 = vmatprep.subr.mxu0 %v3169
    %3956 = vmatpush1.msra.mxu0 %v3168
    %3957 = vmatprep.subr.mxu0 %v3177
    %3958 = vmatpush1.msra.mxu0 %v3176
    %3959 = vmatprep.subr.mxu0 %v3185
    %3960 = vmatpush1.msra.mxu0 %v3184
    %3961 = vmatprep.subr.mxu0 %v3193
    %3962 = vmatpush1.msra.mxu0 %v3192
    %3963 = vmatprep.subr.mxu0 %v3201
    %3964 = vmatpush1.msra.mxu0 %v3200
    %3965 = vmatprep.subr.mxu0 %v3209
    %3966 = vmatpush1.msra.mxu0 %v3208
    %3967 = vmatprep.subr.mxu0 %v3217
    %3968 = vmatpush1.msra.mxu0 %v3216
    %3969 = vmatprep.subr.mxu0 %v3225
    %3970 = vmatpush1.msra.mxu0 %v3224
    %3971 = vmatprep.subr.mxu0 %v3233
    %3972 = vmatpush1.msra.mxu0 %v3232
    %3973 = vmatprep.subr.mxu0 %v3241
    %3974 = vmatpush1.msra.mxu0 %v3240
    %3975 = vmatprep.subr.mxu0 %v3249
    %3976 = vmatpush1.msra.mxu0 %v3248
    %3977 = vmatprep.subr.mxu0 %v3257
    %3978 = vmatpush1.msra.mxu0 %v3256
    %3979 = vmatprep.subr.mxu0 %v3265
    %3980 = vmatpush1.msra.mxu0 %v3264
    %3981 = vmatprep.subr.mxu0 %v3273
    %3982 = vmatpush1.msra.mxu0 %v3272
    %3983 = vmatprep.subr.mxu0 %v3281
    %3984 = vmatpush1.msra.mxu0 %v3280
    %3985 = vmatprep.subr.mxu0 %v3289
    %3986 = vmatpush1.msra.mxu0 %v3288
    %3987 = vmatprep.subr.mxu0 %v3297
    %3988 = vmatpush1.msra.mxu0 %v3296
    %3989 = vmatprep.subr.mxu0 %v3305
    %3990 = vmatpush1.msra.mxu0 %v3304
    %3991 = vmatprep.subr.mxu0 %v3313
    %3992 = vmatpush1.msra.mxu0 %v3312
    %3993 = vmatprep.subr.mxu0 %v3321
    %3994 = vmatpush1.msra.mxu0 %v3320
    %3995 = vmatprep.subr.mxu0 %v3329
    %3996 = vmatpush1.msra.mxu0 %v3328
    %3997 = vmatprep.subr.mxu0 %v3337
    %3998 = vmatpush1.msra.mxu0 %v3336
    %3999 = vmatprep.subr.mxu0 %v3345
    %4000 = vmatpush1.msra.mxu0 %v3344
    %4001 = vmatprep.subr.mxu0 %v3353
    %4002 = vmatpush1.msra.mxu0 %v3352
    %4003 = vmatprep.subr.mxu0 %v3361
    %4004 = vmatpush1.msra.mxu0 %v3360
    %4005 = vmatprep.subr.mxu0 %v3369
    %4006 = vmatpush1.msra.mxu0 %v3368
    %4007 = vmatprep.subr.mxu0 %v3377
    %4008 = vmatpush1.msra.mxu0 %v3376
    %4009 = vmatprep.subr.mxu0 %v3385
    %4010 = vmatpush1.msra.mxu0 %v3384
    %4011 = vmatprep.subr.mxu0 %v3393
    %4012 = vmatpush1.msra.mxu0 %v3392
    %4013 = vmatprep.subr.mxu0 %v3401
    %4014 = vmatpush1.msra.mxu0 %v3400
    %4015 = vmatprep.subr.mxu0 %v3409
    %4016 = vmatpush1.msra.mxu0 %v3408
    %4017 = vmatprep.mubr.f32.mxu0 %v2389
    %4018 = vmatmul.mubr.f32.gmra.mrb[0].mxu0 %v2388
    %v4019 = vpop.f32.mrb[0].mxu0
    %v4020 = vadd.f32 %v3949, %v4019
    %v4021 = vpop.f32.mrb[0].mxu0
    %v4022 = vadd.f32 %v3951, %v4021
    %4023 = vdwg.mxu0
    %4024 = vmatprep.subr.mxu0 %v2395
    %4025 = vmatpush1.msra.mxu0 %v2394
    %4026 = vmatprep.subr.mxu0 %v2403
    %4027 = vmatpush1.msra.mxu0 %v2402
    %4028 = vmatprep.subr.mxu0 %v2411
    %4029 = vmatpush1.msra.mxu0 %v2410
    %4030 = vmatprep.subr.mxu0 %v2419
    %4031 = vmatpush1.msra.mxu0 %v2418
    %4032 = vmatprep.subr.mxu0 %v2427
    %4033 = vmatpush1.msra.mxu0 %v2426
    %4034 = vmatprep.subr.mxu0 %v2435
    %4035 = vmatpush1.msra.mxu0 %v2434
    %4036 = vmatprep.subr.mxu0 %v2443
    %4037 = vmatpush1.msra.mxu0 %v2442
    %4038 = vmatprep.subr.mxu0 %v2451
    %4039 = vmatpush1.msra.mxu0 %v2450
    %4040 = vmatprep.subr.mxu0 %v2459
    %4041 = vmatpush1.msra.mxu0 %v2458
    %4042 = vmatprep.subr.mxu0 %v2467
    %4043 = vmatpush1.msra.mxu0 %v2466
    %4044 = vmatprep.subr.mxu0 %v2475
    %4045 = vmatpush1.msra.mxu0 %v2474
    %4046 = vmatprep.subr.mxu0 %v2483
    %4047 = vmatpush1.msra.mxu0 %v2482
    %4048 = vmatprep.subr.mxu0 %v2491
    %4049 = vmatpush1.msra.mxu0 %v2490
    %4050 = vmatprep.subr.mxu0 %v2499
    %4051 = vmatpush1.msra.mxu0 %v2498
    %4052 = vmatprep.subr.mxu0 %v2507
    %4053 = vmatpush1.msra.mxu0 %v2506
    %4054 = vmatprep.subr.mxu0 %v2515
    %4055 = vmatpush1.msra.mxu0 %v2514
    %4056 = vmatprep.subr.mxu0 %v2523
    %4057 = vmatpush1.msra.mxu0 %v2522
    %4058 = vmatprep.subr.mxu0 %v2531
    %4059 = vmatpush1.msra.mxu0 %v2530
    %4060 = vmatprep.subr.mxu0 %v2539
    %4061 = vmatpush1.msra.mxu0 %v2538
    %4062 = vmatprep.subr.mxu0 %v2547
    %4063 = vmatpush1.msra.mxu0 %v2546
    %4064 = vmatprep.subr.mxu0 %v2555
    %4065 = vmatpush1.msra.mxu0 %v2554
    %4066 = vmatprep.subr.mxu0 %v2563
    %4067 = vmatpush1.msra.mxu0 %v2562
    %4068 = vmatprep.subr.mxu0 %v2571
    %4069 = vmatpush1.msra.mxu0 %v2570
    %4070 = vmatprep.subr.mxu0 %v2579
    %4071 = vmatpush1.msra.mxu0 %v2578
    %4072 = vmatprep.subr.mxu0 %v2587
    %4073 = vmatpush1.msra.mxu0 %v2586
    %4074 = vmatprep.subr.mxu0 %v2595
    %4075 = vmatpush1.msra.mxu0 %v2594
    %4076 = vmatprep.subr.mxu0 %v2603
    %4077 = vmatpush1.msra.mxu0 %v2602
    %4078 = vmatprep.subr.mxu0 %v2611
    %4079 = vmatpush1.msra.mxu0 %v2610
    %4080 = vmatprep.subr.mxu0 %v2619
    %4081 = vmatpush1.msra.mxu0 %v2618
    %4082 = vmatprep.subr.mxu0 %v2627
    %4083 = vmatpush1.msra.mxu0 %v2626
    %4084 = vmatprep.subr.mxu0 %v2635
    %4085 = vmatpush1.msra.mxu0 %v2634
    %4086 = vmatprep.subr.mxu0 %v2643
    %4087 = vmatpush1.msra.mxu0 %v2642
    %4088 = vmatprep.mubr.f32.mxu0 %v2383
    %4089 = vmatmul.mubr.f32.gmra.mrb[0].mxu0 %v2382
    %v4090 = vpop.f32.mrb[0].mxu0
    %v4091 = vadd.f32 %v3435, %v4090
    %v4092 = vpop.f32.mrb[0].mxu0
    %v4093 = vadd.f32 %v3439, %v4092
    %4094 = vdwg.mxu0
    %4095 = vmatprep.subr.mxu0 %v2651
    %4096 = vmatpush1.msra.mxu0 %v2650
    %4097 = vmatprep.subr.mxu0 %v2659
    %4098 = vmatpush1.msra.mxu0 %v2658
    %4099 = vmatprep.subr.mxu0 %v2667
    %4100 = vmatpush1.msra.mxu0 %v2666
    %4101 = vmatprep.subr.mxu0 %v2675
    %4102 = vmatpush1.msra.mxu0 %v2674
    %4103 = vmatprep.subr.mxu0 %v2683
    %4104 = vmatpush1.msra.mxu0 %v2682
    %4105 = vmatprep.subr.mxu0 %v2691
    %4106 = vmatpush1.msra.mxu0 %v2690
    %4107 = vmatprep.subr.mxu0 %v2699
    %4108 = vmatpush1.msra.mxu0 %v2698
    %4109 = vmatprep.subr.mxu0 %v2707
    %4110 = vmatpush1.msra.mxu0 %v2706
    %4111 = vmatprep.subr.mxu0 %v2715
    %4112 = vmatpush1.msra.mxu0 %v2714
    %4113 = vmatprep.subr.mxu0 %v2723
    %4114 = vmatpush1.msra.mxu0 %v2722
    %4115 = vmatprep.subr.mxu0 %v2731
    %4116 = vmatpush1.msra.mxu0 %v2730
    %4117 = vmatprep.subr.mxu0 %v2739
    %4118 = vmatpush1.msra.mxu0 %v2738
    %4119 = vmatprep.subr.mxu0 %v2747
    %4120 = vmatpush1.msra.mxu0 %v2746
    %4121 = vmatprep.subr.mxu0 %v2755
    %4122 = vmatpush1.msra.mxu0 %v2754
    %4123 = vmatprep.subr.mxu0 %v2763
    %4124 = vmatpush1.msra.mxu0 %v2762
    %4125 = vmatprep.subr.mxu0 %v2771
    %4126 = vmatpush1.msra.mxu0 %v2770
    %4127 = vmatprep.subr.mxu0 %v2779
    %4128 = vmatpush1.msra.mxu0 %v2778
    %4129 = vmatprep.subr.mxu0 %v2787
    %4130 = vmatpush1.msra.mxu0 %v2786
    %4131 = vmatprep.subr.mxu0 %v2795
    %4132 = vmatpush1.msra.mxu0 %v2794
    %4133 = vmatprep.subr.mxu0 %v2803
    %4134 = vmatpush1.msra.mxu0 %v2802
    %4135 = vmatprep.subr.mxu0 %v2811
    %4136 = vmatpush1.msra.mxu0 %v2810
    %4137 = vmatprep.subr.mxu0 %v2819
    %4138 = vmatpush1.msra.mxu0 %v2818
    %4139 = vmatprep.subr.mxu0 %v2827
    %4140 = vmatpush1.msra.mxu0 %v2826
    %4141 = vmatprep.subr.mxu0 %v2835
    %4142 = vmatpush1.msra.mxu0 %v2834
    %4143 = vmatprep.subr.mxu0 %v2843
    %4144 = vmatpush1.msra.mxu0 %v2842
    %4145 = vmatprep.subr.mxu0 %v2851
    %4146 = vmatpush1.msra.mxu0 %v2850
    %4147 = vmatprep.subr.mxu0 %v2859
    %4148 = vmatpush1.msra.mxu0 %v2858
    %4149 = vmatprep.subr.mxu0 %v2867
    %4150 = vmatpush1.msra.mxu0 %v2866
    %4151 = vmatprep.subr.mxu0 %v2875
    %4152 = vmatpush1.msra.mxu0 %v2874
    %4153 = vmatprep.subr.mxu0 %v2883
    %4154 = vmatpush1.msra.mxu0 %v2882
    %4155 = vmatprep.subr.mxu0 %v2891
    %4156 = vmatpush1.msra.mxu0 %v2890
    %4157 = vmatprep.subr.mxu0 %v2899
    %4158 = vmatpush1.msra.mxu0 %v2898
    %4159 = vmatprep.mubr.f32.mxu0 %v2385
    %4160 = vmatmul.mubr.f32.gmra.mrb[0].mxu0 %v2384
    %v4161 = vpop.f32.mrb[0].mxu0
    %v4162 = vadd.f32 %v4091, %v4161
    %v4163 = vpop.f32.mrb[0].mxu0
    %v4164 = vadd.f32 %v4093, %v4163
    %4165 = vdwg.mxu0
    %4166 = vmatprep.subr.mxu0 %v2907
    %4167 = vmatpush1.msra.mxu0 %v2906
    %4168 = vmatprep.subr.mxu0 %v2915
    %4169 = vmatpush1.msra.mxu0 %v2914
    %4170 = vmatprep.subr.mxu0 %v2923
    %4171 = vmatpush1.msra.mxu0 %v2922
    %4172 = vmatprep.subr.mxu0 %v2931
    %4173 = vmatpush1.msra.mxu0 %v2930
    %4174 = vmatprep.subr.mxu0 %v2939
    %4175 = vmatpush1.msra.mxu0 %v2938
    %4176 = vmatprep.subr.mxu0 %v2947
    %4177 = vmatpush1.msra.mxu0 %v2946
    %4178 = vmatprep.subr.mxu0 %v2955
    %4179 = vmatpush1.msra.mxu0 %v2954
    %4180 = vmatprep.subr.mxu0 %v2963
    %4181 = vmatpush1.msra.mxu0 %v2962
    %4182 = vmatprep.subr.mxu0 %v2971
    %4183 = vmatpush1.msra.mxu0 %v2970
    %4184 = vmatprep.subr.mxu0 %v2979
    %4185 = vmatpush1.msra.mxu0 %v2978
    %4186 = vmatprep.subr.mxu0 %v2987
    %4187 = vmatpush1.msra.mxu0 %v2986
    %4188 = vmatprep.subr.mxu0 %v2995
    %4189 = vmatpush1.msra.mxu0 %v2994
    %4190 = vmatprep.subr.mxu0 %v3003
    %4191 = vmatpush1.msra.mxu0 %v3002
    %4192 = vmatprep.subr.mxu0 %v3011
    %4193 = vmatpush1.msra.mxu0 %v3010
    %4194 = vmatprep.subr.mxu0 %v3019
    %4195 = vmatpush1.msra.mxu0 %v3018
    %4196 = vmatprep.subr.mxu0 %v3027
    %4197 = vmatpush1.msra.mxu0 %v3026
    %4198 = vmatprep.subr.mxu0 %v3035
    %4199 = vmatpush1.msra.mxu0 %v3034
    %4200 = vmatprep.subr.mxu0 %v3043
    %4201 = vmatpush1.msra.mxu0 %v3042
    %4202 = vmatprep.subr.mxu0 %v3051
    %4203 = vmatpush1.msra.mxu0 %v3050
    %4204 = vmatprep.subr.mxu0 %v3059
    %4205 = vmatpush1.msra.mxu0 %v3058
    %4206 = vmatprep.subr.mxu0 %v3067
    %4207 = vmatpush1.msra.mxu0 %v3066
    %4208 = vmatprep.subr.mxu0 %v3075
    %4209 = vmatpush1.msra.mxu0 %v3074
    %4210 = vmatprep.subr.mxu0 %v3083
    %4211 = vmatpush1.msra.mxu0 %v3082
    %4212 = vmatprep.subr.mxu0 %v3091
    %4213 = vmatpush1.msra.mxu0 %v3090
    %4214 = vmatprep.subr.mxu0 %v3099
    %4215 = vmatpush1.msra.mxu0 %v3098
    %4216 = vmatprep.subr.mxu0 %v3107
    %4217 = vmatpush1.msra.mxu0 %v3106
    %4218 = vmatprep.subr.mxu0 %v3115
    %4219 = vmatpush1.msra.mxu0 %v3114
    %4220 = vmatprep.subr.mxu0 %v3123
    %4221 = vmatpush1.msra.mxu0 %v3122
    %4222 = vmatprep.subr.mxu0 %v3131
    %4223 = vmatpush1.msra.mxu0 %v3130
    %4224 = vmatprep.subr.mxu0 %v3139
    %4225 = vmatpush1.msra.mxu0 %v3138
    %4226 = vmatprep.subr.mxu0 %v3147
    %4227 = vmatpush1.msra.mxu0 %v3146
    %4228 = vmatprep.subr.mxu0 %v3155
    %4229 = vmatpush1.msra.mxu0 %v3154
    %4230 = vmatprep.mubr.f32.mxu0 %v2387
    %4231 = vmatmul.mubr.f32.gmra.mrb[0].mxu0 %v2386
    %v4232 = vpop.f32.mrb[0].mxu0
    %v4233 = vadd.f32 %v4162, %v4232
    %v4234 = vpop.f32.mrb[0].mxu0
    %v4235 = vadd.f32 %v4164, %v4234
    %4236 = vdwg.mxu0
    %4237 = vmatprep.subr.mxu0 %v3163
    %4238 = vmatpush1.msra.mxu0 %v3162
    %4239 = vmatprep.subr.mxu0 %v3171
    %4240 = vmatpush1.msra.mxu0 %v3170
    %4241 = vmatprep.subr.mxu0 %v3179
    %4242 = vmatpush1.msra.mxu0 %v3178
    %4243 = vmatprep.subr.mxu0 %v3187
    %4244 = vmatpush1.msra.mxu0 %v3186
    %4245 = vmatprep.subr.mxu0 %v3195
    %4246 = vmatpush1.msra.mxu0 %v3194
    %4247 = vmatprep.subr.mxu0 %v3203
    %4248 = vmatpush1.msra.mxu0 %v3202
    %4249 = vmatprep.subr.mxu0 %v3211
    %4250 = vmatpush1.msra.mxu0 %v3210
    %4251 = vmatprep.subr.mxu0 %v3219
    %4252 = vmatpush1.msra.mxu0 %v3218
    %4253 = vmatprep.subr.mxu0 %v3227
    %4254 = vmatpush1.msra.mxu0 %v3226
    %4255 = vmatprep.subr.mxu0 %v3235
    %4256 = vmatpush1.msra.mxu0 %v3234
    %4257 = vmatprep.subr.mxu0 %v3243
    %4258 = vmatpush1.msra.mxu0 %v3242
    %4259 = vmatprep.subr.mxu0 %v3251
    %4260 = vmatpush1.msra.mxu0 %v3250
    %4261 = vmatprep.subr.mxu0 %v3259
    %4262 = vmatpush1.msra.mxu0 %v3258
    %4263 = vmatprep.subr.mxu0 %v3267
    %4264 = vmatpush1.msra.mxu0 %v3266
    %4265 = vmatprep.subr.mxu0 %v3275
    %4266 = vmatpush1.msra.mxu0 %v3274
    %4267 = vmatprep.subr.mxu0 %v3283
    %4268 = vmatpush1.msra.mxu0 %v3282
    %4269 = vmatprep.subr.mxu0 %v3291
    %4270 = vmatpush1.msra.mxu0 %v3290
    %4271 = vmatprep.subr.mxu0 %v3299
    %4272 = vmatpush1.msra.mxu0 %v3298
    %4273 = vmatprep.subr.mxu0 %v3307
    %4274 = vmatpush1.msra.mxu0 %v3306
    %4275 = vmatprep.subr.mxu0 %v3315
    %4276 = vmatpush1.msra.mxu0 %v3314
    %4277 = vmatprep.subr.mxu0 %v3323
    %4278 = vmatpush1.msra.mxu0 %v3322
    %4279 = vmatprep.subr.mxu0 %v3331
    %4280 = vmatpush1.msra.mxu0 %v3330
    %4281 = vmatprep.subr.mxu0 %v3339
    %4282 = vmatpush1.msra.mxu0 %v3338
    %4283 = vmatprep.subr.mxu0 %v3347
    %4284 = vmatpush1.msra.mxu0 %v3346
    %4285 = vmatprep.subr.mxu0 %v3355
    %4286 = vmatpush1.msra.mxu0 %v3354
    %4287 = vmatprep.subr.mxu0 %v3363
    %4288 = vmatpush1.msra.mxu0 %v3362
    %4289 = vmatprep.subr.mxu0 %v3371
    %4290 = vmatpush1.msra.mxu0 %v3370
    %4291 = vmatprep.subr.mxu0 %v3379
    %4292 = vmatpush1.msra.mxu0 %v3378
    %4293 = vmatprep.subr.mxu0 %v3387
    %4294 = vmatpush1.msra.mxu0 %v3386
    %4295 = vmatprep.subr.mxu0 %v3395
    %4296 = vmatpush1.msra.mxu0 %v3394
    %4297 = vmatprep.subr.mxu0 %v3403
    %4298 = vmatpush1.msra.mxu0 %v3402
    %4299 = vmatprep.subr.mxu0 %v3411
    %4300 = vmatpush1.msra.mxu0 %v3410
    %4301 = vmatprep.mubr.f32.mxu0 %v2389
    %4302 = vmatmul.mubr.f32.gmra.mrb[0].mxu0 %v2388
    %v4303 = vpop.f32.mrb[0].mxu0
    %v4304 = vadd.f32 %v4233, %v4303
    %v4305 = vpop.f32.mrb[0].mxu0
    %v4306 = vadd.f32 %v4235, %v4305
    %4307 = vdwg.mxu0
    %4308 = vmatprep.subr.mxu0 %v2397
    %4309 = vmatpush1.msra.mxu0 %v2396
    %4310 = vmatprep.subr.mxu0 %v2405
    %4311 = vmatpush1.msra.mxu0 %v2404
    %4312 = vmatprep.subr.mxu0 %v2413
    %4313 = vmatpush1.msra.mxu0 %v2412
    %4314 = vmatprep.subr.mxu0 %v2421
    %4315 = vmatpush1.msra.mxu0 %v2420
    %4316 = vmatprep.subr.mxu0 %v2429
    %4317 = vmatpush1.msra.mxu0 %v2428
    %4318 = vmatprep.subr.mxu0 %v2437
    %4319 = vmatpush1.msra.mxu0 %v2436
    %4320 = vmatprep.subr.mxu0 %v2445
    %4321 = vmatpush1.msra.mxu0 %v2444
    %4322 = vmatprep.subr.mxu0 %v2453
    %4323 = vmatpush1.msra.mxu0 %v2452
    %4324 = vmatprep.subr.mxu0 %v2461
    %4325 = vmatpush1.msra.mxu0 %v2460
    %4326 = vmatprep.subr.mxu0 %v2469
    %4327 = vmatpush1.msra.mxu0 %v2468
    %4328 = vmatprep.subr.mxu0 %v2477
    %4329 = vmatpush1.msra.mxu0 %v2476
    %4330 = vmatprep.subr.mxu0 %v2485
    %4331 = vmatpush1.msra.mxu0 %v2484
    %4332 = vmatprep.subr.mxu0 %v2493
    %4333 = vmatpush1.msra.mxu0 %v2492
    %4334 = vmatprep.subr.mxu0 %v2501
    %4335 = vmatpush1.msra.mxu0 %v2500
    %4336 = vmatprep.subr.mxu0 %v2509
    %4337 = vmatpush1.msra.mxu0 %v2508
    %4338 = vmatprep.subr.mxu0 %v2517
    %4339 = vmatpush1.msra.mxu0 %v2516
    %4340 = vmatprep.subr.mxu0 %v2525
    %4341 = vmatpush1.msra.mxu0 %v2524
    %4342 = vmatprep.subr.mxu0 %v2533
    %4343 = vmatpush1.msra.mxu0 %v2532
    %4344 = vmatprep.subr.mxu0 %v2541
    %4345 = vmatpush1.msra.mxu0 %v2540
    %4346 = vmatprep.subr.mxu0 %v2549
    %4347 = vmatpush1.msra.mxu0 %v2548
    %4348 = vmatprep.subr.mxu0 %v2557
    %4349 = vmatpush1.msra.mxu0 %v2556
    %4350 = vmatprep.subr.mxu0 %v2565
    %4351 = vmatpush1.msra.mxu0 %v2564
    %4352 = vmatprep.subr.mxu0 %v2573
    %4353 = vmatpush1.msra.mxu0 %v2572
    %4354 = vmatprep.subr.mxu0 %v2581
    %4355 = vmatpush1.msra.mxu0 %v2580
    %4356 = vmatprep.subr.mxu0 %v2589
    %4357 = vmatpush1.msra.mxu0 %v2588
    %4358 = vmatprep.subr.mxu0 %v2597
    %4359 = vmatpush1.msra.mxu0 %v2596
    %4360 = vmatprep.subr.mxu0 %v2605
    %4361 = vmatpush1.msra.mxu0 %v2604
    %4362 = vmatprep.subr.mxu0 %v2613
    %4363 = vmatpush1.msra.mxu0 %v2612
    %4364 = vmatprep.subr.mxu0 %v2621
    %4365 = vmatpush1.msra.mxu0 %v2620
    %4366 = vmatprep.subr.mxu0 %v2629
    %4367 = vmatpush1.msra.mxu0 %v2628
    %4368 = vmatprep.subr.mxu0 %v2637
    %4369 = vmatpush1.msra.mxu0 %v2636
    %4370 = vmatprep.subr.mxu0 %v2645
    %4371 = vmatpush1.msra.mxu0 %v2644
    %4372 = vmatprep.mubr.f32.mxu0 %v2383
    %4373 = vmatmul.mubr.f32.gmra.mrb[0].mxu0 %v2382
    %v4374 = vpop.f32.mrb[0].mxu0
    %v4375 = vadd.f32 %v3443, %v4374
    %v4376 = vpop.f32.mrb[0].mxu0
    %v4377 = vadd.f32 %v3447, %v4376
    %4378 = vdwg.mxu0
    %4379 = vmatprep.subr.mxu0 %v2653
    %4380 = vmatpush1.msra.mxu0 %v2652
    %4381 = vmatprep.subr.mxu0 %v2661
    %4382 = vmatpush1.msra.mxu0 %v2660
    %4383 = vmatprep.subr.mxu0 %v2669
    %4384 = vmatpush1.msra.mxu0 %v2668
    %4385 = vmatprep.subr.mxu0 %v2677
    %4386 = vmatpush1.msra.mxu0 %v2676
    %4387 = vmatprep.subr.mxu0 %v2685
    %4388 = vmatpush1.msra.mxu0 %v2684
    %4389 = vmatprep.subr.mxu0 %v2693
    %4390 = vmatpush1.msra.mxu0 %v2692
    %4391 = vmatprep.subr.mxu0 %v2701
    %4392 = vmatpush1.msra.mxu0 %v2700
    %4393 = vmatprep.subr.mxu0 %v2709
    %4394 = vmatpush1.msra.mxu0 %v2708
    %4395 = vmatprep.subr.mxu0 %v2717
    %4396 = vmatpush1.msra.mxu0 %v2716
    %4397 = vmatprep.subr.mxu0 %v2725
    %4398 = vmatpush1.msra.mxu0 %v2724
    %4399 = vmatprep.subr.mxu0 %v2733
    %4400 = vmatpush1.msra.mxu0 %v2732
    %4401 = vmatprep.subr.mxu0 %v2741
    %4402 = vmatpush1.msra.mxu0 %v2740
    %4403 = vmatprep.subr.mxu0 %v2749
    %4404 = vmatpush1.msra.mxu0 %v2748
    %4405 = vmatprep.subr.mxu0 %v2757
    %4406 = vmatpush1.msra.mxu0 %v2756
    %4407 = vmatprep.subr.mxu0 %v2765
    %4408 = vmatpush1.msra.mxu0 %v2764
    %4409 = vmatprep.subr.mxu0 %v2773
    %4410 = vmatpush1.msra.mxu0 %v2772
    %4411 = vmatprep.subr.mxu0 %v2781
    %4412 = vmatpush1.msra.mxu0 %v2780
    %4413 = vmatprep.subr.mxu0 %v2789
    %4414 = vmatpush1.msra.mxu0 %v2788
    %4415 = vmatprep.subr.mxu0 %v2797
    %4416 = vmatpush1.msra.mxu0 %v2796
    %4417 = vmatprep.subr.mxu0 %v2805
    %4418 = vmatpush1.msra.mxu0 %v2804
    %4419 = vmatprep.subr.mxu0 %v2813
    %4420 = vmatpush1.msra.mxu0 %v2812
    %4421 = vmatprep.subr.mxu0 %v2821
    %4422 = vmatpush1.msra.mxu0 %v2820
    %4423 = vmatprep.subr.mxu0 %v2829
    %4424 = vmatpush1.msra.mxu0 %v2828
    %4425 = vmatprep.subr.mxu0 %v2837
    %4426 = vmatpush1.msra.mxu0 %v2836
    %4427 = vmatprep.subr.mxu0 %v2845
    %4428 = vmatpush1.msra.mxu0 %v2844
    %4429 = vmatprep.subr.mxu0 %v2853
    %4430 = vmatpush1.msra.mxu0 %v2852
    %4431 = vmatprep.subr.mxu0 %v2861
    %4432 = vmatpush1.msra.mxu0 %v2860
    %4433 = vmatprep.subr.mxu0 %v2869
    %4434 = vmatpush1.msra.mxu0 %v2868
    %4435 = vmatprep.subr.mxu0 %v2877
    %4436 = vmatpush1.msra.mxu0 %v2876
    %4437 = vmatprep.subr.mxu0 %v2885
    %4438 = vmatpush1.msra.mxu0 %v2884
    %4439 = vmatprep.subr.mxu0 %v2893
    %4440 = vmatpush1.msra.mxu0 %v2892
    %4441 = vmatprep.subr.mxu0 %v2901
    %4442 = vmatpush1.msra.mxu0 %v2900
    %4443 = vmatprep.mubr.f32.mxu0 %v2385
    %4444 = vmatmul.mubr.f32.gmra.mrb[0].mxu0 %v2384
    %v4445 = vpop.f32.mrb[0].mxu0
    %v4446 = vadd.f32 %v4375, %v4445
    %v4447 = vpop.f32.mrb[0].mxu0
    %v4448 = vadd.f32 %v4377, %v4447
    %4449 = vdwg.mxu0
    %4450 = vmatprep.subr.mxu0 %v2909
    %4451 = vmatpush1.msra.mxu0 %v2908
    %4452 = vmatprep.subr.mxu0 %v2917
    %4453 = vmatpush1.msra.mxu0 %v2916
    %4454 = vmatprep.subr.mxu0 %v2925
    %4455 = vmatpush1.msra.mxu0 %v2924
    %4456 = vmatprep.subr.mxu0 %v2933
    %4457 = vmatpush1.msra.mxu0 %v2932
    %4458 = vmatprep.subr.mxu0 %v2941
    %4459 = vmatpush1.msra.mxu0 %v2940
    %4460 = vmatprep.subr.mxu0 %v2949
    %4461 = vmatpush1.msra.mxu0 %v2948
    %4462 = vmatprep.subr.mxu0 %v2957
    %4463 = vmatpush1.msra.mxu0 %v2956
    %4464 = vmatprep.subr.mxu0 %v2965
    %4465 = vmatpush1.msra.mxu0 %v2964
    %4466 = vmatprep.subr.mxu0 %v2973
    %4467 = vmatpush1.msra.mxu0 %v2972
    %4468 = vmatprep.subr.mxu0 %v2981
    %4469 = vmatpush1.msra.mxu0 %v2980
    %4470 = vmatprep.subr.mxu0 %v2989
    %4471 = vmatpush1.msra.mxu0 %v2988
    %4472 = vmatprep.subr.mxu0 %v2997
    %4473 = vmatpush1.msra.mxu0 %v2996
    %4474 = vmatprep.subr.mxu0 %v3005
    %4475 = vmatpush1.msra.mxu0 %v3004
    %4476 = vmatprep.subr.mxu0 %v3013
    %4477 = vmatpush1.msra.mxu0 %v3012
    %4478 = vmatprep.subr.mxu0 %v3021
    %4479 = vmatpush1.msra.mxu0 %v3020
    %4480 = vmatprep.subr.mxu0 %v3029
    %4481 = vmatpush1.msra.mxu0 %v3028
    %4482 = vmatprep.subr.mxu0 %v3037
    %4483 = vmatpush1.msra.mxu0 %v3036
    %4484 = vmatprep.subr.mxu0 %v3045
    %4485 = vmatpush1.msra.mxu0 %v3044
    %4486 = vmatprep.subr.mxu0 %v3053
    %4487 = vmatpush1.msra.mxu0 %v3052
    %4488 = vmatprep.subr.mxu0 %v3061
    %4489 = vmatpush1.msra.mxu0 %v3060
    %4490 = vmatprep.subr.mxu0 %v3069
    %4491 = vmatpush1.msra.mxu0 %v3068
    %4492 = vmatprep.subr.mxu0 %v3077
    %4493 = vmatpush1.msra.mxu0 %v3076
    %4494 = vmatprep.subr.mxu0 %v3085
    %4495 = vmatpush1.msra.mxu0 %v3084
    %4496 = vmatprep.subr.mxu0 %v3093
    %4497 = vmatpush1.msra.mxu0 %v3092
    %4498 = vmatprep.subr.mxu0 %v3101
    %4499 = vmatpush1.msra.mxu0 %v3100
    %4500 = vmatprep.subr.mxu0 %v3109
    %4501 = vmatpush1.msra.mxu0 %v3108
    %4502 = vmatprep.subr.mxu0 %v3117
    %4503 = vmatpush1.msra.mxu0 %v3116
    %4504 = vmatprep.subr.mxu0 %v3125
    %4505 = vmatpush1.msra.mxu0 %v3124
    %4506 = vmatprep.subr.mxu0 %v3133
    %4507 = vmatpush1.msra.mxu0 %v3132
    %4508 = vmatprep.subr.mxu0 %v3141
    %4509 = vmatpush1.msra.mxu0 %v3140
    %4510 = vmatprep.subr.mxu0 %v3149
    %4511 = vmatpush1.msra.mxu0 %v3148
    %4512 = vmatprep.subr.mxu0 %v3157
    %4513 = vmatpush1.msra.mxu0 %v3156
    %4514 = vmatprep.mubr.f32.mxu0 %v2387
    %4515 = vmatmul.mubr.f32.gmra.mrb[0].mxu0 %v2386
    %v4516 = vpop.f32.mrb[0].mxu0
    %v4517 = vadd.f32 %v4446, %v4516
    %v4518 = vpop.f32.mrb[0].mxu0
    %v4519 = vadd.f32 %v4448, %v4518
    %4520 = vdwg.mxu0
    %4521 = vmatprep.subr.mxu0 %v3165
    %4522 = vmatpush1.msra.mxu0 %v3164
    %4523 = vmatprep.subr.mxu0 %v3173
    %4524 = vmatpush1.msra.mxu0 %v3172
    %4525 = vmatprep.subr.mxu0 %v3181
    %4526 = vmatpush1.msra.mxu0 %v3180
    %4527 = vmatprep.subr.mxu0 %v3189
    %4528 = vmatpush1.msra.mxu0 %v3188
    %4529 = vmatprep.subr.mxu0 %v3197
    %4530 = vmatpush1.msra.mxu0 %v3196
    %4531 = vmatprep.subr.mxu0 %v3205
    %4532 = vmatpush1.msra.mxu0 %v3204
    %4533 = vmatprep.subr.mxu0 %v3213
    %4534 = vmatpush1.msra.mxu0 %v3212
    %4535 = vmatprep.subr.mxu0 %v3221
    %4536 = vmatpush1.msra.mxu0 %v3220
    %4537 = vmatprep.subr.mxu0 %v3229
    %4538 = vmatpush1.msra.mxu0 %v3228
    %4539 = vmatprep.subr.mxu0 %v3237
    %4540 = vmatpush1.msra.mxu0 %v3236
    %4541 = vmatprep.subr.mxu0 %v3245
    %4542 = vmatpush1.msra.mxu0 %v3244
    %4543 = vmatprep.subr.mxu0 %v3253
    %4544 = vmatpush1.msra.mxu0 %v3252
    %4545 = vmatprep.subr.mxu0 %v3261
    %4546 = vmatpush1.msra.mxu0 %v3260
    %4547 = vmatprep.subr.mxu0 %v3269
    %4548 = vmatpush1.msra.mxu0 %v3268
    %4549 = vmatprep.subr.mxu0 %v3277
    %4550 = vmatpush1.msra.mxu0 %v3276
    %4551 = vmatprep.subr.mxu0 %v3285
    %4552 = vmatpush1.msra.mxu0 %v3284
    %4553 = vmatprep.subr.mxu0 %v3293
    %4554 = vmatpush1.msra.mxu0 %v3292
    %4555 = vmatprep.subr.mxu0 %v3301
    %4556 = vmatpush1.msra.mxu0 %v3300
    %4557 = vmatprep.subr.mxu0 %v3309
    %4558 = vmatpush1.msra.mxu0 %v3308
    %4559 = vmatprep.subr.mxu0 %v3317
    %4560 = vmatpush1.msra.mxu0 %v3316
    %4561 = vmatprep.subr.mxu0 %v3325
    %4562 = vmatpush1.msra.mxu0 %v3324
    %4563 = vmatprep.subr.mxu0 %v3333
    %4564 = vmatpush1.msra.mxu0 %v3332
    %4565 = vmatprep.subr.mxu0 %v3341
    %4566 = vmatpush1.msra.mxu0 %v3340
    %4567 = vmatprep.subr.mxu0 %v3349
    %4568 = vmatpush1.msra.mxu0 %v3348
    %4569 = vmatprep.subr.mxu0 %v3357
    %4570 = vmatpush1.msra.mxu0 %v3356
    %4571 = vmatprep.subr.mxu0 %v3365
    %4572 = vmatpush1.msra.mxu0 %v3364
    %4573 = vmatprep.subr.mxu0 %v3373
    %4574 = vmatpush1.msra.mxu0 %v3372
    %4575 = vmatprep.subr.mxu0 %v3381
    %4576 = vmatpush1.msra.mxu0 %v3380
    %4577 = vmatprep.subr.mxu0 %v3389
    %4578 = vmatpush1.msra.mxu0 %v3388
    %4579 = vmatprep.subr.mxu0 %v3397
    %4580 = vmatpush1.msra.mxu0 %v3396
    %4581 = vmatprep.subr.mxu0 %v3405
    %4582 = vmatpush1.msra.mxu0 %v3404
    %4583 = vmatprep.subr.mxu0 %v3413
    %4584 = vmatpush1.msra.mxu0 %v3412
    %4585 = vmatprep.mubr.f32.mxu0 %v2389
    %4586 = vmatmul.mubr.f32.gmra.mrb[0].mxu0 %v2388
    %v4587 = vpop.f32.mrb[0].mxu0
    %v4588 = vadd.f32 %v4517, %v4587
    %v4589 = vpop.f32.mrb[0].mxu0
    %v4590 = vadd.f32 %v4519, %v4589
    %4591 = vdwg.mxu0
    %v4592 = vmax.f32 %v3736, 0.0
    %v4593 = vmax.f32 %v3738, 0.0
    %v4594 = vmax.f32 %v4020, 0.0
    %v4595 = vmax.f32 %v4022, 0.0
    %v4596 = vmax.f32 %v4304, 0.0
    %v4597 = vmax.f32 %v4306, 0.0
    %v4598 = vmax.f32 %v4588, 0.0
    %v4599 = vmax.f32 %v4590, 0.0
    %v4600 = vld [vmem:[#allocation11] sm:$0xff]
    %v4601 = vld [vmem:[#allocation11 + $0x8] sm:$0xff]
    %v4602 = vld [vmem:[#allocation11 + $0x10] sm:$0xff]
    %v4603 = vld [vmem:[#allocation11 + $0x18] sm:$0xff]
    %v4604 = vld [vmem:[#allocation11 + $0x20] sm:$0xff]
    %v4605 = vld [vmem:[#allocation11 + $0x28] sm:$0xff]
    %v4606 = vld [vmem:[#allocation11 + $0x30] sm:$0xff]
    %v4607 = vld [vmem:[#allocation11 + $0x38] sm:$0xff]
    %v4608 = vld [vmem:[#allocation11 + $0x40] sm:$0xff]
    %v4609 = vld [vmem:[#allocation11 + $0x48] sm:$0xff]
    %v4610 = vld [vmem:[#allocation11 + $0x50] sm:$0xff]
    %v4611 = vld [vmem:[#allocation11 + $0x58] sm:$0xff]
    %v4612 = vld [vmem:[#allocation11 + $0x60] sm:$0xff]
    %v4613 = vld [vmem:[#allocation11 + $0x68] sm:$0xff]
    %v4614 = vld [vmem:[#allocation11 + $0x70] sm:$0xff]
    %v4615 = vld [vmem:[#allocation11 + $0x78] sm:$0xff]
    %v4616 = vld [vmem:[#allocation11 + $0x80] sm:$0xff]
    %v4617 = vld [vmem:[#allocation11 + $0x88] sm:$0xff]
    %v4618 = vld [vmem:[#allocation11 + $0x90] sm:$0xff]
    %v4619 = vld [vmem:[#allocation11 + $0x98] sm:$0xff]
    %v4620 = vld [vmem:[#allocation11 + $0xa0] sm:$0xff]
    %v4621 = vld [vmem:[#allocation11 + $0xa8] sm:$0xff]
    %v4622 = vld [vmem:[#allocation11 + $0xb0] sm:$0xff]
    %v4623 = vld [vmem:[#allocation11 + $0xb8] sm:$0xff]
    %v4624 = vld [vmem:[#allocation11 + $0xc0] sm:$0xff]
    %v4625 = vld [vmem:[#allocation11 + $0xc8] sm:$0xff]
    %v4626 = vld [vmem:[#allocation11 + $0xd0] sm:$0xff]
    %v4627 = vld [vmem:[#allocation11 + $0xd8] sm:$0xff]
    %v4628 = vld [vmem:[#allocation11 + $0xe0] sm:$0xff]
    %v4629 = vld [vmem:[#allocation11 + $0xe8] sm:$0xff]
    %v4630 = vld [vmem:[#allocation11 + $0xf0] sm:$0xff]
    %v4631 = vld [vmem:[#allocation11 + $0xf8] sm:$0xff]
    %v4632 = vld [vmem:[#allocation11 + $0x100] sm:$0xff]
    %v4633 = vld [vmem:[#allocation11 + $0x108] sm:$0xff]
    %v4634 = vld [vmem:[#allocation11 + $0x110] sm:$0xff]
    %v4635 = vld [vmem:[#allocation11 + $0x118] sm:$0xff]
    %v4636 = vld [vmem:[#allocation11 + $0x120] sm:$0xff]
    %v4637 = vld [vmem:[#allocation11 + $0x128] sm:$0xff]
    %v4638 = vld [vmem:[#allocation11 + $0x130] sm:$0xff]
    %v4639 = vld [vmem:[#allocation11 + $0x138] sm:$0xff]
    %v4640 = vld [vmem:[#allocation11 + $0x140] sm:$0xff]
    %v4641 = vld [vmem:[#allocation11 + $0x148] sm:$0xff]
    %v4642 = vld [vmem:[#allocation11 + $0x150] sm:$0xff]
    %v4643 = vld [vmem:[#allocation11 + $0x158] sm:$0xff]
    %v4644 = vld [vmem:[#allocation11 + $0x160] sm:$0xff]
    %v4645 = vld [vmem:[#allocation11 + $0x168] sm:$0xff]
    %v4646 = vld [vmem:[#allocation11 + $0x170] sm:$0xff]
    %v4647 = vld [vmem:[#allocation11 + $0x178] sm:$0xff]
    %v4648 = vld [vmem:[#allocation11 + $0x180] sm:$0xff]
    %v4649 = vld [vmem:[#allocation11 + $0x188] sm:$0xff]
    %v4650 = vld [vmem:[#allocation11 + $0x190] sm:$0xff]
    %v4651 = vld [vmem:[#allocation11 + $0x198] sm:$0xff]
    %v4652 = vld [vmem:[#allocation11 + $0x1a0] sm:$0xff]
    %v4653 = vld [vmem:[#allocation11 + $0x1a8] sm:$0xff]
    %v4654 = vld [vmem:[#allocation11 + $0x1b0] sm:$0xff]
    %v4655 = vld [vmem:[#allocation11 + $0x1b8] sm:$0xff]
    %v4656 = vld [vmem:[#allocation11 + $0x1c0] sm:$0xff]
    %v4657 = vld [vmem:[#allocation11 + $0x1c8] sm:$0xff]
    %v4658 = vld [vmem:[#allocation11 + $0x1d0] sm:$0xff]
    %v4659 = vld [vmem:[#allocation11 + $0x1d8] sm:$0xff]
    %v4660 = vld [vmem:[#allocation11 + $0x1e0] sm:$0xff]
    %v4661 = vld [vmem:[#allocation11 + $0x1e8] sm:$0xff]
    %v4662 = vld [vmem:[#allocation11 + $0x1f0] sm:$0xff]
    %v4663 = vld [vmem:[#allocation11 + $0x1f8] sm:$0xff]
    %v4664 = vld [vmem:[#allocation11 + $0x200] sm:$0xff]
    %v4665 = vld [vmem:[#allocation11 + $0x208] sm:$0xff]
    %v4666 = vld [vmem:[#allocation11 + $0x210] sm:$0xff]
    %v4667 = vld [vmem:[#allocation11 + $0x218] sm:$0xff]
    %v4668 = vld [vmem:[#allocation11 + $0x220] sm:$0xff]
    %v4669 = vld [vmem:[#allocation11 + $0x228] sm:$0xff]
    %v4670 = vld [vmem:[#allocation11 + $0x230] sm:$0xff]
    %v4671 = vld [vmem:[#allocation11 + $0x238] sm:$0xff]
    %v4672 = vld [vmem:[#allocation11 + $0x240] sm:$0xff]
    %v4673 = vld [vmem:[#allocation11 + $0x248] sm:$0xff]
    %v4674 = vld [vmem:[#allocation11 + $0x250] sm:$0xff]
    %v4675 = vld [vmem:[#allocation11 + $0x258] sm:$0xff]
    %v4676 = vld [vmem:[#allocation11 + $0x260] sm:$0xff]
    %v4677 = vld [vmem:[#allocation11 + $0x268] sm:$0xff]
    %v4678 = vld [vmem:[#allocation11 + $0x270] sm:$0xff]
    %v4679 = vld [vmem:[#allocation11 + $0x278] sm:$0xff]
    %v4680 = vld [vmem:[#allocation11 + $0x280] sm:$0xff]
    %v4681 = vld [vmem:[#allocation11 + $0x288] sm:$0xff]
    %v4682 = vld [vmem:[#allocation11 + $0x290] sm:$0xff]
    %v4683 = vld [vmem:[#allocation11 + $0x298] sm:$0xff]
    %v4684 = vld [vmem:[#allocation11 + $0x2a0] sm:$0xff]
    %v4685 = vld [vmem:[#allocation11 + $0x2a8] sm:$0xff]
    %v4686 = vld [vmem:[#allocation11 + $0x2b0] sm:$0xff]
    %v4687 = vld [vmem:[#allocation11 + $0x2b8] sm:$0xff]
    %v4688 = vld [vmem:[#allocation11 + $0x2c0] sm:$0xff]
    %v4689 = vld [vmem:[#allocation11 + $0x2c8] sm:$0xff]
    %v4690 = vld [vmem:[#allocation11 + $0x2d0] sm:$0xff]
    %v4691 = vld [vmem:[#allocation11 + $0x2d8] sm:$0xff]
    %v4692 = vld [vmem:[#allocation11 + $0x2e0] sm:$0xff]
    %v4693 = vld [vmem:[#allocation11 + $0x2e8] sm:$0xff]
    %v4694 = vld [vmem:[#allocation11 + $0x2f0] sm:$0xff]
    %v4695 = vld [vmem:[#allocation11 + $0x2f8] sm:$0xff]
    %v4696 = vld [vmem:[#allocation11 + $0x300] sm:$0xff]
    %v4697 = vld [vmem:[#allocation11 + $0x308] sm:$0xff]
    %v4698 = vld [vmem:[#allocation11 + $0x310] sm:$0xff]
    %v4699 = vld [vmem:[#allocation11 + $0x318] sm:$0xff]
    %v4700 = vld [vmem:[#allocation11 + $0x320] sm:$0xff]
    %v4701 = vld [vmem:[#allocation11 + $0x328] sm:$0xff]
    %v4702 = vld [vmem:[#allocation11 + $0x330] sm:$0xff]
    %v4703 = vld [vmem:[#allocation11 + $0x338] sm:$0xff]
    %v4704 = vld [vmem:[#allocation11 + $0x340] sm:$0xff]
    %v4705 = vld [vmem:[#allocation11 + $0x348] sm:$0xff]
    %v4706 = vld [vmem:[#allocation11 + $0x350] sm:$0xff]
    %v4707 = vld [vmem:[#allocation11 + $0x358] sm:$0xff]
    %v4708 = vld [vmem:[#allocation11 + $0x360] sm:$0xff]
    %v4709 = vld [vmem:[#allocation11 + $0x368] sm:$0xff]
    %v4710 = vld [vmem:[#allocation11 + $0x370] sm:$0xff]
    %v4711 = vld [vmem:[#allocation11 + $0x378] sm:$0xff]
    %v4712 = vld [vmem:[#allocation11 + $0x380] sm:$0xff]
    %v4713 = vld [vmem:[#allocation11 + $0x388] sm:$0xff]
    %v4714 = vld [vmem:[#allocation11 + $0x390] sm:$0xff]
    %v4715 = vld [vmem:[#allocation11 + $0x398] sm:$0xff]
    %v4716 = vld [vmem:[#allocation11 + $0x3a0] sm:$0xff]
    %v4717 = vld [vmem:[#allocation11 + $0x3a8] sm:$0xff]
    %v4718 = vld [vmem:[#allocation11 + $0x3b0] sm:$0xff]
    %v4719 = vld [vmem:[#allocation11 + $0x3b8] sm:$0xff]
    %v4720 = vld [vmem:[#allocation11 + $0x3c0] sm:$0xff]
    %v4721 = vld [vmem:[#allocation11 + $0x3c8] sm:$0xff]
    %v4722 = vld [vmem:[#allocation11 + $0x3d0] sm:$0xff]
    %v4723 = vld [vmem:[#allocation11 + $0x3d8] sm:$0xff]
    %v4724 = vld [vmem:[#allocation11 + $0x3e0] sm:$0xff]
    %v4725 = vld [vmem:[#allocation11 + $0x3e8] sm:$0xff]
    %v4726 = vld [vmem:[#allocation11 + $0x3f0] sm:$0xff]
    %v4727 = vld [vmem:[#allocation11 + $0x3f8] sm:$0xff]
    %v4728 = vld [vmem:[#allocation11 + $0x400] sm:$0xff]
    %v4729 = vld [vmem:[#allocation11 + $0x408] sm:$0xff]
    %v4730 = vld [vmem:[#allocation11 + $0x410] sm:$0xff]
    %v4731 = vld [vmem:[#allocation11 + $0x418] sm:$0xff]
    %v4732 = vld [vmem:[#allocation11 + $0x420] sm:$0xff]
    %v4733 = vld [vmem:[#allocation11 + $0x428] sm:$0xff]
    %v4734 = vld [vmem:[#allocation11 + $0x430] sm:$0xff]
    %v4735 = vld [vmem:[#allocation11 + $0x438] sm:$0xff]
    %v4736 = vld [vmem:[#allocation11 + $0x440] sm:$0xff]
    %v4737 = vld [vmem:[#allocation11 + $0x448] sm:$0xff]
    %v4738 = vld [vmem:[#allocation11 + $0x450] sm:$0xff]
    %v4739 = vld [vmem:[#allocation11 + $0x458] sm:$0xff]
    %v4740 = vld [vmem:[#allocation11 + $0x460] sm:$0xff]
    %v4741 = vld [vmem:[#allocation11 + $0x468] sm:$0xff]
    %v4742 = vld [vmem:[#allocation11 + $0x470] sm:$0xff]
    %v4743 = vld [vmem:[#allocation11 + $0x478] sm:$0xff]
    %v4744 = vld [vmem:[#allocation11 + $0x480] sm:$0xff]
    %v4745 = vld [vmem:[#allocation11 + $0x488] sm:$0xff]
    %v4746 = vld [vmem:[#allocation11 + $0x490] sm:$0xff]
    %v4747 = vld [vmem:[#allocation11 + $0x498] sm:$0xff]
    %v4748 = vld [vmem:[#allocation11 + $0x4a0] sm:$0xff]
    %v4749 = vld [vmem:[#allocation11 + $0x4a8] sm:$0xff]
    %v4750 = vld [vmem:[#allocation11 + $0x4b0] sm:$0xff]
    %v4751 = vld [vmem:[#allocation11 + $0x4b8] sm:$0xff]
    %v4752 = vld [vmem:[#allocation11 + $0x4c0] sm:$0xff]
    %v4753 = vld [vmem:[#allocation11 + $0x4c8] sm:$0xff]
    %v4754 = vld [vmem:[#allocation11 + $0x4d0] sm:$0xff]
    %v4755 = vld [vmem:[#allocation11 + $0x4d8] sm:$0xff]
    %v4756 = vld [vmem:[#allocation11 + $0x4e0] sm:$0xff]
    %v4757 = vld [vmem:[#allocation11 + $0x4e8] sm:$0xff]
    %v4758 = vld [vmem:[#allocation11 + $0x4f0] sm:$0xff]
    %v4759 = vld [vmem:[#allocation11 + $0x4f8] sm:$0xff]
    %v4760 = vld [vmem:[#allocation11 + $0x500] sm:$0xff]
    %v4761 = vld [vmem:[#allocation11 + $0x508] sm:$0xff]
    %v4762 = vld [vmem:[#allocation11 + $0x510] sm:$0xff]
    %v4763 = vld [vmem:[#allocation11 + $0x518] sm:$0xff]
    %v4764 = vld [vmem:[#allocation11 + $0x520] sm:$0xff]
    %v4765 = vld [vmem:[#allocation11 + $0x528] sm:$0xff]
    %v4766 = vld [vmem:[#allocation11 + $0x530] sm:$0xff]
    %v4767 = vld [vmem:[#allocation11 + $0x538] sm:$0xff]
    %v4768 = vld [vmem:[#allocation11 + $0x540] sm:$0xff]
    %v4769 = vld [vmem:[#allocation11 + $0x548] sm:$0xff]
    %v4770 = vld [vmem:[#allocation11 + $0x550] sm:$0xff]
    %v4771 = vld [vmem:[#allocation11 + $0x558] sm:$0xff]
    %v4772 = vld [vmem:[#allocation11 + $0x560] sm:$0xff]
    %v4773 = vld [vmem:[#allocation11 + $0x568] sm:$0xff]
    %v4774 = vld [vmem:[#allocation11 + $0x570] sm:$0xff]
    %v4775 = vld [vmem:[#allocation11 + $0x578] sm:$0xff]
    %v4776 = vld [vmem:[#allocation11 + $0x580] sm:$0xff]
    %v4777 = vld [vmem:[#allocation11 + $0x588] sm:$0xff]
    %v4778 = vld [vmem:[#allocation11 + $0x590] sm:$0xff]
    %v4779 = vld [vmem:[#allocation11 + $0x598] sm:$0xff]
    %v4780 = vld [vmem:[#allocation11 + $0x5a0] sm:$0xff]
    %v4781 = vld [vmem:[#allocation11 + $0x5a8] sm:$0xff]
    %v4782 = vld [vmem:[#allocation11 + $0x5b0] sm:$0xff]
    %v4783 = vld [vmem:[#allocation11 + $0x5b8] sm:$0xff]
    %v4784 = vld [vmem:[#allocation11 + $0x5c0] sm:$0xff]
    %v4785 = vld [vmem:[#allocation11 + $0x5c8] sm:$0xff]
    %v4786 = vld [vmem:[#allocation11 + $0x5d0] sm:$0xff]
    %v4787 = vld [vmem:[#allocation11 + $0x5d8] sm:$0xff]
    %v4788 = vld [vmem:[#allocation11 + $0x5e0] sm:$0xff]
    %v4789 = vld [vmem:[#allocation11 + $0x5e8] sm:$0xff]
    %v4790 = vld [vmem:[#allocation11 + $0x5f0] sm:$0xff]
    %v4791 = vld [vmem:[#allocation11 + $0x5f8] sm:$0xff]
    %v4792 = vld [vmem:[#allocation11 + $0x600] sm:$0xff]
    %v4793 = vld [vmem:[#allocation11 + $0x608] sm:$0xff]
    %v4794 = vld [vmem:[#allocation11 + $0x610] sm:$0xff]
    %v4795 = vld [vmem:[#allocation11 + $0x618] sm:$0xff]
    %v4796 = vld [vmem:[#allocation11 + $0x620] sm:$0xff]
    %v4797 = vld [vmem:[#allocation11 + $0x628] sm:$0xff]
    %v4798 = vld [vmem:[#allocation11 + $0x630] sm:$0xff]
    %v4799 = vld [vmem:[#allocation11 + $0x638] sm:$0xff]
    %v4800 = vld [vmem:[#allocation11 + $0x640] sm:$0xff]
    %v4801 = vld [vmem:[#allocation11 + $0x648] sm:$0xff]
    %v4802 = vld [vmem:[#allocation11 + $0x650] sm:$0xff]
    %v4803 = vld [vmem:[#allocation11 + $0x658] sm:$0xff]
    %v4804 = vld [vmem:[#allocation11 + $0x660] sm:$0xff]
    %v4805 = vld [vmem:[#allocation11 + $0x668] sm:$0xff]
    %v4806 = vld [vmem:[#allocation11 + $0x670] sm:$0xff]
    %v4807 = vld [vmem:[#allocation11 + $0x678] sm:$0xff]
    %v4808 = vld [vmem:[#allocation11 + $0x680] sm:$0xff]
    %v4809 = vld [vmem:[#allocation11 + $0x688] sm:$0xff]
    %v4810 = vld [vmem:[#allocation11 + $0x690] sm:$0xff]
    %v4811 = vld [vmem:[#allocation11 + $0x698] sm:$0xff]
    %v4812 = vld [vmem:[#allocation11 + $0x6a0] sm:$0xff]
    %v4813 = vld [vmem:[#allocation11 + $0x6a8] sm:$0xff]
    %v4814 = vld [vmem:[#allocation11 + $0x6b0] sm:$0xff]
    %v4815 = vld [vmem:[#allocation11 + $0x6b8] sm:$0xff]
    %v4816 = vld [vmem:[#allocation11 + $0x6c0] sm:$0xff]
    %v4817 = vld [vmem:[#allocation11 + $0x6c8] sm:$0xff]
    %v4818 = vld [vmem:[#allocation11 + $0x6d0] sm:$0xff]
    %v4819 = vld [vmem:[#allocation11 + $0x6d8] sm:$0xff]
    %v4820 = vld [vmem:[#allocation11 + $0x6e0] sm:$0xff]
    %v4821 = vld [vmem:[#allocation11 + $0x6e8] sm:$0xff]
    %v4822 = vld [vmem:[#allocation11 + $0x6f0] sm:$0xff]
    %v4823 = vld [vmem:[#allocation11 + $0x6f8] sm:$0xff]
    %v4824 = vld [vmem:[#allocation11 + $0x700] sm:$0xff]
    %v4825 = vld [vmem:[#allocation11 + $0x708] sm:$0xff]
    %v4826 = vld [vmem:[#allocation11 + $0x710] sm:$0xff]
    %v4827 = vld [vmem:[#allocation11 + $0x718] sm:$0xff]
    %v4828 = vld [vmem:[#allocation11 + $0x720] sm:$0xff]
    %v4829 = vld [vmem:[#allocation11 + $0x728] sm:$0xff]
    %v4830 = vld [vmem:[#allocation11 + $0x730] sm:$0xff]
    %v4831 = vld [vmem:[#allocation11 + $0x738] sm:$0xff]
    %v4832 = vld [vmem:[#allocation11 + $0x740] sm:$0xff]
    %v4833 = vld [vmem:[#allocation11 + $0x748] sm:$0xff]
    %v4834 = vld [vmem:[#allocation11 + $0x750] sm:$0xff]
    %v4835 = vld [vmem:[#allocation11 + $0x758] sm:$0xff]
    %v4836 = vld [vmem:[#allocation11 + $0x760] sm:$0xff]
    %v4837 = vld [vmem:[#allocation11 + $0x768] sm:$0xff]
    %v4838 = vld [vmem:[#allocation11 + $0x770] sm:$0xff]
    %v4839 = vld [vmem:[#allocation11 + $0x778] sm:$0xff]
    %v4840 = vld [vmem:[#allocation11 + $0x780] sm:$0xff]
    %v4841 = vld [vmem:[#allocation11 + $0x788] sm:$0xff]
    %v4842 = vld [vmem:[#allocation11 + $0x790] sm:$0xff]
    %v4843 = vld [vmem:[#allocation11 + $0x798] sm:$0xff]
    %v4844 = vld [vmem:[#allocation11 + $0x7a0] sm:$0xff]
    %v4845 = vld [vmem:[#allocation11 + $0x7a8] sm:$0xff]
    %v4846 = vld [vmem:[#allocation11 + $0x7b0] sm:$0xff]
    %v4847 = vld [vmem:[#allocation11 + $0x7b8] sm:$0xff]
    %v4848 = vld [vmem:[#allocation11 + $0x7c0] sm:$0xff]
    %v4849 = vld [vmem:[#allocation11 + $0x7c8] sm:$0xff]
    %v4850 = vld [vmem:[#allocation11 + $0x7d0] sm:$0xff]
    %v4851 = vld [vmem:[#allocation11 + $0x7d8] sm:$0xff]
    %v4852 = vld [vmem:[#allocation11 + $0x7e0] sm:$0xff]
    %v4853 = vld [vmem:[#allocation11 + $0x7e8] sm:$0xff]
    %v4854 = vld [vmem:[#allocation11 + $0x7f0] sm:$0xff]
    %v4855 = vld [vmem:[#allocation11 + $0x7f8] sm:$0xff]
    %v4856 = vld [vmem:[#allocation11 + $0x800] sm:$0xff]
    %v4857 = vld [vmem:[#allocation11 + $0x808] sm:$0xff]
    %v4858 = vld [vmem:[#allocation11 + $0x810] sm:$0xff]
    %v4859 = vld [vmem:[#allocation11 + $0x818] sm:$0xff]
    %v4860 = vld [vmem:[#allocation11 + $0x820] sm:$0xff]
    %v4861 = vld [vmem:[#allocation11 + $0x828] sm:$0xff]
    %v4862 = vld [vmem:[#allocation11 + $0x830] sm:$0xff]
    %v4863 = vld [vmem:[#allocation11 + $0x838] sm:$0xff]
    %v4864 = vld [vmem:[#allocation11 + $0x840] sm:$0xff]
    %v4865 = vld [vmem:[#allocation11 + $0x848] sm:$0xff]
    %v4866 = vld [vmem:[#allocation11 + $0x850] sm:$0xff]
    %v4867 = vld [vmem:[#allocation11 + $0x858] sm:$0xff]
    %v4868 = vld [vmem:[#allocation11 + $0x860] sm:$0xff]
    %v4869 = vld [vmem:[#allocation11 + $0x868] sm:$0xff]
    %v4870 = vld [vmem:[#allocation11 + $0x870] sm:$0xff]
    %v4871 = vld [vmem:[#allocation11 + $0x878] sm:$0xff]
    %v4872 = vld [vmem:[#allocation11 + $0x880] sm:$0xff]
    %v4873 = vld [vmem:[#allocation11 + $0x888] sm:$0xff]
    %v4874 = vld [vmem:[#allocation11 + $0x890] sm:$0xff]
    %v4875 = vld [vmem:[#allocation11 + $0x898] sm:$0xff]
    %v4876 = vld [vmem:[#allocation11 + $0x8a0] sm:$0xff]
    %v4877 = vld [vmem:[#allocation11 + $0x8a8] sm:$0xff]
    %v4878 = vld [vmem:[#allocation11 + $0x8b0] sm:$0xff]
    %v4879 = vld [vmem:[#allocation11 + $0x8b8] sm:$0xff]
    %v4880 = vld [vmem:[#allocation11 + $0x8c0] sm:$0xff]
    %v4881 = vld [vmem:[#allocation11 + $0x8c8] sm:$0xff]
    %v4882 = vld [vmem:[#allocation11 + $0x8d0] sm:$0xff]
    %v4883 = vld [vmem:[#allocation11 + $0x8d8] sm:$0xff]
    %v4884 = vld [vmem:[#allocation11 + $0x8e0] sm:$0xff]
    %v4885 = vld [vmem:[#allocation11 + $0x8e8] sm:$0xff]
    %v4886 = vld [vmem:[#allocation11 + $0x8f0] sm:$0xff]
    %v4887 = vld [vmem:[#allocation11 + $0x8f8] sm:$0xff]
    %v4888 = vld [vmem:[#allocation11 + $0x900] sm:$0xff]
    %v4889 = vld [vmem:[#allocation11 + $0x908] sm:$0xff]
    %v4890 = vld [vmem:[#allocation11 + $0x910] sm:$0xff]
    %v4891 = vld [vmem:[#allocation11 + $0x918] sm:$0xff]
    %v4892 = vld [vmem:[#allocation11 + $0x920] sm:$0xff]
    %v4893 = vld [vmem:[#allocation11 + $0x928] sm:$0xff]
    %v4894 = vld [vmem:[#allocation11 + $0x930] sm:$0xff]
    %v4895 = vld [vmem:[#allocation11 + $0x938] sm:$0xff]
    %v4896 = vld [vmem:[#allocation11 + $0x940] sm:$0xff]
    %v4897 = vld [vmem:[#allocation11 + $0x948] sm:$0xff]
    %v4898 = vld [vmem:[#allocation11 + $0x950] sm:$0xff]
    %v4899 = vld [vmem:[#allocation11 + $0x958] sm:$0xff]
    %v4900 = vld [vmem:[#allocation11 + $0x960] sm:$0xff]
    %v4901 = vld [vmem:[#allocation11 + $0x968] sm:$0xff]
    %v4902 = vld [vmem:[#allocation11 + $0x970] sm:$0xff]
    %v4903 = vld [vmem:[#allocation11 + $0x978] sm:$0xff]
    %v4904 = vld [vmem:[#allocation11 + $0x980] sm:$0xff]
    %v4905 = vld [vmem:[#allocation11 + $0x988] sm:$0xff]
    %v4906 = vld [vmem:[#allocation11 + $0x990] sm:$0xff]
    %v4907 = vld [vmem:[#allocation11 + $0x998] sm:$0xff]
    %v4908 = vld [vmem:[#allocation11 + $0x9a0] sm:$0xff]
    %v4909 = vld [vmem:[#allocation11 + $0x9a8] sm:$0xff]
    %v4910 = vld [vmem:[#allocation11 + $0x9b0] sm:$0xff]
    %v4911 = vld [vmem:[#allocation11 + $0x9b8] sm:$0xff]
    %v4912 = vld [vmem:[#allocation11 + $0x9c0] sm:$0xff]
    %v4913 = vld [vmem:[#allocation11 + $0x9c8] sm:$0xff]
    %v4914 = vld [vmem:[#allocation11 + $0x9d0] sm:$0xff]
    %v4915 = vld [vmem:[#allocation11 + $0x9d8] sm:$0xff]
    %v4916 = vld [vmem:[#allocation11 + $0x9e0] sm:$0xff]
    %v4917 = vld [vmem:[#allocation11 + $0x9e8] sm:$0xff]
    %v4918 = vld [vmem:[#allocation11 + $0x9f0] sm:$0xff]
    %v4919 = vld [vmem:[#allocation11 + $0x9f8] sm:$0xff]
    %v4920 = vld [vmem:[#allocation11 + $0xa00] sm:$0xff]
    %v4921 = vld [vmem:[#allocation11 + $0xa08] sm:$0xff]
    %v4922 = vld [vmem:[#allocation11 + $0xa10] sm:$0xff]
    %v4923 = vld [vmem:[#allocation11 + $0xa18] sm:$0xff]
    %v4924 = vld [vmem:[#allocation11 + $0xa20] sm:$0xff]
    %v4925 = vld [vmem:[#allocation11 + $0xa28] sm:$0xff]
    %v4926 = vld [vmem:[#allocation11 + $0xa30] sm:$0xff]
    %v4927 = vld [vmem:[#allocation11 + $0xa38] sm:$0xff]
    %v4928 = vld [vmem:[#allocation11 + $0xa40] sm:$0xff]
    %v4929 = vld [vmem:[#allocation11 + $0xa48] sm:$0xff]
    %v4930 = vld [vmem:[#allocation11 + $0xa50] sm:$0xff]
    %v4931 = vld [vmem:[#allocation11 + $0xa58] sm:$0xff]
    %v4932 = vld [vmem:[#allocation11 + $0xa60] sm:$0xff]
    %v4933 = vld [vmem:[#allocation11 + $0xa68] sm:$0xff]
    %v4934 = vld [vmem:[#allocation11 + $0xa70] sm:$0xff]
    %v4935 = vld [vmem:[#allocation11 + $0xa78] sm:$0xff]
    %v4936 = vld [vmem:[#allocation11 + $0xa80] sm:$0xff]
    %v4937 = vld [vmem:[#allocation11 + $0xa88] sm:$0xff]
    %v4938 = vld [vmem:[#allocation11 + $0xa90] sm:$0xff]
    %v4939 = vld [vmem:[#allocation11 + $0xa98] sm:$0xff]
    %v4940 = vld [vmem:[#allocation11 + $0xaa0] sm:$0xff]
    %v4941 = vld [vmem:[#allocation11 + $0xaa8] sm:$0xff]
    %v4942 = vld [vmem:[#allocation11 + $0xab0] sm:$0xff]
    %v4943 = vld [vmem:[#allocation11 + $0xab8] sm:$0xff]
    %v4944 = vld [vmem:[#allocation11 + $0xac0] sm:$0xff]
    %v4945 = vld [vmem:[#allocation11 + $0xac8] sm:$0xff]
    %v4946 = vld [vmem:[#allocation11 + $0xad0] sm:$0xff]
    %v4947 = vld [vmem:[#allocation11 + $0xad8] sm:$0xff]
    %v4948 = vld [vmem:[#allocation11 + $0xae0] sm:$0xff]
    %v4949 = vld [vmem:[#allocation11 + $0xae8] sm:$0xff]
    %v4950 = vld [vmem:[#allocation11 + $0xaf0] sm:$0xff]
    %v4951 = vld [vmem:[#allocation11 + $0xaf8] sm:$0xff]
    %v4952 = vld [vmem:[#allocation11 + $0xb00] sm:$0xff]
    %v4953 = vld [vmem:[#allocation11 + $0xb08] sm:$0xff]
    %v4954 = vld [vmem:[#allocation11 + $0xb10] sm:$0xff]
    %v4955 = vld [vmem:[#allocation11 + $0xb18] sm:$0xff]
    %v4956 = vld [vmem:[#allocation11 + $0xb20] sm:$0xff]
    %v4957 = vld [vmem:[#allocation11 + $0xb28] sm:$0xff]
    %v4958 = vld [vmem:[#allocation11 + $0xb30] sm:$0xff]
    %v4959 = vld [vmem:[#allocation11 + $0xb38] sm:$0xff]
    %v4960 = vld [vmem:[#allocation11 + $0xb40] sm:$0xff]
    %v4961 = vld [vmem:[#allocation11 + $0xb48] sm:$0xff]
    %v4962 = vld [vmem:[#allocation11 + $0xb50] sm:$0xff]
    %v4963 = vld [vmem:[#allocation11 + $0xb58] sm:$0xff]
    %v4964 = vld [vmem:[#allocation11 + $0xb60] sm:$0xff]
    %v4965 = vld [vmem:[#allocation11 + $0xb68] sm:$0xff]
    %v4966 = vld [vmem:[#allocation11 + $0xb70] sm:$0xff]
    %v4967 = vld [vmem:[#allocation11 + $0xb78] sm:$0xff]
    %v4968 = vld [vmem:[#allocation11 + $0xb80] sm:$0xff]
    %v4969 = vld [vmem:[#allocation11 + $0xb88] sm:$0xff]
    %v4970 = vld [vmem:[#allocation11 + $0xb90] sm:$0xff]
    %v4971 = vld [vmem:[#allocation11 + $0xb98] sm:$0xff]
    %v4972 = vld [vmem:[#allocation11 + $0xba0] sm:$0xff]
    %v4973 = vld [vmem:[#allocation11 + $0xba8] sm:$0xff]
    %v4974 = vld [vmem:[#allocation11 + $0xbb0] sm:$0xff]
    %v4975 = vld [vmem:[#allocation11 + $0xbb8] sm:$0xff]
    %v4976 = vld [vmem:[#allocation11 + $0xbc0] sm:$0xff]
    %v4977 = vld [vmem:[#allocation11 + $0xbc8] sm:$0xff]
    %v4978 = vld [vmem:[#allocation11 + $0xbd0] sm:$0xff]
    %v4979 = vld [vmem:[#allocation11 + $0xbd8] sm:$0xff]
    %v4980 = vld [vmem:[#allocation11 + $0xbe0] sm:$0xff]
    %v4981 = vld [vmem:[#allocation11 + $0xbe8] sm:$0xff]
    %v4982 = vld [vmem:[#allocation11 + $0xbf0] sm:$0xff]
    %v4983 = vld [vmem:[#allocation11 + $0xbf8] sm:$0xff]
    %v4984 = vld [vmem:[#allocation13] sm:$0x7]
    %v4986 = vlaneseq
    %v4987 = vshrl.u32 %v4986, 7
    %v4988 = vsub.s32 0, %v4987
    %v4989 = vrot.slane %v4984, %v4988
    %v4990 = vlaneseq
    %v4991 = vshrl.u32 %v4990, 7
    %v4992 = vsub.s32 1, %v4991
    %v4993 = vrot.slane %v4984, %v4992
    %v4994 = vlaneseq
    %v4995 = vshrl.u32 %v4994, 7
    %v4996 = vsub.s32 2, %v4995
    %v4997 = vrot.slane %v4984, %v4996
    %5001 = vmatprep.subr.mxu0 %v4601
    %5002 = vmatpush1.msra.mxu0 %v4600
    %5003 = vmatprep.subr.mxu0 %v4604
    %5004 = vmatpush1.msra.mxu0 %v4603
    %5005 = vmatprep.subr.mxu0 %v4607
    %5006 = vmatpush1.msra.mxu0 %v4606
    %5007 = vmatprep.subr.mxu0 %v4610
    %5008 = vmatpush1.msra.mxu0 %v4609
    %5009 = vmatprep.subr.mxu0 %v4613
    %5010 = vmatpush1.msra.mxu0 %v4612
    %5011 = vmatprep.subr.mxu0 %v4616
    %5012 = vmatpush1.msra.mxu0 %v4615
    %5013 = vmatprep.subr.mxu0 %v4619
    %5014 = vmatpush1.msra.mxu0 %v4618
    %5015 = vmatprep.subr.mxu0 %v4622
    %5016 = vmatpush1.msra.mxu0 %v4621
    %5017 = vmatprep.subr.mxu0 %v4625
    %5018 = vmatpush1.msra.mxu0 %v4624
    %5019 = vmatprep.subr.mxu0 %v4628
    %5020 = vmatpush1.msra.mxu0 %v4627
    %5021 = vmatprep.subr.mxu0 %v4631
    %5022 = vmatpush1.msra.mxu0 %v4630
    %5023 = vmatprep.subr.mxu0 %v4634
    %5024 = vmatpush1.msra.mxu0 %v4633
    %5025 = vmatprep.subr.mxu0 %v4637
    %5026 = vmatpush1.msra.mxu0 %v4636
    %5027 = vmatprep.subr.mxu0 %v4640
    %5028 = vmatpush1.msra.mxu0 %v4639
    %5029 = vmatprep.subr.mxu0 %v4643
    %5030 = vmatpush1.msra.mxu0 %v4642
    %5031 = vmatprep.subr.mxu0 %v4646
    %5032 = vmatpush1.msra.mxu0 %v4645
    %5033 = vmatprep.subr.mxu0 %v4649
    %5034 = vmatpush1.msra.mxu0 %v4648
    %5035 = vmatprep.subr.mxu0 %v4652
    %5036 = vmatpush1.msra.mxu0 %v4651
    %5037 = vmatprep.subr.mxu0 %v4655
    %5038 = vmatpush1.msra.mxu0 %v4654
    %5039 = vmatprep.subr.mxu0 %v4658
    %5040 = vmatpush1.msra.mxu0 %v4657
    %5041 = vmatprep.subr.mxu0 %v4661
    %5042 = vmatpush1.msra.mxu0 %v4660
    %5043 = vmatprep.subr.mxu0 %v4664
    %5044 = vmatpush1.msra.mxu0 %v4663
    %5045 = vmatprep.subr.mxu0 %v4667
    %5046 = vmatpush1.msra.mxu0 %v4666
    %5047 = vmatprep.subr.mxu0 %v4670
    %5048 = vmatpush1.msra.mxu0 %v4669
    %5049 = vmatprep.subr.mxu0 %v4673
    %5050 = vmatpush1.msra.mxu0 %v4672
    %5051 = vmatprep.subr.mxu0 %v4676
    %5052 = vmatpush1.msra.mxu0 %v4675
    %5053 = vmatprep.subr.mxu0 %v4679
    %5054 = vmatpush1.msra.mxu0 %v4678
    %5055 = vmatprep.subr.mxu0 %v4682
    %5056 = vmatpush1.msra.mxu0 %v4681
    %5057 = vmatprep.subr.mxu0 %v4685
    %5058 = vmatpush1.msra.mxu0 %v4684
    %5059 = vmatprep.subr.mxu0 %v4688
    %5060 = vmatpush1.msra.mxu0 %v4687
    %5061 = vmatprep.subr.mxu0 %v4691
    %5062 = vmatpush1.msra.mxu0 %v4690
    %5063 = vmatprep.subr.mxu0 %v4694
    %5064 = vmatpush1.msra.mxu0 %v4693
    %5065 = vmatprep.mubr.f32.mxu0 %v4593
    %5066 = vmatmul.mubr.f32.gmra.mrb[0].mxu0 %v4592
    %v5067 = vpop.f32.mrb[0].mxu0
    %v5068 = vadd.f32 %v4989, %v5067
    %v5069 = vpop.f32.mrb[0].mxu0
    %v5070 = vadd.f32 %v4993, %v5069
    %5071 = vdwg.mxu0
    %5072 = vmatprep.subr.mxu0 %v4697
    %5073 = vmatpush1.msra.mxu0 %v4696
    %5074 = vmatprep.subr.mxu0 %v4700
    %5075 = vmatpush1.msra.mxu0 %v4699
    %5076 = vmatprep.subr.mxu0 %v4703
    %5077 = vmatpush1.msra.mxu0 %v4702
    %5078 = vmatprep.subr.mxu0 %v4706
    %5079 = vmatpush1.msra.mxu0 %v4705
    %5080 = vmatprep.subr.mxu0 %v4709
    %5081 = vmatpush1.msra.mxu0 %v4708
    %5082 = vmatprep.subr.mxu0 %v4712
    %5083 = vmatpush1.msra.mxu0 %v4711
    %5084 = vmatprep.subr.mxu0 %v4715
    %5085 = vmatpush1.msra.mxu0 %v4714
    %5086 = vmatprep.subr.mxu0 %v4718
    %5087 = vmatpush1.msra.mxu0 %v4717
    %5088 = vmatprep.subr.mxu0 %v4721
    %5089 = vmatpush1.msra.mxu0 %v4720
    %5090 = vmatprep.subr.mxu0 %v4724
    %5091 = vmatpush1.msra.mxu0 %v4723
    %5092 = vmatprep.subr.mxu0 %v4727
    %5093 = vmatpush1.msra.mxu0 %v4726
    %5094 = vmatprep.subr.mxu0 %v4730
    %5095 = vmatpush1.msra.mxu0 %v4729
    %5096 = vmatprep.subr.mxu0 %v4733
    %5097 = vmatpush1.msra.mxu0 %v4732
    %5098 = vmatprep.subr.mxu0 %v4736
    %5099 = vmatpush1.msra.mxu0 %v4735
    %5100 = vmatprep.subr.mxu0 %v4739
    %5101 = vmatpush1.msra.mxu0 %v4738
    %5102 = vmatprep.subr.mxu0 %v4742
    %5103 = vmatpush1.msra.mxu0 %v4741
    %5104 = vmatprep.subr.mxu0 %v4745
    %5105 = vmatpush1.msra.mxu0 %v4744
    %5106 = vmatprep.subr.mxu0 %v4748
    %5107 = vmatpush1.msra.mxu0 %v4747
    %5108 = vmatprep.subr.mxu0 %v4751
    %5109 = vmatpush1.msra.mxu0 %v4750
    %5110 = vmatprep.subr.mxu0 %v4754
    %5111 = vmatpush1.msra.mxu0 %v4753
    %5112 = vmatprep.subr.mxu0 %v4757
    %5113 = vmatpush1.msra.mxu0 %v4756
    %5114 = vmatprep.subr.mxu0 %v4760
    %5115 = vmatpush1.msra.mxu0 %v4759
    %5116 = vmatprep.subr.mxu0 %v4763
    %5117 = vmatpush1.msra.mxu0 %v4762
    %5118 = vmatprep.subr.mxu0 %v4766
    %5119 = vmatpush1.msra.mxu0 %v4765
    %5120 = vmatprep.subr.mxu0 %v4769
    %5121 = vmatpush1.msra.mxu0 %v4768
    %5122 = vmatprep.subr.mxu0 %v4772
    %5123 = vmatpush1.msra.mxu0 %v4771
    %5124 = vmatprep.subr.mxu0 %v4775
    %5125 = vmatpush1.msra.mxu0 %v4774
    %5126 = vmatprep.subr.mxu0 %v4778
    %5127 = vmatpush1.msra.mxu0 %v4777
    %5128 = vmatprep.subr.mxu0 %v4781
    %5129 = vmatpush1.msra.mxu0 %v4780
    %5130 = vmatprep.subr.mxu0 %v4784
    %5131 = vmatpush1.msra.mxu0 %v4783
    %5132 = vmatprep.subr.mxu0 %v4787
    %5133 = vmatpush1.msra.mxu0 %v4786
    %5134 = vmatprep.subr.mxu0 %v4790
    %5135 = vmatpush1.msra.mxu0 %v4789
    %5136 = vmatprep.mubr.f32.mxu0 %v4595
    %5137 = vmatmul.mubr.f32.gmra.mrb[0].mxu0 %v4594
    %v5138 = vpop.f32.mrb[0].mxu0
    %v5139 = vadd.f32 %v5068, %v5138
    %v5140 = vpop.f32.mrb[0].mxu0
    %v5141 = vadd.f32 %v5070, %v5140
    %5142 = vdwg.mxu0
    %5143 = vmatprep.subr.mxu0 %v4793
    %5144 = vmatpush1.msra.mxu0 %v4792
    %5145 = vmatprep.subr.mxu0 %v4796
    %5146 = vmatpush1.msra.mxu0 %v4795
    %5147 = vmatprep.subr.mxu0 %v4799
    %5148 = vmatpush1.msra.mxu0 %v4798
    %5149 = vmatprep.subr.mxu0 %v4802
    %5150 = vmatpush1.msra.mxu0 %v4801
    %5151 = vmatprep.subr.mxu0 %v4805
    %5152 = vmatpush1.msra.mxu0 %v4804
    %5153 = vmatprep.subr.mxu0 %v4808
    %5154 = vmatpush1.msra.mxu0 %v4807
    %5155 = vmatprep.subr.mxu0 %v4811
    %5156 = vmatpush1.msra.mxu0 %v4810
    %5157 = vmatprep.subr.mxu0 %v4814
    %5158 = vmatpush1.msra.mxu0 %v4813
    %5159 = vmatprep.subr.mxu0 %v4817
    %5160 = vmatpush1.msra.mxu0 %v4816
    %5161 = vmatprep.subr.mxu0 %v4820
    %5162 = vmatpush1.msra.mxu0 %v4819
    %5163 = vmatprep.subr.mxu0 %v4823
    %5164 = vmatpush1.msra.mxu0 %v4822
    %5165 = vmatprep.subr.mxu0 %v4826
    %5166 = vmatpush1.msra.mxu0 %v4825
    %5167 = vmatprep.subr.mxu0 %v4829
    %5168 = vmatpush1.msra.mxu0 %v4828
    %5169 = vmatprep.subr.mxu0 %v4832
    %5170 = vmatpush1.msra.mxu0 %v4831
    %5171 = vmatprep.subr.mxu0 %v4835
    %5172 = vmatpush1.msra.mxu0 %v4834
    %5173 = vmatprep.subr.mxu0 %v4838
    %5174 = vmatpush1.msra.mxu0 %v4837
    %5175 = vmatprep.subr.mxu0 %v4841
    %5176 = vmatpush1.msra.mxu0 %v4840
    %5177 = vmatprep.subr.mxu0 %v4844
    %5178 = vmatpush1.msra.mxu0 %v4843
    %5179 = vmatprep.subr.mxu0 %v4847
    %5180 = vmatpush1.msra.mxu0 %v4846
    %5181 = vmatprep.subr.mxu0 %v4850
    %5182 = vmatpush1.msra.mxu0 %v4849
    %5183 = vmatprep.subr.mxu0 %v4853
    %5184 = vmatpush1.msra.mxu0 %v4852
    %5185 = vmatprep.subr.mxu0 %v4856
    %5186 = vmatpush1.msra.mxu0 %v4855
    %5187 = vmatprep.subr.mxu0 %v4859
    %5188 = vmatpush1.msra.mxu0 %v4858
    %5189 = vmatprep.subr.mxu0 %v4862
    %5190 = vmatpush1.msra.mxu0 %v4861
    %5191 = vmatprep.subr.mxu0 %v4865
    %5192 = vmatpush1.msra.mxu0 %v4864
    %5193 = vmatprep.subr.mxu0 %v4868
    %5194 = vmatpush1.msra.mxu0 %v4867
    %5195 = vmatprep.subr.mxu0 %v4871
    %5196 = vmatpush1.msra.mxu0 %v4870
    %5197 = vmatprep.subr.mxu0 %v4874
    %5198 = vmatpush1.msra.mxu0 %v4873
    %5199 = vmatprep.subr.mxu0 %v4877
    %5200 = vmatpush1.msra.mxu0 %v4876
    %5201 = vmatprep.subr.mxu0 %v4880
    %5202 = vmatpush1.msra.mxu0 %v4879
    %5203 = vmatprep.subr.mxu0 %v4883
    %5204 = vmatpush1.msra.mxu0 %v4882
    %5205 = vmatprep.subr.mxu0 %v4886
    %5206 = vmatpush1.msra.mxu0 %v4885
    %5207 = vmatprep.mubr.f32.mxu0 %v4597
    %5208 = vmatmul.mubr.f32.gmra.mrb[0].mxu0 %v4596
    %v5209 = vpop.f32.mrb[0].mxu0
    %v5210 = vadd.f32 %v5139, %v5209
    %v5211 = vpop.f32.mrb[0].mxu0
    %v5212 = vadd.f32 %v5141, %v5211
    %5213 = vdwg.mxu0
    %5214 = vmatprep.subr.mxu0 %v4889
    %5215 = vmatpush1.msra.mxu0 %v4888
    %5216 = vmatprep.subr.mxu0 %v4892
    %5217 = vmatpush1.msra.mxu0 %v4891
    %5218 = vmatprep.subr.mxu0 %v4895
    %5219 = vmatpush1.msra.mxu0 %v4894
    %5220 = vmatprep.subr.mxu0 %v4898
    %5221 = vmatpush1.msra.mxu0 %v4897
    %5222 = vmatprep.subr.mxu0 %v4901
    %5223 = vmatpush1.msra.mxu0 %v4900
    %5224 = vmatprep.subr.mxu0 %v4904
    %5225 = vmatpush1.msra.mxu0 %v4903
    %5226 = vmatprep.subr.mxu0 %v4907
    %5227 = vmatpush1.msra.mxu0 %v4906
    %5228 = vmatprep.subr.mxu0 %v4910
    %5229 = vmatpush1.msra.mxu0 %v4909
    %5230 = vmatprep.subr.mxu0 %v4913
    %5231 = vmatpush1.msra.mxu0 %v4912
    %5232 = vmatprep.subr.mxu0 %v4916
    %5233 = vmatpush1.msra.mxu0 %v4915
    %5234 = vmatprep.subr.mxu0 %v4919
    %5235 = vmatpush1.msra.mxu0 %v4918
    %5236 = vmatprep.subr.mxu0 %v4922
    %5237 = vmatpush1.msra.mxu0 %v4921
    %5238 = vmatprep.subr.mxu0 %v4925
    %5239 = vmatpush1.msra.mxu0 %v4924
    %5240 = vmatprep.subr.mxu0 %v4928
    %5241 = vmatpush1.msra.mxu0 %v4927
    %5242 = vmatprep.subr.mxu0 %v4931
    %5243 = vmatpush1.msra.mxu0 %v4930
    %5244 = vmatprep.subr.mxu0 %v4934
    %5245 = vmatpush1.msra.mxu0 %v4933
    %5246 = vmatprep.subr.mxu0 %v4937
    %5247 = vmatpush1.msra.mxu0 %v4936
    %5248 = vmatprep.subr.mxu0 %v4940
    %5249 = vmatpush1.msra.mxu0 %v4939
    %5250 = vmatprep.subr.mxu0 %v4943
    %5251 = vmatpush1.msra.mxu0 %v4942
    %5252 = vmatprep.subr.mxu0 %v4946
    %5253 = vmatpush1.msra.mxu0 %v4945
    %5254 = vmatprep.subr.mxu0 %v4949
    %5255 = vmatpush1.msra.mxu0 %v4948
    %5256 = vmatprep.subr.mxu0 %v4952
    %5257 = vmatpush1.msra.mxu0 %v4951
    %5258 = vmatprep.subr.mxu0 %v4955
    %5259 = vmatpush1.msra.mxu0 %v4954
    %5260 = vmatprep.subr.mxu0 %v4958
    %5261 = vmatpush1.msra.mxu0 %v4957
    %5262 = vmatprep.subr.mxu0 %v4961
    %5263 = vmatpush1.msra.mxu0 %v4960
    %5264 = vmatprep.subr.mxu0 %v4964
    %5265 = vmatpush1.msra.mxu0 %v4963
    %5266 = vmatprep.subr.mxu0 %v4967
    %5267 = vmatpush1.msra.mxu0 %v4966
    %5268 = vmatprep.subr.mxu0 %v4970
    %5269 = vmatpush1.msra.mxu0 %v4969
    %5270 = vmatprep.subr.mxu0 %v4973
    %5271 = vmatpush1.msra.mxu0 %v4972
    %5272 = vmatprep.subr.mxu0 %v4976
    %5273 = vmatpush1.msra.mxu0 %v4975
    %5274 = vmatprep.subr.mxu0 %v4979
    %5275 = vmatpush1.msra.mxu0 %v4978
    %5276 = vmatprep.subr.mxu0 %v4982
    %5277 = vmatpush1.msra.mxu0 %v4981
    %5278 = vmatprep.mubr.f32.mxu0 %v4599
    %5279 = vmatmul.mubr.f32.gmra.mrb[0].mxu0 %v4598
    %v5280 = vpop.f32.mrb[0].mxu0
    %v5281 = vadd.f32 %v5210, %v5280
    %v5282 = vpop.f32.mrb[0].mxu0
    %v5283 = vadd.f32 %v5212, %v5282
    %5284 = vdwg.mxu0
    %5285 = vmatprep.subr.mxu0 0.0
    %5286 = vmatpush1.msra.mxu0 %v4602
    %5287 = vmatprep.subr.mxu0 0.0
    %5288 = vmatpush1.msra.mxu0 %v4605
    %5289 = vmatprep.subr.mxu0 0.0
    %5290 = vmatpush1.msra.mxu0 %v4608
    %5291 = vmatprep.subr.mxu0 0.0
    %5292 = vmatpush1.msra.mxu0 %v4611
    %5293 = vmatprep.subr.mxu0 0.0
    %5294 = vmatpush1.msra.mxu0 %v4614
    %5295 = vmatprep.subr.mxu0 0.0
    %5296 = vmatpush1.msra.mxu0 %v4617
    %5297 = vmatprep.subr.mxu0 0.0
    %5298 = vmatpush1.msra.mxu0 %v4620
    %5299 = vmatprep.subr.mxu0 0.0
    %5300 = vmatpush1.msra.mxu0 %v4623
    %5301 = vmatprep.subr.mxu0 0.0
    %5302 = vmatpush1.msra.mxu0 %v4626
    %5303 = vmatprep.subr.mxu0 0.0
    %5304 = vmatpush1.msra.mxu0 %v4629
    %5305 = vmatprep.subr.mxu0 0.0
    %5306 = vmatpush1.msra.mxu0 %v4632
    %5307 = vmatprep.subr.mxu0 0.0
    %5308 = vmatpush1.msra.mxu0 %v4635
    %5309 = vmatprep.subr.mxu0 0.0
    %5310 = vmatpush1.msra.mxu0 %v4638
    %5311 = vmatprep.subr.mxu0 0.0
    %5312 = vmatpush1.msra.mxu0 %v4641
    %5313 = vmatprep.subr.mxu0 0.0
    %5314 = vmatpush1.msra.mxu0 %v4644
    %5315 = vmatprep.subr.mxu0 0.0
    %5316 = vmatpush1.msra.mxu0 %v4647
    %5317 = vmatprep.subr.mxu0 0.0
    %5318 = vmatpush1.msra.mxu0 %v4650
    %5319 = vmatprep.subr.mxu0 0.0
    %5320 = vmatpush1.msra.mxu0 %v4653
    %5321 = vmatprep.subr.mxu0 0.0
    %5322 = vmatpush1.msra.mxu0 %v4656
    %5323 = vmatprep.subr.mxu0 0.0
    %5324 = vmatpush1.msra.mxu0 %v4659
    %5325 = vmatprep.subr.mxu0 0.0
    %5326 = vmatpush1.msra.mxu0 %v4662
    %5327 = vmatprep.subr.mxu0 0.0
    %5328 = vmatpush1.msra.mxu0 %v4665
    %5329 = vmatprep.subr.mxu0 0.0
    %5330 = vmatpush1.msra.mxu0 %v4668
    %5331 = vmatprep.subr.mxu0 0.0
    %5332 = vmatpush1.msra.mxu0 %v4671
    %5333 = vmatprep.subr.mxu0 0.0
    %5334 = vmatpush1.msra.mxu0 %v4674
    %5335 = vmatprep.subr.mxu0 0.0
    %5336 = vmatpush1.msra.mxu0 %v4677
    %5337 = vmatprep.subr.mxu0 0.0
    %5338 = vmatpush1.msra.mxu0 %v4680
    %5339 = vmatprep.subr.mxu0 0.0
    %5340 = vmatpush1.msra.mxu0 %v4683
    %5341 = vmatprep.subr.mxu0 0.0
    %5342 = vmatpush1.msra.mxu0 %v4686
    %5343 = vmatprep.subr.mxu0 0.0
    %5344 = vmatpush1.msra.mxu0 %v4689
    %5345 = vmatprep.subr.mxu0 0.0
    %5346 = vmatpush1.msra.mxu0 %v4692
    %5347 = vmatprep.subr.mxu0 0.0
    %5348 = vmatpush1.msra.mxu0 %v4695
    %5349 = vmatprep.mubr.f32.mxu0 %v4593
    %5350 = vmatmul.mubr.f32.gmra.mrb[0].mxu0 %v4592
    %v5351 = vpop.f32.mrb[0].mxu0
    %v5352 = vadd.f32 %v4997, %v5351
    %v5353 = vpop.f32.mrb[0].mxu0
    %5354 = vdwg.mxu0
    %5355 = vmatprep.subr.mxu0 0.0
    %5356 = vmatpush1.msra.mxu0 %v4698
    %5357 = vmatprep.subr.mxu0 0.0
    %5358 = vmatpush1.msra.mxu0 %v4701
    %5359 = vmatprep.subr.mxu0 0.0
    %5360 = vmatpush1.msra.mxu0 %v4704
    %5361 = vmatprep.subr.mxu0 0.0
    %5362 = vmatpush1.msra.mxu0 %v4707
    %5363 = vmatprep.subr.mxu0 0.0
    %5364 = vmatpush1.msra.mxu0 %v4710
    %5365 = vmatprep.subr.mxu0 0.0
    %5366 = vmatpush1.msra.mxu0 %v4713
    %5367 = vmatprep.subr.mxu0 0.0
    %5368 = vmatpush1.msra.mxu0 %v4716
    %5369 = vmatprep.subr.mxu0 0.0
    %5370 = vmatpush1.msra.mxu0 %v4719
    %5371 = vmatprep.subr.mxu0 0.0
    %5372 = vmatpush1.msra.mxu0 %v4722
    %5373 = vmatprep.subr.mxu0 0.0
    %5374 = vmatpush1.msra.mxu0 %v4725
    %5375 = vmatprep.subr.mxu0 0.0
    %5376 = vmatpush1.msra.mxu0 %v4728
    %5377 = vmatprep.subr.mxu0 0.0
    %5378 = vmatpush1.msra.mxu0 %v4731
    %5379 = vmatprep.subr.mxu0 0.0
    %5380 = vmatpush1.msra.mxu0 %v4734
    %5381 = vmatprep.subr.mxu0 0.0
    %5382 = vmatpush1.msra.mxu0 %v4737
    %5383 = vmatprep.subr.mxu0 0.0
    %5384 = vmatpush1.msra.mxu0 %v4740
    %5385 = vmatprep.subr.mxu0 0.0
    %5386 = vmatpush1.msra.mxu0 %v4743
    %5387 = vmatprep.subr.mxu0 0.0
    %5388 = vmatpush1.msra.mxu0 %v4746
    %5389 = vmatprep.subr.mxu0 0.0
    %5390 = vmatpush1.msra.mxu0 %v4749
    %5391 = vmatprep.subr.mxu0 0.0
    %5392 = vmatpush1.msra.mxu0 %v4752
    %5393 = vmatprep.subr.mxu0 0.0
    %5394 = vmatpush1.msra.mxu0 %v4755
    %5395 = vmatprep.subr.mxu0 0.0
    %5396 = vmatpush1.msra.mxu0 %v4758
    %5397 = vmatprep.subr.mxu0 0.0
    %5398 = vmatpush1.msra.mxu0 %v4761
    %5399 = vmatprep.subr.mxu0 0.0
    %5400 = vmatpush1.msra.mxu0 %v4764
    %5401 = vmatprep.subr.mxu0 0.0
    %5402 = vmatpush1.msra.mxu0 %v4767
    %5403 = vmatprep.subr.mxu0 0.0
    %5404 = vmatpush1.msra.mxu0 %v4770
    %5405 = vmatprep.subr.mxu0 0.0
    %5406 = vmatpush1.msra.mxu0 %v4773
    %5407 = vmatprep.subr.mxu0 0.0
    %5408 = vmatpush1.msra.mxu0 %v4776
    %5409 = vmatprep.subr.mxu0 0.0
    %5410 = vmatpush1.msra.mxu0 %v4779
    %5411 = vmatprep.subr.mxu0 0.0
    %5412 = vmatpush1.msra.mxu0 %v4782
    %5413 = vmatprep.subr.mxu0 0.0
    %5414 = vmatpush1.msra.mxu0 %v4785
    %5415 = vmatprep.subr.mxu0 0.0
    %5416 = vmatpush1.msra.mxu0 %v4788
    %5417 = vmatprep.subr.mxu0 0.0
    %5418 = vmatpush1.msra.mxu0 %v4791
    %5419 = vmatprep.mubr.f32.mxu0 %v4595
    %5420 = vmatmul.mubr.f32.gmra.mrb[0].mxu0 %v4594
    %v5421 = vpop.f32.mrb[0].mxu0
    %v5422 = vadd.f32 %v5352, %v5421
    %v5423 = vpop.f32.mrb[0].mxu0
    %5424 = vdwg.mxu0
    %5425 = vmatprep.subr.mxu0 0.0
    %5426 = vmatpush1.msra.mxu0 %v4794
    %5427 = vmatprep.subr.mxu0 0.0
    %5428 = vmatpush1.msra.mxu0 %v4797
    %5429 = vmatprep.subr.mxu0 0.0
    %5430 = vmatpush1.msra.mxu0 %v4800
    %5431 = vmatprep.subr.mxu0 0.0
    %5432 = vmatpush1.msra.mxu0 %v4803
    %5433 = vmatprep.subr.mxu0 0.0
    %5434 = vmatpush1.msra.mxu0 %v4806
    %5435 = vmatprep.subr.mxu0 0.0
    %5436 = vmatpush1.msra.mxu0 %v4809
    %5437 = vmatprep.subr.mxu0 0.0
    %5438 = vmatpush1.msra.mxu0 %v4812
    %5439 = vmatprep.subr.mxu0 0.0
    %5440 = vmatpush1.msra.mxu0 %v4815
    %5441 = vmatprep.subr.mxu0 0.0
    %5442 = vmatpush1.msra.mxu0 %v4818
    %5443 = vmatprep.subr.mxu0 0.0
    %5444 = vmatpush1.msra.mxu0 %v4821
    %5445 = vmatprep.subr.mxu0 0.0
    %5446 = vmatpush1.msra.mxu0 %v4824
    %5447 = vmatprep.subr.mxu0 0.0
    %5448 = vmatpush1.msra.mxu0 %v4827
    %5449 = vmatprep.subr.mxu0 0.0
    %5450 = vmatpush1.msra.mxu0 %v4830
    %5451 = vmatprep.subr.mxu0 0.0
    %5452 = vmatpush1.msra.mxu0 %v4833
    %5453 = vmatprep.subr.mxu0 0.0
    %5454 = vmatpush1.msra.mxu0 %v4836
    %5455 = vmatprep.subr.mxu0 0.0
    %5456 = vmatpush1.msra.mxu0 %v4839
    %5457 = vmatprep.subr.mxu0 0.0
    %5458 = vmatpush1.msra.mxu0 %v4842
    %5459 = vmatprep.subr.mxu0 0.0
    %5460 = vmatpush1.msra.mxu0 %v4845
    %5461 = vmatprep.subr.mxu0 0.0
    %5462 = vmatpush1.msra.mxu0 %v4848
    %5463 = vmatprep.subr.mxu0 0.0
    %5464 = vmatpush1.msra.mxu0 %v4851
    %5465 = vmatprep.subr.mxu0 0.0
    %5466 = vmatpush1.msra.mxu0 %v4854
    %5467 = vmatprep.subr.mxu0 0.0
    %5468 = vmatpush1.msra.mxu0 %v4857
    %5469 = vmatprep.subr.mxu0 0.0
    %5470 = vmatpush1.msra.mxu0 %v4860
    %5471 = vmatprep.subr.mxu0 0.0
    %5472 = vmatpush1.msra.mxu0 %v4863
    %5473 = vmatprep.subr.mxu0 0.0
    %5474 = vmatpush1.msra.mxu0 %v4866
    %5475 = vmatprep.subr.mxu0 0.0
    %5476 = vmatpush1.msra.mxu0 %v4869
    %5477 = vmatprep.subr.mxu0 0.0
    %5478 = vmatpush1.msra.mxu0 %v4872
    %5479 = vmatprep.subr.mxu0 0.0
    %5480 = vmatpush1.msra.mxu0 %v4875
    %5481 = vmatprep.subr.mxu0 0.0
    %5482 = vmatpush1.msra.mxu0 %v4878
    %5483 = vmatprep.subr.mxu0 0.0
    %5484 = vmatpush1.msra.mxu0 %v4881
    %5485 = vmatprep.subr.mxu0 0.0
    %5486 = vmatpush1.msra.mxu0 %v4884
    %5487 = vmatprep.subr.mxu0 0.0
    %5488 = vmatpush1.msra.mxu0 %v4887
    %5489 = vmatprep.mubr.f32.mxu0 %v4597
    %5490 = vmatmul.mubr.f32.gmra.mrb[0].mxu0 %v4596
    %v5491 = vpop.f32.mrb[0].mxu0
    %v5492 = vadd.f32 %v5422, %v5491
    %v5493 = vpop.f32.mrb[0].mxu0
    %5494 = vdwg.mxu0
    %5495 = vmatprep.subr.mxu0 0.0
    %5496 = vmatpush1.msra.mxu0 %v4890
    %5497 = vmatprep.subr.mxu0 0.0
    %5498 = vmatpush1.msra.mxu0 %v4893
    %5499 = vmatprep.subr.mxu0 0.0
    %5500 = vmatpush1.msra.mxu0 %v4896
    %5501 = vmatprep.subr.mxu0 0.0
    %5502 = vmatpush1.msra.mxu0 %v4899
    %5503 = vmatprep.subr.mxu0 0.0
    %5504 = vmatpush1.msra.mxu0 %v4902
    %5505 = vmatprep.subr.mxu0 0.0
    %5506 = vmatpush1.msra.mxu0 %v4905
    %5507 = vmatprep.subr.mxu0 0.0
    %5508 = vmatpush1.msra.mxu0 %v4908
    %5509 = vmatprep.subr.mxu0 0.0
    %5510 = vmatpush1.msra.mxu0 %v4911
    %5511 = vmatprep.subr.mxu0 0.0
    %5512 = vmatpush1.msra.mxu0 %v4914
    %5513 = vmatprep.subr.mxu0 0.0
    %5514 = vmatpush1.msra.mxu0 %v4917
    %5515 = vmatprep.subr.mxu0 0.0
    %5516 = vmatpush1.msra.mxu0 %v4920
    %5517 = vmatprep.subr.mxu0 0.0
    %5518 = vmatpush1.msra.mxu0 %v4923
    %5519 = vmatprep.subr.mxu0 0.0
    %5520 = vmatpush1.msra.mxu0 %v4926
    %5521 = vmatprep.subr.mxu0 0.0
    %5522 = vmatpush1.msra.mxu0 %v4929
    %5523 = vmatprep.subr.mxu0 0.0
    %5524 = vmatpush1.msra.mxu0 %v4932
    %5525 = vmatprep.subr.mxu0 0.0
    %5526 = vmatpush1.msra.mxu0 %v4935
    %5527 = vmatprep.subr.mxu0 0.0
    %5528 = vmatpush1.msra.mxu0 %v4938
    %5529 = vmatprep.subr.mxu0 0.0
    %5530 = vmatpush1.msra.mxu0 %v4941
    %5531 = vmatprep.subr.mxu0 0.0
    %5532 = vmatpush1.msra.mxu0 %v4944
    %5533 = vmatprep.subr.mxu0 0.0
    %5534 = vmatpush1.msra.mxu0 %v4947
    %5535 = vmatprep.subr.mxu0 0.0
    %5536 = vmatpush1.msra.mxu0 %v4950
    %5537 = vmatprep.subr.mxu0 0.0
    %5538 = vmatpush1.msra.mxu0 %v4953
    %5539 = vmatprep.subr.mxu0 0.0
    %5540 = vmatpush1.msra.mxu0 %v4956
    %5541 = vmatprep.subr.mxu0 0.0
    %5542 = vmatpush1.msra.mxu0 %v4959
    %5543 = vmatprep.subr.mxu0 0.0
    %5544 = vmatpush1.msra.mxu0 %v4962
    %5545 = vmatprep.subr.mxu0 0.0
    %5546 = vmatpush1.msra.mxu0 %v4965
    %5547 = vmatprep.subr.mxu0 0.0
    %5548 = vmatpush1.msra.mxu0 %v4968
    %5549 = vmatprep.subr.mxu0 0.0
    %5550 = vmatpush1.msra.mxu0 %v4971
    %5551 = vmatprep.subr.mxu0 0.0
    %5552 = vmatpush1.msra.mxu0 %v4974
    %5553 = vmatprep.subr.mxu0 0.0
    %5554 = vmatpush1.msra.mxu0 %v4977
    %5555 = vmatprep.subr.mxu0 0.0
    %5556 = vmatpush1.msra.mxu0 %v4980
    %5557 = vmatprep.subr.mxu0 0.0
    %5558 = vmatpush1.msra.mxu0 %v4983
    %5559 = vmatprep.mubr.f32.mxu0 %v4599
    %5560 = vmatmul.mubr.f32.gmra.mrb[0].mxu0 %v4598
    %v5561 = vpop.f32.mrb[0].mxu0
    %v5562 = vadd.f32 %v5492, %v5561
    %v5563 = vpop.f32.mrb[0].mxu0
    %5564 = vdwg.mxu0
    %v5568 = vcombine.low %v5281, %v5283
    %v5570 = vunpack.c.l.s4 1983009808
    %v5571 = vunpack.c.0.s8 %v5570
    %v5572 = vlaneseq
    %v5573 = vshrl.u32 %v5572, 7
    %v5574 = vsub.s32 %v5571, %v5573
    %v5575 = vrot.slane %v5568, %v5574
    %v5577 = vunpack.c.l.s4 1983009808
    %v5578 = vunpack.c.0.s8 %v5577
    %v5579 = vlaneseq
    %v5580 = vshrl.u32 %v5579, 7
    %v5581 = vsub.s32 %v5578, %v5580
    %v5582 = vrot.slane %v5562, %v5581
    %v5583 = vcombine.low %v5575, %v5582
    %5585 = vst [vmem:[#allocation16] sm:$0x3f] %v5583
    %v5586 = vld [vmem:[#allocation14] sm:$0xff]
    %v5587 = vld [vmem:[#allocation14 + $0x8] sm:$0xff]
    %v5588 = vld [vmem:[#allocation14 + $0x10] sm:$0xff]
    %v5589 = vld [vmem:[#allocation14 + $0x18] sm:$0xff]
    %v5590 = vld [vmem:[#allocation14 + $0x20] sm:$0xff]
    %v5591 = vld [vmem:[#allocation14 + $0x28] sm:$0xff]
    %v5592 = vld [vmem:[#allocation14 + $0x30] sm:$0xff]
    %v5593 = vld [vmem:[#allocation14 + $0x38] sm:$0xff]
    %v5594 = vld [vmem:[#allocation14 + $0x40] sm:$0xff]
    %v5595 = vld [vmem:[#allocation14 + $0x48] sm:$0xff]
    %v5596 = vld [vmem:[#allocation14 + $0x50] sm:$0xff]
    %v5597 = vld [vmem:[#allocation14 + $0x58] sm:$0xff]
    %v5598 = vld [vmem:[#allocation14 + $0x60] sm:$0xff]
    %v5599 = vld [vmem:[#allocation14 + $0x68] sm:$0xff]
    %v5600 = vld [vmem:[#allocation14 + $0x70] sm:$0xff]
    %v5601 = vld [vmem:[#allocation14 + $0x78] sm:$0xff]
    %v5602 = vld [vmem:[#allocation14 + $0x80] sm:$0xff]
    %v5603 = vld [vmem:[#allocation14 + $0x88] sm:$0xff]
    %v5604 = vld [vmem:[#allocation14 + $0x90] sm:$0xff]
    %v5605 = vld [vmem:[#allocation14 + $0x98] sm:$0xff]
    %v5606 = vld [vmem:[#allocation14 + $0xa0] sm:$0xff]
    %v5607 = vld [vmem:[#allocation14 + $0xa8] sm:$0xff]
    %v5608 = vld [vmem:[#allocation14 + $0xb0] sm:$0xff]
    %v5609 = vld [vmem:[#allocation14 + $0xb8] sm:$0xff]
    %v5610 = vld [vmem:[#allocation14 + $0xc0] sm:$0xff]
    %v5611 = vld [vmem:[#allocation14 + $0xc8] sm:$0xff]
    %v5612 = vld [vmem:[#allocation14 + $0xd0] sm:$0xff]
    %v5613 = vld [vmem:[#allocation14 + $0xd8] sm:$0xff]
    %v5614 = vld [vmem:[#allocation14 + $0xe0] sm:$0xff]
    %v5615 = vld [vmem:[#allocation14 + $0xe8] sm:$0xff]
    %v5616 = vld [vmem:[#allocation14 + $0xf0] sm:$0xff]
    %v5617 = vld [vmem:[#allocation14 + $0xf8] sm:$0xff]
    %v5618 = vld [vmem:[#allocation14 + $0x100] sm:$0xff]
    %v5619 = vld [vmem:[#allocation14 + $0x108] sm:$0xff]
    %v5620 = vld [vmem:[#allocation14 + $0x110] sm:$0xff]
    %v5621 = vld [vmem:[#allocation14 + $0x118] sm:$0xff]
    %v5622 = vld [vmem:[#allocation14 + $0x120] sm:$0xff]
    %v5623 = vld [vmem:[#allocation14 + $0x128] sm:$0xff]
    %v5624 = vld [vmem:[#allocation14 + $0x130] sm:$0xff]
    %v5625 = vld [vmem:[#allocation14 + $0x138] sm:$0xff]
    %v5626 = vld [vmem:[#allocation14 + $0x140] sm:$0xff]
    %v5627 = vld [vmem:[#allocation14 + $0x148] sm:$0xff]
    %v5628 = vld [vmem:[#allocation14 + $0x150] sm:$0xff]
    %v5629 = vld [vmem:[#allocation14 + $0x158] sm:$0xff]
    %v5630 = vld [vmem:[#allocation14 + $0x160] sm:$0xff]
    %v5631 = vld [vmem:[#allocation14 + $0x168] sm:$0xff]
    %v5632 = vld [vmem:[#allocation14 + $0x170] sm:$0xff]
    %v5633 = vld [vmem:[#allocation14 + $0x178] sm:$0xff]
    %v5634 = vld [vmem:[#allocation14 + $0x180] sm:$0xff]
    %v5635 = vld [vmem:[#allocation14 + $0x188] sm:$0xff]
    %v5636 = vld [vmem:[#allocation14 + $0x190] sm:$0xff]
    %v5637 = vld [vmem:[#allocation14 + $0x198] sm:$0xff]
    %v5638 = vld [vmem:[#allocation14 + $0x1a0] sm:$0xff]
    %v5639 = vld [vmem:[#allocation14 + $0x1a8] sm:$0xff]
    %v5640 = vld [vmem:[#allocation14 + $0x1b0] sm:$0xff]
    %v5641 = vld [vmem:[#allocation14 + $0x1b8] sm:$0xff]
    %v5642 = vld [vmem:[#allocation14 + $0x1c0] sm:$0xff]
    %v5643 = vld [vmem:[#allocation14 + $0x1c8] sm:$0xff]
    %v5644 = vld [vmem:[#allocation14 + $0x1d0] sm:$0xff]
    %v5645 = vld [vmem:[#allocation14 + $0x1d8] sm:$0xff]
    %v5646 = vld [vmem:[#allocation14 + $0x1e0] sm:$0xff]
    %v5647 = vld [vmem:[#allocation14 + $0x1e8] sm:$0xff]
    %v5648 = vld [vmem:[#allocation14 + $0x1f0] sm:$0xff]
    %v5649 = vld [vmem:[#allocation14 + $0x1f8] sm:$0xff]
    %v5650 = vld [vmem:[#allocation14 + $0x200] sm:$0xff]
    %v5651 = vld [vmem:[#allocation14 + $0x208] sm:$0xff]
    %v5652 = vld [vmem:[#allocation14 + $0x210] sm:$0xff]
    %v5653 = vld [vmem:[#allocation14 + $0x218] sm:$0xff]
    %v5654 = vld [vmem:[#allocation14 + $0x220] sm:$0xff]
    %v5655 = vld [vmem:[#allocation14 + $0x228] sm:$0xff]
    %v5656 = vld [vmem:[#allocation14 + $0x230] sm:$0xff]
    %v5657 = vld [vmem:[#allocation14 + $0x238] sm:$0xff]
    %v5658 = vld [vmem:[#allocation14 + $0x240] sm:$0xff]
    %v5659 = vld [vmem:[#allocation14 + $0x248] sm:$0xff]
    %v5660 = vld [vmem:[#allocation14 + $0x250] sm:$0xff]
    %v5661 = vld [vmem:[#allocation14 + $0x258] sm:$0xff]
    %v5662 = vld [vmem:[#allocation14 + $0x260] sm:$0xff]
    %v5663 = vld [vmem:[#allocation14 + $0x268] sm:$0xff]
    %v5664 = vld [vmem:[#allocation14 + $0x270] sm:$0xff]
    %v5665 = vld [vmem:[#allocation14 + $0x278] sm:$0xff]
    %v5666 = vld [vmem:[#allocation14 + $0x280] sm:$0xff]
    %v5667 = vld [vmem:[#allocation14 + $0x288] sm:$0xff]
    %v5668 = vld [vmem:[#allocation14 + $0x290] sm:$0xff]
    %v5669 = vld [vmem:[#allocation14 + $0x298] sm:$0xff]
    %v5670 = vld [vmem:[#allocation14 + $0x2a0] sm:$0xff]
    %v5671 = vld [vmem:[#allocation14 + $0x2a8] sm:$0xff]
    %v5672 = vld [vmem:[#allocation14 + $0x2b0] sm:$0xff]
    %v5673 = vld [vmem:[#allocation14 + $0x2b8] sm:$0xff]
    %v5674 = vld [vmem:[#allocation14 + $0x2c0] sm:$0xff]
    %v5675 = vld [vmem:[#allocation14 + $0x2c8] sm:$0xff]
    %v5676 = vld [vmem:[#allocation14 + $0x2d0] sm:$0xff]
    %v5677 = vld [vmem:[#allocation14 + $0x2d8] sm:$0xff]
    %v5678 = vld [vmem:[#allocation14 + $0x2e0] sm:$0xff]
    %v5679 = vld [vmem:[#allocation14 + $0x2e8] sm:$0xff]
    %v5680 = vld [vmem:[#allocation14 + $0x2f0] sm:$0xff]
    %v5681 = vld [vmem:[#allocation14 + $0x2f8] sm:$0xff]
    %v5682 = vld [vmem:[#allocation14 + $0x300] sm:$0xff]
    %v5683 = vld [vmem:[#allocation14 + $0x308] sm:$0xff]
    %v5684 = vld [vmem:[#allocation14 + $0x310] sm:$0xff]
    %v5685 = vld [vmem:[#allocation14 + $0x318] sm:$0xff]
    %v5686 = vld [vmem:[#allocation14 + $0x320] sm:$0xff]
    %v5687 = vld [vmem:[#allocation14 + $0x328] sm:$0xff]
    %v5688 = vld [vmem:[#allocation14 + $0x330] sm:$0xff]
    %v5689 = vld [vmem:[#allocation14 + $0x338] sm:$0xff]
    %v5690 = vld [vmem:[#allocation14 + $0x340] sm:$0xff]
    %v5691 = vld [vmem:[#allocation14 + $0x348] sm:$0xff]
    %v5692 = vld [vmem:[#allocation14 + $0x350] sm:$0xff]
    %v5693 = vld [vmem:[#allocation14 + $0x358] sm:$0xff]
    %v5694 = vld [vmem:[#allocation14 + $0x360] sm:$0xff]
    %v5695 = vld [vmem:[#allocation14 + $0x368] sm:$0xff]
    %v5696 = vld [vmem:[#allocation14 + $0x370] sm:$0xff]
    %v5697 = vld [vmem:[#allocation14 + $0x378] sm:$0xff]
    %v5698 = vld [vmem:[#allocation14 + $0x380] sm:$0xff]
    %v5699 = vld [vmem:[#allocation14 + $0x388] sm:$0xff]
    %v5700 = vld [vmem:[#allocation14 + $0x390] sm:$0xff]
    %v5701 = vld [vmem:[#allocation14 + $0x398] sm:$0xff]
    %v5702 = vld [vmem:[#allocation14 + $0x3a0] sm:$0xff]
    %v5703 = vld [vmem:[#allocation14 + $0x3a8] sm:$0xff]
    %v5704 = vld [vmem:[#allocation14 + $0x3b0] sm:$0xff]
    %v5705 = vld [vmem:[#allocation14 + $0x3b8] sm:$0xff]
    %v5706 = vld [vmem:[#allocation14 + $0x3c0] sm:$0xff]
    %v5707 = vld [vmem:[#allocation14 + $0x3c8] sm:$0xff]
    %v5708 = vld [vmem:[#allocation14 + $0x3d0] sm:$0xff]
    %v5709 = vld [vmem:[#allocation14 + $0x3d8] sm:$0xff]
    %v5710 = vld [vmem:[#allocation14 + $0x3e0] sm:$0xff]
    %v5711 = vld [vmem:[#allocation14 + $0x3e8] sm:$0xff]
    %v5712 = vld [vmem:[#allocation14 + $0x3f0] sm:$0xff]
    %v5713 = vld [vmem:[#allocation14 + $0x3f8] sm:$0xff]
    %v5714 = vld [vmem:[#allocation14 + $0x400] sm:$0xff]
    %v5715 = vld [vmem:[#allocation14 + $0x408] sm:$0xff]
    %v5716 = vld [vmem:[#allocation14 + $0x410] sm:$0xff]
    %v5717 = vld [vmem:[#allocation14 + $0x418] sm:$0xff]
    %v5718 = vld [vmem:[#allocation14 + $0x420] sm:$0xff]
    %v5719 = vld [vmem:[#allocation14 + $0x428] sm:$0xff]
    %v5720 = vld [vmem:[#allocation14 + $0x430] sm:$0xff]
    %v5721 = vld [vmem:[#allocation14 + $0x438] sm:$0xff]
    %v5722 = vld [vmem:[#allocation14 + $0x440] sm:$0xff]
    %v5723 = vld [vmem:[#allocation14 + $0x448] sm:$0xff]
    %v5724 = vld [vmem:[#allocation14 + $0x450] sm:$0xff]
    %v5725 = vld [vmem:[#allocation14 + $0x458] sm:$0xff]
    %v5726 = vld [vmem:[#allocation14 + $0x460] sm:$0xff]
    %v5727 = vld [vmem:[#allocation14 + $0x468] sm:$0xff]
    %v5728 = vld [vmem:[#allocation14 + $0x470] sm:$0xff]
    %v5729 = vld [vmem:[#allocation14 + $0x478] sm:$0xff]
    %v5730 = vld [vmem:[#allocation14 + $0x480] sm:$0xff]
    %v5731 = vld [vmem:[#allocation14 + $0x488] sm:$0xff]
    %v5732 = vld [vmem:[#allocation14 + $0x490] sm:$0xff]
    %v5733 = vld [vmem:[#allocation14 + $0x498] sm:$0xff]
    %v5734 = vld [vmem:[#allocation14 + $0x4a0] sm:$0xff]
    %v5735 = vld [vmem:[#allocation14 + $0x4a8] sm:$0xff]
    %v5736 = vld [vmem:[#allocation14 + $0x4b0] sm:$0xff]
    %v5737 = vld [vmem:[#allocation14 + $0x4b8] sm:$0xff]
    %v5738 = vld [vmem:[#allocation14 + $0x4c0] sm:$0xff]
    %v5739 = vld [vmem:[#allocation14 + $0x4c8] sm:$0xff]
    %v5740 = vld [vmem:[#allocation14 + $0x4d0] sm:$0xff]
    %v5741 = vld [vmem:[#allocation14 + $0x4d8] sm:$0xff]
    %v5742 = vld [vmem:[#allocation14 + $0x4e0] sm:$0xff]
    %v5743 = vld [vmem:[#allocation14 + $0x4e8] sm:$0xff]
    %v5744 = vld [vmem:[#allocation14 + $0x4f0] sm:$0xff]
    %v5745 = vld [vmem:[#allocation14 + $0x4f8] sm:$0xff]
    %v5746 = vld [vmem:[#allocation14 + $0x500] sm:$0xff]
    %v5747 = vld [vmem:[#allocation14 + $0x508] sm:$0xff]
    %v5748 = vld [vmem:[#allocation14 + $0x510] sm:$0xff]
    %v5749 = vld [vmem:[#allocation14 + $0x518] sm:$0xff]
    %v5750 = vld [vmem:[#allocation14 + $0x520] sm:$0xff]
    %v5751 = vld [vmem:[#allocation14 + $0x528] sm:$0xff]
    %v5752 = vld [vmem:[#allocation14 + $0x530] sm:$0xff]
    %v5753 = vld [vmem:[#allocation14 + $0x538] sm:$0xff]
    %v5754 = vld [vmem:[#allocation14 + $0x540] sm:$0xff]
    %v5755 = vld [vmem:[#allocation14 + $0x548] sm:$0xff]
    %v5756 = vld [vmem:[#allocation14 + $0x550] sm:$0xff]
    %v5757 = vld [vmem:[#allocation14 + $0x558] sm:$0xff]
    %v5758 = vld [vmem:[#allocation14 + $0x560] sm:$0xff]
    %v5759 = vld [vmem:[#allocation14 + $0x568] sm:$0xff]
    %v5760 = vld [vmem:[#allocation14 + $0x570] sm:$0xff]
    %v5761 = vld [vmem:[#allocation14 + $0x578] sm:$0xff]
    %v5762 = vld [vmem:[#allocation14 + $0x580] sm:$0xff]
    %v5763 = vld [vmem:[#allocation14 + $0x588] sm:$0xff]
    %v5764 = vld [vmem:[#allocation14 + $0x590] sm:$0xff]
    %v5765 = vld [vmem:[#allocation14 + $0x598] sm:$0xff]
    %v5766 = vld [vmem:[#allocation14 + $0x5a0] sm:$0xff]
    %v5767 = vld [vmem:[#allocation14 + $0x5a8] sm:$0xff]
    %v5768 = vld [vmem:[#allocation14 + $0x5b0] sm:$0xff]
    %v5769 = vld [vmem:[#allocation14 + $0x5b8] sm:$0xff]
    %v5770 = vld [vmem:[#allocation14 + $0x5c0] sm:$0xff]
    %v5771 = vld [vmem:[#allocation14 + $0x5c8] sm:$0xff]
    %v5772 = vld [vmem:[#allocation14 + $0x5d0] sm:$0xff]
    %v5773 = vld [vmem:[#allocation14 + $0x5d8] sm:$0xff]
    %v5774 = vld [vmem:[#allocation14 + $0x5e0] sm:$0xff]
    %v5775 = vld [vmem:[#allocation14 + $0x5e8] sm:$0xff]
    %v5776 = vld [vmem:[#allocation14 + $0x5f0] sm:$0xff]
    %v5777 = vld [vmem:[#allocation14 + $0x5f8] sm:$0xff]
    %v5778 = vld [vmem:[#allocation14 + $0x600] sm:$0xff]
    %v5779 = vld [vmem:[#allocation14 + $0x608] sm:$0xff]
    %v5780 = vld [vmem:[#allocation14 + $0x610] sm:$0xff]
    %v5781 = vld [vmem:[#allocation14 + $0x618] sm:$0xff]
    %v5782 = vld [vmem:[#allocation14 + $0x620] sm:$0xff]
    %v5783 = vld [vmem:[#allocation14 + $0x628] sm:$0xff]
    %v5784 = vld [vmem:[#allocation14 + $0x630] sm:$0xff]
    %v5785 = vld [vmem:[#allocation14 + $0x638] sm:$0xff]
    %v5786 = vld [vmem:[#allocation14 + $0x640] sm:$0xff]
    %v5787 = vld [vmem:[#allocation14 + $0x648] sm:$0xff]
    %v5788 = vld [vmem:[#allocation14 + $0x650] sm:$0xff]
    %v5789 = vld [vmem:[#allocation14 + $0x658] sm:$0xff]
    %v5790 = vld [vmem:[#allocation14 + $0x660] sm:$0xff]
    %v5791 = vld [vmem:[#allocation14 + $0x668] sm:$0xff]
    %v5792 = vld [vmem:[#allocation14 + $0x670] sm:$0xff]
    %v5793 = vld [vmem:[#allocation14 + $0x678] sm:$0xff]
    %v5794 = vld [vmem:[#allocation14 + $0x680] sm:$0xff]
    %v5795 = vld [vmem:[#allocation14 + $0x688] sm:$0xff]
    %v5796 = vld [vmem:[#allocation14 + $0x690] sm:$0xff]
    %v5797 = vld [vmem:[#allocation14 + $0x698] sm:$0xff]
    %v5798 = vld [vmem:[#allocation14 + $0x6a0] sm:$0xff]
    %v5799 = vld [vmem:[#allocation14 + $0x6a8] sm:$0xff]
    %v5800 = vld [vmem:[#allocation14 + $0x6b0] sm:$0xff]
    %v5801 = vld [vmem:[#allocation14 + $0x6b8] sm:$0xff]
    %v5802 = vld [vmem:[#allocation14 + $0x6c0] sm:$0xff]
    %v5803 = vld [vmem:[#allocation14 + $0x6c8] sm:$0xff]
    %v5804 = vld [vmem:[#allocation14 + $0x6d0] sm:$0xff]
    %v5805 = vld [vmem:[#allocation14 + $0x6d8] sm:$0xff]
    %v5806 = vld [vmem:[#allocation14 + $0x6e0] sm:$0xff]
    %v5807 = vld [vmem:[#allocation14 + $0x6e8] sm:$0xff]
    %v5808 = vld [vmem:[#allocation14 + $0x6f0] sm:$0xff]
    %v5809 = vld [vmem:[#allocation14 + $0x6f8] sm:$0xff]
    %v5810 = vld [vmem:[#allocation14 + $0x700] sm:$0xff]
    %v5811 = vld [vmem:[#allocation14 + $0x708] sm:$0xff]
    %v5812 = vld [vmem:[#allocation14 + $0x710] sm:$0xff]
    %v5813 = vld [vmem:[#allocation14 + $0x718] sm:$0xff]
    %v5814 = vld [vmem:[#allocation14 + $0x720] sm:$0xff]
    %v5815 = vld [vmem:[#allocation14 + $0x728] sm:$0xff]
    %v5816 = vld [vmem:[#allocation14 + $0x730] sm:$0xff]
    %v5817 = vld [vmem:[#allocation14 + $0x738] sm:$0xff]
    %v5818 = vld [vmem:[#allocation14 + $0x740] sm:$0xff]
    %v5819 = vld [vmem:[#allocation14 + $0x748] sm:$0xff]
    %v5820 = vld [vmem:[#allocation14 + $0x750] sm:$0xff]
    %v5821 = vld [vmem:[#allocation14 + $0x758] sm:$0xff]
    %v5822 = vld [vmem:[#allocation14 + $0x760] sm:$0xff]
    %v5823 = vld [vmem:[#allocation14 + $0x768] sm:$0xff]
    %v5824 = vld [vmem:[#allocation14 + $0x770] sm:$0xff]
    %v5825 = vld [vmem:[#allocation14 + $0x778] sm:$0xff]
    %v5826 = vld [vmem:[#allocation14 + $0x780] sm:$0xff]
    %v5827 = vld [vmem:[#allocation14 + $0x788] sm:$0xff]
    %v5828 = vld [vmem:[#allocation14 + $0x790] sm:$0xff]
    %v5829 = vld [vmem:[#allocation14 + $0x798] sm:$0xff]
    %v5830 = vld [vmem:[#allocation14 + $0x7a0] sm:$0xff]
    %v5831 = vld [vmem:[#allocation14 + $0x7a8] sm:$0xff]
    %v5832 = vld [vmem:[#allocation14 + $0x7b0] sm:$0xff]
    %v5833 = vld [vmem:[#allocation14 + $0x7b8] sm:$0xff]
    %v5834 = vld [vmem:[#allocation14 + $0x7c0] sm:$0xff]
    %v5835 = vld [vmem:[#allocation14 + $0x7c8] sm:$0xff]
    %v5836 = vld [vmem:[#allocation14 + $0x7d0] sm:$0xff]
    %v5837 = vld [vmem:[#allocation14 + $0x7d8] sm:$0xff]
    %v5838 = vld [vmem:[#allocation14 + $0x7e0] sm:$0xff]
    %v5839 = vld [vmem:[#allocation14 + $0x7e8] sm:$0xff]
    %v5840 = vld [vmem:[#allocation14 + $0x7f0] sm:$0xff]
    %v5841 = vld [vmem:[#allocation14 + $0x7f8] sm:$0xff]
    %v5842 = vld [vmem:[#allocation14 + $0x800] sm:$0xff]
    %v5843 = vld [vmem:[#allocation14 + $0x808] sm:$0xff]
    %v5844 = vld [vmem:[#allocation14 + $0x810] sm:$0xff]
    %v5845 = vld [vmem:[#allocation14 + $0x818] sm:$0xff]
    %v5846 = vld [vmem:[#allocation14 + $0x820] sm:$0xff]
    %v5847 = vld [vmem:[#allocation14 + $0x828] sm:$0xff]
    %v5848 = vld [vmem:[#allocation14 + $0x830] sm:$0xff]
    %v5849 = vld [vmem:[#allocation14 + $0x838] sm:$0xff]
    %v5850 = vld [vmem:[#allocation14 + $0x840] sm:$0xff]
    %v5851 = vld [vmem:[#allocation14 + $0x848] sm:$0xff]
    %v5852 = vld [vmem:[#allocation14 + $0x850] sm:$0xff]
    %v5853 = vld [vmem:[#allocation14 + $0x858] sm:$0xff]
    %v5854 = vld [vmem:[#allocation14 + $0x860] sm:$0xff]
    %v5855 = vld [vmem:[#allocation14 + $0x868] sm:$0xff]
    %v5856 = vld [vmem:[#allocation14 + $0x870] sm:$0xff]
    %v5857 = vld [vmem:[#allocation14 + $0x878] sm:$0xff]
    %v5858 = vld [vmem:[#allocation14 + $0x880] sm:$0xff]
    %v5859 = vld [vmem:[#allocation14 + $0x888] sm:$0xff]
    %v5860 = vld [vmem:[#allocation14 + $0x890] sm:$0xff]
    %v5861 = vld [vmem:[#allocation14 + $0x898] sm:$0xff]
    %v5862 = vld [vmem:[#allocation14 + $0x8a0] sm:$0xff]
    %v5863 = vld [vmem:[#allocation14 + $0x8a8] sm:$0xff]
    %v5864 = vld [vmem:[#allocation14 + $0x8b0] sm:$0xff]
    %v5865 = vld [vmem:[#allocation14 + $0x8b8] sm:$0xff]
    %v5866 = vld [vmem:[#allocation14 + $0x8c0] sm:$0xff]
    %v5867 = vld [vmem:[#allocation14 + $0x8c8] sm:$0xff]
    %v5868 = vld [vmem:[#allocation14 + $0x8d0] sm:$0xff]
    %v5869 = vld [vmem:[#allocation14 + $0x8d8] sm:$0xff]
    %v5870 = vld [vmem:[#allocation14 + $0x8e0] sm:$0xff]
    %v5871 = vld [vmem:[#allocation14 + $0x8e8] sm:$0xff]
    %v5872 = vld [vmem:[#allocation14 + $0x8f0] sm:$0xff]
    %v5873 = vld [vmem:[#allocation14 + $0x8f8] sm:$0xff]
    %v5874 = vld [vmem:[#allocation14 + $0x900] sm:$0xff]
    %v5875 = vld [vmem:[#allocation14 + $0x908] sm:$0xff]
    %v5876 = vld [vmem:[#allocation14 + $0x910] sm:$0xff]
    %v5877 = vld [vmem:[#allocation14 + $0x918] sm:$0xff]
    %v5878 = vld [vmem:[#allocation14 + $0x920] sm:$0xff]
    %v5879 = vld [vmem:[#allocation14 + $0x928] sm:$0xff]
    %v5880 = vld [vmem:[#allocation14 + $0x930] sm:$0xff]
    %v5881 = vld [vmem:[#allocation14 + $0x938] sm:$0xff]
    %v5882 = vld [vmem:[#allocation14 + $0x940] sm:$0xff]
    %v5883 = vld [vmem:[#allocation14 + $0x948] sm:$0xff]
    %v5884 = vld [vmem:[#allocation14 + $0x950] sm:$0xff]
    %v5885 = vld [vmem:[#allocation14 + $0x958] sm:$0xff]
    %v5886 = vld [vmem:[#allocation14 + $0x960] sm:$0xff]
    %v5887 = vld [vmem:[#allocation14 + $0x968] sm:$0xff]
    %v5888 = vld [vmem:[#allocation14 + $0x970] sm:$0xff]
    %v5889 = vld [vmem:[#allocation14 + $0x978] sm:$0xff]
    %v5890 = vld [vmem:[#allocation14 + $0x980] sm:$0xff]
    %v5891 = vld [vmem:[#allocation14 + $0x988] sm:$0xff]
    %v5892 = vld [vmem:[#allocation14 + $0x990] sm:$0xff]
    %v5893 = vld [vmem:[#allocation14 + $0x998] sm:$0xff]
    %v5894 = vld [vmem:[#allocation14 + $0x9a0] sm:$0xff]
    %v5895 = vld [vmem:[#allocation14 + $0x9a8] sm:$0xff]
    %v5896 = vld [vmem:[#allocation14 + $0x9b0] sm:$0xff]
    %v5897 = vld [vmem:[#allocation14 + $0x9b8] sm:$0xff]
    %v5898 = vld [vmem:[#allocation14 + $0x9c0] sm:$0xff]
    %v5899 = vld [vmem:[#allocation14 + $0x9c8] sm:$0xff]
    %v5900 = vld [vmem:[#allocation14 + $0x9d0] sm:$0xff]
    %v5901 = vld [vmem:[#allocation14 + $0x9d8] sm:$0xff]
    %v5902 = vld [vmem:[#allocation14 + $0x9e0] sm:$0xff]
    %v5903 = vld [vmem:[#allocation14 + $0x9e8] sm:$0xff]
    %v5904 = vld [vmem:[#allocation14 + $0x9f0] sm:$0xff]
    %v5905 = vld [vmem:[#allocation14 + $0x9f8] sm:$0xff]
    %v5906 = vld [vmem:[#allocation14 + $0xa00] sm:$0xff]
    %v5907 = vld [vmem:[#allocation14 + $0xa08] sm:$0xff]
    %v5908 = vld [vmem:[#allocation14 + $0xa10] sm:$0xff]
    %v5909 = vld [vmem:[#allocation14 + $0xa18] sm:$0xff]
    %v5910 = vld [vmem:[#allocation14 + $0xa20] sm:$0xff]
    %v5911 = vld [vmem:[#allocation14 + $0xa28] sm:$0xff]
    %v5912 = vld [vmem:[#allocation14 + $0xa30] sm:$0xff]
    %v5913 = vld [vmem:[#allocation14 + $0xa38] sm:$0xff]
    %v5914 = vld [vmem:[#allocation14 + $0xa40] sm:$0xff]
    %v5915 = vld [vmem:[#allocation14 + $0xa48] sm:$0xff]
    %v5916 = vld [vmem:[#allocation14 + $0xa50] sm:$0xff]
    %v5917 = vld [vmem:[#allocation14 + $0xa58] sm:$0xff]
    %v5918 = vld [vmem:[#allocation14 + $0xa60] sm:$0xff]
    %v5919 = vld [vmem:[#allocation14 + $0xa68] sm:$0xff]
    %v5920 = vld [vmem:[#allocation14 + $0xa70] sm:$0xff]
    %v5921 = vld [vmem:[#allocation14 + $0xa78] sm:$0xff]
    %v5922 = vld [vmem:[#allocation14 + $0xa80] sm:$0xff]
    %v5923 = vld [vmem:[#allocation14 + $0xa88] sm:$0xff]
    %v5924 = vld [vmem:[#allocation14 + $0xa90] sm:$0xff]
    %v5925 = vld [vmem:[#allocation14 + $0xa98] sm:$0xff]
    %v5926 = vld [vmem:[#allocation14 + $0xaa0] sm:$0xff]
    %v5927 = vld [vmem:[#allocation14 + $0xaa8] sm:$0xff]
    %v5928 = vld [vmem:[#allocation14 + $0xab0] sm:$0xff]
    %v5929 = vld [vmem:[#allocation14 + $0xab8] sm:$0xff]
    %v5930 = vld [vmem:[#allocation14 + $0xac0] sm:$0xff]
    %v5931 = vld [vmem:[#allocation14 + $0xac8] sm:$0xff]
    %v5932 = vld [vmem:[#allocation14 + $0xad0] sm:$0xff]
    %v5933 = vld [vmem:[#allocation14 + $0xad8] sm:$0xff]
    %v5934 = vld [vmem:[#allocation14 + $0xae0] sm:$0xff]
    %v5935 = vld [vmem:[#allocation14 + $0xae8] sm:$0xff]
    %v5936 = vld [vmem:[#allocation14 + $0xaf0] sm:$0xff]
    %v5937 = vld [vmem:[#allocation14 + $0xaf8] sm:$0xff]
    %v5938 = vld [vmem:[#allocation14 + $0xb00] sm:$0xff]
    %v5939 = vld [vmem:[#allocation14 + $0xb08] sm:$0xff]
    %v5940 = vld [vmem:[#allocation14 + $0xb10] sm:$0xff]
    %v5941 = vld [vmem:[#allocation14 + $0xb18] sm:$0xff]
    %v5942 = vld [vmem:[#allocation14 + $0xb20] sm:$0xff]
    %v5943 = vld [vmem:[#allocation14 + $0xb28] sm:$0xff]
    %v5944 = vld [vmem:[#allocation14 + $0xb30] sm:$0xff]
    %v5945 = vld [vmem:[#allocation14 + $0xb38] sm:$0xff]
    %v5946 = vld [vmem:[#allocation14 + $0xb40] sm:$0xff]
    %v5947 = vld [vmem:[#allocation14 + $0xb48] sm:$0xff]
    %v5948 = vld [vmem:[#allocation14 + $0xb50] sm:$0xff]
    %v5949 = vld [vmem:[#allocation14 + $0xb58] sm:$0xff]
    %v5950 = vld [vmem:[#allocation14 + $0xb60] sm:$0xff]
    %v5951 = vld [vmem:[#allocation14 + $0xb68] sm:$0xff]
    %v5952 = vld [vmem:[#allocation14 + $0xb70] sm:$0xff]
    %v5953 = vld [vmem:[#allocation14 + $0xb78] sm:$0xff]
    %v5954 = vld [vmem:[#allocation14 + $0xb80] sm:$0xff]
    %v5955 = vld [vmem:[#allocation14 + $0xb88] sm:$0xff]
    %v5956 = vld [vmem:[#allocation14 + $0xb90] sm:$0xff]
    %v5957 = vld [vmem:[#allocation14 + $0xb98] sm:$0xff]
    %v5958 = vld [vmem:[#allocation14 + $0xba0] sm:$0xff]
    %v5959 = vld [vmem:[#allocation14 + $0xba8] sm:$0xff]
    %v5960 = vld [vmem:[#allocation14 + $0xbb0] sm:$0xff]
    %v5961 = vld [vmem:[#allocation14 + $0xbb8] sm:$0xff]
    %v5962 = vld [vmem:[#allocation14 + $0xbc0] sm:$0xff]
    %v5963 = vld [vmem:[#allocation14 + $0xbc8] sm:$0xff]
    %v5964 = vld [vmem:[#allocation14 + $0xbd0] sm:$0xff]
    %v5965 = vld [vmem:[#allocation14 + $0xbd8] sm:$0xff]
    %v5966 = vld [vmem:[#allocation14 + $0xbe0] sm:$0xff]
    %v5967 = vld [vmem:[#allocation14 + $0xbe8] sm:$0xff]
    %v5968 = vld [vmem:[#allocation14 + $0xbf0] sm:$0xff]
    %v5969 = vld [vmem:[#allocation14 + $0xbf8] sm:$0xff]
    %v5970 = vld [vmem:[#allocation14 + $0xc00] sm:$0xff]
    %v5971 = vld [vmem:[#allocation14 + $0xc08] sm:$0xff]
    %v5972 = vld [vmem:[#allocation14 + $0xc10] sm:$0xff]
    %v5973 = vld [vmem:[#allocation14 + $0xc18] sm:$0xff]
    %v5974 = vld [vmem:[#allocation14 + $0xc20] sm:$0xff]
    %v5975 = vld [vmem:[#allocation14 + $0xc28] sm:$0xff]
    %v5976 = vld [vmem:[#allocation14 + $0xc30] sm:$0xff]
    %v5977 = vld [vmem:[#allocation14 + $0xc38] sm:$0xff]
    %v5978 = vld [vmem:[#allocation14 + $0xc40] sm:$0xff]
    %v5979 = vld [vmem:[#allocation14 + $0xc48] sm:$0xff]
    %v5980 = vld [vmem:[#allocation14 + $0xc50] sm:$0xff]
    %v5981 = vld [vmem:[#allocation14 + $0xc58] sm:$0xff]
    %v5982 = vld [vmem:[#allocation14 + $0xc60] sm:$0xff]
    %v5983 = vld [vmem:[#allocation14 + $0xc68] sm:$0xff]
    %v5984 = vld [vmem:[#allocation14 + $0xc70] sm:$0xff]
    %v5985 = vld [vmem:[#allocation14 + $0xc78] sm:$0xff]
    %v5986 = vld [vmem:[#allocation14 + $0xc80] sm:$0xff]
    %v5987 = vld [vmem:[#allocation14 + $0xc88] sm:$0xff]
    %v5988 = vld [vmem:[#allocation14 + $0xc90] sm:$0xff]
    %v5989 = vld [vmem:[#allocation14 + $0xc98] sm:$0xff]
    %v5990 = vld [vmem:[#allocation14 + $0xca0] sm:$0xff]
    %v5991 = vld [vmem:[#allocation14 + $0xca8] sm:$0xff]
    %v5992 = vld [vmem:[#allocation14 + $0xcb0] sm:$0xff]
    %v5993 = vld [vmem:[#allocation14 + $0xcb8] sm:$0xff]
    %v5994 = vld [vmem:[#allocation14 + $0xcc0] sm:$0xff]
    %v5995 = vld [vmem:[#allocation14 + $0xcc8] sm:$0xff]
    %v5996 = vld [vmem:[#allocation14 + $0xcd0] sm:$0xff]
    %v5997 = vld [vmem:[#allocation14 + $0xcd8] sm:$0xff]
    %v5998 = vld [vmem:[#allocation14 + $0xce0] sm:$0xff]
    %v5999 = vld [vmem:[#allocation14 + $0xce8] sm:$0xff]
    %v6000 = vld [vmem:[#allocation14 + $0xcf0] sm:$0xff]
    %v6001 = vld [vmem:[#allocation14 + $0xcf8] sm:$0xff]
    %v6002 = vld [vmem:[#allocation14 + $0xd00] sm:$0xff]
    %v6003 = vld [vmem:[#allocation14 + $0xd08] sm:$0xff]
    %v6004 = vld [vmem:[#allocation14 + $0xd10] sm:$0xff]
    %v6005 = vld [vmem:[#allocation14 + $0xd18] sm:$0xff]
    %v6006 = vld [vmem:[#allocation14 + $0xd20] sm:$0xff]
    %v6007 = vld [vmem:[#allocation14 + $0xd28] sm:$0xff]
    %v6008 = vld [vmem:[#allocation14 + $0xd30] sm:$0xff]
    %v6009 = vld [vmem:[#allocation14 + $0xd38] sm:$0xff]
    %v6010 = vld [vmem:[#allocation14 + $0xd40] sm:$0xff]
    %v6011 = vld [vmem:[#allocation14 + $0xd48] sm:$0xff]
    %v6012 = vld [vmem:[#allocation14 + $0xd50] sm:$0xff]
    %v6013 = vld [vmem:[#allocation14 + $0xd58] sm:$0xff]
    %v6014 = vld [vmem:[#allocation14 + $0xd60] sm:$0xff]
    %v6015 = vld [vmem:[#allocation14 + $0xd68] sm:$0xff]
    %v6016 = vld [vmem:[#allocation14 + $0xd70] sm:$0xff]
    %v6017 = vld [vmem:[#allocation14 + $0xd78] sm:$0xff]
    %v6018 = vld [vmem:[#allocation14 + $0xd80] sm:$0xff]
    %v6019 = vld [vmem:[#allocation14 + $0xd88] sm:$0xff]
    %v6020 = vld [vmem:[#allocation14 + $0xd90] sm:$0xff]
    %v6021 = vld [vmem:[#allocation14 + $0xd98] sm:$0xff]
    %v6022 = vld [vmem:[#allocation14 + $0xda0] sm:$0xff]
    %v6023 = vld [vmem:[#allocation14 + $0xda8] sm:$0xff]
    %v6024 = vld [vmem:[#allocation14 + $0xdb0] sm:$0xff]
    %v6025 = vld [vmem:[#allocation14 + $0xdb8] sm:$0xff]
    %v6026 = vld [vmem:[#allocation14 + $0xdc0] sm:$0xff]
    %v6027 = vld [vmem:[#allocation14 + $0xdc8] sm:$0xff]
    %v6028 = vld [vmem:[#allocation14 + $0xdd0] sm:$0xff]
    %v6029 = vld [vmem:[#allocation14 + $0xdd8] sm:$0xff]
    %v6030 = vld [vmem:[#allocation14 + $0xde0] sm:$0xff]
    %v6031 = vld [vmem:[#allocation14 + $0xde8] sm:$0xff]
    %v6032 = vld [vmem:[#allocation14 + $0xdf0] sm:$0xff]
    %v6033 = vld [vmem:[#allocation14 + $0xdf8] sm:$0xff]
    %v6034 = vld [vmem:[#allocation14 + $0xe00] sm:$0xff]
    %v6035 = vld [vmem:[#allocation14 + $0xe08] sm:$0xff]
    %v6036 = vld [vmem:[#allocation14 + $0xe10] sm:$0xff]
    %v6037 = vld [vmem:[#allocation14 + $0xe18] sm:$0xff]
    %v6038 = vld [vmem:[#allocation14 + $0xe20] sm:$0xff]
    %v6039 = vld [vmem:[#allocation14 + $0xe28] sm:$0xff]
    %v6040 = vld [vmem:[#allocation14 + $0xe30] sm:$0xff]
    %v6041 = vld [vmem:[#allocation14 + $0xe38] sm:$0xff]
    %v6042 = vld [vmem:[#allocation14 + $0xe40] sm:$0xff]
    %v6043 = vld [vmem:[#allocation14 + $0xe48] sm:$0xff]
    %v6044 = vld [vmem:[#allocation14 + $0xe50] sm:$0xff]
    %v6045 = vld [vmem:[#allocation14 + $0xe58] sm:$0xff]
    %v6046 = vld [vmem:[#allocation14 + $0xe60] sm:$0xff]
    %v6047 = vld [vmem:[#allocation14 + $0xe68] sm:$0xff]
    %v6048 = vld [vmem:[#allocation14 + $0xe70] sm:$0xff]
    %v6049 = vld [vmem:[#allocation14 + $0xe78] sm:$0xff]
    %v6050 = vld [vmem:[#allocation14 + $0xe80] sm:$0xff]
    %v6051 = vld [vmem:[#allocation14 + $0xe88] sm:$0xff]
    %v6052 = vld [vmem:[#allocation14 + $0xe90] sm:$0xff]
    %v6053 = vld [vmem:[#allocation14 + $0xe98] sm:$0xff]
    %v6054 = vld [vmem:[#allocation14 + $0xea0] sm:$0xff]
    %v6055 = vld [vmem:[#allocation14 + $0xea8] sm:$0xff]
    %v6056 = vld [vmem:[#allocation14 + $0xeb0] sm:$0xff]
    %v6057 = vld [vmem:[#allocation14 + $0xeb8] sm:$0xff]
    %v6058 = vld [vmem:[#allocation14 + $0xec0] sm:$0xff]
    %v6059 = vld [vmem:[#allocation14 + $0xec8] sm:$0xff]
    %v6060 = vld [vmem:[#allocation14 + $0xed0] sm:$0xff]
    %v6061 = vld [vmem:[#allocation14 + $0xed8] sm:$0xff]
    %v6062 = vld [vmem:[#allocation14 + $0xee0] sm:$0xff]
    %v6063 = vld [vmem:[#allocation14 + $0xee8] sm:$0xff]
    %v6064 = vld [vmem:[#allocation14 + $0xef0] sm:$0xff]
    %v6065 = vld [vmem:[#allocation14 + $0xef8] sm:$0xff]
    %v6066 = vld [vmem:[#allocation14 + $0xf00] sm:$0xff]
    %v6067 = vld [vmem:[#allocation14 + $0xf08] sm:$0xff]
    %v6068 = vld [vmem:[#allocation14 + $0xf10] sm:$0xff]
    %v6069 = vld [vmem:[#allocation14 + $0xf18] sm:$0xff]
    %v6070 = vld [vmem:[#allocation14 + $0xf20] sm:$0xff]
    %v6071 = vld [vmem:[#allocation14 + $0xf28] sm:$0xff]
    %v6072 = vld [vmem:[#allocation14 + $0xf30] sm:$0xff]
    %v6073 = vld [vmem:[#allocation14 + $0xf38] sm:$0xff]
    %v6074 = vld [vmem:[#allocation14 + $0xf40] sm:$0xff]
    %v6075 = vld [vmem:[#allocation14 + $0xf48] sm:$0xff]
    %v6076 = vld [vmem:[#allocation14 + $0xf50] sm:$0xff]
    %v6077 = vld [vmem:[#allocation14 + $0xf58] sm:$0xff]
    %v6078 = vld [vmem:[#allocation14 + $0xf60] sm:$0xff]
    %v6079 = vld [vmem:[#allocation14 + $0xf68] sm:$0xff]
    %v6080 = vld [vmem:[#allocation14 + $0xf70] sm:$0xff]
    %v6081 = vld [vmem:[#allocation14 + $0xf78] sm:$0xff]
    %v6082 = vld [vmem:[#allocation14 + $0xf80] sm:$0xff]
    %v6083 = vld [vmem:[#allocation14 + $0xf88] sm:$0xff]
    %v6084 = vld [vmem:[#allocation14 + $0xf90] sm:$0xff]
    %v6085 = vld [vmem:[#allocation14 + $0xf98] sm:$0xff]
    %v6086 = vld [vmem:[#allocation14 + $0xfa0] sm:$0xff]
    %v6087 = vld [vmem:[#allocation14 + $0xfa8] sm:$0xff]
    %v6088 = vld [vmem:[#allocation14 + $0xfb0] sm:$0xff]
    %v6089 = vld [vmem:[#allocation14 + $0xfb8] sm:$0xff]
    %v6090 = vld [vmem:[#allocation14 + $0xfc0] sm:$0xff]
    %v6091 = vld [vmem:[#allocation14 + $0xfc8] sm:$0xff]
    %v6092 = vld [vmem:[#allocation14 + $0xfd0] sm:$0xff]
    %v6093 = vld [vmem:[#allocation14 + $0xfd8] sm:$0xff]
    %v6094 = vld [vmem:[#allocation14 + $0xfe0] sm:$0xff]
    %v6095 = vld [vmem:[#allocation14 + $0xfe8] sm:$0xff]
    %v6096 = vld [vmem:[#allocation14 + $0xff0] sm:$0xff]
    %v6097 = vld [vmem:[#allocation14 + $0xff8] sm:$0xff]
    %6098 = vmatprep.subr.mxu0 %v5587
    %6099 = vmatpush1.msra.mxu0 %v5586
    %6100 = vmatprep.subr.mxu0 %v5591
    %6101 = vmatpush1.msra.mxu0 %v5590
    %6102 = vmatprep.subr.mxu0 %v5595
    %6103 = vmatpush1.msra.mxu0 %v5594
    %6104 = vmatprep.subr.mxu0 %v5599
    %6105 = vmatpush1.msra.mxu0 %v5598
    %6106 = vmatprep.subr.mxu0 %v5603
    %6107 = vmatpush1.msra.mxu0 %v5602
    %6108 = vmatprep.subr.mxu0 %v5607
    %6109 = vmatpush1.msra.mxu0 %v5606
    %6110 = vmatprep.subr.mxu0 %v5611
    %6111 = vmatpush1.msra.mxu0 %v5610
    %6112 = vmatprep.subr.mxu0 %v5615
    %6113 = vmatpush1.msra.mxu0 %v5614
    %6114 = vmatprep.subr.mxu0 %v5619
    %6115 = vmatpush1.msra.mxu0 %v5618
    %6116 = vmatprep.subr.mxu0 %v5623
    %6117 = vmatpush1.msra.mxu0 %v5622
    %6118 = vmatprep.subr.mxu0 %v5627
    %6119 = vmatpush1.msra.mxu0 %v5626
    %6120 = vmatprep.subr.mxu0 %v5631
    %6121 = vmatpush1.msra.mxu0 %v5630
    %6122 = vmatprep.subr.mxu0 %v5635
    %6123 = vmatpush1.msra.mxu0 %v5634
    %6124 = vmatprep.subr.mxu0 %v5639
    %6125 = vmatpush1.msra.mxu0 %v5638
    %6126 = vmatprep.subr.mxu0 %v5643
    %6127 = vmatpush1.msra.mxu0 %v5642
    %6128 = vmatprep.subr.mxu0 %v5647
    %6129 = vmatpush1.msra.mxu0 %v5646
    %6130 = vmatprep.subr.mxu0 %v5651
    %6131 = vmatpush1.msra.mxu0 %v5650
    %6132 = vmatprep.subr.mxu0 %v5655
    %6133 = vmatpush1.msra.mxu0 %v5654
    %6134 = vmatprep.subr.mxu0 %v5659
    %6135 = vmatpush1.msra.mxu0 %v5658
    %6136 = vmatprep.subr.mxu0 %v5663
    %6137 = vmatpush1.msra.mxu0 %v5662
    %6138 = vmatprep.subr.mxu0 %v5667
    %6139 = vmatpush1.msra.mxu0 %v5666
    %6140 = vmatprep.subr.mxu0 %v5671
    %6141 = vmatpush1.msra.mxu0 %v5670
    %6142 = vmatprep.subr.mxu0 %v5675
    %6143 = vmatpush1.msra.mxu0 %v5674
    %6144 = vmatprep.subr.mxu0 %v5679
    %6145 = vmatpush1.msra.mxu0 %v5678
    %6146 = vmatprep.subr.mxu0 %v5683
    %6147 = vmatpush1.msra.mxu0 %v5682
    %6148 = vmatprep.subr.mxu0 %v5687
    %6149 = vmatpush1.msra.mxu0 %v5686
    %6150 = vmatprep.subr.mxu0 %v5691
    %6151 = vmatpush1.msra.mxu0 %v5690
    %6152 = vmatprep.subr.mxu0 %v5695
    %6153 = vmatpush1.msra.mxu0 %v5694
    %6154 = vmatprep.subr.mxu0 %v5699
    %6155 = vmatpush1.msra.mxu0 %v5698
    %6156 = vmatprep.subr.mxu0 %v5703
    %6157 = vmatpush1.msra.mxu0 %v5702
    %6158 = vmatprep.subr.mxu0 %v5707
    %6159 = vmatpush1.msra.mxu0 %v5706
    %6160 = vmatprep.subr.mxu0 %v5711
    %6161 = vmatpush1.msra.mxu0 %v5710
    %6162 = vmatprep.mubr.f32.mxu0 %v1219
    %6163 = vmatmul.mubr.f32.gmra.mrb[0].mxu0 %v1211
    %v6164 = vpop.f32.mrb[0].mxu0
    %v6165 = vadd.f32 0.0, %v6164
    %v6166 = vpop.f32.mrb[0].mxu0
    %v6167 = vadd.f32 0.0, %v6166
    %6168 = vdwg.mxu0
    %6169 = vmatprep.subr.mxu0 %v5715
    %6170 = vmatpush1.msra.mxu0 %v5714
    %6171 = vmatprep.subr.mxu0 %v5719
    %6172 = vmatpush1.msra.mxu0 %v5718
    %6173 = vmatprep.subr.mxu0 %v5723
    %6174 = vmatpush1.msra.mxu0 %v5722
    %6175 = vmatprep.subr.mxu0 %v5727
    %6176 = vmatpush1.msra.mxu0 %v5726
    %6177 = vmatprep.subr.mxu0 %v5731
    %6178 = vmatpush1.msra.mxu0 %v5730
    %6179 = vmatprep.subr.mxu0 %v5735
    %6180 = vmatpush1.msra.mxu0 %v5734
    %6181 = vmatprep.subr.mxu0 %v5739
    %6182 = vmatpush1.msra.mxu0 %v5738
    %6183 = vmatprep.subr.mxu0 %v5743
    %6184 = vmatpush1.msra.mxu0 %v5742
    %6185 = vmatprep.subr.mxu0 %v5747
    %6186 = vmatpush1.msra.mxu0 %v5746
    %6187 = vmatprep.subr.mxu0 %v5751
    %6188 = vmatpush1.msra.mxu0 %v5750
    %6189 = vmatprep.subr.mxu0 %v5755
    %6190 = vmatpush1.msra.mxu0 %v5754
    %6191 = vmatprep.subr.mxu0 %v5759
    %6192 = vmatpush1.msra.mxu0 %v5758
    %6193 = vmatprep.subr.mxu0 %v5763
    %6194 = vmatpush1.msra.mxu0 %v5762
    %6195 = vmatprep.subr.mxu0 %v5767
    %6196 = vmatpush1.msra.mxu0 %v5766
    %6197 = vmatprep.subr.mxu0 %v5771
    %6198 = vmatpush1.msra.mxu0 %v5770
    %6199 = vmatprep.subr.mxu0 %v5775
    %6200 = vmatpush1.msra.mxu0 %v5774
    %6201 = vmatprep.subr.mxu0 %v5779
    %6202 = vmatpush1.msra.mxu0 %v5778
    %6203 = vmatprep.subr.mxu0 %v5783
    %6204 = vmatpush1.msra.mxu0 %v5782
    %6205 = vmatprep.subr.mxu0 %v5787
    %6206 = vmatpush1.msra.mxu0 %v5786
    %6207 = vmatprep.subr.mxu0 %v5791
    %6208 = vmatpush1.msra.mxu0 %v5790
    %6209 = vmatprep.subr.mxu0 %v5795
    %6210 = vmatpush1.msra.mxu0 %v5794
    %6211 = vmatprep.subr.mxu0 %v5799
    %6212 = vmatpush1.msra.mxu0 %v5798
    %6213 = vmatprep.subr.mxu0 %v5803
    %6214 = vmatpush1.msra.mxu0 %v5802
    %6215 = vmatprep.subr.mxu0 %v5807
    %6216 = vmatpush1.msra.mxu0 %v5806
    %6217 = vmatprep.subr.mxu0 %v5811
    %6218 = vmatpush1.msra.mxu0 %v5810
    %6219 = vmatprep.subr.mxu0 %v5815
    %6220 = vmatpush1.msra.mxu0 %v5814
    %6221 = vmatprep.subr.mxu0 %v5819
    %6222 = vmatpush1.msra.mxu0 %v5818
    %6223 = vmatprep.subr.mxu0 %v5823
    %6224 = vmatpush1.msra.mxu0 %v5822
    %6225 = vmatprep.subr.mxu0 %v5827
    %6226 = vmatpush1.msra.mxu0 %v5826
    %6227 = vmatprep.subr.mxu0 %v5831
    %6228 = vmatpush1.msra.mxu0 %v5830
    %6229 = vmatprep.subr.mxu0 %v5835
    %6230 = vmatpush1.msra.mxu0 %v5834
    %6231 = vmatprep.subr.mxu0 %v5839
    %6232 = vmatpush1.msra.mxu0 %v5838
    %6233 = vmatprep.mubr.f32.mxu0 %v1220
    %6234 = vmatmul.mubr.f32.gmra.mrb[0].mxu0 %v1218
    %v6235 = vpop.f32.mrb[0].mxu0
    %v6236 = vadd.f32 %v6165, %v6235
    %v6237 = vpop.f32.mrb[0].mxu0
    %v6238 = vadd.f32 %v6167, %v6237
    %6239 = vdwg.mxu0
    %6240 = vmatprep.subr.mxu0 %v5843
    %6241 = vmatpush1.msra.mxu0 %v5842
    %6242 = vmatprep.subr.mxu0 %v5847
    %6243 = vmatpush1.msra.mxu0 %v5846
    %6244 = vmatprep.subr.mxu0 %v5851
    %6245 = vmatpush1.msra.mxu0 %v5850
    %6246 = vmatprep.subr.mxu0 %v5855
    %6247 = vmatpush1.msra.mxu0 %v5854
    %6248 = vmatprep.subr.mxu0 %v5859
    %6249 = vmatpush1.msra.mxu0 %v5858
    %6250 = vmatprep.subr.mxu0 %v5863
    %6251 = vmatpush1.msra.mxu0 %v5862
    %6252 = vmatprep.subr.mxu0 %v5867
    %6253 = vmatpush1.msra.mxu0 %v5866
    %6254 = vmatprep.subr.mxu0 %v5871
    %6255 = vmatpush1.msra.mxu0 %v5870
    %6256 = vmatprep.subr.mxu0 %v5875
    %6257 = vmatpush1.msra.mxu0 %v5874
    %6258 = vmatprep.subr.mxu0 %v5879
    %6259 = vmatpush1.msra.mxu0 %v5878
    %6260 = vmatprep.subr.mxu0 %v5883
    %6261 = vmatpush1.msra.mxu0 %v5882
    %6262 = vmatprep.subr.mxu0 %v5887
    %6263 = vmatpush1.msra.mxu0 %v5886
    %6264 = vmatprep.subr.mxu0 %v5891
    %6265 = vmatpush1.msra.mxu0 %v5890
    %6266 = vmatprep.subr.mxu0 %v5895
    %6267 = vmatpush1.msra.mxu0 %v5894
    %6268 = vmatprep.subr.mxu0 %v5899
    %6269 = vmatpush1.msra.mxu0 %v5898
    %6270 = vmatprep.subr.mxu0 %v5903
    %6271 = vmatpush1.msra.mxu0 %v5902
    %6272 = vmatprep.subr.mxu0 %v5907
    %6273 = vmatpush1.msra.mxu0 %v5906
    %6274 = vmatprep.subr.mxu0 %v5911
    %6275 = vmatpush1.msra.mxu0 %v5910
    %6276 = vmatprep.subr.mxu0 %v5915
    %6277 = vmatpush1.msra.mxu0 %v5914
    %6278 = vmatprep.subr.mxu0 %v5919
    %6279 = vmatpush1.msra.mxu0 %v5918
    %6280 = vmatprep.subr.mxu0 %v5923
    %6281 = vmatpush1.msra.mxu0 %v5922
    %6282 = vmatprep.subr.mxu0 %v5927
    %6283 = vmatpush1.msra.mxu0 %v5926
    %6284 = vmatprep.subr.mxu0 %v5931
    %6285 = vmatpush1.msra.mxu0 %v5930
    %6286 = vmatprep.subr.mxu0 %v5935
    %6287 = vmatpush1.msra.mxu0 %v5934
    %6288 = vmatprep.subr.mxu0 %v5939
    %6289 = vmatpush1.msra.mxu0 %v5938
    %6290 = vmatprep.subr.mxu0 %v5943
    %6291 = vmatpush1.msra.mxu0 %v5942
    %6292 = vmatprep.subr.mxu0 %v5947
    %6293 = vmatpush1.msra.mxu0 %v5946
    %6294 = vmatprep.subr.mxu0 %v5951
    %6295 = vmatpush1.msra.mxu0 %v5950
    %6296 = vmatprep.subr.mxu0 %v5955
    %6297 = vmatpush1.msra.mxu0 %v5954
    %6298 = vmatprep.subr.mxu0 %v5959
    %6299 = vmatpush1.msra.mxu0 %v5958
    %6300 = vmatprep.subr.mxu0 %v5963
    %6301 = vmatpush1.msra.mxu0 %v5962
    %6302 = vmatprep.subr.mxu0 %v5967
    %6303 = vmatpush1.msra.mxu0 %v5966
    %6304 = vmatprep.mubr.f32.mxu0 %v1236
    %6305 = vmatmul.mubr.f32.gmra.mrb[0].mxu0 %v1228
    %v6306 = vpop.f32.mrb[0].mxu0
    %v6307 = vadd.f32 %v6236, %v6306
    %v6308 = vpop.f32.mrb[0].mxu0
    %v6309 = vadd.f32 %v6238, %v6308
    %6310 = vdwg.mxu0
    %6311 = vmatprep.subr.mxu0 %v5971
    %6312 = vmatpush1.msra.mxu0 %v5970
    %6313 = vmatprep.subr.mxu0 %v5975
    %6314 = vmatpush1.msra.mxu0 %v5974
    %6315 = vmatprep.subr.mxu0 %v5979
    %6316 = vmatpush1.msra.mxu0 %v5978
    %6317 = vmatprep.subr.mxu0 %v5983
    %6318 = vmatpush1.msra.mxu0 %v5982
    %6319 = vmatprep.subr.mxu0 %v5987
    %6320 = vmatpush1.msra.mxu0 %v5986
    %6321 = vmatprep.subr.mxu0 %v5991
    %6322 = vmatpush1.msra.mxu0 %v5990
    %6323 = vmatprep.subr.mxu0 %v5995
    %6324 = vmatpush1.msra.mxu0 %v5994
    %6325 = vmatprep.subr.mxu0 %v5999
    %6326 = vmatpush1.msra.mxu0 %v5998
    %6327 = vmatprep.subr.mxu0 %v6003
    %6328 = vmatpush1.msra.mxu0 %v6002
    %6329 = vmatprep.subr.mxu0 %v6007
    %6330 = vmatpush1.msra.mxu0 %v6006
    %6331 = vmatprep.subr.mxu0 %v6011
    %6332 = vmatpush1.msra.mxu0 %v6010
    %6333 = vmatprep.subr.mxu0 %v6015
    %6334 = vmatpush1.msra.mxu0 %v6014
    %6335 = vmatprep.subr.mxu0 %v6019
    %6336 = vmatpush1.msra.mxu0 %v6018
    %6337 = vmatprep.subr.mxu0 %v6023
    %6338 = vmatpush1.msra.mxu0 %v6022
    %6339 = vmatprep.subr.mxu0 %v6027
    %6340 = vmatpush1.msra.mxu0 %v6026
    %6341 = vmatprep.subr.mxu0 %v6031
    %6342 = vmatpush1.msra.mxu0 %v6030
    %6343 = vmatprep.subr.mxu0 %v6035
    %6344 = vmatpush1.msra.mxu0 %v6034
    %6345 = vmatprep.subr.mxu0 %v6039
    %6346 = vmatpush1.msra.mxu0 %v6038
    %6347 = vmatprep.subr.mxu0 %v6043
    %6348 = vmatpush1.msra.mxu0 %v6042
    %6349 = vmatprep.subr.mxu0 %v6047
    %6350 = vmatpush1.msra.mxu0 %v6046
    %6351 = vmatprep.subr.mxu0 %v6051
    %6352 = vmatpush1.msra.mxu0 %v6050
    %6353 = vmatprep.subr.mxu0 %v6055
    %6354 = vmatpush1.msra.mxu0 %v6054
    %6355 = vmatprep.subr.mxu0 %v6059
    %6356 = vmatpush1.msra.mxu0 %v6058
    %6357 = vmatprep.subr.mxu0 %v6063
    %6358 = vmatpush1.msra.mxu0 %v6062
    %6359 = vmatprep.subr.mxu0 %v6067
    %6360 = vmatpush1.msra.mxu0 %v6066
    %6361 = vmatprep.subr.mxu0 %v6071
    %6362 = vmatpush1.msra.mxu0 %v6070
    %6363 = vmatprep.subr.mxu0 %v6075
    %6364 = vmatpush1.msra.mxu0 %v6074
    %6365 = vmatprep.subr.mxu0 %v6079
    %6366 = vmatpush1.msra.mxu0 %v6078
    %6367 = vmatprep.subr.mxu0 %v6083
    %6368 = vmatpush1.msra.mxu0 %v6082
    %6369 = vmatprep.subr.mxu0 %v6087
    %6370 = vmatpush1.msra.mxu0 %v6086
    %6371 = vmatprep.subr.mxu0 %v6091
    %6372 = vmatpush1.msra.mxu0 %v6090
    %6373 = vmatprep.subr.mxu0 %v6095
    %6374 = vmatpush1.msra.mxu0 %v6094
    %6375 = vmatprep.mubr.f32.mxu0 %v1237
    %6376 = vmatmul.mubr.f32.gmra.mrb[0].mxu0 %v1235
    %v6377 = vpop.f32.mrb[0].mxu0
    %v6378 = vadd.f32 %v6307, %v6377
    %v6379 = vpop.f32.mrb[0].mxu0
    %v6380 = vadd.f32 %v6309, %v6379
    %6381 = vdwg.mxu0
    %6382 = vmatprep.subr.mxu0 %v5589
    %6383 = vmatpush1.msra.mxu0 %v5588
    %6384 = vmatprep.subr.mxu0 %v5593
    %6385 = vmatpush1.msra.mxu0 %v5592
    %6386 = vmatprep.subr.mxu0 %v5597
    %6387 = vmatpush1.msra.mxu0 %v5596
    %6388 = vmatprep.subr.mxu0 %v5601
    %6389 = vmatpush1.msra.mxu0 %v5600
    %6390 = vmatprep.subr.mxu0 %v5605
    %6391 = vmatpush1.msra.mxu0 %v5604
    %6392 = vmatprep.subr.mxu0 %v5609
    %6393 = vmatpush1.msra.mxu0 %v5608
    %6394 = vmatprep.subr.mxu0 %v5613
    %6395 = vmatpush1.msra.mxu0 %v5612
    %6396 = vmatprep.subr.mxu0 %v5617
    %6397 = vmatpush1.msra.mxu0 %v5616
    %6398 = vmatprep.subr.mxu0 %v5621
    %6399 = vmatpush1.msra.mxu0 %v5620
    %6400 = vmatprep.subr.mxu0 %v5625
    %6401 = vmatpush1.msra.mxu0 %v5624
    %6402 = vmatprep.subr.mxu0 %v5629
    %6403 = vmatpush1.msra.mxu0 %v5628
    %6404 = vmatprep.subr.mxu0 %v5633
    %6405 = vmatpush1.msra.mxu0 %v5632
    %6406 = vmatprep.subr.mxu0 %v5637
    %6407 = vmatpush1.msra.mxu0 %v5636
    %6408 = vmatprep.subr.mxu0 %v5641
    %6409 = vmatpush1.msra.mxu0 %v5640
    %6410 = vmatprep.subr.mxu0 %v5645
    %6411 = vmatpush1.msra.mxu0 %v5644
    %6412 = vmatprep.subr.mxu0 %v5649
    %6413 = vmatpush1.msra.mxu0 %v5648
    %6414 = vmatprep.subr.mxu0 %v5653
    %6415 = vmatpush1.msra.mxu0 %v5652
    %6416 = vmatprep.subr.mxu0 %v5657
    %6417 = vmatpush1.msra.mxu0 %v5656
    %6418 = vmatprep.subr.mxu0 %v5661
    %6419 = vmatpush1.msra.mxu0 %v5660
    %6420 = vmatprep.subr.mxu0 %v5665
    %6421 = vmatpush1.msra.mxu0 %v5664
    %6422 = vmatprep.subr.mxu0 %v5669
    %6423 = vmatpush1.msra.mxu0 %v5668
    %6424 = vmatprep.subr.mxu0 %v5673
    %6425 = vmatpush1.msra.mxu0 %v5672
    %6426 = vmatprep.subr.mxu0 %v5677
    %6427 = vmatpush1.msra.mxu0 %v5676
    %6428 = vmatprep.subr.mxu0 %v5681
    %6429 = vmatpush1.msra.mxu0 %v5680
    %6430 = vmatprep.subr.mxu0 %v5685
    %6431 = vmatpush1.msra.mxu0 %v5684
    %6432 = vmatprep.subr.mxu0 %v5689
    %6433 = vmatpush1.msra.mxu0 %v5688
    %6434 = vmatprep.subr.mxu0 %v5693
    %6435 = vmatpush1.msra.mxu0 %v5692
    %6436 = vmatprep.subr.mxu0 %v5697
    %6437 = vmatpush1.msra.mxu0 %v5696
    %6438 = vmatprep.subr.mxu0 %v5701
    %6439 = vmatpush1.msra.mxu0 %v5700
    %6440 = vmatprep.subr.mxu0 %v5705
    %6441 = vmatpush1.msra.mxu0 %v5704
    %6442 = vmatprep.subr.mxu0 %v5709
    %6443 = vmatpush1.msra.mxu0 %v5708
    %6444 = vmatprep.subr.mxu0 %v5713
    %6445 = vmatpush1.msra.mxu0 %v5712
    %6446 = vmatprep.mubr.f32.mxu0 %v1219
    %6447 = vmatmul.mubr.f32.gmra.mrb[0].mxu0 %v1211
    %v6448 = vpop.f32.mrb[0].mxu0
    %v6449 = vadd.f32 0.0, %v6448
    %v6450 = vpop.f32.mrb[0].mxu0
    %v6451 = vadd.f32 0.0, %v6450
    %6452 = vdwg.mxu0
    %6453 = vmatprep.subr.mxu0 %v5717
    %6454 = vmatpush1.msra.mxu0 %v5716
    %6455 = vmatprep.subr.mxu0 %v5721
    %6456 = vmatpush1.msra.mxu0 %v5720
    %6457 = vmatprep.subr.mxu0 %v5725
    %6458 = vmatpush1.msra.mxu0 %v5724
    %6459 = vmatprep.subr.mxu0 %v5729
    %6460 = vmatpush1.msra.mxu0 %v5728
    %6461 = vmatprep.subr.mxu0 %v5733
    %6462 = vmatpush1.msra.mxu0 %v5732
    %6463 = vmatprep.subr.mxu0 %v5737
    %6464 = vmatpush1.msra.mxu0 %v5736
    %6465 = vmatprep.subr.mxu0 %v5741
    %6466 = vmatpush1.msra.mxu0 %v5740
    %6467 = vmatprep.subr.mxu0 %v5745
    %6468 = vmatpush1.msra.mxu0 %v5744
    %6469 = vmatprep.subr.mxu0 %v5749
    %6470 = vmatpush1.msra.mxu0 %v5748
    %6471 = vmatprep.subr.mxu0 %v5753
    %6472 = vmatpush1.msra.mxu0 %v5752
    %6473 = vmatprep.subr.mxu0 %v5757
    %6474 = vmatpush1.msra.mxu0 %v5756
    %6475 = vmatprep.subr.mxu0 %v5761
    %6476 = vmatpush1.msra.mxu0 %v5760
    %6477 = vmatprep.subr.mxu0 %v5765
    %6478 = vmatpush1.msra.mxu0 %v5764
    %6479 = vmatprep.subr.mxu0 %v5769
    %6480 = vmatpush1.msra.mxu0 %v5768
    %6481 = vmatprep.subr.mxu0 %v5773
    %6482 = vmatpush1.msra.mxu0 %v5772
    %6483 = vmatprep.subr.mxu0 %v5777
    %6484 = vmatpush1.msra.mxu0 %v5776
    %6485 = vmatprep.subr.mxu0 %v5781
    %6486 = vmatpush1.msra.mxu0 %v5780
    %6487 = vmatprep.subr.mxu0 %v5785
    %6488 = vmatpush1.msra.mxu0 %v5784
    %6489 = vmatprep.subr.mxu0 %v5789
    %6490 = vmatpush1.msra.mxu0 %v5788
    %6491 = vmatprep.subr.mxu0 %v5793
    %6492 = vmatpush1.msra.mxu0 %v5792
    %6493 = vmatprep.subr.mxu0 %v5797
    %6494 = vmatpush1.msra.mxu0 %v5796
    %6495 = vmatprep.subr.mxu0 %v5801
    %6496 = vmatpush1.msra.mxu0 %v5800
    %6497 = vmatprep.subr.mxu0 %v5805
    %6498 = vmatpush1.msra.mxu0 %v5804
    %6499 = vmatprep.subr.mxu0 %v5809
    %6500 = vmatpush1.msra.mxu0 %v5808
    %6501 = vmatprep.subr.mxu0 %v5813
    %6502 = vmatpush1.msra.mxu0 %v5812
    %6503 = vmatprep.subr.mxu0 %v5817
    %6504 = vmatpush1.msra.mxu0 %v5816
    %6505 = vmatprep.subr.mxu0 %v5821
    %6506 = vmatpush1.msra.mxu0 %v5820
    %6507 = vmatprep.subr.mxu0 %v5825
    %6508 = vmatpush1.msra.mxu0 %v5824
    %6509 = vmatprep.subr.mxu0 %v5829
    %6510 = vmatpush1.msra.mxu0 %v5828
    %6511 = vmatprep.subr.mxu0 %v5833
    %6512 = vmatpush1.msra.mxu0 %v5832
    %6513 = vmatprep.subr.mxu0 %v5837
    %6514 = vmatpush1.msra.mxu0 %v5836
    %6515 = vmatprep.subr.mxu0 %v5841
    %6516 = vmatpush1.msra.mxu0 %v5840
    %6517 = vmatprep.mubr.f32.mxu0 %v1220
    %6518 = vmatmul.mubr.f32.gmra.mrb[0].mxu0 %v1218
    %v6519 = vpop.f32.mrb[0].mxu0
    %v6520 = vadd.f32 %v6449, %v6519
    %v6521 = vpop.f32.mrb[0].mxu0
    %v6522 = vadd.f32 %v6451, %v6521
    %6523 = vdwg.mxu0
    %6524 = vmatprep.subr.mxu0 %v5845
    %6525 = vmatpush1.msra.mxu0 %v5844
    %6526 = vmatprep.subr.mxu0 %v5849
    %6527 = vmatpush1.msra.mxu0 %v5848
    %6528 = vmatprep.subr.mxu0 %v5853
    %6529 = vmatpush1.msra.mxu0 %v5852
    %6530 = vmatprep.subr.mxu0 %v5857
    %6531 = vmatpush1.msra.mxu0 %v5856
    %6532 = vmatprep.subr.mxu0 %v5861
    %6533 = vmatpush1.msra.mxu0 %v5860
    %6534 = vmatprep.subr.mxu0 %v5865
    %6535 = vmatpush1.msra.mxu0 %v5864
    %6536 = vmatprep.subr.mxu0 %v5869
    %6537 = vmatpush1.msra.mxu0 %v5868
    %6538 = vmatprep.subr.mxu0 %v5873
    %6539 = vmatpush1.msra.mxu0 %v5872
    %6540 = vmatprep.subr.mxu0 %v5877
    %6541 = vmatpush1.msra.mxu0 %v5876
    %6542 = vmatprep.subr.mxu0 %v5881
    %6543 = vmatpush1.msra.mxu0 %v5880
    %6544 = vmatprep.subr.mxu0 %v5885
    %6545 = vmatpush1.msra.mxu0 %v5884
    %6546 = vmatprep.subr.mxu0 %v5889
    %6547 = vmatpush1.msra.mxu0 %v5888
    %6548 = vmatprep.subr.mxu0 %v5893
    %6549 = vmatpush1.msra.mxu0 %v5892
    %6550 = vmatprep.subr.mxu0 %v5897
    %6551 = vmatpush1.msra.mxu0 %v5896
    %6552 = vmatprep.subr.mxu0 %v5901
    %6553 = vmatpush1.msra.mxu0 %v5900
    %6554 = vmatprep.subr.mxu0 %v5905
    %6555 = vmatpush1.msra.mxu0 %v5904
    %6556 = vmatprep.subr.mxu0 %v5909
    %6557 = vmatpush1.msra.mxu0 %v5908
    %6558 = vmatprep.subr.mxu0 %v5913
    %6559 = vmatpush1.msra.mxu0 %v5912
    %6560 = vmatprep.subr.mxu0 %v5917
    %6561 = vmatpush1.msra.mxu0 %v5916
    %6562 = vmatprep.subr.mxu0 %v5921
    %6563 = vmatpush1.msra.mxu0 %v5920
    %6564 = vmatprep.subr.mxu0 %v5925
    %6565 = vmatpush1.msra.mxu0 %v5924
    %6566 = vmatprep.subr.mxu0 %v5929
    %6567 = vmatpush1.msra.mxu0 %v5928
    %6568 = vmatprep.subr.mxu0 %v5933
    %6569 = vmatpush1.msra.mxu0 %v5932
    %6570 = vmatprep.subr.mxu0 %v5937
    %6571 = vmatpush1.msra.mxu0 %v5936
    %6572 = vmatprep.subr.mxu0 %v5941
    %6573 = vmatpush1.msra.mxu0 %v5940
    %6574 = vmatprep.subr.mxu0 %v5945
    %6575 = vmatpush1.msra.mxu0 %v5944
    %6576 = vmatprep.subr.mxu0 %v5949
    %6577 = vmatpush1.msra.mxu0 %v5948
    %6578 = vmatprep.subr.mxu0 %v5953
    %6579 = vmatpush1.msra.mxu0 %v5952
    %6580 = vmatprep.subr.mxu0 %v5957
    %6581 = vmatpush1.msra.mxu0 %v5956
    %6582 = vmatprep.subr.mxu0 %v5961
    %6583 = vmatpush1.msra.mxu0 %v5960
    %6584 = vmatprep.subr.mxu0 %v5965
    %6585 = vmatpush1.msra.mxu0 %v5964
    %6586 = vmatprep.subr.mxu0 %v5969
    %6587 = vmatpush1.msra.mxu0 %v5968
    %6588 = vmatprep.mubr.f32.mxu0 %v1236
    %6589 = vmatmul.mubr.f32.gmra.mrb[0].mxu0 %v1228
    %v6590 = vpop.f32.mrb[0].mxu0
    %v6591 = vadd.f32 %v6520, %v6590
    %v6592 = vpop.f32.mrb[0].mxu0
    %v6593 = vadd.f32 %v6522, %v6592
    %6594 = vdwg.mxu0
    %6595 = vmatprep.subr.mxu0 %v5973
    %6596 = vmatpush1.msra.mxu0 %v5972
    %6597 = vmatprep.subr.mxu0 %v5977
    %6598 = vmatpush1.msra.mxu0 %v5976
    %6599 = vmatprep.subr.mxu0 %v5981
    %6600 = vmatpush1.msra.mxu0 %v5980
    %6601 = vmatprep.subr.mxu0 %v5985
    %6602 = vmatpush1.msra.mxu0 %v5984
    %6603 = vmatprep.subr.mxu0 %v5989
    %6604 = vmatpush1.msra.mxu0 %v5988
    %6605 = vmatprep.subr.mxu0 %v5993
    %6606 = vmatpush1.msra.mxu0 %v5992
    %6607 = vmatprep.subr.mxu0 %v5997
    %6608 = vmatpush1.msra.mxu0 %v5996
    %6609 = vmatprep.subr.mxu0 %v6001
    %6610 = vmatpush1.msra.mxu0 %v6000
    %6611 = vmatprep.subr.mxu0 %v6005
    %6612 = vmatpush1.msra.mxu0 %v6004
    %6613 = vmatprep.subr.mxu0 %v6009
    %6614 = vmatpush1.msra.mxu0 %v6008
    %6615 = vmatprep.subr.mxu0 %v6013
    %6616 = vmatpush1.msra.mxu0 %v6012
    %6617 = vmatprep.subr.mxu0 %v6017
    %6618 = vmatpush1.msra.mxu0 %v6016
    %6619 = vmatprep.subr.mxu0 %v6021
    %6620 = vmatpush1.msra.mxu0 %v6020
    %6621 = vmatprep.subr.mxu0 %v6025
    %6622 = vmatpush1.msra.mxu0 %v6024
    %6623 = vmatprep.subr.mxu0 %v6029
    %6624 = vmatpush1.msra.mxu0 %v6028
    %6625 = vmatprep.subr.mxu0 %v6033
    %6626 = vmatpush1.msra.mxu0 %v6032
    %6627 = vmatprep.subr.mxu0 %v6037
    %6628 = vmatpush1.msra.mxu0 %v6036
    %6629 = vmatprep.subr.mxu0 %v6041
    %6630 = vmatpush1.msra.mxu0 %v6040
    %6631 = vmatprep.subr.mxu0 %v6045
    %6632 = vmatpush1.msra.mxu0 %v6044
    %6633 = vmatprep.subr.mxu0 %v6049
    %6634 = vmatpush1.msra.mxu0 %v6048
    %6635 = vmatprep.subr.mxu0 %v6053
    %6636 = vmatpush1.msra.mxu0 %v6052
    %6637 = vmatprep.subr.mxu0 %v6057
    %6638 = vmatpush1.msra.mxu0 %v6056
    %6639 = vmatprep.subr.mxu0 %v6061
    %6640 = vmatpush1.msra.mxu0 %v6060
    %6641 = vmatprep.subr.mxu0 %v6065
    %6642 = vmatpush1.msra.mxu0 %v6064
    %6643 = vmatprep.subr.mxu0 %v6069
    %6644 = vmatpush1.msra.mxu0 %v6068
    %6645 = vmatprep.subr.mxu0 %v6073
    %6646 = vmatpush1.msra.mxu0 %v6072
    %6647 = vmatprep.subr.mxu0 %v6077
    %6648 = vmatpush1.msra.mxu0 %v6076
    %6649 = vmatprep.subr.mxu0 %v6081
    %6650 = vmatpush1.msra.mxu0 %v6080
    %6651 = vmatprep.subr.mxu0 %v6085
    %6652 = vmatpush1.msra.mxu0 %v6084
    %6653 = vmatprep.subr.mxu0 %v6089
    %6654 = vmatpush1.msra.mxu0 %v6088
    %6655 = vmatprep.subr.mxu0 %v6093
    %6656 = vmatpush1.msra.mxu0 %v6092
    %6657 = vmatprep.subr.mxu0 %v6097
    %6658 = vmatpush1.msra.mxu0 %v6096
    %6659 = vmatprep.mubr.f32.mxu0 %v1237
    %6660 = vmatmul.mubr.f32.gmra.mrb[0].mxu0 %v1235
    %v6661 = vpop.f32.mrb[0].mxu0
    %v6662 = vadd.f32 %v6591, %v6661
    %v6663 = vpop.f32.mrb[0].mxu0
    %v6664 = vadd.f32 %v6593, %v6663
    %6665 = vdwg.mxu0
    %v6670 = vcombine.low %v6378, %v6380
    %v6671 = vcombine.low %v6662, %v6664
    %v6673 = vunpack.c.l.s4 1983009808
    %v6674 = vunpack.c.0.s8 %v6673
    %v6675 = vlaneseq
    %v6676 = vshrl.u32 %v6675, 7
    %v6677 = vsub.s32 %v6674, %v6676
    %v6678 = vrot.slane %v6670, %v6677
    %v6680 = vunpack.c.l.s4 1983009808
    %v6681 = vunpack.c.0.s8 %v6680
    %v6682 = vlaneseq
    %v6683 = vshrl.u32 %v6682, 7
    %v6684 = vsub.s32 %v6681, %v6683
    %v6685 = vrot.slane %v6671, %v6684
    %v6686 = vcombine.low %v6678, %v6685
    %6688 = vst [vmem:[#allocation17] sm:$0xff] %v6686
    // Predicated region
    $region66: #{tpu_custom_call.1} parent=1 // pred_check
      _
    $region67: #{tpu_custom_call.1} parent=1 // pred_check_branch
      %6690 = sbr.rel (0) target = $region69
    $region68: #{tpu_custom_call.1} parent=1 // pred_region
      %s6692 = ssub.s32 96, 96
      %6693 = vsyncadd [#allocation4], %s6692
      %s6695 = sshll.u32 [#allocation16], 4
      %s6696 = int_to_ptr.vmem [resolvable:$true] %s6695
      %6698 = dma.vmem_to_hbm [thread:$0]  %s6696, 96, %s8, [#allocation4]
    $region69: #{tpu_custom_call.1} parent=1 // pred_fallthru
      _
    // Predicated region
    $region70: #{tpu_custom_call.1} parent=1 // pred_check
      _
    $region71: #{tpu_custom_call.1} parent=1 // pred_check_branch
      %6700 = sbr.rel (0) target = $region73
    $region72: #{tpu_custom_call.1} parent=1 // pred_region
      %s6702 = ssub.s32 128, 128
      %6703 = vsyncadd [#allocation18], %s6702
      %s6705 = sshll.u32 [#allocation17], 4
      %s6706 = int_to_ptr.vmem [resolvable:$true] %s6705
      %6708 = dma.vmem_to_hbm [thread:$0]  %s6706, 128, %s9, [#allocation18]
    $region73: #{tpu_custom_call.1} parent=1 // pred_fallthru
      _
    // Predicated region
    $region74: #{tpu_custom_call.1} parent=1 // pred_check
      _
    $region75: #{tpu_custom_call.1} parent=1 // pred_check_branch
      %6710 = sbr.rel (0) target = $region77
    $region76: #{tpu_custom_call.1} parent=1 // pred_region
      %6711 = dma.done [#allocation4], 96
    $region77: #{tpu_custom_call.1} parent=1 // pred_fallthru
      _
    // Predicated region
    $region78: #{tpu_custom_call.1} parent=1 // pred_check
      _
    $region79: #{tpu_custom_call.1} parent=1 // pred_check_branch
      %6713 = sbr.rel (0) target = $region81
    $region80: #{tpu_custom_call.1} parent=1 // pred_region
      %6714 = dma.done [#allocation18], 128
    $region81: #{tpu_custom_call.1} parent=1 // pred_fallthru
      _
    %6715 = vsyncpa [#allocation3], 1
    %6716 = vsyncpa [#allocation6], 1
    %6717 = vsyncpa [#allocation9], 1
    %6718 = vsyncpa [#allocation12], 1
    %6719 = vsyncpa [#allocation15], 1
    %6720 = vsyncpa [#allocation4], 1
    %6721 = vsyncpa [#allocation18], 1

</llo_original>
